<compile_context>
chip_gen: v6e
topology: v6e:2x2x1
jax: 0.10.0
libtpu: 0.0.40
codegen_flags: <defaults>
</compile_context>

<pallas_src>
import functools

import numpy as np
import jax
import jax.numpy as jnp
from jax import lax
from jax.experimental import pallas as pl
from jax.experimental.pallas import tpu as pltpu

# Explicit precision (instead of a global jax_default_matmul_precision side
# effect) so the pure-JAX reference matches the in-kernel f32 MXU matmuls.
_HP = lax.Precision.HIGHEST


# -----------------------------------------------------------------------------
# Kernel
# -----------------------------------------------------------------------------
def net_kernel(idx_f_ref, idx_b_ref, table_ref, wh_ref, w1_ref, b1_ref,
               out_ref, gx_ref, *, T, B, H):
    """Fused embedding + bidirectional LSTM + max-pool-over-time + fc1."""
    NB2 = table_ref.shape[0]          # 2 * num_bins (fwd rows, then bwd rows)

    # --- Embedding + input projection + bias for both directions, hoisted out
    # of the recurrence as a single two-hot MXU matmul.  gx_ref row block t*B
    # holds the fwd-token-t and bwd-token-(T-1-t) gate pre-activations
    # (minus the recurrent term), already gate-permuted and lane-dense. -------
    iota = lax.broadcasted_iota(jnp.int32, (T * B, NB2), 1)
    twohot = jnp.logical_or(idx_f_ref[...] == iota,
                            idx_b_ref[...] == iota).astype(jnp.float32)
    gx_ref[...] = jnp.dot(twohot, table_ref[...],
                          preferred_element_type=jnp.float32,
                          precision=_HP)                      # (T*B, 8H)

    wh = wh_ref[...]                                          # (2H, 8H) blockdiag

    h0 = jnp.zeros((B, 2 * H), jnp.float32)
    m0 = jnp.full((B, 2 * H), -jnp.inf, jnp.float32)

    # --- Fused bidirectional LSTM recurrence + MaxPool2d((T, 1)) as a running
    # max.  Gate column layout: [i_f i_b | f_f f_b | o_f o_b | g_f g_b]. ------
    def body(t, carry):
        h, c, m = carry                                       # (B, 2H) each
        off = pl.multiple_of(t * B, B)
        gx = gx_ref[pl.ds(off, B), :]                         # (B, 8H)
        g = gx + jnp.dot(h, wh, preferred_element_type=jnp.float32,
                         precision=_HP)                       # (B, 8H)
        sig = jax.nn.sigmoid(g[:, 0:6 * H])                   # i | f | o gates
        gg = jnp.tanh(g[:, 6 * H:8 * H])                      # g gate
        c = sig[:, 2 * H:4 * H] * c + sig[:, 0:2 * H] * gg
        h = sig[:, 4 * H:6 * H] * jnp.tanh(c)
        m = jnp.maximum(m, h)
        return h, c, m

    _, _, m = lax.fori_loop(0, T, body, (h0, h0, m0), unroll=True)

    # Dropout(0.5) is identity in eval mode.  fc1 on pooled [fwd | bwd] feats.
    out_ref[...] = (jnp.dot(m, w1_ref[...], preferred_element_type=jnp.float32,
                            precision=_HP)
                    + b1_ref[...])                            # (B, 1)


# -----------------------------------------------------------------------------
# Weight pre-packing (wrapper-side, outside the recurrence)
# -----------------------------------------------------------------------------
def _split_ifgo(w, H):
    """Split the PyTorch LSTM gate axis (order i, f, g, o) into gate blocks."""
    return w[..., 0:H], w[..., H:2 * H], w[..., 2 * H:3 * H], w[..., 3 * H:4 * H]


def _pack_params(params):
    """Fold params into the fused, lane-dense layout used by the kernel.

    Fused gate column layout (8H wide): [i_f i_b | f_f f_b | o_f o_b | g_f g_b].
    NOTE: PyTorch nn.LSTM has two biases per direction (b_ih, b_hh); `b_f` /
    `b_b` here must be their sum when loading real PyTorch weights.
    """
    emb = params["emb"].astype(jnp.float32)
    NB, E = emb.shape
    H = params["wh_f"].shape[0]

    xi_f, xf_f, xg_f, xo_f = _split_ifgo(params["wx_f"], H)    # (E, H) each
    xi_b, xf_b, xg_b, xo_b = _split_ifgo(params["wx_b"], H)
    ZE = jnp.zeros((E, H), jnp.float32)
    wx_fwd = jnp.concatenate([xi_f, ZE, xf_f, ZE, xo_f, ZE, xg_f, ZE], axis=1)
    wx_bwd = jnp.concatenate([ZE, xi_b, ZE, xf_b, ZE, xo_b, ZE, xg_b], axis=1)

    bi_f, bf_f, bg_f, bo_f = _split_ifgo(params["b_f"], H)     # (H,) each
    bi_b, bf_b, bg_b, bo_b = _split_ifgo(params["b_b"], H)
    Z1 = jnp.zeros((H,), jnp.float32)
    b_fwd = jnp.concatenate([bi_f, Z1, bf_f, Z1, bo_f, Z1, bg_f, Z1])
    b_bwd = jnp.concatenate([Z1, bi_b, Z1, bf_b, Z1, bo_b, Z1, bg_b])

    # (2*NB, 8H): rows [0, NB) = fwd x-projection (+bias) in fwd columns,
    # rows [NB, 2NB) = bwd x-projection (+bias) in bwd columns; off-direction
    # columns are exactly 0, so the in-kernel two-hot matmul (one fwd row + one
    # bwd row) yields the full per-step gate pre-activation (minus h @ Wh).
    table = jnp.concatenate(
        [jnp.dot(emb, wx_fwd, precision=_HP) + b_fwd[None, :],
         jnp.dot(emb, wx_bwd, precision=_HP) + b_bwd[None, :]], axis=0)

    hi_f, hf_f, hg_f, ho_f = _split_ifgo(params["wh_f"], H)    # (H, H) each
    hi_b, hf_b, hg_b, ho_b = _split_ifgo(params["wh_b"], H)
    ZH = jnp.zeros((H, H), jnp.float32)
    wh_cat = jnp.concatenate([
        jnp.concatenate([hi_f, ZH, hf_f, ZH, ho_f, ZH, hg_f, ZH], axis=1),
        jnp.concatenate([ZH, hi_b, ZH, hf_b, ZH, ho_b, ZH, hg_b], axis=1)],
        axis=0)                                                # (2H, 8H)

    w1 = params["w1"].astype(jnp.float32)                      # (2H, 1)
    b1 = params["b1"].reshape(1, 1).astype(jnp.float32)
    return table, wh_cat, w1, b1, NB, H


def net_forward(idx_bt, params):
    """idx_bt: (B, T) int32 bin indices. Returns (B, 1) float32 like Net.forward."""
    B, T = idx_bt.shape
    table, wh_cat, w1, b1, NB, H = _pack_params(params)

    # Time-major index columns: fwd reads token at step t, bwd reads token at
    # step T-1-t (offset by NB to hit the bwd half of the table).
    idx_tb = jnp.transpose(idx_bt, (1, 0)).astype(jnp.int32)   # (T, B)
    idx_f = idx_tb.reshape(T * B, 1)
    idx_b = idx_tb[::-1].reshape(T * B, 1) + NB

    vmem = pl.BlockSpec(memory_space=pltpu.MemorySpace.VMEM)
    kernel = functools.partial(net_kernel, T=T, B=B, H=H)
    # TODO(synk): at realistic batch sizes add a batch grid axis with
    # dimension_semantics=("parallel",) to shard across v7x's two TensorCores;
    # at B=8 a single invocation is best.
    return pl.pallas_call(
        kernel,
        out_shape=jax.ShapeDtypeStruct((B, 1), jnp.float32),
        in_specs=[vmem] * 6,
        out_specs=vmem,
        scratch_shapes=[pltpu.VMEM((T * B, 8 * H), jnp.float32)],  # lane-dense
    )(idx_f, idx_b, table, wh_cat, w1, b1)


# -----------------------------------------------------------------------------
# Pure-JAX reference (for verification)
# -----------------------------------------------------------------------------
def net_reference(idx_bt, params):
    B, T = idx_bt.shape
    H = params["wh_f"].shape[0]
    x = params["emb"].astype(jnp.float32)[idx_bt]               # (B, T, E)
    x_t = jnp.swapaxes(x, 0, 1)                                 # (T, B, E)

    def run(seq_tbe, wx, wh, b):
        def step(carry, x_s):
            h, c = carry
            g = (jnp.dot(x_s, wx, precision=_HP)
                 + jnp.dot(h, wh, precision=_HP) + b)
            i = jax.nn.sigmoid(g[:, :H])
            f = jax.nn.sigmoid(g[:, H:2 * H])
            gg = jnp.tanh(g[:, 2 * H:3 * H])
            o = jax.nn.sigmoid(g[:, 3 * H:])
            c = f * c + i * gg
            h = o * jnp.tanh(c)
            return (h, c), h
        init = (jnp.zeros((B, H), jnp.float32), jnp.zeros((B, H), jnp.float32))
        _, hs = lax.scan(step, init, seq_tbe)
        return hs                                               # (T, B, H)

    h_f = run(x_t, params["wx_f"], params["wh_f"], params["b_f"])
    h_b = run(x_t[::-1], params["wx_b"], params["wh_b"], params["b_b"])
    feat = jnp.concatenate([h_f.max(axis=0), h_b.max(axis=0)], axis=1)  # (B, 2H)
    # Dropout = identity (eval); fc1.
    return jnp.dot(feat, params["w1"], precision=_HP) + params["b1"]


if __name__ == "__main__":
    # params: num_bins=32, embedding_dim=16, lstm_hidden_dim=32, in_dim=T=8, B=8.
    B, T, E, H, NB = 8, 8, 16, 32, 32

    key = jax.random.PRNGKey(0)
    ks = jax.random.split(key, 10)
    sh = float(1.0 / np.sqrt(H))
    sf = float(1.0 / np.sqrt(2 * H))

    params = dict(
        emb=jax.random.normal(ks[0], (NB, E), jnp.float32),
        # LSTM forward direction (weights stored transposed: x @ W); biases are
        # the sum b_ih + b_hh when importing real PyTorch weights.
        wx_f=jax.random.uniform(ks[1], (E, 4 * H), jnp.float32, -sh, sh),
        wh_f=jax.random.uniform(ks[2], (H, 4 * H), jnp.float32, -sh, sh),
        b_f=jax.random.uniform(ks[3], (4 * H,), jnp.float32, -sh, sh),
        # LSTM backward direction
        wx_b=jax.random.uniform(ks[4], (E, 4 * H), jnp.float32, -sh, sh),
        wh_b=jax.random.uniform(ks[5], (H, 4 * H), jnp.float32, -sh, sh),
        b_b=jax.random.uniform(ks[6], (4 * H,), jnp.float32, -sh, sh),
        # fc1: Linear(2H, 1), stored transposed (2H, 1)
        w1=jax.random.uniform(ks[7], (2 * H, 1), jnp.float32, -sf, sf),
        b1=jax.random.uniform(ks[8], (1,), jnp.float32, -sf, sf),
    )
    # TODO(synk): nn.Dropout(0.5) is modeled in eval mode (identity); train-mode
    # stochastic masking is not reproduced. fc2 is unused in Net.forward.

    idx = jax.random.randint(ks[9], (B, T), 0, NB, dtype=jnp.int32)

    out = net_forward(idx, params)
    out = jax.block_until_ready(out)
    ref = net_reference(idx, params)

    assert out.shape == (B, 1), out.shape
    np.testing.assert_allclose(np.asarray(out), np.asarray(ref),
                               rtol=2e-3, atol=2e-3)
    print("KERNEL_OK")
</pallas_src>

<mosaic_0001>
module attributes {stable_mosaic.version = 11 : i64} {
  func.func @net_kernel(%arg0: memref<64x1xi32, #tpu.memory_space<vmem>>, %arg1: memref<64x1xi32, #tpu.memory_space<vmem>>, %arg2: memref<64x256xf32, #tpu.memory_space<vmem>>, %arg3: memref<64x256xf32, #tpu.memory_space<vmem>>, %arg4: memref<64x1xf32, #tpu.memory_space<vmem>>, %arg5: memref<1x1xf32, #tpu.memory_space<vmem>>, %arg6: memref<8x1xf32, #tpu.memory_space<vmem>>, %arg7: memref<64x256xf32, #tpu.memory_space<vmem>>) attributes {dimension_semantics = [], scalar_prefetch = 0 : i64, scratch_operands = 1 : i64, tpu.core_type = #tpu.core_type<tc>} {
    %0 = tpu.iota {dimensions = array<i32: 1>} : vector<64x64xi32>
    %c0 = arith.constant 0 : index
    %c0_0 = arith.constant 0 : index
    %1 = vector.load %arg0[%c0, %c0_0] : memref<64x1xi32, #tpu.memory_space<vmem>>, vector<64x1xi32>
    %2 = vector.broadcast %1 : vector<64x1xi32> to vector<64x64xi32>
    %3 = arith.cmpi eq, %2, %0 : vector<64x64xi32>
    %c0_1 = arith.constant 0 : index
    %c0_2 = arith.constant 0 : index
    %4 = vector.load %arg1[%c0_1, %c0_2] : memref<64x1xi32, #tpu.memory_space<vmem>>, vector<64x1xi32>
    %5 = vector.broadcast %4 : vector<64x1xi32> to vector<64x64xi32>
    %6 = arith.cmpi eq, %5, %0 : vector<64x64xi32>
    %7 = arith.ori %3, %6 : vector<64x64xi1>
    %8 = arith.extui %7 : vector<64x64xi1> to vector<64x64xi32>
    %9 = arith.sitofp %8 : vector<64x64xi32> to vector<64x64xf32>
    %c0_3 = arith.constant 0 : index
    %c0_4 = arith.constant 0 : index
    %10 = vector.load %arg2[%c0_3, %c0_4] : memref<64x256xf32, #tpu.memory_space<vmem>>, vector<64x256xf32>
    %cst = arith.constant dense<0.000000e+00> : vector<64x256xf32>
    %11 = tpu.matmul %9, %10, %cst {dimension_numbers = #tpu.dot_dimension_numbers<[1], [0], [0], [1], [0, 0, 1, 1], [], []>, precision = #tpu.contract_precision<fp32>} : vector<64x64xf32>, vector<64x256xf32>, vector<64x256xf32> -> vector<64x256xf32>
    %c0_5 = arith.constant 0 : index
    %c0_6 = arith.constant 0 : index
    %12 = vector.load %arg7[%c0_5, %c0_6] : memref<64x256xf32, #tpu.memory_space<vmem>>, vector<64x256xf32>
    tpu.vector_store %arg7[%c0_5, %c0_6], %11 {strides = array<i32>} : memref<64x256xf32, #tpu.memory_space<vmem>>, vector<64x256xf32>,
    %c0_7 = arith.constant 0 : index
    %c0_8 = arith.constant 0 : index
    %13 = vector.load %arg3[%c0_7, %c0_8] : memref<64x256xf32, #tpu.memory_space<vmem>>, vector<64x256xf32>
    %cst_9 = arith.constant 0.000000e+00 : f32
    %14 = vector.broadcast %cst_9 : f32 to vector<8x64xf32>
    %cst_10 = arith.constant 0xFF800000 : f32
    %15 = vector.broadcast %cst_10 : f32 to vector<8x64xf32>
    %c0_i32 = arith.constant 0 : i32
    %c8_i32 = arith.constant 8 : i32
    %16 = arith.muli %c0_i32, %c8_i32 : i32
    %17 = tpu.assume_multiple %16, 8 : i32
    %18 = arith.index_cast %17 : i32 to index
    %c0_11 = arith.constant 0 : index
    %19 = vector.load %arg7[%18, %c0_11] : memref<64x256xf32, #tpu.memory_space<vmem>>, vector<8x256xf32>
    %cst_12 = arith.constant dense<0.000000e+00> : vector<8x256xf32>
    %20 = tpu.matmul %14, %13, %cst_12 {dimension_numbers = #tpu.dot_dimension_numbers<[1], [0], [0], [1], [0, 0, 1, 1], [], []>, precision = #tpu.contract_precision<fp32>} : vector<8x64xf32>, vector<64x256xf32>, vector<8x256xf32> -> vector<8x256xf32>
    %21 = arith.addf %19, %20 : vector<8x256xf32>
    %22 = vector.extract_strided_slice %21 {offsets = [0, 0], sizes = [8, 192], strides = [1, 1]} : vector<8x256xf32> to vector<8x192xf32>
    %23 = arith.negf %22 : vector<8x192xf32>
    %24 = math.exp %23 : vector<8x192xf32>
    %cst_13 = arith.constant 1.000000e+00 : f32
    %25 = vector.broadcast %cst_13 : f32 to vector<8x192xf32>
    %26 = arith.addf %25, %24 : vector<8x192xf32>
    %27 = arith.divf %25, %26 : vector<8x192xf32>
    %28 = vector.extract_strided_slice %21 {offsets = [0, 192], sizes = [8, 64], strides = [1, 1]} : vector<8x256xf32> to vector<8x64xf32>
    %29 = math.tanh %28 : vector<8x64xf32>
    %30 = vector.extract_strided_slice %27 {offsets = [0, 64], sizes = [8, 64], strides = [1, 1]} : vector<8x192xf32> to vector<8x64xf32>
    %31 = arith.mulf %30, %14 : vector<8x64xf32>
    %32 = vector.extract_strided_slice %27 {offsets = [0, 0], sizes = [8, 64], strides = [1, 1]} : vector<8x192xf32> to vector<8x64xf32>
    %33 = arith.mulf %32, %29 : vector<8x64xf32>
    %34 = arith.addf %31, %33 : vector<8x64xf32>
    %35 = vector.extract_strided_slice %27 {offsets = [0, 128], sizes = [8, 64], strides = [1, 1]} : vector<8x192xf32> to vector<8x64xf32>
    %36 = math.tanh %34 : vector<8x64xf32>
    %37 = arith.mulf %35, %36 : vector<8x64xf32>
    %38 = arith.maximumf %15, %37 : vector<8x64xf32>
    %c1_i32 = arith.constant 1 : i32
    %c8_i32_14 = arith.constant 8 : i32
    %39 = arith.muli %c1_i32, %c8_i32_14 : i32
    %40 = tpu.assume_multiple %39, 8 : i32
    %41 = arith.index_cast %40 : i32 to index
    %c0_15 = arith.constant 0 : index
    %42 = vector.load %arg7[%41, %c0_15] : memref<64x256xf32, #tpu.memory_space<vmem>>, vector<8x256xf32>
    %cst_16 = arith.constant dense<0.000000e+00> : vector<8x256xf32>
    %43 = tpu.matmul %37, %13, %cst_16 {dimension_numbers = #tpu.dot_dimension_numbers<[1], [0], [0], [1], [0, 0, 1, 1], [], []>, precision = #tpu.contract_precision<fp32>} : vector<8x64xf32>, vector<64x256xf32>, vector<8x256xf32> -> vector<8x256xf32>
    %44 = arith.addf %42, %43 : vector<8x256xf32>
    %45 = vector.extract_strided_slice %44 {offsets = [0, 0], sizes = [8, 192], strides = [1, 1]} : vector<8x256xf32> to vector<8x192xf32>
    %46 = arith.negf %45 : vector<8x192xf32>
    %47 = math.exp %46 : vector<8x192xf32>
    %cst_17 = arith.constant 1.000000e+00 : f32
    %48 = vector.broadcast %cst_17 : f32 to vector<8x192xf32>
    %49 = arith.addf %48, %47 : vector<8x192xf32>
    %50 = arith.divf %48, %49 : vector<8x192xf32>
    %51 = vector.extract_strided_slice %44 {offsets = [0, 192], sizes = [8, 64], strides = [1, 1]} : vector<8x256xf32> to vector<8x64xf32>
    %52 = math.tanh %51 : vector<8x64xf32>
    %53 = vector.extract_strided_slice %50 {offsets = [0, 64], sizes = [8, 64], strides = [1, 1]} : vector<8x192xf32> to vector<8x64xf32>
    %54 = arith.mulf %53, %34 : vector<8x64xf32>
    %55 = vector.extract_strided_slice %50 {offsets = [0, 0], sizes = [8, 64], strides = [1, 1]} : vector<8x192xf32> to vector<8x64xf32>
    %56 = arith.mulf %55, %52 : vector<8x64xf32>
    %57 = arith.addf %54, %56 : vector<8x64xf32>
    %58 = vector.extract_strided_slice %50 {offsets = [0, 128], sizes = [8, 64], strides = [1, 1]} : vector<8x192xf32> to vector<8x64xf32>
    %59 = math.tanh %57 : vector<8x64xf32>
    %60 = arith.mulf %58, %59 : vector<8x64xf32>
    %61 = arith.maximumf %38, %60 : vector<8x64xf32>
    %c2_i32 = arith.constant 2 : i32
    %c8_i32_18 = arith.constant 8 : i32
    %62 = arith.muli %c2_i32, %c8_i32_18 : i32
    %63 = tpu.assume_multiple %62, 8 : i32
    %64 = arith.index_cast %63 : i32 to index
    %c0_19 = arith.constant 0 : index
    %65 = vector.load %arg7[%64, %c0_19] : memref<64x256xf32, #tpu.memory_space<vmem>>, vector<8x256xf32>
    %cst_20 = arith.constant dense<0.000000e+00> : vector<8x256xf32>
    %66 = tpu.matmul %60, %13, %cst_20 {dimension_numbers = #tpu.dot_dimension_numbers<[1], [0], [0], [1], [0, 0, 1, 1], [], []>, precision = #tpu.contract_precision<fp32>} : vector<8x64xf32>, vector<64x256xf32>, vector<8x256xf32> -> vector<8x256xf32>
    %67 = arith.addf %65, %66 : vector<8x256xf32>
    %68 = vector.extract_strided_slice %67 {offsets = [0, 0], sizes = [8, 192], strides = [1, 1]} : vector<8x256xf32> to vector<8x192xf32>
    %69 = arith.negf %68 : vector<8x192xf32>
    %70 = math.exp %69 : vector<8x192xf32>
    %cst_21 = arith.constant 1.000000e+00 : f32
    %71 = vector.broadcast %cst_21 : f32 to vector<8x192xf32>
    %72 = arith.addf %71, %70 : vector<8x192xf32>
    %73 = arith.divf %71, %72 : vector<8x192xf32>
    %74 = vector.extract_strided_slice %67 {offsets = [0, 192], sizes = [8, 64], strides = [1, 1]} : vector<8x256xf32> to vector<8x64xf32>
    %75 = math.tanh %74 : vector<8x64xf32>
    %76 = vector.extract_strided_slice %73 {offsets = [0, 64], sizes = [8, 64], strides = [1, 1]} : vector<8x192xf32> to vector<8x64xf32>
    %77 = arith.mulf %76, %57 : vector<8x64xf32>
    %78 = vector.extract_strided_slice %73 {offsets = [0, 0], sizes = [8, 64], strides = [1, 1]} : vector<8x192xf32> to vector<8x64xf32>
    %79 = arith.mulf %78, %75 : vector<8x64xf32>
    %80 = arith.addf %77, %79 : vector<8x64xf32>
    %81 = vector.extract_strided_slice %73 {offsets = [0, 128], sizes = [8, 64], strides = [1, 1]} : vector<8x192xf32> to vector<8x64xf32>
    %82 = math.tanh %80 : vector<8x64xf32>
    %83 = arith.mulf %81, %82 : vector<8x64xf32>
    %84 = arith.maximumf %61, %83 : vector<8x64xf32>
    %c3_i32 = arith.constant 3 : i32
    %c8_i32_22 = arith.constant 8 : i32
    %85 = arith.muli %c3_i32, %c8_i32_22 : i32
    %86 = tpu.assume_multiple %85, 8 : i32
    %87 = arith.index_cast %86 : i32 to index
    %c0_23 = arith.constant 0 : index
    %88 = vector.load %arg7[%87, %c0_23] : memref<64x256xf32, #tpu.memory_space<vmem>>, vector<8x256xf32>
    %cst_24 = arith.constant dense<0.000000e+00> : vector<8x256xf32>
    %89 = tpu.matmul %83, %13, %cst_24 {dimension_numbers = #tpu.dot_dimension_numbers<[1], [0], [0], [1], [0, 0, 1, 1], [], []>, precision = #tpu.contract_precision<fp32>} : vector<8x64xf32>, vector<64x256xf32>, vector<8x256xf32> -> vector<8x256xf32>
    %90 = arith.addf %88, %89 : vector<8x256xf32>
    %91 = vector.extract_strided_slice %90 {offsets = [0, 0], sizes = [8, 192], strides = [1, 1]} : vector<8x256xf32> to vector<8x192xf32>
    %92 = arith.negf %91 : vector<8x192xf32>
    %93 = math.exp %92 : vector<8x192xf32>
    %cst_25 = arith.constant 1.000000e+00 : f32
    %94 = vector.broadcast %cst_25 : f32 to vector<8x192xf32>
    %95 = arith.addf %94, %93 : vector<8x192xf32>
    %96 = arith.divf %94, %95 : vector<8x192xf32>
    %97 = vector.extract_strided_slice %90 {offsets = [0, 192], sizes = [8, 64], strides = [1, 1]} : vector<8x256xf32> to vector<8x64xf32>
    %98 = math.tanh %97 : vector<8x64xf32>
    %99 = vector.extract_strided_slice %96 {offsets = [0, 64], sizes = [8, 64], strides = [1, 1]} : vector<8x192xf32> to vector<8x64xf32>
    %100 = arith.mulf %99, %80 : vector<8x64xf32>
    %101 = vector.extract_strided_slice %96 {offsets = [0, 0], sizes = [8, 64], strides = [1, 1]} : vector<8x192xf32> to vector<8x64xf32>
    %102 = arith.mulf %101, %98 : vector<8x64xf32>
    %103 = arith.addf %100, %102 : vector<8x64xf32>
    %104 = vector.extract_strided_slice %96 {offsets = [0, 128], sizes = [8, 64], strides = [1, 1]} : vector<8x192xf32> to vector<8x64xf32>
    %105 = math.tanh %103 : vector<8x64xf32>
    %106 = arith.mulf %104, %105 : vector<8x64xf32>
    %107 = arith.maximumf %84, %106 : vector<8x64xf32>
    %c4_i32 = arith.constant 4 : i32
    %c8_i32_26 = arith.constant 8 : i32
    %108 = arith.muli %c4_i32, %c8_i32_26 : i32
    %109 = tpu.assume_multiple %108, 8 : i32
    %110 = arith.index_cast %109 : i32 to index
    %c0_27 = arith.constant 0 : index
    %111 = vector.load %arg7[%110, %c0_27] : memref<64x256xf32, #tpu.memory_space<vmem>>, vector<8x256xf32>
    %cst_28 = arith.constant dense<0.000000e+00> : vector<8x256xf32>
    %112 = tpu.matmul %106, %13, %cst_28 {dimension_numbers = #tpu.dot_dimension_numbers<[1], [0], [0], [1], [0, 0, 1, 1], [], []>, precision = #tpu.contract_precision<fp32>} : vector<8x64xf32>, vector<64x256xf32>, vector<8x256xf32> -> vector<8x256xf32>
    %113 = arith.addf %111, %112 : vector<8x256xf32>
    %114 = vector.extract_strided_slice %113 {offsets = [0, 0], sizes = [8, 192], strides = [1, 1]} : vector<8x256xf32> to vector<8x192xf32>
    %115 = arith.negf %114 : vector<8x192xf32>
    %116 = math.exp %115 : vector<8x192xf32>
    %cst_29 = arith.constant 1.000000e+00 : f32
    %117 = vector.broadcast %cst_29 : f32 to vector<8x192xf32>
    %118 = arith.addf %117, %116 : vector<8x192xf32>
    %119 = arith.divf %117, %118 : vector<8x192xf32>
    %120 = vector.extract_strided_slice %113 {offsets = [0, 192], sizes = [8, 64], strides = [1, 1]} : vector<8x256xf32> to vector<8x64xf32>
    %121 = math.tanh %120 : vector<8x64xf32>
    %122 = vector.extract_strided_slice %119 {offsets = [0, 64], sizes = [8, 64], strides = [1, 1]} : vector<8x192xf32> to vector<8x64xf32>
    %123 = arith.mulf %122, %103 : vector<8x64xf32>
    %124 = vector.extract_strided_slice %119 {offsets = [0, 0], sizes = [8, 64], strides = [1, 1]} : vector<8x192xf32> to vector<8x64xf32>
    %125 = arith.mulf %124, %121 : vector<8x64xf32>
    %126 = arith.addf %123, %125 : vector<8x64xf32>
    %127 = vector.extract_strided_slice %119 {offsets = [0, 128], sizes = [8, 64], strides = [1, 1]} : vector<8x192xf32> to vector<8x64xf32>
    %128 = math.tanh %126 : vector<8x64xf32>
    %129 = arith.mulf %127, %128 : vector<8x64xf32>
    %130 = arith.maximumf %107, %129 : vector<8x64xf32>
    %c5_i32 = arith.constant 5 : i32
    %c8_i32_30 = arith.constant 8 : i32
    %131 = arith.muli %c5_i32, %c8_i32_30 : i32
    %132 = tpu.assume_multiple %131, 8 : i32
    %133 = arith.index_cast %132 : i32 to index
    %c0_31 = arith.constant 0 : index
    %134 = vector.load %arg7[%133, %c0_31] : memref<64x256xf32, #tpu.memory_space<vmem>>, vector<8x256xf32>
    %cst_32 = arith.constant dense<0.000000e+00> : vector<8x256xf32>
    %135 = tpu.matmul %129, %13, %cst_32 {dimension_numbers = #tpu.dot_dimension_numbers<[1], [0], [0], [1], [0, 0, 1, 1], [], []>, precision = #tpu.contract_precision<fp32>} : vector<8x64xf32>, vector<64x256xf32>, vector<8x256xf32> -> vector<8x256xf32>
    %136 = arith.addf %134, %135 : vector<8x256xf32>
    %137 = vector.extract_strided_slice %136 {offsets = [0, 0], sizes = [8, 192], strides = [1, 1]} : vector<8x256xf32> to vector<8x192xf32>
    %138 = arith.negf %137 : vector<8x192xf32>
    %139 = math.exp %138 : vector<8x192xf32>
    %cst_33 = arith.constant 1.000000e+00 : f32
    %140 = vector.broadcast %cst_33 : f32 to vector<8x192xf32>
    %141 = arith.addf %140, %139 : vector<8x192xf32>
    %142 = arith.divf %140, %141 : vector<8x192xf32>
    %143 = vector.extract_strided_slice %136 {offsets = [0, 192], sizes = [8, 64], strides = [1, 1]} : vector<8x256xf32> to vector<8x64xf32>
    %144 = math.tanh %143 : vector<8x64xf32>
    %145 = vector.extract_strided_slice %142 {offsets = [0, 64], sizes = [8, 64], strides = [1, 1]} : vector<8x192xf32> to vector<8x64xf32>
    %146 = arith.mulf %145, %126 : vector<8x64xf32>
    %147 = vector.extract_strided_slice %142 {offsets = [0, 0], sizes = [8, 64], strides = [1, 1]} : vector<8x192xf32> to vector<8x64xf32>
    %148 = arith.mulf %147, %144 : vector<8x64xf32>
    %149 = arith.addf %146, %148 : vector<8x64xf32>
    %150 = vector.extract_strided_slice %142 {offsets = [0, 128], sizes = [8, 64], strides = [1, 1]} : vector<8x192xf32> to vector<8x64xf32>
    %151 = math.tanh %149 : vector<8x64xf32>
    %152 = arith.mulf %150, %151 : vector<8x64xf32>
    %153 = arith.maximumf %130, %152 : vector<8x64xf32>
    %c6_i32 = arith.constant 6 : i32
    %c8_i32_34 = arith.constant 8 : i32
    %154 = arith.muli %c6_i32, %c8_i32_34 : i32
    %155 = tpu.assume_multiple %154, 8 : i32
    %156 = arith.index_cast %155 : i32 to index
    %c0_35 = arith.constant 0 : index
    %157 = vector.load %arg7[%156, %c0_35] : memref<64x256xf32, #tpu.memory_space<vmem>>, vector<8x256xf32>
    %cst_36 = arith.constant dense<0.000000e+00> : vector<8x256xf32>
    %158 = tpu.matmul %152, %13, %cst_36 {dimension_numbers = #tpu.dot_dimension_numbers<[1], [0], [0], [1], [0, 0, 1, 1], [], []>, precision = #tpu.contract_precision<fp32>} : vector<8x64xf32>, vector<64x256xf32>, vector<8x256xf32> -> vector<8x256xf32>
    %159 = arith.addf %157, %158 : vector<8x256xf32>
    %160 = vector.extract_strided_slice %159 {offsets = [0, 0], sizes = [8, 192], strides = [1, 1]} : vector<8x256xf32> to vector<8x192xf32>
    %161 = arith.negf %160 : vector<8x192xf32>
    %162 = math.exp %161 : vector<8x192xf32>
    %cst_37 = arith.constant 1.000000e+00 : f32
    %163 = vector.broadcast %cst_37 : f32 to vector<8x192xf32>
    %164 = arith.addf %163, %162 : vector<8x192xf32>
    %165 = arith.divf %163, %164 : vector<8x192xf32>
    %166 = vector.extract_strided_slice %159 {offsets = [0, 192], sizes = [8, 64], strides = [1, 1]} : vector<8x256xf32> to vector<8x64xf32>
    %167 = math.tanh %166 : vector<8x64xf32>
    %168 = vector.extract_strided_slice %165 {offsets = [0, 64], sizes = [8, 64], strides = [1, 1]} : vector<8x192xf32> to vector<8x64xf32>
    %169 = arith.mulf %168, %149 : vector<8x64xf32>
    %170 = vector.extract_strided_slice %165 {offsets = [0, 0], sizes = [8, 64], strides = [1, 1]} : vector<8x192xf32> to vector<8x64xf32>
    %171 = arith.mulf %170, %167 : vector<8x64xf32>
    %172 = arith.addf %169, %171 : vector<8x64xf32>
    %173 = vector.extract_strided_slice %165 {offsets = [0, 128], sizes = [8, 64], strides = [1, 1]} : vector<8x192xf32> to vector<8x64xf32>
    %174 = math.tanh %172 : vector<8x64xf32>
    %175 = arith.mulf %173, %174 : vector<8x64xf32>
    %176 = arith.maximumf %153, %175 : vector<8x64xf32>
    %c7_i32 = arith.constant 7 : i32
    %c8_i32_38 = arith.constant 8 : i32
    %177 = arith.muli %c7_i32, %c8_i32_38 : i32
    %178 = tpu.assume_multiple %177, 8 : i32
    %179 = arith.index_cast %178 : i32 to index
    %c0_39 = arith.constant 0 : index
    %180 = vector.load %arg7[%179, %c0_39] : memref<64x256xf32, #tpu.memory_space<vmem>>, vector<8x256xf32>
    %cst_40 = arith.constant dense<0.000000e+00> : vector<8x256xf32>
    %181 = tpu.matmul %175, %13, %cst_40 {dimension_numbers = #tpu.dot_dimension_numbers<[1], [0], [0], [1], [0, 0, 1, 1], [], []>, precision = #tpu.contract_precision<fp32>} : vector<8x64xf32>, vector<64x256xf32>, vector<8x256xf32> -> vector<8x256xf32>
    %182 = arith.addf %180, %181 : vector<8x256xf32>
    %183 = vector.extract_strided_slice %182 {offsets = [0, 0], sizes = [8, 192], strides = [1, 1]} : vector<8x256xf32> to vector<8x192xf32>
    %184 = arith.negf %183 : vector<8x192xf32>
    %185 = math.exp %184 : vector<8x192xf32>
    %cst_41 = arith.constant 1.000000e+00 : f32
    %186 = vector.broadcast %cst_41 : f32 to vector<8x192xf32>
    %187 = arith.addf %186, %185 : vector<8x192xf32>
    %188 = arith.divf %186, %187 : vector<8x192xf32>
    %189 = vector.extract_strided_slice %182 {offsets = [0, 192], sizes = [8, 64], strides = [1, 1]} : vector<8x256xf32> to vector<8x64xf32>
    %190 = math.tanh %189 : vector<8x64xf32>
    %191 = vector.extract_strided_slice %188 {offsets = [0, 64], sizes = [8, 64], strides = [1, 1]} : vector<8x192xf32> to vector<8x64xf32>
    %192 = arith.mulf %191, %172 : vector<8x64xf32>
    %193 = vector.extract_strided_slice %188 {offsets = [0, 0], sizes = [8, 64], strides = [1, 1]} : vector<8x192xf32> to vector<8x64xf32>
    %194 = arith.mulf %193, %190 : vector<8x64xf32>
    %195 = arith.addf %192, %194 : vector<8x64xf32>
    %196 = vector.extract_strided_slice %188 {offsets = [0, 128], sizes = [8, 64], strides = [1, 1]} : vector<8x192xf32> to vector<8x64xf32>
    %197 = math.tanh %195 : vector<8x64xf32>
    %198 = arith.mulf %196, %197 : vector<8x64xf32>
    %199 = arith.maximumf %176, %198 : vector<8x64xf32>
    %c8_i32_42 = arith.constant 8 : i32
    %c0_43 = arith.constant 0 : index
    %c0_44 = arith.constant 0 : index
    %200 = vector.load %arg4[%c0_43, %c0_44] : memref<64x1xf32, #tpu.memory_space<vmem>>, vector<64x1xf32>
    %cst_45 = arith.constant dense<0.000000e+00> : vector<8x1xf32>
    %201 = tpu.matmul %199, %200, %cst_45 {dimension_numbers = #tpu.dot_dimension_numbers<[1], [0], [0], [1], [0, 0, 1, 1], [], []>, precision = #tpu.contract_precision<fp32>} : vector<8x64xf32>, vector<64x1xf32>, vector<8x1xf32> -> vector<8x1xf32>
    %c0_46 = arith.constant 0 : index
    %c0_47 = arith.constant 0 : index
    %202 = vector.load %arg5[%c0_46, %c0_47] : memref<1x1xf32, #tpu.memory_space<vmem>>, vector<1x1xf32>
    %203 = vector.broadcast %202 : vector<1x1xf32> to vector<8x1xf32>
    %204 = arith.addf %201, %203 : vector<8x1xf32>
    %c0_48 = arith.constant 0 : index
    %c0_49 = arith.constant 0 : index
    %205 = vector.load %arg6[%c0_48, %c0_49] : memref<8x1xf32, #tpu.memory_space<vmem>>, vector<8x1xf32>
    tpu.vector_store %arg6[%c0_48, %c0_49], %204 {strides = array<i32>} : memref<8x1xf32, #tpu.memory_space<vmem>>, vector<8x1xf32>,
    return
  }
}

</mosaic_0001>

<llo_original>
// kernel: tpu_custom_call.1
$region0: #{tpu_custom_call.1}
  #allocation0 [shape = 'u32[]', space=smem, size = 0x4, offset = 0x4, fixed_abs, tag = 'smem constant byte address 0x4 - core index']
  #allocation1 [shape = 'u32[144,128]{1,0:T(1,128)}', space=vmem, size = 0x12000, scoped, tag = 'internal scratch']
  #allocation2 [shape = 'f32[64,256]{1,0:T(8,128)}', space=vmem, size = 0x10000, scoped, tag = 'scratch operand']
  #allocation3 [shape = 'f32[1,1]{1,0:T(1,128)S(1)}', space=vmem, size = 0x200, scoped, tag = 'scoped memory for tpu_custom_call.1']
  %s0 = inlined_call_operand.vmem [shape: s32[64,1], index: 0, kind: input, shape index: {}]
  %s1 = inlined_call_operand.vmem [shape: s32[64,1], index: 1, kind: input, shape index: {}]
  %s2 = inlined_call_operand.vmem [shape: f32[64,256], index: 2, kind: input, shape index: {}]
  %s3 = inlined_call_operand.hbm [shape: f32[64,256], index: 3, kind: input, shape index: {}]
  %s4 = inlined_call_operand.vmem [shape: f32[64,1], index: 4, kind: input, shape index: {}]
  %s5 = inlined_call_operand.<no memory space> [shape: f32[1,1], index: 5, kind: input, shape index: {}]
  %s6 = inlined_call_operand.vmem [shape: f32[8,1], index: 6, kind: output, shape index: {}]
  %s7 = sld [smem:[#allocation0]]
  $region38: #{tpu_custom_call.1} parent=0
    _
  %s9 = ssub.s32 1, %s7
  %s10 = scalar_select 0, %s9, %s7
  %v11 = vstv %s5
  %12 = vst [vmem:[#allocation3] sm:$0x1] %v11
  $region1: #{tpu_custom_call.1} parent=0
    #allocation4 [shape = 'u8[65536]{0}', space=vmem, size = 0x10000, scoped, tag = 'input window, operand 3, single buffered']
    #allocation5 [shape = 's32[1]{0}', space=sflag, size = 0x4, scoped, tag = 'scoped memory for tpu_custom_call.1']
    %13 = vsyncpa [#allocation5], 0
    // Predicated region
    $region2: #{tpu_custom_call.1} parent=1 // pred_check
      _
    $region3: #{tpu_custom_call.1} parent=1 // pred_check_branch
      %15 = sbr.rel (0) target = $region5
    $region4: #{tpu_custom_call.1} parent=1 // pred_region
      _
    $region5: #{tpu_custom_call.1} parent=1 // pred_fallthru
      _
    // Predicated region
    $region6: #{tpu_custom_call.1} parent=1 // pred_check
      _
    $region7: #{tpu_custom_call.1} parent=1 // pred_check_branch
      %17 = sbr.rel (0) target = $region9
    $region8: #{tpu_custom_call.1} parent=1 // pred_region
      _
    $region9: #{tpu_custom_call.1} parent=1 // pred_fallthru
      _
    // Predicated region
    $region10: #{tpu_custom_call.1} parent=1 // pred_check
      _
    $region11: #{tpu_custom_call.1} parent=1 // pred_check_branch
      %19 = sbr.rel (0) target = $region13
    $region12: #{tpu_custom_call.1} parent=1 // pred_region
      _
    $region13: #{tpu_custom_call.1} parent=1 // pred_fallthru
      _
    // Predicated region
    $region14: #{tpu_custom_call.1} parent=1 // pred_check
      _
    $region15: #{tpu_custom_call.1} parent=1 // pred_check_branch
      %21 = sbr.rel (0) target = $region17
    $region16: #{tpu_custom_call.1} parent=1 // pred_region
      %s23 = ssub.s32 2048, 2048
      %24 = vsyncadd [#allocation5], %s23
      %s25 = sshll.u32 [#allocation4], 4
      %s26 = int_to_ptr.vmem [resolvable:$true] %s25
      %31 = dma.hbm_to_vmem [thread:$0]  %s3, 2048, %s26, [#allocation5], 256, 256, 16
    $region17: #{tpu_custom_call.1} parent=1 // pred_fallthru
      _
    // Predicated region
    $region18: #{tpu_custom_call.1} parent=1 // pred_check
      _
    $region19: #{tpu_custom_call.1} parent=1 // pred_check_branch
      %33 = sbr.rel (0) target = $region21
    $region20: #{tpu_custom_call.1} parent=1 // pred_region
      _
    $region21: #{tpu_custom_call.1} parent=1 // pred_fallthru
      _
    // Predicated region
    $region22: #{tpu_custom_call.1} parent=1 // pred_check
      _
    $region23: #{tpu_custom_call.1} parent=1 // pred_check_branch
      %35 = sbr.rel (0) target = $region25
    $region24: #{tpu_custom_call.1} parent=1 // pred_region
      _
    $region25: #{tpu_custom_call.1} parent=1 // pred_fallthru
      _
    // Predicated region
    $region26: #{tpu_custom_call.1} parent=1 // pred_check
      _
    $region27: #{tpu_custom_call.1} parent=1 // pred_check_branch
      %37 = sbr.rel (0) target = $region29
    $region28: #{tpu_custom_call.1} parent=1 // pred_region
      %38 = dma.done [#allocation5], 2048
    $region29: #{tpu_custom_call.1} parent=1 // pred_fallthru
      _
    %v39 = vlaneseq
    %v40 = vand.u32 %v39, 127
    %v41 = vld [vmem:[%s0] sm:$0xff]
    %v42 = vld [vmem:[%s0 + $0x8] sm:$0xff]
    %v43 = vld [vmem:[%s0 + $0x10] sm:$0xff]
    %v44 = vld [vmem:[%s0 + $0x18] sm:$0xff]
    %v45 = vld [vmem:[%s0 + $0x20] sm:$0xff]
    %v46 = vld [vmem:[%s0 + $0x28] sm:$0xff]
    %v47 = vld [vmem:[%s0 + $0x30] sm:$0xff]
    %v48 = vld [vmem:[%s0 + $0x38] sm:$0xff]
    %49 = vset.pattern.permute.xlu0 0
    %50 = vperm.xlu0 %49, %v41
    %v51 = vpop.permute.xlu0 %50
    %52 = vset.pattern.permute.xlu0 0
    %53 = vperm.xlu0 %52, %v42
    %v54 = vpop.permute.xlu0 %53
    %55 = vset.pattern.permute.xlu0 0
    %56 = vperm.xlu0 %55, %v43
    %v57 = vpop.permute.xlu0 %56
    %58 = vset.pattern.permute.xlu0 0
    %59 = vperm.xlu0 %58, %v44
    %v60 = vpop.permute.xlu0 %59
    %61 = vset.pattern.permute.xlu0 0
    %62 = vperm.xlu0 %61, %v45
    %v63 = vpop.permute.xlu0 %62
    %64 = vset.pattern.permute.xlu0 0
    %65 = vperm.xlu0 %64, %v46
    %v66 = vpop.permute.xlu0 %65
    %67 = vset.pattern.permute.xlu0 0
    %68 = vperm.xlu0 %67, %v47
    %v69 = vpop.permute.xlu0 %68
    %70 = vset.pattern.permute.xlu0 0
    %71 = vperm.xlu0 %70, %v48
    %v72 = vpop.permute.xlu0 %71
    %vm73 = vcmp.eq.s32.totalorder %v51, %v40
    %vm74 = vcmp.eq.s32.totalorder %v54, %v40
    %vm75 = vcmp.eq.s32.totalorder %v57, %v40
    %vm76 = vcmp.eq.s32.totalorder %v60, %v40
    %vm77 = vcmp.eq.s32.totalorder %v63, %v40
    %vm78 = vcmp.eq.s32.totalorder %v66, %v40
    %vm79 = vcmp.eq.s32.totalorder %v69, %v40
    %vm80 = vcmp.eq.s32.totalorder %v72, %v40
    %v81 = vld [vmem:[%s1] sm:$0xff]
    %v82 = vld [vmem:[%s1 + $0x8] sm:$0xff]
    %v83 = vld [vmem:[%s1 + $0x10] sm:$0xff]
    %v84 = vld [vmem:[%s1 + $0x18] sm:$0xff]
    %v85 = vld [vmem:[%s1 + $0x20] sm:$0xff]
    %v86 = vld [vmem:[%s1 + $0x28] sm:$0xff]
    %v87 = vld [vmem:[%s1 + $0x30] sm:$0xff]
    %v88 = vld [vmem:[%s1 + $0x38] sm:$0xff]
    %89 = vset.pattern.permute.xlu0 0
    %90 = vperm.xlu0 %89, %v81
    %v91 = vpop.permute.xlu0 %90
    %92 = vset.pattern.permute.xlu0 0
    %93 = vperm.xlu0 %92, %v82
    %v94 = vpop.permute.xlu0 %93
    %95 = vset.pattern.permute.xlu0 0
    %96 = vperm.xlu0 %95, %v83
    %v97 = vpop.permute.xlu0 %96
    %98 = vset.pattern.permute.xlu0 0
    %99 = vperm.xlu0 %98, %v84
    %v100 = vpop.permute.xlu0 %99
    %101 = vset.pattern.permute.xlu0 0
    %102 = vperm.xlu0 %101, %v85
    %v103 = vpop.permute.xlu0 %102
    %104 = vset.pattern.permute.xlu0 0
    %105 = vperm.xlu0 %104, %v86
    %v106 = vpop.permute.xlu0 %105
    %107 = vset.pattern.permute.xlu0 0
    %108 = vperm.xlu0 %107, %v87
    %v109 = vpop.permute.xlu0 %108
    %110 = vset.pattern.permute.xlu0 0
    %111 = vperm.xlu0 %110, %v88
    %v112 = vpop.permute.xlu0 %111
    %vm113 = vcmp.eq.s32.totalorder %v91, %v40
    %vm114 = vcmp.eq.s32.totalorder %v94, %v40
    %vm115 = vcmp.eq.s32.totalorder %v97, %v40
    %vm116 = vcmp.eq.s32.totalorder %v100, %v40
    %vm117 = vcmp.eq.s32.totalorder %v103, %v40
    %vm118 = vcmp.eq.s32.totalorder %v106, %v40
    %vm119 = vcmp.eq.s32.totalorder %v109, %v40
    %vm120 = vcmp.eq.s32.totalorder %v112, %v40
    %vm121 = vmor %vm73, %vm113
    %vm122 = vmor %vm74, %vm114
    %vm123 = vmor %vm75, %vm115
    %vm124 = vmor %vm76, %vm116
    %vm125 = vmor %vm77, %vm117
    %vm126 = vmor %vm78, %vm118
    %vm127 = vmor %vm79, %vm119
    %vm128 = vmor %vm80, %vm120
    %v129 = vsel %vm121, 1, 0
    %v130 = vsel %vm122, 1, 0
    %v131 = vsel %vm123, 1, 0
    %v132 = vsel %vm124, 1, 0
    %v133 = vsel %vm125, 1, 0
    %v134 = vsel %vm126, 1, 0
    %v135 = vsel %vm127, 1, 0
    %v136 = vsel %vm128, 1, 0
    %v137 = vcvt.s32.f32 %v129
    %v138 = vcvt.s32.f32 %v130
    %v139 = vcvt.s32.f32 %v131
    %v140 = vcvt.s32.f32 %v132
    %v141 = vcvt.s32.f32 %v133
    %v142 = vcvt.s32.f32 %v134
    %v143 = vcvt.s32.f32 %v135
    %v144 = vcvt.s32.f32 %v136
    %v145 = vld [vmem:[%s2] sm:$0xff]
    %v146 = vld [vmem:[%s2 + $0x8] sm:$0xff]
    %v147 = vld [vmem:[%s2 + $0x10] sm:$0xff]
    %v148 = vld [vmem:[%s2 + $0x18] sm:$0xff]
    %v149 = vld [vmem:[%s2 + $0x20] sm:$0xff]
    %v150 = vld [vmem:[%s2 + $0x28] sm:$0xff]
    %v151 = vld [vmem:[%s2 + $0x30] sm:$0xff]
    %v152 = vld [vmem:[%s2 + $0x38] sm:$0xff]
    %v153 = vld [vmem:[%s2 + $0x40] sm:$0xff]
    %v154 = vld [vmem:[%s2 + $0x48] sm:$0xff]
    %v155 = vld [vmem:[%s2 + $0x50] sm:$0xff]
    %v156 = vld [vmem:[%s2 + $0x58] sm:$0xff]
    %v157 = vld [vmem:[%s2 + $0x60] sm:$0xff]
    %v158 = vld [vmem:[%s2 + $0x68] sm:$0xff]
    %v159 = vld [vmem:[%s2 + $0x70] sm:$0xff]
    %v160 = vld [vmem:[%s2 + $0x78] sm:$0xff]
    %vm161 = vcmask 523264
    %v163 = vsel %vm161, %v137, 0
    %v166 = vsel %vm161, %v138, 0
    %v169 = vsel %vm161, %v139, 0
    %v172 = vsel %vm161, %v140, 0
    %v175 = vsel %vm161, %v141, 0
    %v178 = vsel %vm161, %v142, 0
    %v181 = vsel %vm161, %v143, 0
    %v184 = vsel %vm161, %v144, 0
    %186 = vmatprep.subr.mxu0 0.0
    %187 = vmatpush1.msra.mxu0 0.0
    %188 = vmatprep.subr.mxu0 0.0
    %189 = vmatpush1.msra.mxu0 0.0
    %190 = vmatprep.subr.mxu0 0.0
    %191 = vmatpush1.msra.mxu0 0.0
    %192 = vmatprep.subr.mxu0 0.0
    %193 = vmatpush1.msra.mxu0 0.0
    %194 = vmatprep.subr.mxu0 0.0
    %195 = vmatpush1.msra.mxu0 0.0
    %196 = vmatprep.subr.mxu0 0.0
    %197 = vmatpush1.msra.mxu0 0.0
    %198 = vmatprep.subr.mxu0 0.0
    %199 = vmatpush1.msra.mxu0 0.0
    %200 = vmatprep.subr.mxu0 0.0
    %201 = vmatpush1.msra.mxu0 0.0
    %v202 = vand.u32 %v160, 4294901760
    %203 = vmatprep.subr.mxu0 %v202
    %v204 = vand.u32 %v159, 4294901760
    %205 = vmatpush1.msra.mxu0 %v204
    %v206 = vand.u32 %v158, 4294901760
    %207 = vmatprep.subr.mxu0 %v206
    %v208 = vand.u32 %v157, 4294901760
    %209 = vmatpush1.msra.mxu0 %v208
    %v210 = vand.u32 %v156, 4294901760
    %211 = vmatprep.subr.mxu0 %v210
    %v212 = vand.u32 %v155, 4294901760
    %213 = vmatpush1.msra.mxu0 %v212
    %v214 = vand.u32 %v154, 4294901760
    %215 = vmatprep.subr.mxu0 %v214
    %v216 = vand.u32 %v153, 4294901760
    %217 = vmatpush1.msra.mxu0 %v216
    %v218 = vand.u32 %v152, 4294901760
    %219 = vmatprep.subr.mxu0 %v218
    %v220 = vand.u32 %v151, 4294901760
    %221 = vmatpush1.msra.mxu0 %v220
    %v222 = vand.u32 %v150, 4294901760
    %223 = vmatprep.subr.mxu0 %v222
    %v224 = vand.u32 %v149, 4294901760
    %225 = vmatpush1.msra.mxu0 %v224
    %v226 = vand.u32 %v148, 4294901760
    %227 = vmatprep.subr.mxu0 %v226
    %v228 = vand.u32 %v147, 4294901760
    %229 = vmatpush1.msra.mxu0 %v228
    %v230 = vand.u32 %v146, 4294901760
    %231 = vmatprep.subr.mxu0 %v230
    %v232 = vand.u32 %v145, 4294901760
    %233 = vmatpush1.msra.mxu0 %v232
    %234 = vmatprep.subr.mxu0 0.0
    %235 = vmatpush2.msra.mxu0 0.0
    %236 = vmatprep.subr.mxu0 0.0
    %237 = vmatpush2.msra.mxu0 0.0
    %238 = vmatprep.subr.mxu0 0.0
    %239 = vmatpush2.msra.mxu0 0.0
    %240 = vmatprep.subr.mxu0 0.0
    %241 = vmatpush2.msra.mxu0 0.0
    %242 = vmatprep.subr.mxu0 0.0
    %243 = vmatpush2.msra.mxu0 0.0
    %244 = vmatprep.subr.mxu0 0.0
    %245 = vmatpush2.msra.mxu0 0.0
    %246 = vmatprep.subr.mxu0 0.0
    %247 = vmatpush2.msra.mxu0 0.0
    %248 = vmatprep.subr.mxu0 0.0
    %249 = vmatpush2.msra.mxu0 0.0
    %250 = vmatprep.subr.mxu0 0.0
    %251 = vmatpush2.msra.mxu0 0.0
    %252 = vmatprep.subr.mxu0 0.0
    %253 = vmatpush2.msra.mxu0 0.0
    %254 = vmatprep.subr.mxu0 0.0
    %255 = vmatpush2.msra.mxu0 0.0
    %256 = vmatprep.subr.mxu0 0.0
    %257 = vmatpush2.msra.mxu0 0.0
    %258 = vmatprep.subr.mxu0 0.0
    %259 = vmatpush2.msra.mxu0 0.0
    %260 = vmatprep.subr.mxu0 0.0
    %261 = vmatpush2.msra.mxu0 0.0
    %262 = vmatprep.subr.mxu0 0.0
    %263 = vmatpush2.msra.mxu0 0.0
    %264 = vmatprep.subr.mxu0 0.0
    %265 = vmatpush2.msra.mxu0 0.0
    %266 = vmatprep.mubr.f32.mxu0 0.0
    %v267 = vand.u32 %v163, 4294901760
    %v268 = vsub.f32 %v163, %v267
    %v269 = vand.u32 %v268, 4294901760
    %v270 = vsub.f32 %v268, %v269
    %v271 = vand.u32 %v270, 4294901760
    %272 = vmatmul.mubr.f32.gmra.mxu0 %v271
    %v273 = vpop.f32.mrf.mxu0
    %v274 = vadd.f32 0.0, %v273
    %v275 = vpop.f32.mrf.mxu0
    %v276 = vadd.f32 0.0, %v275
    %277 = vmatprep.mubr.f32.mxu0 0.0
    %v278 = vand.u32 %v166, 4294901760
    %v279 = vsub.f32 %v166, %v278
    %v280 = vand.u32 %v279, 4294901760
    %v281 = vsub.f32 %v279, %v280
    %v282 = vand.u32 %v281, 4294901760
    %283 = vmatmul.mubr.f32.gmra.mxu0 %v282
    %v284 = vpop.f32.mrf.mxu0
    %v285 = vadd.f32 0.0, %v284
    %v286 = vpop.f32.mrf.mxu0
    %v287 = vadd.f32 0.0, %v286
    %288 = vmatprep.mubr.f32.mxu0 0.0
    %v289 = vand.u32 %v169, 4294901760
    %v290 = vsub.f32 %v169, %v289
    %v291 = vand.u32 %v290, 4294901760
    %v292 = vsub.f32 %v290, %v291
    %v293 = vand.u32 %v292, 4294901760
    %294 = vmatmul.mubr.f32.gmra.mxu0 %v293
    %v295 = vpop.f32.mrf.mxu0
    %v296 = vadd.f32 0.0, %v295
    %v297 = vpop.f32.mrf.mxu0
    %v298 = vadd.f32 0.0, %v297
    %299 = vmatprep.mubr.f32.mxu0 0.0
    %v300 = vand.u32 %v172, 4294901760
    %v301 = vsub.f32 %v172, %v300
    %v302 = vand.u32 %v301, 4294901760
    %v303 = vsub.f32 %v301, %v302
    %v304 = vand.u32 %v303, 4294901760
    %305 = vmatmul.mubr.f32.gmra.mxu0 %v304
    %v306 = vpop.f32.mrf.mxu0
    %v307 = vadd.f32 0.0, %v306
    %v308 = vpop.f32.mrf.mxu0
    %v309 = vadd.f32 0.0, %v308
    %310 = vmatprep.mubr.f32.mxu0 0.0
    %v311 = vand.u32 %v175, 4294901760
    %v312 = vsub.f32 %v175, %v311
    %v313 = vand.u32 %v312, 4294901760
    %v314 = vsub.f32 %v312, %v313
    %v315 = vand.u32 %v314, 4294901760
    %316 = vmatmul.mubr.f32.gmra.mxu0 %v315
    %v317 = vpop.f32.mrf.mxu0
    %v318 = vadd.f32 0.0, %v317
    %v319 = vpop.f32.mrf.mxu0
    %v320 = vadd.f32 0.0, %v319
    %321 = vmatprep.mubr.f32.mxu0 0.0
    %v322 = vand.u32 %v178, 4294901760
    %v323 = vsub.f32 %v178, %v322
    %v324 = vand.u32 %v323, 4294901760
    %v325 = vsub.f32 %v323, %v324
    %v326 = vand.u32 %v325, 4294901760
    %327 = vmatmul.mubr.f32.gmra.mxu0 %v326
    %v328 = vpop.f32.mrf.mxu0
    %v329 = vadd.f32 0.0, %v328
    %v330 = vpop.f32.mrf.mxu0
    %v331 = vadd.f32 0.0, %v330
    %332 = vmatprep.mubr.f32.mxu0 0.0
    %v333 = vand.u32 %v181, 4294901760
    %v334 = vsub.f32 %v181, %v333
    %v335 = vand.u32 %v334, 4294901760
    %v336 = vsub.f32 %v334, %v335
    %v337 = vand.u32 %v336, 4294901760
    %338 = vmatmul.mubr.f32.gmra.mxu0 %v337
    %v339 = vpop.f32.mrf.mxu0
    %v340 = vadd.f32 0.0, %v339
    %v341 = vpop.f32.mrf.mxu0
    %v342 = vadd.f32 0.0, %v341
    %343 = vmatprep.mubr.f32.mxu0 0.0
    %v344 = vand.u32 %v184, 4294901760
    %v345 = vsub.f32 %v184, %v344
    %v346 = vand.u32 %v345, 4294901760
    %v347 = vsub.f32 %v345, %v346
    %v348 = vand.u32 %v347, 4294901760
    %349 = vmatmul.mubr.f32.gmra.mxu0 %v348
    %v350 = vpop.f32.mrf.mxu0
    %v351 = vadd.f32 0.0, %v350
    %v352 = vpop.f32.mrf.mxu0
    %v353 = vadd.f32 0.0, %v352
    %354 = vdwg.mxu0
    %355 = vmatprep.subr.mxu0 0.0
    %356 = vmatpush1.msra.mxu0 0.0
    %357 = vmatprep.subr.mxu0 0.0
    %358 = vmatpush1.msra.mxu0 0.0
    %359 = vmatprep.subr.mxu0 0.0
    %360 = vmatpush1.msra.mxu0 0.0
    %361 = vmatprep.subr.mxu0 0.0
    %362 = vmatpush1.msra.mxu0 0.0
    %363 = vmatprep.subr.mxu0 0.0
    %364 = vmatpush1.msra.mxu0 0.0
    %365 = vmatprep.subr.mxu0 0.0
    %366 = vmatpush1.msra.mxu0 0.0
    %367 = vmatprep.subr.mxu0 0.0
    %368 = vmatpush1.msra.mxu0 0.0
    %369 = vmatprep.subr.mxu0 0.0
    %370 = vmatpush1.msra.mxu0 0.0
    %v371 = vand.u32 %v160, 4294901760
    %v372 = vsub.f32 %v160, %v371
    %v373 = vand.u32 %v372, 4294901760
    %v374 = vsub.f32 %v372, %v373
    %v375 = vand.u32 %v374, 4294901760
    %376 = vmatprep.subr.mxu0 %v375
    %v377 = vand.u32 %v159, 4294901760
    %v378 = vsub.f32 %v159, %v377
    %v379 = vand.u32 %v378, 4294901760
    %v380 = vsub.f32 %v378, %v379
    %v381 = vand.u32 %v380, 4294901760
    %382 = vmatpush1.msra.mxu0 %v381
    %v383 = vand.u32 %v158, 4294901760
    %v384 = vsub.f32 %v158, %v383
    %v385 = vand.u32 %v384, 4294901760
    %v386 = vsub.f32 %v384, %v385
    %v387 = vand.u32 %v386, 4294901760
    %388 = vmatprep.subr.mxu0 %v387
    %v389 = vand.u32 %v157, 4294901760
    %v390 = vsub.f32 %v157, %v389
    %v391 = vand.u32 %v390, 4294901760
    %v392 = vsub.f32 %v390, %v391
    %v393 = vand.u32 %v392, 4294901760
    %394 = vmatpush1.msra.mxu0 %v393
    %v395 = vand.u32 %v156, 4294901760
    %v396 = vsub.f32 %v156, %v395
    %v397 = vand.u32 %v396, 4294901760
    %v398 = vsub.f32 %v396, %v397
    %v399 = vand.u32 %v398, 4294901760
    %400 = vmatprep.subr.mxu0 %v399
    %v401 = vand.u32 %v155, 4294901760
    %v402 = vsub.f32 %v155, %v401
    %v403 = vand.u32 %v402, 4294901760
    %v404 = vsub.f32 %v402, %v403
    %v405 = vand.u32 %v404, 4294901760
    %406 = vmatpush1.msra.mxu0 %v405
    %v407 = vand.u32 %v154, 4294901760
    %v408 = vsub.f32 %v154, %v407
    %v409 = vand.u32 %v408, 4294901760
    %v410 = vsub.f32 %v408, %v409
    %v411 = vand.u32 %v410, 4294901760
    %412 = vmatprep.subr.mxu0 %v411
    %v413 = vand.u32 %v153, 4294901760
    %v414 = vsub.f32 %v153, %v413
    %v415 = vand.u32 %v414, 4294901760
    %v416 = vsub.f32 %v414, %v415
    %v417 = vand.u32 %v416, 4294901760
    %418 = vmatpush1.msra.mxu0 %v417
    %v419 = vand.u32 %v152, 4294901760
    %v420 = vsub.f32 %v152, %v419
    %v421 = vand.u32 %v420, 4294901760
    %v422 = vsub.f32 %v420, %v421
    %v423 = vand.u32 %v422, 4294901760
    %424 = vmatprep.subr.mxu0 %v423
    %v425 = vand.u32 %v151, 4294901760
    %v426 = vsub.f32 %v151, %v425
    %v427 = vand.u32 %v426, 4294901760
    %v428 = vsub.f32 %v426, %v427
    %v429 = vand.u32 %v428, 4294901760
    %430 = vmatpush1.msra.mxu0 %v429
    %v431 = vand.u32 %v150, 4294901760
    %v432 = vsub.f32 %v150, %v431
    %v433 = vand.u32 %v432, 4294901760
    %v434 = vsub.f32 %v432, %v433
    %v435 = vand.u32 %v434, 4294901760
    %436 = vmatprep.subr.mxu0 %v435
    %v437 = vand.u32 %v149, 4294901760
    %v438 = vsub.f32 %v149, %v437
    %v439 = vand.u32 %v438, 4294901760
    %v440 = vsub.f32 %v438, %v439
    %v441 = vand.u32 %v440, 4294901760
    %442 = vmatpush1.msra.mxu0 %v441
    %v443 = vand.u32 %v148, 4294901760
    %v444 = vsub.f32 %v148, %v443
    %v445 = vand.u32 %v444, 4294901760
    %v446 = vsub.f32 %v444, %v445
    %v447 = vand.u32 %v446, 4294901760
    %448 = vmatprep.subr.mxu0 %v447
    %v449 = vand.u32 %v147, 4294901760
    %v450 = vsub.f32 %v147, %v449
    %v451 = vand.u32 %v450, 4294901760
    %v452 = vsub.f32 %v450, %v451
    %v453 = vand.u32 %v452, 4294901760
    %454 = vmatpush1.msra.mxu0 %v453
    %v455 = vand.u32 %v146, 4294901760
    %v456 = vsub.f32 %v146, %v455
    %v457 = vand.u32 %v456, 4294901760
    %v458 = vsub.f32 %v456, %v457
    %v459 = vand.u32 %v458, 4294901760
    %460 = vmatprep.subr.mxu0 %v459
    %v461 = vand.u32 %v145, 4294901760
    %v462 = vsub.f32 %v145, %v461
    %v463 = vand.u32 %v462, 4294901760
    %v464 = vsub.f32 %v462, %v463
    %v465 = vand.u32 %v464, 4294901760
    %466 = vmatpush1.msra.mxu0 %v465
    %467 = vmatprep.subr.mxu0 0.0
    %468 = vmatpush2.msra.mxu0 0.0
    %469 = vmatprep.subr.mxu0 0.0
    %470 = vmatpush2.msra.mxu0 0.0
    %471 = vmatprep.subr.mxu0 0.0
    %472 = vmatpush2.msra.mxu0 0.0
    %473 = vmatprep.subr.mxu0 0.0
    %474 = vmatpush2.msra.mxu0 0.0
    %475 = vmatprep.subr.mxu0 0.0
    %476 = vmatpush2.msra.mxu0 0.0
    %477 = vmatprep.subr.mxu0 0.0
    %478 = vmatpush2.msra.mxu0 0.0
    %479 = vmatprep.subr.mxu0 0.0
    %480 = vmatpush2.msra.mxu0 0.0
    %481 = vmatprep.subr.mxu0 0.0
    %482 = vmatpush2.msra.mxu0 0.0
    %483 = vmatprep.subr.mxu0 0.0
    %484 = vmatpush2.msra.mxu0 0.0
    %485 = vmatprep.subr.mxu0 0.0
    %486 = vmatpush2.msra.mxu0 0.0
    %487 = vmatprep.subr.mxu0 0.0
    %488 = vmatpush2.msra.mxu0 0.0
    %489 = vmatprep.subr.mxu0 0.0
    %490 = vmatpush2.msra.mxu0 0.0
    %491 = vmatprep.subr.mxu0 0.0
    %492 = vmatpush2.msra.mxu0 0.0
    %493 = vmatprep.subr.mxu0 0.0
    %494 = vmatpush2.msra.mxu0 0.0
    %495 = vmatprep.subr.mxu0 0.0
    %496 = vmatpush2.msra.mxu0 0.0
    %497 = vmatprep.subr.mxu0 0.0
    %498 = vmatpush2.msra.mxu0 0.0
    %499 = vmatprep.mubr.f32.mxu0 0.0
    %v500 = vand.u32 %v163, 4294901760
    %501 = vmatmul.mubr.f32.gmra.mxu0 %v500
    %v502 = vpop.f32.mrf.mxu0
    %v503 = vadd.f32 %v274, %v502
    %v504 = vpop.f32.mrf.mxu0
    %v505 = vadd.f32 %v276, %v504
    %506 = vmatprep.mubr.f32.mxu0 0.0
    %v507 = vand.u32 %v166, 4294901760
    %508 = vmatmul.mubr.f32.gmra.mxu0 %v507
    %v509 = vpop.f32.mrf.mxu0
    %v510 = vadd.f32 %v285, %v509
    %v511 = vpop.f32.mrf.mxu0
    %v512 = vadd.f32 %v287, %v511
    %513 = vmatprep.mubr.f32.mxu0 0.0
    %v514 = vand.u32 %v169, 4294901760
    %515 = vmatmul.mubr.f32.gmra.mxu0 %v514
    %v516 = vpop.f32.mrf.mxu0
    %v517 = vadd.f32 %v296, %v516
    %v518 = vpop.f32.mrf.mxu0
    %v519 = vadd.f32 %v298, %v518
    %520 = vmatprep.mubr.f32.mxu0 0.0
    %v521 = vand.u32 %v172, 4294901760
    %522 = vmatmul.mubr.f32.gmra.mxu0 %v521
    %v523 = vpop.f32.mrf.mxu0
    %v524 = vadd.f32 %v307, %v523
    %v525 = vpop.f32.mrf.mxu0
    %v526 = vadd.f32 %v309, %v525
    %527 = vmatprep.mubr.f32.mxu0 0.0
    %v528 = vand.u32 %v175, 4294901760
    %529 = vmatmul.mubr.f32.gmra.mxu0 %v528
    %v530 = vpop.f32.mrf.mxu0
    %v531 = vadd.f32 %v318, %v530
    %v532 = vpop.f32.mrf.mxu0
    %v533 = vadd.f32 %v320, %v532
    %534 = vmatprep.mubr.f32.mxu0 0.0
    %v535 = vand.u32 %v178, 4294901760
    %536 = vmatmul.mubr.f32.gmra.mxu0 %v535
    %v537 = vpop.f32.mrf.mxu0
    %v538 = vadd.f32 %v329, %v537
    %v539 = vpop.f32.mrf.mxu0
    %v540 = vadd.f32 %v331, %v539
    %541 = vmatprep.mubr.f32.mxu0 0.0
    %v542 = vand.u32 %v181, 4294901760
    %543 = vmatmul.mubr.f32.gmra.mxu0 %v542
    %v544 = vpop.f32.mrf.mxu0
    %v545 = vadd.f32 %v340, %v544
    %v546 = vpop.f32.mrf.mxu0
    %v547 = vadd.f32 %v342, %v546
    %548 = vmatprep.mubr.f32.mxu0 0.0
    %v549 = vand.u32 %v184, 4294901760
    %550 = vmatmul.mubr.f32.gmra.mxu0 %v549
    %v551 = vpop.f32.mrf.mxu0
    %v552 = vadd.f32 %v351, %v551
    %v553 = vpop.f32.mrf.mxu0
    %v554 = vadd.f32 %v353, %v553
    %555 = vdwg.mxu0
    %556 = vmatprep.subr.mxu0 0.0
    %557 = vmatpush1.msra.mxu0 0.0
    %558 = vmatprep.subr.mxu0 0.0
    %559 = vmatpush1.msra.mxu0 0.0
    %560 = vmatprep.subr.mxu0 0.0
    %561 = vmatpush1.msra.mxu0 0.0
    %562 = vmatprep.subr.mxu0 0.0
    %563 = vmatpush1.msra.mxu0 0.0
    %564 = vmatprep.subr.mxu0 0.0
    %565 = vmatpush1.msra.mxu0 0.0
    %566 = vmatprep.subr.mxu0 0.0
    %567 = vmatpush1.msra.mxu0 0.0
    %568 = vmatprep.subr.mxu0 0.0
    %569 = vmatpush1.msra.mxu0 0.0
    %570 = vmatprep.subr.mxu0 0.0
    %571 = vmatpush1.msra.mxu0 0.0
    %v572 = vand.u32 %v160, 4294901760
    %v573 = vsub.f32 %v160, %v572
    %574 = vmatprep.subr.mxu0 %v573
    %v575 = vand.u32 %v159, 4294901760
    %v576 = vsub.f32 %v159, %v575
    %577 = vmatpush1.msra.mxu0 %v576
    %v578 = vand.u32 %v158, 4294901760
    %v579 = vsub.f32 %v158, %v578
    %580 = vmatprep.subr.mxu0 %v579
    %v581 = vand.u32 %v157, 4294901760
    %v582 = vsub.f32 %v157, %v581
    %583 = vmatpush1.msra.mxu0 %v582
    %v584 = vand.u32 %v156, 4294901760
    %v585 = vsub.f32 %v156, %v584
    %586 = vmatprep.subr.mxu0 %v585
    %v587 = vand.u32 %v155, 4294901760
    %v588 = vsub.f32 %v155, %v587
    %589 = vmatpush1.msra.mxu0 %v588
    %v590 = vand.u32 %v154, 4294901760
    %v591 = vsub.f32 %v154, %v590
    %592 = vmatprep.subr.mxu0 %v591
    %v593 = vand.u32 %v153, 4294901760
    %v594 = vsub.f32 %v153, %v593
    %595 = vmatpush1.msra.mxu0 %v594
    %v596 = vand.u32 %v152, 4294901760
    %v597 = vsub.f32 %v152, %v596
    %598 = vmatprep.subr.mxu0 %v597
    %v599 = vand.u32 %v151, 4294901760
    %v600 = vsub.f32 %v151, %v599
    %601 = vmatpush1.msra.mxu0 %v600
    %v602 = vand.u32 %v150, 4294901760
    %v603 = vsub.f32 %v150, %v602
    %604 = vmatprep.subr.mxu0 %v603
    %v605 = vand.u32 %v149, 4294901760
    %v606 = vsub.f32 %v149, %v605
    %607 = vmatpush1.msra.mxu0 %v606
    %v608 = vand.u32 %v148, 4294901760
    %v609 = vsub.f32 %v148, %v608
    %610 = vmatprep.subr.mxu0 %v609
    %v611 = vand.u32 %v147, 4294901760
    %v612 = vsub.f32 %v147, %v611
    %613 = vmatpush1.msra.mxu0 %v612
    %v614 = vand.u32 %v146, 4294901760
    %v615 = vsub.f32 %v146, %v614
    %616 = vmatprep.subr.mxu0 %v615
    %v617 = vand.u32 %v145, 4294901760
    %v618 = vsub.f32 %v145, %v617
    %619 = vmatpush1.msra.mxu0 %v618
    %620 = vmatprep.subr.mxu0 0.0
    %621 = vmatpush2.msra.mxu0 0.0
    %622 = vmatprep.subr.mxu0 0.0
    %623 = vmatpush2.msra.mxu0 0.0
    %624 = vmatprep.subr.mxu0 0.0
    %625 = vmatpush2.msra.mxu0 0.0
    %626 = vmatprep.subr.mxu0 0.0
    %627 = vmatpush2.msra.mxu0 0.0
    %628 = vmatprep.subr.mxu0 0.0
    %629 = vmatpush2.msra.mxu0 0.0
    %630 = vmatprep.subr.mxu0 0.0
    %631 = vmatpush2.msra.mxu0 0.0
    %632 = vmatprep.subr.mxu0 0.0
    %633 = vmatpush2.msra.mxu0 0.0
    %634 = vmatprep.subr.mxu0 0.0
    %635 = vmatpush2.msra.mxu0 0.0
    %636 = vmatprep.subr.mxu0 0.0
    %637 = vmatpush2.msra.mxu0 0.0
    %638 = vmatprep.subr.mxu0 0.0
    %639 = vmatpush2.msra.mxu0 0.0
    %640 = vmatprep.subr.mxu0 0.0
    %641 = vmatpush2.msra.mxu0 0.0
    %642 = vmatprep.subr.mxu0 0.0
    %643 = vmatpush2.msra.mxu0 0.0
    %644 = vmatprep.subr.mxu0 0.0
    %645 = vmatpush2.msra.mxu0 0.0
    %646 = vmatprep.subr.mxu0 0.0
    %647 = vmatpush2.msra.mxu0 0.0
    %648 = vmatprep.subr.mxu0 0.0
    %649 = vmatpush2.msra.mxu0 0.0
    %650 = vmatprep.subr.mxu0 0.0
    %651 = vmatpush2.msra.mxu0 0.0
    %652 = vmatprep.mubr.f32.mxu0 0.0
    %v653 = vand.u32 %v163, 4294901760
    %v654 = vsub.f32 %v163, %v653
    %655 = vmatmul.mubr.f32.gmra.mxu0 %v654
    %v656 = vpop.f32.mrf.mxu0
    %v657 = vadd.f32 %v503, %v656
    %v658 = vpop.f32.mrf.mxu0
    %v659 = vadd.f32 %v505, %v658
    %660 = vmatprep.mubr.f32.mxu0 0.0
    %v661 = vand.u32 %v166, 4294901760
    %v662 = vsub.f32 %v166, %v661
    %663 = vmatmul.mubr.f32.gmra.mxu0 %v662
    %v664 = vpop.f32.mrf.mxu0
    %v665 = vadd.f32 %v510, %v664
    %v666 = vpop.f32.mrf.mxu0
    %v667 = vadd.f32 %v512, %v666
    %668 = vmatprep.mubr.f32.mxu0 0.0
    %v669 = vand.u32 %v169, 4294901760
    %v670 = vsub.f32 %v169, %v669
    %671 = vmatmul.mubr.f32.gmra.mxu0 %v670
    %v672 = vpop.f32.mrf.mxu0
    %v673 = vadd.f32 %v517, %v672
    %v674 = vpop.f32.mrf.mxu0
    %v675 = vadd.f32 %v519, %v674
    %676 = vmatprep.mubr.f32.mxu0 0.0
    %v677 = vand.u32 %v172, 4294901760
    %v678 = vsub.f32 %v172, %v677
    %679 = vmatmul.mubr.f32.gmra.mxu0 %v678
    %v680 = vpop.f32.mrf.mxu0
    %v681 = vadd.f32 %v524, %v680
    %v682 = vpop.f32.mrf.mxu0
    %v683 = vadd.f32 %v526, %v682
    %684 = vmatprep.mubr.f32.mxu0 0.0
    %v685 = vand.u32 %v175, 4294901760
    %v686 = vsub.f32 %v175, %v685
    %687 = vmatmul.mubr.f32.gmra.mxu0 %v686
    %v688 = vpop.f32.mrf.mxu0
    %v689 = vadd.f32 %v531, %v688
    %v690 = vpop.f32.mrf.mxu0
    %v691 = vadd.f32 %v533, %v690
    %692 = vmatprep.mubr.f32.mxu0 0.0
    %v693 = vand.u32 %v178, 4294901760
    %v694 = vsub.f32 %v178, %v693
    %695 = vmatmul.mubr.f32.gmra.mxu0 %v694
    %v696 = vpop.f32.mrf.mxu0
    %v697 = vadd.f32 %v538, %v696
    %v698 = vpop.f32.mrf.mxu0
    %v699 = vadd.f32 %v540, %v698
    %700 = vmatprep.mubr.f32.mxu0 0.0
    %v701 = vand.u32 %v181, 4294901760
    %v702 = vsub.f32 %v181, %v701
    %703 = vmatmul.mubr.f32.gmra.mxu0 %v702
    %v704 = vpop.f32.mrf.mxu0
    %v705 = vadd.f32 %v545, %v704
    %v706 = vpop.f32.mrf.mxu0
    %v707 = vadd.f32 %v547, %v706
    %708 = vmatprep.mubr.f32.mxu0 0.0
    %v709 = vand.u32 %v184, 4294901760
    %v710 = vsub.f32 %v184, %v709
    %711 = vmatmul.mubr.f32.gmra.mxu0 %v710
    %v712 = vpop.f32.mrf.mxu0
    %v713 = vadd.f32 %v552, %v712
    %v714 = vpop.f32.mrf.mxu0
    %v715 = vadd.f32 %v554, %v714
    %716 = vdwg.mxu0
    %717 = vmatprep.subr.mxu0 0.0
    %718 = vmatpush1.msra.mxu0 0.0
    %719 = vmatprep.subr.mxu0 0.0
    %720 = vmatpush1.msra.mxu0 0.0
    %721 = vmatprep.subr.mxu0 0.0
    %722 = vmatpush1.msra.mxu0 0.0
    %723 = vmatprep.subr.mxu0 0.0
    %724 = vmatpush1.msra.mxu0 0.0
    %725 = vmatprep.subr.mxu0 0.0
    %726 = vmatpush1.msra.mxu0 0.0
    %727 = vmatprep.subr.mxu0 0.0
    %728 = vmatpush1.msra.mxu0 0.0
    %729 = vmatprep.subr.mxu0 0.0
    %730 = vmatpush1.msra.mxu0 0.0
    %731 = vmatprep.subr.mxu0 0.0
    %732 = vmatpush1.msra.mxu0 0.0
    %v733 = vand.u32 %v160, 4294901760
    %734 = vmatprep.subr.mxu0 %v733
    %v735 = vand.u32 %v159, 4294901760
    %736 = vmatpush1.msra.mxu0 %v735
    %v737 = vand.u32 %v158, 4294901760
    %738 = vmatprep.subr.mxu0 %v737
    %v739 = vand.u32 %v157, 4294901760
    %740 = vmatpush1.msra.mxu0 %v739
    %v741 = vand.u32 %v156, 4294901760
    %742 = vmatprep.subr.mxu0 %v741
    %v743 = vand.u32 %v155, 4294901760
    %744 = vmatpush1.msra.mxu0 %v743
    %v745 = vand.u32 %v154, 4294901760
    %746 = vmatprep.subr.mxu0 %v745
    %v747 = vand.u32 %v153, 4294901760
    %748 = vmatpush1.msra.mxu0 %v747
    %v749 = vand.u32 %v152, 4294901760
    %750 = vmatprep.subr.mxu0 %v749
    %v751 = vand.u32 %v151, 4294901760
    %752 = vmatpush1.msra.mxu0 %v751
    %v753 = vand.u32 %v150, 4294901760
    %754 = vmatprep.subr.mxu0 %v753
    %v755 = vand.u32 %v149, 4294901760
    %756 = vmatpush1.msra.mxu0 %v755
    %v757 = vand.u32 %v148, 4294901760
    %758 = vmatprep.subr.mxu0 %v757
    %v759 = vand.u32 %v147, 4294901760
    %760 = vmatpush1.msra.mxu0 %v759
    %v761 = vand.u32 %v146, 4294901760
    %762 = vmatprep.subr.mxu0 %v761
    %v763 = vand.u32 %v145, 4294901760
    %764 = vmatpush1.msra.mxu0 %v763
    %765 = vmatprep.subr.mxu0 0.0
    %766 = vmatpush2.msra.mxu0 0.0
    %767 = vmatprep.subr.mxu0 0.0
    %768 = vmatpush2.msra.mxu0 0.0
    %769 = vmatprep.subr.mxu0 0.0
    %770 = vmatpush2.msra.mxu0 0.0
    %771 = vmatprep.subr.mxu0 0.0
    %772 = vmatpush2.msra.mxu0 0.0
    %773 = vmatprep.subr.mxu0 0.0
    %774 = vmatpush2.msra.mxu0 0.0
    %775 = vmatprep.subr.mxu0 0.0
    %776 = vmatpush2.msra.mxu0 0.0
    %777 = vmatprep.subr.mxu0 0.0
    %778 = vmatpush2.msra.mxu0 0.0
    %779 = vmatprep.subr.mxu0 0.0
    %780 = vmatpush2.msra.mxu0 0.0
    %781 = vmatprep.subr.mxu0 0.0
    %782 = vmatpush2.msra.mxu0 0.0
    %783 = vmatprep.subr.mxu0 0.0
    %784 = vmatpush2.msra.mxu0 0.0
    %785 = vmatprep.subr.mxu0 0.0
    %786 = vmatpush2.msra.mxu0 0.0
    %787 = vmatprep.subr.mxu0 0.0
    %788 = vmatpush2.msra.mxu0 0.0
    %789 = vmatprep.subr.mxu0 0.0
    %790 = vmatpush2.msra.mxu0 0.0
    %791 = vmatprep.subr.mxu0 0.0
    %792 = vmatpush2.msra.mxu0 0.0
    %793 = vmatprep.subr.mxu0 0.0
    %794 = vmatpush2.msra.mxu0 0.0
    %795 = vmatprep.subr.mxu0 0.0
    %796 = vmatpush2.msra.mxu0 0.0
    %797 = vmatprep.mubr.f32.mxu0 0.0
    %v798 = vand.u32 %v163, 4294901760
    %v799 = vsub.f32 %v163, %v798
    %v800 = vand.u32 %v799, 4294901760
    %801 = vmatmul.mubr.f32.gmra.mxu0 %v800
    %v802 = vpop.f32.mrf.mxu0
    %v803 = vadd.f32 %v657, %v802
    %v804 = vpop.f32.mrf.mxu0
    %v805 = vadd.f32 %v659, %v804
    %806 = vmatprep.mubr.f32.mxu0 0.0
    %v807 = vand.u32 %v166, 4294901760
    %v808 = vsub.f32 %v166, %v807
    %v809 = vand.u32 %v808, 4294901760
    %810 = vmatmul.mubr.f32.gmra.mxu0 %v809
    %v811 = vpop.f32.mrf.mxu0
    %v812 = vadd.f32 %v665, %v811
    %v813 = vpop.f32.mrf.mxu0
    %v814 = vadd.f32 %v667, %v813
    %815 = vmatprep.mubr.f32.mxu0 0.0
    %v816 = vand.u32 %v169, 4294901760
    %v817 = vsub.f32 %v169, %v816
    %v818 = vand.u32 %v817, 4294901760
    %819 = vmatmul.mubr.f32.gmra.mxu0 %v818
    %v820 = vpop.f32.mrf.mxu0
    %v821 = vadd.f32 %v673, %v820
    %v822 = vpop.f32.mrf.mxu0
    %v823 = vadd.f32 %v675, %v822
    %824 = vmatprep.mubr.f32.mxu0 0.0
    %v825 = vand.u32 %v172, 4294901760
    %v826 = vsub.f32 %v172, %v825
    %v827 = vand.u32 %v826, 4294901760
    %828 = vmatmul.mubr.f32.gmra.mxu0 %v827
    %v829 = vpop.f32.mrf.mxu0
    %v830 = vadd.f32 %v681, %v829
    %v831 = vpop.f32.mrf.mxu0
    %v832 = vadd.f32 %v683, %v831
    %833 = vmatprep.mubr.f32.mxu0 0.0
    %v834 = vand.u32 %v175, 4294901760
    %v835 = vsub.f32 %v175, %v834
    %v836 = vand.u32 %v835, 4294901760
    %837 = vmatmul.mubr.f32.gmra.mxu0 %v836
    %v838 = vpop.f32.mrf.mxu0
    %v839 = vadd.f32 %v689, %v838
    %v840 = vpop.f32.mrf.mxu0
    %v841 = vadd.f32 %v691, %v840
    %842 = vmatprep.mubr.f32.mxu0 0.0
    %v843 = vand.u32 %v178, 4294901760
    %v844 = vsub.f32 %v178, %v843
    %v845 = vand.u32 %v844, 4294901760
    %846 = vmatmul.mubr.f32.gmra.mxu0 %v845
    %v847 = vpop.f32.mrf.mxu0
    %v848 = vadd.f32 %v697, %v847
    %v849 = vpop.f32.mrf.mxu0
    %v850 = vadd.f32 %v699, %v849
    %851 = vmatprep.mubr.f32.mxu0 0.0
    %v852 = vand.u32 %v181, 4294901760
    %v853 = vsub.f32 %v181, %v852
    %v854 = vand.u32 %v853, 4294901760
    %855 = vmatmul.mubr.f32.gmra.mxu0 %v854
    %v856 = vpop.f32.mrf.mxu0
    %v857 = vadd.f32 %v705, %v856
    %v858 = vpop.f32.mrf.mxu0
    %v859 = vadd.f32 %v707, %v858
    %860 = vmatprep.mubr.f32.mxu0 0.0
    %v861 = vand.u32 %v184, 4294901760
    %v862 = vsub.f32 %v184, %v861
    %v863 = vand.u32 %v862, 4294901760
    %864 = vmatmul.mubr.f32.gmra.mxu0 %v863
    %v865 = vpop.f32.mrf.mxu0
    %v866 = vadd.f32 %v713, %v865
    %v867 = vpop.f32.mrf.mxu0
    %v868 = vadd.f32 %v715, %v867
    %869 = vdwg.mxu0
    %870 = vmatprep.subr.mxu0 0.0
    %871 = vmatpush1.msra.mxu0 0.0
    %872 = vmatprep.subr.mxu0 0.0
    %873 = vmatpush1.msra.mxu0 0.0
    %874 = vmatprep.subr.mxu0 0.0
    %875 = vmatpush1.msra.mxu0 0.0
    %876 = vmatprep.subr.mxu0 0.0
    %877 = vmatpush1.msra.mxu0 0.0
    %878 = vmatprep.subr.mxu0 0.0
    %879 = vmatpush1.msra.mxu0 0.0
    %880 = vmatprep.subr.mxu0 0.0
    %881 = vmatpush1.msra.mxu0 0.0
    %882 = vmatprep.subr.mxu0 0.0
    %883 = vmatpush1.msra.mxu0 0.0
    %884 = vmatprep.subr.mxu0 0.0
    %885 = vmatpush1.msra.mxu0 0.0
    %v886 = vand.u32 %v160, 4294901760
    %v887 = vsub.f32 %v160, %v886
    %v888 = vand.u32 %v887, 4294901760
    %889 = vmatprep.subr.mxu0 %v888
    %v890 = vand.u32 %v159, 4294901760
    %v891 = vsub.f32 %v159, %v890
    %v892 = vand.u32 %v891, 4294901760
    %893 = vmatpush1.msra.mxu0 %v892
    %v894 = vand.u32 %v158, 4294901760
    %v895 = vsub.f32 %v158, %v894
    %v896 = vand.u32 %v895, 4294901760
    %897 = vmatprep.subr.mxu0 %v896
    %v898 = vand.u32 %v157, 4294901760
    %v899 = vsub.f32 %v157, %v898
    %v900 = vand.u32 %v899, 4294901760
    %901 = vmatpush1.msra.mxu0 %v900
    %v902 = vand.u32 %v156, 4294901760
    %v903 = vsub.f32 %v156, %v902
    %v904 = vand.u32 %v903, 4294901760
    %905 = vmatprep.subr.mxu0 %v904
    %v906 = vand.u32 %v155, 4294901760
    %v907 = vsub.f32 %v155, %v906
    %v908 = vand.u32 %v907, 4294901760
    %909 = vmatpush1.msra.mxu0 %v908
    %v910 = vand.u32 %v154, 4294901760
    %v911 = vsub.f32 %v154, %v910
    %v912 = vand.u32 %v911, 4294901760
    %913 = vmatprep.subr.mxu0 %v912
    %v914 = vand.u32 %v153, 4294901760
    %v915 = vsub.f32 %v153, %v914
    %v916 = vand.u32 %v915, 4294901760
    %917 = vmatpush1.msra.mxu0 %v916
    %v918 = vand.u32 %v152, 4294901760
    %v919 = vsub.f32 %v152, %v918
    %v920 = vand.u32 %v919, 4294901760
    %921 = vmatprep.subr.mxu0 %v920
    %v922 = vand.u32 %v151, 4294901760
    %v923 = vsub.f32 %v151, %v922
    %v924 = vand.u32 %v923, 4294901760
    %925 = vmatpush1.msra.mxu0 %v924
    %v926 = vand.u32 %v150, 4294901760
    %v927 = vsub.f32 %v150, %v926
    %v928 = vand.u32 %v927, 4294901760
    %929 = vmatprep.subr.mxu0 %v928
    %v930 = vand.u32 %v149, 4294901760
    %v931 = vsub.f32 %v149, %v930
    %v932 = vand.u32 %v931, 4294901760
    %933 = vmatpush1.msra.mxu0 %v932
    %v934 = vand.u32 %v148, 4294901760
    %v935 = vsub.f32 %v148, %v934
    %v936 = vand.u32 %v935, 4294901760
    %937 = vmatprep.subr.mxu0 %v936
    %v938 = vand.u32 %v147, 4294901760
    %v939 = vsub.f32 %v147, %v938
    %v940 = vand.u32 %v939, 4294901760
    %941 = vmatpush1.msra.mxu0 %v940
    %v942 = vand.u32 %v146, 4294901760
    %v943 = vsub.f32 %v146, %v942
    %v944 = vand.u32 %v943, 4294901760
    %945 = vmatprep.subr.mxu0 %v944
    %v946 = vand.u32 %v145, 4294901760
    %v947 = vsub.f32 %v145, %v946
    %v948 = vand.u32 %v947, 4294901760
    %949 = vmatpush1.msra.mxu0 %v948
    %950 = vmatprep.subr.mxu0 0.0
    %951 = vmatpush2.msra.mxu0 0.0
    %952 = vmatprep.subr.mxu0 0.0
    %953 = vmatpush2.msra.mxu0 0.0
    %954 = vmatprep.subr.mxu0 0.0
    %955 = vmatpush2.msra.mxu0 0.0
    %956 = vmatprep.subr.mxu0 0.0
    %957 = vmatpush2.msra.mxu0 0.0
    %958 = vmatprep.subr.mxu0 0.0
    %959 = vmatpush2.msra.mxu0 0.0
    %960 = vmatprep.subr.mxu0 0.0
    %961 = vmatpush2.msra.mxu0 0.0
    %962 = vmatprep.subr.mxu0 0.0
    %963 = vmatpush2.msra.mxu0 0.0
    %964 = vmatprep.subr.mxu0 0.0
    %965 = vmatpush2.msra.mxu0 0.0
    %966 = vmatprep.subr.mxu0 0.0
    %967 = vmatpush2.msra.mxu0 0.0
    %968 = vmatprep.subr.mxu0 0.0
    %969 = vmatpush2.msra.mxu0 0.0
    %970 = vmatprep.subr.mxu0 0.0
    %971 = vmatpush2.msra.mxu0 0.0
    %972 = vmatprep.subr.mxu0 0.0
    %973 = vmatpush2.msra.mxu0 0.0
    %974 = vmatprep.subr.mxu0 0.0
    %975 = vmatpush2.msra.mxu0 0.0
    %976 = vmatprep.subr.mxu0 0.0
    %977 = vmatpush2.msra.mxu0 0.0
    %978 = vmatprep.subr.mxu0 0.0
    %979 = vmatpush2.msra.mxu0 0.0
    %980 = vmatprep.subr.mxu0 0.0
    %981 = vmatpush2.msra.mxu0 0.0
    %982 = vmatprep.mubr.f32.mxu0 0.0
    %v983 = vand.u32 %v163, 4294901760
    %984 = vmatmul.mubr.f32.gmra.mxu0 %v983
    %v985 = vpop.f32.mrf.mxu0
    %v986 = vadd.f32 %v803, %v985
    %v987 = vpop.f32.mrf.mxu0
    %v988 = vadd.f32 %v805, %v987
    %989 = vmatprep.mubr.f32.mxu0 0.0
    %v990 = vand.u32 %v166, 4294901760
    %991 = vmatmul.mubr.f32.gmra.mxu0 %v990
    %v992 = vpop.f32.mrf.mxu0
    %v993 = vadd.f32 %v812, %v992
    %v994 = vpop.f32.mrf.mxu0
    %v995 = vadd.f32 %v814, %v994
    %996 = vmatprep.mubr.f32.mxu0 0.0
    %v997 = vand.u32 %v169, 4294901760
    %998 = vmatmul.mubr.f32.gmra.mxu0 %v997
    %v999 = vpop.f32.mrf.mxu0
    %v1000 = vadd.f32 %v821, %v999
    %v1001 = vpop.f32.mrf.mxu0
    %v1002 = vadd.f32 %v823, %v1001
    %1003 = vmatprep.mubr.f32.mxu0 0.0
    %v1004 = vand.u32 %v172, 4294901760
    %1005 = vmatmul.mubr.f32.gmra.mxu0 %v1004
    %v1006 = vpop.f32.mrf.mxu0
    %v1007 = vadd.f32 %v830, %v1006
    %v1008 = vpop.f32.mrf.mxu0
    %v1009 = vadd.f32 %v832, %v1008
    %1010 = vmatprep.mubr.f32.mxu0 0.0
    %v1011 = vand.u32 %v175, 4294901760
    %1012 = vmatmul.mubr.f32.gmra.mxu0 %v1011
    %v1013 = vpop.f32.mrf.mxu0
    %v1014 = vadd.f32 %v839, %v1013
    %v1015 = vpop.f32.mrf.mxu0
    %v1016 = vadd.f32 %v841, %v1015
    %1017 = vmatprep.mubr.f32.mxu0 0.0
    %v1018 = vand.u32 %v178, 4294901760
    %1019 = vmatmul.mubr.f32.gmra.mxu0 %v1018
    %v1020 = vpop.f32.mrf.mxu0
    %v1021 = vadd.f32 %v848, %v1020
    %v1022 = vpop.f32.mrf.mxu0
    %v1023 = vadd.f32 %v850, %v1022
    %1024 = vmatprep.mubr.f32.mxu0 0.0
    %v1025 = vand.u32 %v181, 4294901760
    %1026 = vmatmul.mubr.f32.gmra.mxu0 %v1025
    %v1027 = vpop.f32.mrf.mxu0
    %v1028 = vadd.f32 %v857, %v1027
    %v1029 = vpop.f32.mrf.mxu0
    %v1030 = vadd.f32 %v859, %v1029
    %1031 = vmatprep.mubr.f32.mxu0 0.0
    %v1032 = vand.u32 %v184, 4294901760
    %1033 = vmatmul.mubr.f32.gmra.mxu0 %v1032
    %v1034 = vpop.f32.mrf.mxu0
    %v1035 = vadd.f32 %v866, %v1034
    %v1036 = vpop.f32.mrf.mxu0
    %v1037 = vadd.f32 %v868, %v1036
    %1038 = vdwg.mxu0
    %1039 = vmatprep.subr.mxu0 0.0
    %1040 = vmatpush1.msra.mxu0 0.0
    %1041 = vmatprep.subr.mxu0 0.0
    %1042 = vmatpush1.msra.mxu0 0.0
    %1043 = vmatprep.subr.mxu0 0.0
    %1044 = vmatpush1.msra.mxu0 0.0
    %1045 = vmatprep.subr.mxu0 0.0
    %1046 = vmatpush1.msra.mxu0 0.0
    %1047 = vmatprep.subr.mxu0 0.0
    %1048 = vmatpush1.msra.mxu0 0.0
    %1049 = vmatprep.subr.mxu0 0.0
    %1050 = vmatpush1.msra.mxu0 0.0
    %1051 = vmatprep.subr.mxu0 0.0
    %1052 = vmatpush1.msra.mxu0 0.0
    %1053 = vmatprep.subr.mxu0 0.0
    %1054 = vmatpush1.msra.mxu0 0.0
    %v1055 = vand.u32 %v160, 4294901760
    %1056 = vmatprep.subr.mxu0 %v1055
    %v1057 = vand.u32 %v159, 4294901760
    %1058 = vmatpush1.msra.mxu0 %v1057
    %v1059 = vand.u32 %v158, 4294901760
    %1060 = vmatprep.subr.mxu0 %v1059
    %v1061 = vand.u32 %v157, 4294901760
    %1062 = vmatpush1.msra.mxu0 %v1061
    %v1063 = vand.u32 %v156, 4294901760
    %1064 = vmatprep.subr.mxu0 %v1063
    %v1065 = vand.u32 %v155, 4294901760
    %1066 = vmatpush1.msra.mxu0 %v1065
    %v1067 = vand.u32 %v154, 4294901760
    %1068 = vmatprep.subr.mxu0 %v1067
    %v1069 = vand.u32 %v153, 4294901760
    %1070 = vmatpush1.msra.mxu0 %v1069
    %v1071 = vand.u32 %v152, 4294901760
    %1072 = vmatprep.subr.mxu0 %v1071
    %v1073 = vand.u32 %v151, 4294901760
    %1074 = vmatpush1.msra.mxu0 %v1073
    %v1075 = vand.u32 %v150, 4294901760
    %1076 = vmatprep.subr.mxu0 %v1075
    %v1077 = vand.u32 %v149, 4294901760
    %1078 = vmatpush1.msra.mxu0 %v1077
    %v1079 = vand.u32 %v148, 4294901760
    %1080 = vmatprep.subr.mxu0 %v1079
    %v1081 = vand.u32 %v147, 4294901760
    %1082 = vmatpush1.msra.mxu0 %v1081
    %v1083 = vand.u32 %v146, 4294901760
    %1084 = vmatprep.subr.mxu0 %v1083
    %v1085 = vand.u32 %v145, 4294901760
    %1086 = vmatpush1.msra.mxu0 %v1085
    %1087 = vmatprep.subr.mxu0 0.0
    %1088 = vmatpush2.msra.mxu0 0.0
    %1089 = vmatprep.subr.mxu0 0.0
    %1090 = vmatpush2.msra.mxu0 0.0
    %1091 = vmatprep.subr.mxu0 0.0
    %1092 = vmatpush2.msra.mxu0 0.0
    %1093 = vmatprep.subr.mxu0 0.0
    %1094 = vmatpush2.msra.mxu0 0.0
    %1095 = vmatprep.subr.mxu0 0.0
    %1096 = vmatpush2.msra.mxu0 0.0
    %1097 = vmatprep.subr.mxu0 0.0
    %1098 = vmatpush2.msra.mxu0 0.0
    %1099 = vmatprep.subr.mxu0 0.0
    %1100 = vmatpush2.msra.mxu0 0.0
    %1101 = vmatprep.subr.mxu0 0.0
    %1102 = vmatpush2.msra.mxu0 0.0
    %1103 = vmatprep.subr.mxu0 0.0
    %1104 = vmatpush2.msra.mxu0 0.0
    %1105 = vmatprep.subr.mxu0 0.0
    %1106 = vmatpush2.msra.mxu0 0.0
    %1107 = vmatprep.subr.mxu0 0.0
    %1108 = vmatpush2.msra.mxu0 0.0
    %1109 = vmatprep.subr.mxu0 0.0
    %1110 = vmatpush2.msra.mxu0 0.0
    %1111 = vmatprep.subr.mxu0 0.0
    %1112 = vmatpush2.msra.mxu0 0.0
    %1113 = vmatprep.subr.mxu0 0.0
    %1114 = vmatpush2.msra.mxu0 0.0
    %1115 = vmatprep.subr.mxu0 0.0
    %1116 = vmatpush2.msra.mxu0 0.0
    %1117 = vmatprep.subr.mxu0 0.0
    %1118 = vmatpush2.msra.mxu0 0.0
    %1119 = vmatprep.mubr.f32.mxu0 0.0
    %v1120 = vand.u32 %v163, 4294901760
    %1121 = vmatmul.mubr.f32.gmra.mxu0 %v1120
    %v1122 = vpop.f32.mrf.mxu0
    %v1123 = vadd.f32 %v986, %v1122
    %v1124 = vpop.f32.mrf.mxu0
    %v1125 = vadd.f32 %v988, %v1124
    %1126 = vmatprep.mubr.f32.mxu0 0.0
    %v1127 = vand.u32 %v166, 4294901760
    %1128 = vmatmul.mubr.f32.gmra.mxu0 %v1127
    %v1129 = vpop.f32.mrf.mxu0
    %v1130 = vadd.f32 %v993, %v1129
    %v1131 = vpop.f32.mrf.mxu0
    %v1132 = vadd.f32 %v995, %v1131
    %1133 = vmatprep.mubr.f32.mxu0 0.0
    %v1134 = vand.u32 %v169, 4294901760
    %1135 = vmatmul.mubr.f32.gmra.mxu0 %v1134
    %v1136 = vpop.f32.mrf.mxu0
    %v1137 = vadd.f32 %v1000, %v1136
    %v1138 = vpop.f32.mrf.mxu0
    %v1139 = vadd.f32 %v1002, %v1138
    %1140 = vmatprep.mubr.f32.mxu0 0.0
    %v1141 = vand.u32 %v172, 4294901760
    %1142 = vmatmul.mubr.f32.gmra.mxu0 %v1141
    %v1143 = vpop.f32.mrf.mxu0
    %v1144 = vadd.f32 %v1007, %v1143
    %v1145 = vpop.f32.mrf.mxu0
    %v1146 = vadd.f32 %v1009, %v1145
    %1147 = vmatprep.mubr.f32.mxu0 0.0
    %v1148 = vand.u32 %v175, 4294901760
    %1149 = vmatmul.mubr.f32.gmra.mxu0 %v1148
    %v1150 = vpop.f32.mrf.mxu0
    %v1151 = vadd.f32 %v1014, %v1150
    %v1152 = vpop.f32.mrf.mxu0
    %v1153 = vadd.f32 %v1016, %v1152
    %1154 = vmatprep.mubr.f32.mxu0 0.0
    %v1155 = vand.u32 %v178, 4294901760
    %1156 = vmatmul.mubr.f32.gmra.mxu0 %v1155
    %v1157 = vpop.f32.mrf.mxu0
    %v1158 = vadd.f32 %v1021, %v1157
    %v1159 = vpop.f32.mrf.mxu0
    %v1160 = vadd.f32 %v1023, %v1159
    %1161 = vmatprep.mubr.f32.mxu0 0.0
    %v1162 = vand.u32 %v181, 4294901760
    %1163 = vmatmul.mubr.f32.gmra.mxu0 %v1162
    %v1164 = vpop.f32.mrf.mxu0
    %v1165 = vadd.f32 %v1028, %v1164
    %v1166 = vpop.f32.mrf.mxu0
    %v1167 = vadd.f32 %v1030, %v1166
    %1168 = vmatprep.mubr.f32.mxu0 0.0
    %v1169 = vand.u32 %v184, 4294901760
    %1170 = vmatmul.mubr.f32.gmra.mxu0 %v1169
    %v1171 = vpop.f32.mrf.mxu0
    %v1172 = vadd.f32 %v1035, %v1171
    %v1173 = vpop.f32.mrf.mxu0
    %v1174 = vadd.f32 %v1037, %v1173
    %1175 = vdwg.mxu0
    %1176 = vst [vmem:[#allocation2] sm:$0xff] %v1123
    %1177 = vst [vmem:[#allocation2 + $0x8] sm:$0xff] %v1125
    %1178 = vst [vmem:[#allocation2 + $0x10] sm:$0xff] %v1130
    %1179 = vst [vmem:[#allocation2 + $0x18] sm:$0xff] %v1132
    %1180 = vst [vmem:[#allocation2 + $0x20] sm:$0xff] %v1137
    %1181 = vst [vmem:[#allocation2 + $0x28] sm:$0xff] %v1139
    %1182 = vst [vmem:[#allocation2 + $0x30] sm:$0xff] %v1144
    %1183 = vst [vmem:[#allocation2 + $0x38] sm:$0xff] %v1146
    %1184 = vst [vmem:[#allocation2 + $0x40] sm:$0xff] %v1151
    %1185 = vst [vmem:[#allocation2 + $0x48] sm:$0xff] %v1153
    %1186 = vst [vmem:[#allocation2 + $0x50] sm:$0xff] %v1158
    %1187 = vst [vmem:[#allocation2 + $0x58] sm:$0xff] %v1160
    %1188 = vst [vmem:[#allocation2 + $0x60] sm:$0xff] %v1165
    %1189 = vst [vmem:[#allocation2 + $0x68] sm:$0xff] %v1167
    %1190 = vst [vmem:[#allocation2 + $0x70] sm:$0xff] %v1172
    %1191 = vst [vmem:[#allocation2 + $0x78] sm:$0xff] %v1174
    %v1192 = vld [vmem:[#allocation4] sm:$0xff]
    %v1193 = vld [vmem:[#allocation4 + $0x8] sm:$0xff]
    %v1194 = vld [vmem:[#allocation4 + $0x10] sm:$0xff]
    %v1195 = vld [vmem:[#allocation4 + $0x18] sm:$0xff]
    %v1196 = vld [vmem:[#allocation4 + $0x20] sm:$0xff]
    %v1197 = vld [vmem:[#allocation4 + $0x28] sm:$0xff]
    %v1198 = vld [vmem:[#allocation4 + $0x30] sm:$0xff]
    %v1199 = vld [vmem:[#allocation4 + $0x38] sm:$0xff]
    %v1200 = vld [vmem:[#allocation4 + $0x40] sm:$0xff]
    %v1201 = vld [vmem:[#allocation4 + $0x48] sm:$0xff]
    %v1202 = vld [vmem:[#allocation4 + $0x50] sm:$0xff]
    %v1203 = vld [vmem:[#allocation4 + $0x58] sm:$0xff]
    %v1204 = vld [vmem:[#allocation4 + $0x60] sm:$0xff]
    %v1205 = vld [vmem:[#allocation4 + $0x68] sm:$0xff]
    %v1206 = vld [vmem:[#allocation4 + $0x70] sm:$0xff]
    %v1207 = vld [vmem:[#allocation4 + $0x78] sm:$0xff]
    %s1208 = smul.u32 0, 2
    %s1209 = smul.addr %s1208, 8
    %s1210 = scalar_lea.vmem [#allocation2], %s1209
    %v1211 = vld [vmem:[%s1210] sm:$0xff]
    %v1212 = vld [vmem:[%s1210 + $0x8] sm:$0xff]
    %v1214 = vsel %vm161, 0.0, 0
    %1216 = vmatprep.subr.mxu0 0.0
    %1217 = vmatpush1.msra.mxu0 0.0
    %1218 = vmatprep.subr.mxu0 0.0
    %1219 = vmatpush1.msra.mxu0 0.0
    %1220 = vmatprep.subr.mxu0 0.0
    %1221 = vmatpush1.msra.mxu0 0.0
    %1222 = vmatprep.subr.mxu0 0.0
    %1223 = vmatpush1.msra.mxu0 0.0
    %1224 = vmatprep.subr.mxu0 0.0
    %1225 = vmatpush1.msra.mxu0 0.0
    %1226 = vmatprep.subr.mxu0 0.0
    %1227 = vmatpush1.msra.mxu0 0.0
    %1228 = vmatprep.subr.mxu0 0.0
    %1229 = vmatpush1.msra.mxu0 0.0
    %1230 = vmatprep.subr.mxu0 0.0
    %1231 = vmatpush1.msra.mxu0 0.0
    %v1232 = vand.u32 %v1207, 4294901760
    %1233 = vmatprep.subr.mxu0 %v1232
    %v1234 = vand.u32 %v1206, 4294901760
    %1235 = vmatpush1.msra.mxu0 %v1234
    %v1236 = vand.u32 %v1205, 4294901760
    %1237 = vmatprep.subr.mxu0 %v1236
    %v1238 = vand.u32 %v1204, 4294901760
    %1239 = vmatpush1.msra.mxu0 %v1238
    %v1240 = vand.u32 %v1203, 4294901760
    %1241 = vmatprep.subr.mxu0 %v1240
    %v1242 = vand.u32 %v1202, 4294901760
    %1243 = vmatpush1.msra.mxu0 %v1242
    %v1244 = vand.u32 %v1201, 4294901760
    %1245 = vmatprep.subr.mxu0 %v1244
    %v1246 = vand.u32 %v1200, 4294901760
    %1247 = vmatpush1.msra.mxu0 %v1246
    %v1248 = vand.u32 %v1199, 4294901760
    %1249 = vmatprep.subr.mxu0 %v1248
    %v1250 = vand.u32 %v1198, 4294901760
    %1251 = vmatpush1.msra.mxu0 %v1250
    %v1252 = vand.u32 %v1197, 4294901760
    %1253 = vmatprep.subr.mxu0 %v1252
    %v1254 = vand.u32 %v1196, 4294901760
    %1255 = vmatpush1.msra.mxu0 %v1254
    %v1256 = vand.u32 %v1195, 4294901760
    %1257 = vmatprep.subr.mxu0 %v1256
    %v1258 = vand.u32 %v1194, 4294901760
    %1259 = vmatpush1.msra.mxu0 %v1258
    %v1260 = vand.u32 %v1193, 4294901760
    %1261 = vmatprep.subr.mxu0 %v1260
    %v1262 = vand.u32 %v1192, 4294901760
    %1263 = vmatpush1.msra.mxu0 %v1262
    %1264 = vmatprep.subr.mxu0 0.0
    %1265 = vmatpush2.msra.mxu0 0.0
    %1266 = vmatprep.subr.mxu0 0.0
    %1267 = vmatpush2.msra.mxu0 0.0
    %1268 = vmatprep.subr.mxu0 0.0
    %1269 = vmatpush2.msra.mxu0 0.0
    %1270 = vmatprep.subr.mxu0 0.0
    %1271 = vmatpush2.msra.mxu0 0.0
    %1272 = vmatprep.subr.mxu0 0.0
    %1273 = vmatpush2.msra.mxu0 0.0
    %1274 = vmatprep.subr.mxu0 0.0
    %1275 = vmatpush2.msra.mxu0 0.0
    %1276 = vmatprep.subr.mxu0 0.0
    %1277 = vmatpush2.msra.mxu0 0.0
    %1278 = vmatprep.subr.mxu0 0.0
    %1279 = vmatpush2.msra.mxu0 0.0
    %1280 = vmatprep.subr.mxu0 0.0
    %1281 = vmatpush2.msra.mxu0 0.0
    %1282 = vmatprep.subr.mxu0 0.0
    %1283 = vmatpush2.msra.mxu0 0.0
    %1284 = vmatprep.subr.mxu0 0.0
    %1285 = vmatpush2.msra.mxu0 0.0
    %1286 = vmatprep.subr.mxu0 0.0
    %1287 = vmatpush2.msra.mxu0 0.0
    %1288 = vmatprep.subr.mxu0 0.0
    %1289 = vmatpush2.msra.mxu0 0.0
    %1290 = vmatprep.subr.mxu0 0.0
    %1291 = vmatpush2.msra.mxu0 0.0
    %1292 = vmatprep.subr.mxu0 0.0
    %1293 = vmatpush2.msra.mxu0 0.0
    %1294 = vmatprep.subr.mxu0 0.0
    %1295 = vmatpush2.msra.mxu0 0.0
    %1296 = vmatprep.mubr.f32.mxu0 0.0
    %v1297 = vand.u32 %v1214, 4294901760
    %v1298 = vsub.f32 %v1214, %v1297
    %v1299 = vand.u32 %v1298, 4294901760
    %v1300 = vsub.f32 %v1298, %v1299
    %v1301 = vand.u32 %v1300, 4294901760
    %1302 = vmatmul.mubr.f32.gmra.mxu0 %v1301
    %v1303 = vpop.f32.mrf.mxu0
    %v1304 = vadd.f32 0.0, %v1303
    %v1305 = vpop.f32.mrf.mxu0
    %v1306 = vadd.f32 0.0, %v1305
    %1307 = vdwg.mxu0
    %1308 = vmatprep.subr.mxu0 0.0
    %1309 = vmatpush1.msra.mxu0 0.0
    %1310 = vmatprep.subr.mxu0 0.0
    %1311 = vmatpush1.msra.mxu0 0.0
    %1312 = vmatprep.subr.mxu0 0.0
    %1313 = vmatpush1.msra.mxu0 0.0
    %1314 = vmatprep.subr.mxu0 0.0
    %1315 = vmatpush1.msra.mxu0 0.0
    %1316 = vmatprep.subr.mxu0 0.0
    %1317 = vmatpush1.msra.mxu0 0.0
    %1318 = vmatprep.subr.mxu0 0.0
    %1319 = vmatpush1.msra.mxu0 0.0
    %1320 = vmatprep.subr.mxu0 0.0
    %1321 = vmatpush1.msra.mxu0 0.0
    %1322 = vmatprep.subr.mxu0 0.0
    %1323 = vmatpush1.msra.mxu0 0.0
    %v1324 = vand.u32 %v1207, 4294901760
    %v1325 = vsub.f32 %v1207, %v1324
    %v1326 = vand.u32 %v1325, 4294901760
    %v1327 = vsub.f32 %v1325, %v1326
    %v1328 = vand.u32 %v1327, 4294901760
    %1329 = vmatprep.subr.mxu0 %v1328
    %v1330 = vand.u32 %v1206, 4294901760
    %v1331 = vsub.f32 %v1206, %v1330
    %v1332 = vand.u32 %v1331, 4294901760
    %v1333 = vsub.f32 %v1331, %v1332
    %v1334 = vand.u32 %v1333, 4294901760
    %1335 = vmatpush1.msra.mxu0 %v1334
    %v1336 = vand.u32 %v1205, 4294901760
    %v1337 = vsub.f32 %v1205, %v1336
    %v1338 = vand.u32 %v1337, 4294901760
    %v1339 = vsub.f32 %v1337, %v1338
    %v1340 = vand.u32 %v1339, 4294901760
    %1341 = vmatprep.subr.mxu0 %v1340
    %v1342 = vand.u32 %v1204, 4294901760
    %v1343 = vsub.f32 %v1204, %v1342
    %v1344 = vand.u32 %v1343, 4294901760
    %v1345 = vsub.f32 %v1343, %v1344
    %v1346 = vand.u32 %v1345, 4294901760
    %1347 = vmatpush1.msra.mxu0 %v1346
    %v1348 = vand.u32 %v1203, 4294901760
    %v1349 = vsub.f32 %v1203, %v1348
    %v1350 = vand.u32 %v1349, 4294901760
    %v1351 = vsub.f32 %v1349, %v1350
    %v1352 = vand.u32 %v1351, 4294901760
    %1353 = vmatprep.subr.mxu0 %v1352
    %v1354 = vand.u32 %v1202, 4294901760
    %v1355 = vsub.f32 %v1202, %v1354
    %v1356 = vand.u32 %v1355, 4294901760
    %v1357 = vsub.f32 %v1355, %v1356
    %v1358 = vand.u32 %v1357, 4294901760
    %1359 = vmatpush1.msra.mxu0 %v1358
    %v1360 = vand.u32 %v1201, 4294901760
    %v1361 = vsub.f32 %v1201, %v1360
    %v1362 = vand.u32 %v1361, 4294901760
    %v1363 = vsub.f32 %v1361, %v1362
    %v1364 = vand.u32 %v1363, 4294901760
    %1365 = vmatprep.subr.mxu0 %v1364
    %v1366 = vand.u32 %v1200, 4294901760
    %v1367 = vsub.f32 %v1200, %v1366
    %v1368 = vand.u32 %v1367, 4294901760
    %v1369 = vsub.f32 %v1367, %v1368
    %v1370 = vand.u32 %v1369, 4294901760
    %1371 = vmatpush1.msra.mxu0 %v1370
    %v1372 = vand.u32 %v1199, 4294901760
    %v1373 = vsub.f32 %v1199, %v1372
    %v1374 = vand.u32 %v1373, 4294901760
    %v1375 = vsub.f32 %v1373, %v1374
    %v1376 = vand.u32 %v1375, 4294901760
    %1377 = vmatprep.subr.mxu0 %v1376
    %v1378 = vand.u32 %v1198, 4294901760
    %v1379 = vsub.f32 %v1198, %v1378
    %v1380 = vand.u32 %v1379, 4294901760
    %v1381 = vsub.f32 %v1379, %v1380
    %v1382 = vand.u32 %v1381, 4294901760
    %1383 = vmatpush1.msra.mxu0 %v1382
    %v1384 = vand.u32 %v1197, 4294901760
    %v1385 = vsub.f32 %v1197, %v1384
    %v1386 = vand.u32 %v1385, 4294901760
    %v1387 = vsub.f32 %v1385, %v1386
    %v1388 = vand.u32 %v1387, 4294901760
    %1389 = vmatprep.subr.mxu0 %v1388
    %v1390 = vand.u32 %v1196, 4294901760
    %v1391 = vsub.f32 %v1196, %v1390
    %v1392 = vand.u32 %v1391, 4294901760
    %v1393 = vsub.f32 %v1391, %v1392
    %v1394 = vand.u32 %v1393, 4294901760
    %1395 = vmatpush1.msra.mxu0 %v1394
    %v1396 = vand.u32 %v1195, 4294901760
    %v1397 = vsub.f32 %v1195, %v1396
    %v1398 = vand.u32 %v1397, 4294901760
    %v1399 = vsub.f32 %v1397, %v1398
    %v1400 = vand.u32 %v1399, 4294901760
    %1401 = vmatprep.subr.mxu0 %v1400
    %v1402 = vand.u32 %v1194, 4294901760
    %v1403 = vsub.f32 %v1194, %v1402
    %v1404 = vand.u32 %v1403, 4294901760
    %v1405 = vsub.f32 %v1403, %v1404
    %v1406 = vand.u32 %v1405, 4294901760
    %1407 = vmatpush1.msra.mxu0 %v1406
    %v1408 = vand.u32 %v1193, 4294901760
    %v1409 = vsub.f32 %v1193, %v1408
    %v1410 = vand.u32 %v1409, 4294901760
    %v1411 = vsub.f32 %v1409, %v1410
    %v1412 = vand.u32 %v1411, 4294901760
    %1413 = vmatprep.subr.mxu0 %v1412
    %v1414 = vand.u32 %v1192, 4294901760
    %v1415 = vsub.f32 %v1192, %v1414
    %v1416 = vand.u32 %v1415, 4294901760
    %v1417 = vsub.f32 %v1415, %v1416
    %v1418 = vand.u32 %v1417, 4294901760
    %1419 = vmatpush1.msra.mxu0 %v1418
    %1420 = vmatprep.subr.mxu0 0.0
    %1421 = vmatpush2.msra.mxu0 0.0
    %1422 = vmatprep.subr.mxu0 0.0
    %1423 = vmatpush2.msra.mxu0 0.0
    %1424 = vmatprep.subr.mxu0 0.0
    %1425 = vmatpush2.msra.mxu0 0.0
    %1426 = vmatprep.subr.mxu0 0.0
    %1427 = vmatpush2.msra.mxu0 0.0
    %1428 = vmatprep.subr.mxu0 0.0
    %1429 = vmatpush2.msra.mxu0 0.0
    %1430 = vmatprep.subr.mxu0 0.0
    %1431 = vmatpush2.msra.mxu0 0.0
    %1432 = vmatprep.subr.mxu0 0.0
    %1433 = vmatpush2.msra.mxu0 0.0
    %1434 = vmatprep.subr.mxu0 0.0
    %1435 = vmatpush2.msra.mxu0 0.0
    %1436 = vmatprep.subr.mxu0 0.0
    %1437 = vmatpush2.msra.mxu0 0.0
    %1438 = vmatprep.subr.mxu0 0.0
    %1439 = vmatpush2.msra.mxu0 0.0
    %1440 = vmatprep.subr.mxu0 0.0
    %1441 = vmatpush2.msra.mxu0 0.0
    %1442 = vmatprep.subr.mxu0 0.0
    %1443 = vmatpush2.msra.mxu0 0.0
    %1444 = vmatprep.subr.mxu0 0.0
    %1445 = vmatpush2.msra.mxu0 0.0
    %1446 = vmatprep.subr.mxu0 0.0
    %1447 = vmatpush2.msra.mxu0 0.0
    %1448 = vmatprep.subr.mxu0 0.0
    %1449 = vmatpush2.msra.mxu0 0.0
    %1450 = vmatprep.subr.mxu0 0.0
    %1451 = vmatpush2.msra.mxu0 0.0
    %1452 = vmatprep.mubr.f32.mxu0 0.0
    %v1453 = vand.u32 %v1214, 4294901760
    %1454 = vmatmul.mubr.f32.gmra.mxu0 %v1453
    %v1455 = vpop.f32.mrf.mxu0
    %v1456 = vadd.f32 %v1304, %v1455
    %v1457 = vpop.f32.mrf.mxu0
    %v1458 = vadd.f32 %v1306, %v1457
    %1459 = vdwg.mxu0
    %1460 = vmatprep.subr.mxu0 0.0
    %1461 = vmatpush1.msra.mxu0 0.0
    %1462 = vmatprep.subr.mxu0 0.0
    %1463 = vmatpush1.msra.mxu0 0.0
    %1464 = vmatprep.subr.mxu0 0.0
    %1465 = vmatpush1.msra.mxu0 0.0
    %1466 = vmatprep.subr.mxu0 0.0
    %1467 = vmatpush1.msra.mxu0 0.0
    %1468 = vmatprep.subr.mxu0 0.0
    %1469 = vmatpush1.msra.mxu0 0.0
    %1470 = vmatprep.subr.mxu0 0.0
    %1471 = vmatpush1.msra.mxu0 0.0
    %1472 = vmatprep.subr.mxu0 0.0
    %1473 = vmatpush1.msra.mxu0 0.0
    %1474 = vmatprep.subr.mxu0 0.0
    %1475 = vmatpush1.msra.mxu0 0.0
    %v1476 = vand.u32 %v1207, 4294901760
    %v1477 = vsub.f32 %v1207, %v1476
    %1478 = vmatprep.subr.mxu0 %v1477
    %v1479 = vand.u32 %v1206, 4294901760
    %v1480 = vsub.f32 %v1206, %v1479
    %1481 = vmatpush1.msra.mxu0 %v1480
    %v1482 = vand.u32 %v1205, 4294901760
    %v1483 = vsub.f32 %v1205, %v1482
    %1484 = vmatprep.subr.mxu0 %v1483
    %v1485 = vand.u32 %v1204, 4294901760
    %v1486 = vsub.f32 %v1204, %v1485
    %1487 = vmatpush1.msra.mxu0 %v1486
    %v1488 = vand.u32 %v1203, 4294901760
    %v1489 = vsub.f32 %v1203, %v1488
    %1490 = vmatprep.subr.mxu0 %v1489
    %v1491 = vand.u32 %v1202, 4294901760
    %v1492 = vsub.f32 %v1202, %v1491
    %1493 = vmatpush1.msra.mxu0 %v1492
    %v1494 = vand.u32 %v1201, 4294901760
    %v1495 = vsub.f32 %v1201, %v1494
    %1496 = vmatprep.subr.mxu0 %v1495
    %v1497 = vand.u32 %v1200, 4294901760
    %v1498 = vsub.f32 %v1200, %v1497
    %1499 = vmatpush1.msra.mxu0 %v1498
    %v1500 = vand.u32 %v1199, 4294901760
    %v1501 = vsub.f32 %v1199, %v1500
    %1502 = vmatprep.subr.mxu0 %v1501
    %v1503 = vand.u32 %v1198, 4294901760
    %v1504 = vsub.f32 %v1198, %v1503
    %1505 = vmatpush1.msra.mxu0 %v1504
    %v1506 = vand.u32 %v1197, 4294901760
    %v1507 = vsub.f32 %v1197, %v1506
    %1508 = vmatprep.subr.mxu0 %v1507
    %v1509 = vand.u32 %v1196, 4294901760
    %v1510 = vsub.f32 %v1196, %v1509
    %1511 = vmatpush1.msra.mxu0 %v1510
    %v1512 = vand.u32 %v1195, 4294901760
    %v1513 = vsub.f32 %v1195, %v1512
    %1514 = vmatprep.subr.mxu0 %v1513
    %v1515 = vand.u32 %v1194, 4294901760
    %v1516 = vsub.f32 %v1194, %v1515
    %1517 = vmatpush1.msra.mxu0 %v1516
    %v1518 = vand.u32 %v1193, 4294901760
    %v1519 = vsub.f32 %v1193, %v1518
    %1520 = vmatprep.subr.mxu0 %v1519
    %v1521 = vand.u32 %v1192, 4294901760
    %v1522 = vsub.f32 %v1192, %v1521
    %1523 = vmatpush1.msra.mxu0 %v1522
    %1524 = vmatprep.subr.mxu0 0.0
    %1525 = vmatpush2.msra.mxu0 0.0
    %1526 = vmatprep.subr.mxu0 0.0
    %1527 = vmatpush2.msra.mxu0 0.0
    %1528 = vmatprep.subr.mxu0 0.0
    %1529 = vmatpush2.msra.mxu0 0.0
    %1530 = vmatprep.subr.mxu0 0.0
    %1531 = vmatpush2.msra.mxu0 0.0
    %1532 = vmatprep.subr.mxu0 0.0
    %1533 = vmatpush2.msra.mxu0 0.0
    %1534 = vmatprep.subr.mxu0 0.0
    %1535 = vmatpush2.msra.mxu0 0.0
    %1536 = vmatprep.subr.mxu0 0.0
    %1537 = vmatpush2.msra.mxu0 0.0
    %1538 = vmatprep.subr.mxu0 0.0
    %1539 = vmatpush2.msra.mxu0 0.0
    %1540 = vmatprep.subr.mxu0 0.0
    %1541 = vmatpush2.msra.mxu0 0.0
    %1542 = vmatprep.subr.mxu0 0.0
    %1543 = vmatpush2.msra.mxu0 0.0
    %1544 = vmatprep.subr.mxu0 0.0
    %1545 = vmatpush2.msra.mxu0 0.0
    %1546 = vmatprep.subr.mxu0 0.0
    %1547 = vmatpush2.msra.mxu0 0.0
    %1548 = vmatprep.subr.mxu0 0.0
    %1549 = vmatpush2.msra.mxu0 0.0
    %1550 = vmatprep.subr.mxu0 0.0
    %1551 = vmatpush2.msra.mxu0 0.0
    %1552 = vmatprep.subr.mxu0 0.0
    %1553 = vmatpush2.msra.mxu0 0.0
    %1554 = vmatprep.subr.mxu0 0.0
    %1555 = vmatpush2.msra.mxu0 0.0
    %1556 = vmatprep.mubr.f32.mxu0 0.0
    %v1557 = vand.u32 %v1214, 4294901760
    %v1558 = vsub.f32 %v1214, %v1557
    %1559 = vmatmul.mubr.f32.gmra.mxu0 %v1558
    %v1560 = vpop.f32.mrf.mxu0
    %v1561 = vadd.f32 %v1456, %v1560
    %v1562 = vpop.f32.mrf.mxu0
    %v1563 = vadd.f32 %v1458, %v1562
    %1564 = vdwg.mxu0
    %1565 = vmatprep.subr.mxu0 0.0
    %1566 = vmatpush1.msra.mxu0 0.0
    %1567 = vmatprep.subr.mxu0 0.0
    %1568 = vmatpush1.msra.mxu0 0.0
    %1569 = vmatprep.subr.mxu0 0.0
    %1570 = vmatpush1.msra.mxu0 0.0
    %1571 = vmatprep.subr.mxu0 0.0
    %1572 = vmatpush1.msra.mxu0 0.0
    %1573 = vmatprep.subr.mxu0 0.0
    %1574 = vmatpush1.msra.mxu0 0.0
    %1575 = vmatprep.subr.mxu0 0.0
    %1576 = vmatpush1.msra.mxu0 0.0
    %1577 = vmatprep.subr.mxu0 0.0
    %1578 = vmatpush1.msra.mxu0 0.0
    %1579 = vmatprep.subr.mxu0 0.0
    %1580 = vmatpush1.msra.mxu0 0.0
    %v1581 = vand.u32 %v1207, 4294901760
    %1582 = vmatprep.subr.mxu0 %v1581
    %v1583 = vand.u32 %v1206, 4294901760
    %1584 = vmatpush1.msra.mxu0 %v1583
    %v1585 = vand.u32 %v1205, 4294901760
    %1586 = vmatprep.subr.mxu0 %v1585
    %v1587 = vand.u32 %v1204, 4294901760
    %1588 = vmatpush1.msra.mxu0 %v1587
    %v1589 = vand.u32 %v1203, 4294901760
    %1590 = vmatprep.subr.mxu0 %v1589
    %v1591 = vand.u32 %v1202, 4294901760
    %1592 = vmatpush1.msra.mxu0 %v1591
    %v1593 = vand.u32 %v1201, 4294901760
    %1594 = vmatprep.subr.mxu0 %v1593
    %v1595 = vand.u32 %v1200, 4294901760
    %1596 = vmatpush1.msra.mxu0 %v1595
    %v1597 = vand.u32 %v1199, 4294901760
    %1598 = vmatprep.subr.mxu0 %v1597
    %v1599 = vand.u32 %v1198, 4294901760
    %1600 = vmatpush1.msra.mxu0 %v1599
    %v1601 = vand.u32 %v1197, 4294901760
    %1602 = vmatprep.subr.mxu0 %v1601
    %v1603 = vand.u32 %v1196, 4294901760
    %1604 = vmatpush1.msra.mxu0 %v1603
    %v1605 = vand.u32 %v1195, 4294901760
    %1606 = vmatprep.subr.mxu0 %v1605
    %v1607 = vand.u32 %v1194, 4294901760
    %1608 = vmatpush1.msra.mxu0 %v1607
    %v1609 = vand.u32 %v1193, 4294901760
    %1610 = vmatprep.subr.mxu0 %v1609
    %v1611 = vand.u32 %v1192, 4294901760
    %1612 = vmatpush1.msra.mxu0 %v1611
    %1613 = vmatprep.subr.mxu0 0.0
    %1614 = vmatpush2.msra.mxu0 0.0
    %1615 = vmatprep.subr.mxu0 0.0
    %1616 = vmatpush2.msra.mxu0 0.0
    %1617 = vmatprep.subr.mxu0 0.0
    %1618 = vmatpush2.msra.mxu0 0.0
    %1619 = vmatprep.subr.mxu0 0.0
    %1620 = vmatpush2.msra.mxu0 0.0
    %1621 = vmatprep.subr.mxu0 0.0
    %1622 = vmatpush2.msra.mxu0 0.0
    %1623 = vmatprep.subr.mxu0 0.0
    %1624 = vmatpush2.msra.mxu0 0.0
    %1625 = vmatprep.subr.mxu0 0.0
    %1626 = vmatpush2.msra.mxu0 0.0
    %1627 = vmatprep.subr.mxu0 0.0
    %1628 = vmatpush2.msra.mxu0 0.0
    %1629 = vmatprep.subr.mxu0 0.0
    %1630 = vmatpush2.msra.mxu0 0.0
    %1631 = vmatprep.subr.mxu0 0.0
    %1632 = vmatpush2.msra.mxu0 0.0
    %1633 = vmatprep.subr.mxu0 0.0
    %1634 = vmatpush2.msra.mxu0 0.0
    %1635 = vmatprep.subr.mxu0 0.0
    %1636 = vmatpush2.msra.mxu0 0.0
    %1637 = vmatprep.subr.mxu0 0.0
    %1638 = vmatpush2.msra.mxu0 0.0
    %1639 = vmatprep.subr.mxu0 0.0
    %1640 = vmatpush2.msra.mxu0 0.0
    %1641 = vmatprep.subr.mxu0 0.0
    %1642 = vmatpush2.msra.mxu0 0.0
    %1643 = vmatprep.subr.mxu0 0.0
    %1644 = vmatpush2.msra.mxu0 0.0
    %1645 = vmatprep.mubr.f32.mxu0 0.0
    %v1646 = vand.u32 %v1214, 4294901760
    %v1647 = vsub.f32 %v1214, %v1646
    %v1648 = vand.u32 %v1647, 4294901760
    %1649 = vmatmul.mubr.f32.gmra.mxu0 %v1648
    %v1650 = vpop.f32.mrf.mxu0
    %v1651 = vadd.f32 %v1561, %v1650
    %v1652 = vpop.f32.mrf.mxu0
    %v1653 = vadd.f32 %v1563, %v1652
    %1654 = vdwg.mxu0
    %1655 = vmatprep.subr.mxu0 0.0
    %1656 = vmatpush1.msra.mxu0 0.0
    %1657 = vmatprep.subr.mxu0 0.0
    %1658 = vmatpush1.msra.mxu0 0.0
    %1659 = vmatprep.subr.mxu0 0.0
    %1660 = vmatpush1.msra.mxu0 0.0
    %1661 = vmatprep.subr.mxu0 0.0
    %1662 = vmatpush1.msra.mxu0 0.0
    %1663 = vmatprep.subr.mxu0 0.0
    %1664 = vmatpush1.msra.mxu0 0.0
    %1665 = vmatprep.subr.mxu0 0.0
    %1666 = vmatpush1.msra.mxu0 0.0
    %1667 = vmatprep.subr.mxu0 0.0
    %1668 = vmatpush1.msra.mxu0 0.0
    %1669 = vmatprep.subr.mxu0 0.0
    %1670 = vmatpush1.msra.mxu0 0.0
    %v1671 = vand.u32 %v1207, 4294901760
    %v1672 = vsub.f32 %v1207, %v1671
    %v1673 = vand.u32 %v1672, 4294901760
    %1674 = vmatprep.subr.mxu0 %v1673
    %v1675 = vand.u32 %v1206, 4294901760
    %v1676 = vsub.f32 %v1206, %v1675
    %v1677 = vand.u32 %v1676, 4294901760
    %1678 = vmatpush1.msra.mxu0 %v1677
    %v1679 = vand.u32 %v1205, 4294901760
    %v1680 = vsub.f32 %v1205, %v1679
    %v1681 = vand.u32 %v1680, 4294901760
    %1682 = vmatprep.subr.mxu0 %v1681
    %v1683 = vand.u32 %v1204, 4294901760
    %v1684 = vsub.f32 %v1204, %v1683
    %v1685 = vand.u32 %v1684, 4294901760
    %1686 = vmatpush1.msra.mxu0 %v1685
    %v1687 = vand.u32 %v1203, 4294901760
    %v1688 = vsub.f32 %v1203, %v1687
    %v1689 = vand.u32 %v1688, 4294901760
    %1690 = vmatprep.subr.mxu0 %v1689
    %v1691 = vand.u32 %v1202, 4294901760
    %v1692 = vsub.f32 %v1202, %v1691
    %v1693 = vand.u32 %v1692, 4294901760
    %1694 = vmatpush1.msra.mxu0 %v1693
    %v1695 = vand.u32 %v1201, 4294901760
    %v1696 = vsub.f32 %v1201, %v1695
    %v1697 = vand.u32 %v1696, 4294901760
    %1698 = vmatprep.subr.mxu0 %v1697
    %v1699 = vand.u32 %v1200, 4294901760
    %v1700 = vsub.f32 %v1200, %v1699
    %v1701 = vand.u32 %v1700, 4294901760
    %1702 = vmatpush1.msra.mxu0 %v1701
    %v1703 = vand.u32 %v1199, 4294901760
    %v1704 = vsub.f32 %v1199, %v1703
    %v1705 = vand.u32 %v1704, 4294901760
    %1706 = vmatprep.subr.mxu0 %v1705
    %v1707 = vand.u32 %v1198, 4294901760
    %v1708 = vsub.f32 %v1198, %v1707
    %v1709 = vand.u32 %v1708, 4294901760
    %1710 = vmatpush1.msra.mxu0 %v1709
    %v1711 = vand.u32 %v1197, 4294901760
    %v1712 = vsub.f32 %v1197, %v1711
    %v1713 = vand.u32 %v1712, 4294901760
    %1714 = vmatprep.subr.mxu0 %v1713
    %v1715 = vand.u32 %v1196, 4294901760
    %v1716 = vsub.f32 %v1196, %v1715
    %v1717 = vand.u32 %v1716, 4294901760
    %1718 = vmatpush1.msra.mxu0 %v1717
    %v1719 = vand.u32 %v1195, 4294901760
    %v1720 = vsub.f32 %v1195, %v1719
    %v1721 = vand.u32 %v1720, 4294901760
    %1722 = vmatprep.subr.mxu0 %v1721
    %v1723 = vand.u32 %v1194, 4294901760
    %v1724 = vsub.f32 %v1194, %v1723
    %v1725 = vand.u32 %v1724, 4294901760
    %1726 = vmatpush1.msra.mxu0 %v1725
    %v1727 = vand.u32 %v1193, 4294901760
    %v1728 = vsub.f32 %v1193, %v1727
    %v1729 = vand.u32 %v1728, 4294901760
    %1730 = vmatprep.subr.mxu0 %v1729
    %v1731 = vand.u32 %v1192, 4294901760
    %v1732 = vsub.f32 %v1192, %v1731
    %v1733 = vand.u32 %v1732, 4294901760
    %1734 = vmatpush1.msra.mxu0 %v1733
    %1735 = vmatprep.subr.mxu0 0.0
    %1736 = vmatpush2.msra.mxu0 0.0
    %1737 = vmatprep.subr.mxu0 0.0
    %1738 = vmatpush2.msra.mxu0 0.0
    %1739 = vmatprep.subr.mxu0 0.0
    %1740 = vmatpush2.msra.mxu0 0.0
    %1741 = vmatprep.subr.mxu0 0.0
    %1742 = vmatpush2.msra.mxu0 0.0
    %1743 = vmatprep.subr.mxu0 0.0
    %1744 = vmatpush2.msra.mxu0 0.0
    %1745 = vmatprep.subr.mxu0 0.0
    %1746 = vmatpush2.msra.mxu0 0.0
    %1747 = vmatprep.subr.mxu0 0.0
    %1748 = vmatpush2.msra.mxu0 0.0
    %1749 = vmatprep.subr.mxu0 0.0
    %1750 = vmatpush2.msra.mxu0 0.0
    %1751 = vmatprep.subr.mxu0 0.0
    %1752 = vmatpush2.msra.mxu0 0.0
    %1753 = vmatprep.subr.mxu0 0.0
    %1754 = vmatpush2.msra.mxu0 0.0
    %1755 = vmatprep.subr.mxu0 0.0
    %1756 = vmatpush2.msra.mxu0 0.0
    %1757 = vmatprep.subr.mxu0 0.0
    %1758 = vmatpush2.msra.mxu0 0.0
    %1759 = vmatprep.subr.mxu0 0.0
    %1760 = vmatpush2.msra.mxu0 0.0
    %1761 = vmatprep.subr.mxu0 0.0
    %1762 = vmatpush2.msra.mxu0 0.0
    %1763 = vmatprep.subr.mxu0 0.0
    %1764 = vmatpush2.msra.mxu0 0.0
    %1765 = vmatprep.subr.mxu0 0.0
    %1766 = vmatpush2.msra.mxu0 0.0
    %1767 = vmatprep.mubr.f32.mxu0 0.0
    %v1768 = vand.u32 %v1214, 4294901760
    %1769 = vmatmul.mubr.f32.gmra.mxu0 %v1768
    %v1770 = vpop.f32.mrf.mxu0
    %v1771 = vadd.f32 %v1651, %v1770
    %v1772 = vpop.f32.mrf.mxu0
    %v1773 = vadd.f32 %v1653, %v1772
    %1774 = vdwg.mxu0
    %1775 = vmatprep.subr.mxu0 0.0
    %1776 = vmatpush1.msra.mxu0 0.0
    %1777 = vmatprep.subr.mxu0 0.0
    %1778 = vmatpush1.msra.mxu0 0.0
    %1779 = vmatprep.subr.mxu0 0.0
    %1780 = vmatpush1.msra.mxu0 0.0
    %1781 = vmatprep.subr.mxu0 0.0
    %1782 = vmatpush1.msra.mxu0 0.0
    %1783 = vmatprep.subr.mxu0 0.0
    %1784 = vmatpush1.msra.mxu0 0.0
    %1785 = vmatprep.subr.mxu0 0.0
    %1786 = vmatpush1.msra.mxu0 0.0
    %1787 = vmatprep.subr.mxu0 0.0
    %1788 = vmatpush1.msra.mxu0 0.0
    %1789 = vmatprep.subr.mxu0 0.0
    %1790 = vmatpush1.msra.mxu0 0.0
    %v1791 = vand.u32 %v1207, 4294901760
    %1792 = vmatprep.subr.mxu0 %v1791
    %v1793 = vand.u32 %v1206, 4294901760
    %1794 = vmatpush1.msra.mxu0 %v1793
    %v1795 = vand.u32 %v1205, 4294901760
    %1796 = vmatprep.subr.mxu0 %v1795
    %v1797 = vand.u32 %v1204, 4294901760
    %1798 = vmatpush1.msra.mxu0 %v1797
    %v1799 = vand.u32 %v1203, 4294901760
    %1800 = vmatprep.subr.mxu0 %v1799
    %v1801 = vand.u32 %v1202, 4294901760
    %1802 = vmatpush1.msra.mxu0 %v1801
    %v1803 = vand.u32 %v1201, 4294901760
    %1804 = vmatprep.subr.mxu0 %v1803
    %v1805 = vand.u32 %v1200, 4294901760
    %1806 = vmatpush1.msra.mxu0 %v1805
    %v1807 = vand.u32 %v1199, 4294901760
    %1808 = vmatprep.subr.mxu0 %v1807
    %v1809 = vand.u32 %v1198, 4294901760
    %1810 = vmatpush1.msra.mxu0 %v1809
    %v1811 = vand.u32 %v1197, 4294901760
    %1812 = vmatprep.subr.mxu0 %v1811
    %v1813 = vand.u32 %v1196, 4294901760
    %1814 = vmatpush1.msra.mxu0 %v1813
    %v1815 = vand.u32 %v1195, 4294901760
    %1816 = vmatprep.subr.mxu0 %v1815
    %v1817 = vand.u32 %v1194, 4294901760
    %1818 = vmatpush1.msra.mxu0 %v1817
    %v1819 = vand.u32 %v1193, 4294901760
    %1820 = vmatprep.subr.mxu0 %v1819
    %v1821 = vand.u32 %v1192, 4294901760
    %1822 = vmatpush1.msra.mxu0 %v1821
    %1823 = vmatprep.subr.mxu0 0.0
    %1824 = vmatpush2.msra.mxu0 0.0
    %1825 = vmatprep.subr.mxu0 0.0
    %1826 = vmatpush2.msra.mxu0 0.0
    %1827 = vmatprep.subr.mxu0 0.0
    %1828 = vmatpush2.msra.mxu0 0.0
    %1829 = vmatprep.subr.mxu0 0.0
    %1830 = vmatpush2.msra.mxu0 0.0
    %1831 = vmatprep.subr.mxu0 0.0
    %1832 = vmatpush2.msra.mxu0 0.0
    %1833 = vmatprep.subr.mxu0 0.0
    %1834 = vmatpush2.msra.mxu0 0.0
    %1835 = vmatprep.subr.mxu0 0.0
    %1836 = vmatpush2.msra.mxu0 0.0
    %1837 = vmatprep.subr.mxu0 0.0
    %1838 = vmatpush2.msra.mxu0 0.0
    %1839 = vmatprep.subr.mxu0 0.0
    %1840 = vmatpush2.msra.mxu0 0.0
    %1841 = vmatprep.subr.mxu0 0.0
    %1842 = vmatpush2.msra.mxu0 0.0
    %1843 = vmatprep.subr.mxu0 0.0
    %1844 = vmatpush2.msra.mxu0 0.0
    %1845 = vmatprep.subr.mxu0 0.0
    %1846 = vmatpush2.msra.mxu0 0.0
    %1847 = vmatprep.subr.mxu0 0.0
    %1848 = vmatpush2.msra.mxu0 0.0
    %1849 = vmatprep.subr.mxu0 0.0
    %1850 = vmatpush2.msra.mxu0 0.0
    %1851 = vmatprep.subr.mxu0 0.0
    %1852 = vmatpush2.msra.mxu0 0.0
    %1853 = vmatprep.subr.mxu0 0.0
    %1854 = vmatpush2.msra.mxu0 0.0
    %1855 = vmatprep.mubr.f32.mxu0 0.0
    %v1856 = vand.u32 %v1214, 4294901760
    %1857 = vmatmul.mubr.f32.gmra.mxu0 %v1856
    %v1858 = vpop.f32.mrf.mxu0
    %v1859 = vadd.f32 %v1771, %v1858
    %v1860 = vpop.f32.mrf.mxu0
    %v1861 = vadd.f32 %v1773, %v1860
    %1862 = vdwg.mxu0
    %v1863 = vadd.f32 %v1211, %v1859
    %v1864 = vadd.f32 %v1212, %v1861
    %v1865 = vxor.u32 %v1863, 2147483648
    %v1866 = vxor.u32 %v1864, 2147483648
    %v1867 = vmul.f32 %v1865, 1.442695
    %v1868 = vpow.pop %v1867
    %v1869 = vmul.f32 %v1866, 1.442695
    %v1870 = vpow.pop %v1869
    %v1871 = vadd.f32 %v1868, 1.0
    %v1872 = vadd.f32 %v1870, 1.0
    %v1873 = vrcp.pop %v1871
    %v1874 = vmul.f32 1.0, %v1873
    %v1875 = vrcp.pop %v1872
    %v1876 = vmul.f32 1.0, %v1875
    %v1877 = vtanh.pop %v1864
    %v1878 = vmul.f32 %v1874, 0.0
    %1880 = vrot.lane.b32.xlu0 %v1877, 64
    %v1881 = vpop.permute.xlu0 %1880
    %v1883 = vmul.f32 %v1874, %v1881
    %1885 = vrot.lane.b32.xlu0 %v1883, 64
    %v1886 = vpop.permute.xlu0 %1885
    %v1888 = vadd.f32 %v1878, %v1886
    %v1889 = vtanh.pop %v1888
    %1891 = vrot.lane.b32.xlu0 %v1889, 64
    %v1892 = vpop.permute.xlu0 %1891
    %v1894 = vmul.f32 %v1876, %v1892
    %s1895 = smul.u32 1, 2
    %s1896 = smul.addr %s1895, 8
    %s1897 = scalar_lea.vmem [#allocation2], %s1896
    %v1898 = vld [vmem:[%s1897] sm:$0xff]
    %v1899 = vld [vmem:[%s1897 + $0x8] sm:$0xff]
    %v1901 = vsel %vm161, %v1894, 0
    %1903 = vmatprep.subr.mxu0 0.0
    %1904 = vmatpush1.msra.mxu0 0.0
    %1905 = vmatprep.subr.mxu0 0.0
    %1906 = vmatpush1.msra.mxu0 0.0
    %1907 = vmatprep.subr.mxu0 0.0
    %1908 = vmatpush1.msra.mxu0 0.0
    %1909 = vmatprep.subr.mxu0 0.0
    %1910 = vmatpush1.msra.mxu0 0.0
    %1911 = vmatprep.subr.mxu0 0.0
    %1912 = vmatpush1.msra.mxu0 0.0
    %1913 = vmatprep.subr.mxu0 0.0
    %1914 = vmatpush1.msra.mxu0 0.0
    %1915 = vmatprep.subr.mxu0 0.0
    %1916 = vmatpush1.msra.mxu0 0.0
    %1917 = vmatprep.subr.mxu0 0.0
    %1918 = vmatpush1.msra.mxu0 0.0
    %v1919 = vand.u32 %v1207, 4294901760
    %1920 = vmatprep.subr.mxu0 %v1919
    %v1921 = vand.u32 %v1206, 4294901760
    %1922 = vmatpush1.msra.mxu0 %v1921
    %v1923 = vand.u32 %v1205, 4294901760
    %1924 = vmatprep.subr.mxu0 %v1923
    %v1925 = vand.u32 %v1204, 4294901760
    %1926 = vmatpush1.msra.mxu0 %v1925
    %v1927 = vand.u32 %v1203, 4294901760
    %1928 = vmatprep.subr.mxu0 %v1927
    %v1929 = vand.u32 %v1202, 4294901760
    %1930 = vmatpush1.msra.mxu0 %v1929
    %v1931 = vand.u32 %v1201, 4294901760
    %1932 = vmatprep.subr.mxu0 %v1931
    %v1933 = vand.u32 %v1200, 4294901760
    %1934 = vmatpush1.msra.mxu0 %v1933
    %v1935 = vand.u32 %v1199, 4294901760
    %1936 = vmatprep.subr.mxu0 %v1935
    %v1937 = vand.u32 %v1198, 4294901760
    %1938 = vmatpush1.msra.mxu0 %v1937
    %v1939 = vand.u32 %v1197, 4294901760
    %1940 = vmatprep.subr.mxu0 %v1939
    %v1941 = vand.u32 %v1196, 4294901760
    %1942 = vmatpush1.msra.mxu0 %v1941
    %v1943 = vand.u32 %v1195, 4294901760
    %1944 = vmatprep.subr.mxu0 %v1943
    %v1945 = vand.u32 %v1194, 4294901760
    %1946 = vmatpush1.msra.mxu0 %v1945
    %v1947 = vand.u32 %v1193, 4294901760
    %1948 = vmatprep.subr.mxu0 %v1947
    %v1949 = vand.u32 %v1192, 4294901760
    %1950 = vmatpush1.msra.mxu0 %v1949
    %1951 = vmatprep.subr.mxu0 0.0
    %1952 = vmatpush2.msra.mxu0 0.0
    %1953 = vmatprep.subr.mxu0 0.0
    %1954 = vmatpush2.msra.mxu0 0.0
    %1955 = vmatprep.subr.mxu0 0.0
    %1956 = vmatpush2.msra.mxu0 0.0
    %1957 = vmatprep.subr.mxu0 0.0
    %1958 = vmatpush2.msra.mxu0 0.0
    %1959 = vmatprep.subr.mxu0 0.0
    %1960 = vmatpush2.msra.mxu0 0.0
    %1961 = vmatprep.subr.mxu0 0.0
    %1962 = vmatpush2.msra.mxu0 0.0
    %1963 = vmatprep.subr.mxu0 0.0
    %1964 = vmatpush2.msra.mxu0 0.0
    %1965 = vmatprep.subr.mxu0 0.0
    %1966 = vmatpush2.msra.mxu0 0.0
    %1967 = vmatprep.subr.mxu0 0.0
    %1968 = vmatpush2.msra.mxu0 0.0
    %1969 = vmatprep.subr.mxu0 0.0
    %1970 = vmatpush2.msra.mxu0 0.0
    %1971 = vmatprep.subr.mxu0 0.0
    %1972 = vmatpush2.msra.mxu0 0.0
    %1973 = vmatprep.subr.mxu0 0.0
    %1974 = vmatpush2.msra.mxu0 0.0
    %1975 = vmatprep.subr.mxu0 0.0
    %1976 = vmatpush2.msra.mxu0 0.0
    %1977 = vmatprep.subr.mxu0 0.0
    %1978 = vmatpush2.msra.mxu0 0.0
    %1979 = vmatprep.subr.mxu0 0.0
    %1980 = vmatpush2.msra.mxu0 0.0
    %1981 = vmatprep.subr.mxu0 0.0
    %1982 = vmatpush2.msra.mxu0 0.0
    %1983 = vmatprep.mubr.f32.mxu0 0.0
    %v1984 = vand.u32 %v1901, 4294901760
    %v1985 = vsub.f32 %v1901, %v1984
    %v1986 = vand.u32 %v1985, 4294901760
    %v1987 = vsub.f32 %v1985, %v1986
    %v1988 = vand.u32 %v1987, 4294901760
    %1989 = vmatmul.mubr.f32.gmra.mxu0 %v1988
    %v1990 = vpop.f32.mrf.mxu0
    %v1991 = vadd.f32 0.0, %v1990
    %v1992 = vpop.f32.mrf.mxu0
    %v1993 = vadd.f32 0.0, %v1992
    %1994 = vdwg.mxu0
    %1995 = vmatprep.subr.mxu0 0.0
    %1996 = vmatpush1.msra.mxu0 0.0
    %1997 = vmatprep.subr.mxu0 0.0
    %1998 = vmatpush1.msra.mxu0 0.0
    %1999 = vmatprep.subr.mxu0 0.0
    %2000 = vmatpush1.msra.mxu0 0.0
    %2001 = vmatprep.subr.mxu0 0.0
    %2002 = vmatpush1.msra.mxu0 0.0
    %2003 = vmatprep.subr.mxu0 0.0
    %2004 = vmatpush1.msra.mxu0 0.0
    %2005 = vmatprep.subr.mxu0 0.0
    %2006 = vmatpush1.msra.mxu0 0.0
    %2007 = vmatprep.subr.mxu0 0.0
    %2008 = vmatpush1.msra.mxu0 0.0
    %2009 = vmatprep.subr.mxu0 0.0
    %2010 = vmatpush1.msra.mxu0 0.0
    %v2011 = vand.u32 %v1207, 4294901760
    %v2012 = vsub.f32 %v1207, %v2011
    %v2013 = vand.u32 %v2012, 4294901760
    %v2014 = vsub.f32 %v2012, %v2013
    %v2015 = vand.u32 %v2014, 4294901760
    %2016 = vmatprep.subr.mxu0 %v2015
    %v2017 = vand.u32 %v1206, 4294901760
    %v2018 = vsub.f32 %v1206, %v2017
    %v2019 = vand.u32 %v2018, 4294901760
    %v2020 = vsub.f32 %v2018, %v2019
    %v2021 = vand.u32 %v2020, 4294901760
    %2022 = vmatpush1.msra.mxu0 %v2021
    %v2023 = vand.u32 %v1205, 4294901760
    %v2024 = vsub.f32 %v1205, %v2023
    %v2025 = vand.u32 %v2024, 4294901760
    %v2026 = vsub.f32 %v2024, %v2025
    %v2027 = vand.u32 %v2026, 4294901760
    %2028 = vmatprep.subr.mxu0 %v2027
    %v2029 = vand.u32 %v1204, 4294901760
    %v2030 = vsub.f32 %v1204, %v2029
    %v2031 = vand.u32 %v2030, 4294901760
    %v2032 = vsub.f32 %v2030, %v2031
    %v2033 = vand.u32 %v2032, 4294901760
    %2034 = vmatpush1.msra.mxu0 %v2033
    %v2035 = vand.u32 %v1203, 4294901760
    %v2036 = vsub.f32 %v1203, %v2035
    %v2037 = vand.u32 %v2036, 4294901760
    %v2038 = vsub.f32 %v2036, %v2037
    %v2039 = vand.u32 %v2038, 4294901760
    %2040 = vmatprep.subr.mxu0 %v2039
    %v2041 = vand.u32 %v1202, 4294901760
    %v2042 = vsub.f32 %v1202, %v2041
    %v2043 = vand.u32 %v2042, 4294901760
    %v2044 = vsub.f32 %v2042, %v2043
    %v2045 = vand.u32 %v2044, 4294901760
    %2046 = vmatpush1.msra.mxu0 %v2045
    %v2047 = vand.u32 %v1201, 4294901760
    %v2048 = vsub.f32 %v1201, %v2047
    %v2049 = vand.u32 %v2048, 4294901760
    %v2050 = vsub.f32 %v2048, %v2049
    %v2051 = vand.u32 %v2050, 4294901760
    %2052 = vmatprep.subr.mxu0 %v2051
    %v2053 = vand.u32 %v1200, 4294901760
    %v2054 = vsub.f32 %v1200, %v2053
    %v2055 = vand.u32 %v2054, 4294901760
    %v2056 = vsub.f32 %v2054, %v2055
    %v2057 = vand.u32 %v2056, 4294901760
    %2058 = vmatpush1.msra.mxu0 %v2057
    %v2059 = vand.u32 %v1199, 4294901760
    %v2060 = vsub.f32 %v1199, %v2059
    %v2061 = vand.u32 %v2060, 4294901760
    %v2062 = vsub.f32 %v2060, %v2061
    %v2063 = vand.u32 %v2062, 4294901760
    %2064 = vmatprep.subr.mxu0 %v2063
    %v2065 = vand.u32 %v1198, 4294901760
    %v2066 = vsub.f32 %v1198, %v2065
    %v2067 = vand.u32 %v2066, 4294901760
    %v2068 = vsub.f32 %v2066, %v2067
    %v2069 = vand.u32 %v2068, 4294901760
    %2070 = vmatpush1.msra.mxu0 %v2069
    %v2071 = vand.u32 %v1197, 4294901760
    %v2072 = vsub.f32 %v1197, %v2071
    %v2073 = vand.u32 %v2072, 4294901760
    %v2074 = vsub.f32 %v2072, %v2073
    %v2075 = vand.u32 %v2074, 4294901760
    %2076 = vmatprep.subr.mxu0 %v2075
    %v2077 = vand.u32 %v1196, 4294901760
    %v2078 = vsub.f32 %v1196, %v2077
    %v2079 = vand.u32 %v2078, 4294901760
    %v2080 = vsub.f32 %v2078, %v2079
    %v2081 = vand.u32 %v2080, 4294901760
    %2082 = vmatpush1.msra.mxu0 %v2081
    %v2083 = vand.u32 %v1195, 4294901760
    %v2084 = vsub.f32 %v1195, %v2083
    %v2085 = vand.u32 %v2084, 4294901760
    %v2086 = vsub.f32 %v2084, %v2085
    %v2087 = vand.u32 %v2086, 4294901760
    %2088 = vmatprep.subr.mxu0 %v2087
    %v2089 = vand.u32 %v1194, 4294901760
    %v2090 = vsub.f32 %v1194, %v2089
    %v2091 = vand.u32 %v2090, 4294901760
    %v2092 = vsub.f32 %v2090, %v2091
    %v2093 = vand.u32 %v2092, 4294901760
    %2094 = vmatpush1.msra.mxu0 %v2093
    %v2095 = vand.u32 %v1193, 4294901760
    %v2096 = vsub.f32 %v1193, %v2095
    %v2097 = vand.u32 %v2096, 4294901760
    %v2098 = vsub.f32 %v2096, %v2097
    %v2099 = vand.u32 %v2098, 4294901760
    %2100 = vmatprep.subr.mxu0 %v2099
    %v2101 = vand.u32 %v1192, 4294901760
    %v2102 = vsub.f32 %v1192, %v2101
    %v2103 = vand.u32 %v2102, 4294901760
    %v2104 = vsub.f32 %v2102, %v2103
    %v2105 = vand.u32 %v2104, 4294901760
    %2106 = vmatpush1.msra.mxu0 %v2105
    %2107 = vmatprep.subr.mxu0 0.0
    %2108 = vmatpush2.msra.mxu0 0.0
    %2109 = vmatprep.subr.mxu0 0.0
    %2110 = vmatpush2.msra.mxu0 0.0
    %2111 = vmatprep.subr.mxu0 0.0
    %2112 = vmatpush2.msra.mxu0 0.0
    %2113 = vmatprep.subr.mxu0 0.0
    %2114 = vmatpush2.msra.mxu0 0.0
    %2115 = vmatprep.subr.mxu0 0.0
    %2116 = vmatpush2.msra.mxu0 0.0
    %2117 = vmatprep.subr.mxu0 0.0
    %2118 = vmatpush2.msra.mxu0 0.0
    %2119 = vmatprep.subr.mxu0 0.0
    %2120 = vmatpush2.msra.mxu0 0.0
    %2121 = vmatprep.subr.mxu0 0.0
    %2122 = vmatpush2.msra.mxu0 0.0
    %2123 = vmatprep.subr.mxu0 0.0
    %2124 = vmatpush2.msra.mxu0 0.0
    %2125 = vmatprep.subr.mxu0 0.0
    %2126 = vmatpush2.msra.mxu0 0.0
    %2127 = vmatprep.subr.mxu0 0.0
    %2128 = vmatpush2.msra.mxu0 0.0
    %2129 = vmatprep.subr.mxu0 0.0
    %2130 = vmatpush2.msra.mxu0 0.0
    %2131 = vmatprep.subr.mxu0 0.0
    %2132 = vmatpush2.msra.mxu0 0.0
    %2133 = vmatprep.subr.mxu0 0.0
    %2134 = vmatpush2.msra.mxu0 0.0
    %2135 = vmatprep.subr.mxu0 0.0
    %2136 = vmatpush2.msra.mxu0 0.0
    %2137 = vmatprep.subr.mxu0 0.0
    %2138 = vmatpush2.msra.mxu0 0.0
    %2139 = vmatprep.mubr.f32.mxu0 0.0
    %v2140 = vand.u32 %v1901, 4294901760
    %2141 = vmatmul.mubr.f32.gmra.mxu0 %v2140
    %v2142 = vpop.f32.mrf.mxu0
    %v2143 = vadd.f32 %v1991, %v2142
    %v2144 = vpop.f32.mrf.mxu0
    %v2145 = vadd.f32 %v1993, %v2144
    %2146 = vdwg.mxu0
    %2147 = vmatprep.subr.mxu0 0.0
    %2148 = vmatpush1.msra.mxu0 0.0
    %2149 = vmatprep.subr.mxu0 0.0
    %2150 = vmatpush1.msra.mxu0 0.0
    %2151 = vmatprep.subr.mxu0 0.0
    %2152 = vmatpush1.msra.mxu0 0.0
    %2153 = vmatprep.subr.mxu0 0.0
    %2154 = vmatpush1.msra.mxu0 0.0
    %2155 = vmatprep.subr.mxu0 0.0
    %2156 = vmatpush1.msra.mxu0 0.0
    %2157 = vmatprep.subr.mxu0 0.0
    %2158 = vmatpush1.msra.mxu0 0.0
    %2159 = vmatprep.subr.mxu0 0.0
    %2160 = vmatpush1.msra.mxu0 0.0
    %2161 = vmatprep.subr.mxu0 0.0
    %2162 = vmatpush1.msra.mxu0 0.0
    %v2163 = vand.u32 %v1207, 4294901760
    %v2164 = vsub.f32 %v1207, %v2163
    %2165 = vmatprep.subr.mxu0 %v2164
    %v2166 = vand.u32 %v1206, 4294901760
    %v2167 = vsub.f32 %v1206, %v2166
    %2168 = vmatpush1.msra.mxu0 %v2167
    %v2169 = vand.u32 %v1205, 4294901760
    %v2170 = vsub.f32 %v1205, %v2169
    %2171 = vmatprep.subr.mxu0 %v2170
    %v2172 = vand.u32 %v1204, 4294901760
    %v2173 = vsub.f32 %v1204, %v2172
    %2174 = vmatpush1.msra.mxu0 %v2173
    %v2175 = vand.u32 %v1203, 4294901760
    %v2176 = vsub.f32 %v1203, %v2175
    %2177 = vmatprep.subr.mxu0 %v2176
    %v2178 = vand.u32 %v1202, 4294901760
    %v2179 = vsub.f32 %v1202, %v2178
    %2180 = vmatpush1.msra.mxu0 %v2179
    %v2181 = vand.u32 %v1201, 4294901760
    %v2182 = vsub.f32 %v1201, %v2181
    %2183 = vmatprep.subr.mxu0 %v2182
    %v2184 = vand.u32 %v1200, 4294901760
    %v2185 = vsub.f32 %v1200, %v2184
    %2186 = vmatpush1.msra.mxu0 %v2185
    %v2187 = vand.u32 %v1199, 4294901760
    %v2188 = vsub.f32 %v1199, %v2187
    %2189 = vmatprep.subr.mxu0 %v2188
    %v2190 = vand.u32 %v1198, 4294901760
    %v2191 = vsub.f32 %v1198, %v2190
    %2192 = vmatpush1.msra.mxu0 %v2191
    %v2193 = vand.u32 %v1197, 4294901760
    %v2194 = vsub.f32 %v1197, %v2193
    %2195 = vmatprep.subr.mxu0 %v2194
    %v2196 = vand.u32 %v1196, 4294901760
    %v2197 = vsub.f32 %v1196, %v2196
    %2198 = vmatpush1.msra.mxu0 %v2197
    %v2199 = vand.u32 %v1195, 4294901760
    %v2200 = vsub.f32 %v1195, %v2199
    %2201 = vmatprep.subr.mxu0 %v2200
    %v2202 = vand.u32 %v1194, 4294901760
    %v2203 = vsub.f32 %v1194, %v2202
    %2204 = vmatpush1.msra.mxu0 %v2203
    %v2205 = vand.u32 %v1193, 4294901760
    %v2206 = vsub.f32 %v1193, %v2205
    %2207 = vmatprep.subr.mxu0 %v2206
    %v2208 = vand.u32 %v1192, 4294901760
    %v2209 = vsub.f32 %v1192, %v2208
    %2210 = vmatpush1.msra.mxu0 %v2209
    %2211 = vmatprep.subr.mxu0 0.0
    %2212 = vmatpush2.msra.mxu0 0.0
    %2213 = vmatprep.subr.mxu0 0.0
    %2214 = vmatpush2.msra.mxu0 0.0
    %2215 = vmatprep.subr.mxu0 0.0
    %2216 = vmatpush2.msra.mxu0 0.0
    %2217 = vmatprep.subr.mxu0 0.0
    %2218 = vmatpush2.msra.mxu0 0.0
    %2219 = vmatprep.subr.mxu0 0.0
    %2220 = vmatpush2.msra.mxu0 0.0
    %2221 = vmatprep.subr.mxu0 0.0
    %2222 = vmatpush2.msra.mxu0 0.0
    %2223 = vmatprep.subr.mxu0 0.0
    %2224 = vmatpush2.msra.mxu0 0.0
    %2225 = vmatprep.subr.mxu0 0.0
    %2226 = vmatpush2.msra.mxu0 0.0
    %2227 = vmatprep.subr.mxu0 0.0
    %2228 = vmatpush2.msra.mxu0 0.0
    %2229 = vmatprep.subr.mxu0 0.0
    %2230 = vmatpush2.msra.mxu0 0.0
    %2231 = vmatprep.subr.mxu0 0.0
    %2232 = vmatpush2.msra.mxu0 0.0
    %2233 = vmatprep.subr.mxu0 0.0
    %2234 = vmatpush2.msra.mxu0 0.0
    %2235 = vmatprep.subr.mxu0 0.0
    %2236 = vmatpush2.msra.mxu0 0.0
    %2237 = vmatprep.subr.mxu0 0.0
    %2238 = vmatpush2.msra.mxu0 0.0
    %2239 = vmatprep.subr.mxu0 0.0
    %2240 = vmatpush2.msra.mxu0 0.0
    %2241 = vmatprep.subr.mxu0 0.0
    %2242 = vmatpush2.msra.mxu0 0.0
    %2243 = vmatprep.mubr.f32.mxu0 0.0
    %v2244 = vand.u32 %v1901, 4294901760
    %v2245 = vsub.f32 %v1901, %v2244
    %2246 = vmatmul.mubr.f32.gmra.mxu0 %v2245
    %v2247 = vpop.f32.mrf.mxu0
    %v2248 = vadd.f32 %v2143, %v2247
    %v2249 = vpop.f32.mrf.mxu0
    %v2250 = vadd.f32 %v2145, %v2249
    %2251 = vdwg.mxu0
    %2252 = vmatprep.subr.mxu0 0.0
    %2253 = vmatpush1.msra.mxu0 0.0
    %2254 = vmatprep.subr.mxu0 0.0
    %2255 = vmatpush1.msra.mxu0 0.0
    %2256 = vmatprep.subr.mxu0 0.0
    %2257 = vmatpush1.msra.mxu0 0.0
    %2258 = vmatprep.subr.mxu0 0.0
    %2259 = vmatpush1.msra.mxu0 0.0
    %2260 = vmatprep.subr.mxu0 0.0
    %2261 = vmatpush1.msra.mxu0 0.0
    %2262 = vmatprep.subr.mxu0 0.0
    %2263 = vmatpush1.msra.mxu0 0.0
    %2264 = vmatprep.subr.mxu0 0.0
    %2265 = vmatpush1.msra.mxu0 0.0
    %2266 = vmatprep.subr.mxu0 0.0
    %2267 = vmatpush1.msra.mxu0 0.0
    %v2268 = vand.u32 %v1207, 4294901760
    %2269 = vmatprep.subr.mxu0 %v2268
    %v2270 = vand.u32 %v1206, 4294901760
    %2271 = vmatpush1.msra.mxu0 %v2270
    %v2272 = vand.u32 %v1205, 4294901760
    %2273 = vmatprep.subr.mxu0 %v2272
    %v2274 = vand.u32 %v1204, 4294901760
    %2275 = vmatpush1.msra.mxu0 %v2274
    %v2276 = vand.u32 %v1203, 4294901760
    %2277 = vmatprep.subr.mxu0 %v2276
    %v2278 = vand.u32 %v1202, 4294901760
    %2279 = vmatpush1.msra.mxu0 %v2278
    %v2280 = vand.u32 %v1201, 4294901760
    %2281 = vmatprep.subr.mxu0 %v2280
    %v2282 = vand.u32 %v1200, 4294901760
    %2283 = vmatpush1.msra.mxu0 %v2282
    %v2284 = vand.u32 %v1199, 4294901760
    %2285 = vmatprep.subr.mxu0 %v2284
    %v2286 = vand.u32 %v1198, 4294901760
    %2287 = vmatpush1.msra.mxu0 %v2286
    %v2288 = vand.u32 %v1197, 4294901760
    %2289 = vmatprep.subr.mxu0 %v2288
    %v2290 = vand.u32 %v1196, 4294901760
    %2291 = vmatpush1.msra.mxu0 %v2290
    %v2292 = vand.u32 %v1195, 4294901760
    %2293 = vmatprep.subr.mxu0 %v2292
    %v2294 = vand.u32 %v1194, 4294901760
    %2295 = vmatpush1.msra.mxu0 %v2294
    %v2296 = vand.u32 %v1193, 4294901760
    %2297 = vmatprep.subr.mxu0 %v2296
    %v2298 = vand.u32 %v1192, 4294901760
    %2299 = vmatpush1.msra.mxu0 %v2298
    %2300 = vmatprep.subr.mxu0 0.0
    %2301 = vmatpush2.msra.mxu0 0.0
    %2302 = vmatprep.subr.mxu0 0.0
    %2303 = vmatpush2.msra.mxu0 0.0
    %2304 = vmatprep.subr.mxu0 0.0
    %2305 = vmatpush2.msra.mxu0 0.0
    %2306 = vmatprep.subr.mxu0 0.0
    %2307 = vmatpush2.msra.mxu0 0.0
    %2308 = vmatprep.subr.mxu0 0.0
    %2309 = vmatpush2.msra.mxu0 0.0
    %2310 = vmatprep.subr.mxu0 0.0
    %2311 = vmatpush2.msra.mxu0 0.0
    %2312 = vmatprep.subr.mxu0 0.0
    %2313 = vmatpush2.msra.mxu0 0.0
    %2314 = vmatprep.subr.mxu0 0.0
    %2315 = vmatpush2.msra.mxu0 0.0
    %2316 = vmatprep.subr.mxu0 0.0
    %2317 = vmatpush2.msra.mxu0 0.0
    %2318 = vmatprep.subr.mxu0 0.0
    %2319 = vmatpush2.msra.mxu0 0.0
    %2320 = vmatprep.subr.mxu0 0.0
    %2321 = vmatpush2.msra.mxu0 0.0
    %2322 = vmatprep.subr.mxu0 0.0
    %2323 = vmatpush2.msra.mxu0 0.0
    %2324 = vmatprep.subr.mxu0 0.0
    %2325 = vmatpush2.msra.mxu0 0.0
    %2326 = vmatprep.subr.mxu0 0.0
    %2327 = vmatpush2.msra.mxu0 0.0
    %2328 = vmatprep.subr.mxu0 0.0
    %2329 = vmatpush2.msra.mxu0 0.0
    %2330 = vmatprep.subr.mxu0 0.0
    %2331 = vmatpush2.msra.mxu0 0.0
    %2332 = vmatprep.mubr.f32.mxu0 0.0
    %v2333 = vand.u32 %v1901, 4294901760
    %v2334 = vsub.f32 %v1901, %v2333
    %v2335 = vand.u32 %v2334, 4294901760
    %2336 = vmatmul.mubr.f32.gmra.mxu0 %v2335
    %v2337 = vpop.f32.mrf.mxu0
    %v2338 = vadd.f32 %v2248, %v2337
    %v2339 = vpop.f32.mrf.mxu0
    %v2340 = vadd.f32 %v2250, %v2339
    %2341 = vdwg.mxu0
    %2342 = vmatprep.subr.mxu0 0.0
    %2343 = vmatpush1.msra.mxu0 0.0
    %2344 = vmatprep.subr.mxu0 0.0
    %2345 = vmatpush1.msra.mxu0 0.0
    %2346 = vmatprep.subr.mxu0 0.0
    %2347 = vmatpush1.msra.mxu0 0.0
    %2348 = vmatprep.subr.mxu0 0.0
    %2349 = vmatpush1.msra.mxu0 0.0
    %2350 = vmatprep.subr.mxu0 0.0
    %2351 = vmatpush1.msra.mxu0 0.0
    %2352 = vmatprep.subr.mxu0 0.0
    %2353 = vmatpush1.msra.mxu0 0.0
    %2354 = vmatprep.subr.mxu0 0.0
    %2355 = vmatpush1.msra.mxu0 0.0
    %2356 = vmatprep.subr.mxu0 0.0
    %2357 = vmatpush1.msra.mxu0 0.0
    %v2358 = vand.u32 %v1207, 4294901760
    %v2359 = vsub.f32 %v1207, %v2358
    %v2360 = vand.u32 %v2359, 4294901760
    %2361 = vmatprep.subr.mxu0 %v2360
    %v2362 = vand.u32 %v1206, 4294901760
    %v2363 = vsub.f32 %v1206, %v2362
    %v2364 = vand.u32 %v2363, 4294901760
    %2365 = vmatpush1.msra.mxu0 %v2364
    %v2366 = vand.u32 %v1205, 4294901760
    %v2367 = vsub.f32 %v1205, %v2366
    %v2368 = vand.u32 %v2367, 4294901760
    %2369 = vmatprep.subr.mxu0 %v2368
    %v2370 = vand.u32 %v1204, 4294901760
    %v2371 = vsub.f32 %v1204, %v2370
    %v2372 = vand.u32 %v2371, 4294901760
    %2373 = vmatpush1.msra.mxu0 %v2372
    %v2374 = vand.u32 %v1203, 4294901760
    %v2375 = vsub.f32 %v1203, %v2374
    %v2376 = vand.u32 %v2375, 4294901760
    %2377 = vmatprep.subr.mxu0 %v2376
    %v2378 = vand.u32 %v1202, 4294901760
    %v2379 = vsub.f32 %v1202, %v2378
    %v2380 = vand.u32 %v2379, 4294901760
    %2381 = vmatpush1.msra.mxu0 %v2380
    %v2382 = vand.u32 %v1201, 4294901760
    %v2383 = vsub.f32 %v1201, %v2382
    %v2384 = vand.u32 %v2383, 4294901760
    %2385 = vmatprep.subr.mxu0 %v2384
    %v2386 = vand.u32 %v1200, 4294901760
    %v2387 = vsub.f32 %v1200, %v2386
    %v2388 = vand.u32 %v2387, 4294901760
    %2389 = vmatpush1.msra.mxu0 %v2388
    %v2390 = vand.u32 %v1199, 4294901760
    %v2391 = vsub.f32 %v1199, %v2390
    %v2392 = vand.u32 %v2391, 4294901760
    %2393 = vmatprep.subr.mxu0 %v2392
    %v2394 = vand.u32 %v1198, 4294901760
    %v2395 = vsub.f32 %v1198, %v2394
    %v2396 = vand.u32 %v2395, 4294901760
    %2397 = vmatpush1.msra.mxu0 %v2396
    %v2398 = vand.u32 %v1197, 4294901760
    %v2399 = vsub.f32 %v1197, %v2398
    %v2400 = vand.u32 %v2399, 4294901760
    %2401 = vmatprep.subr.mxu0 %v2400
    %v2402 = vand.u32 %v1196, 4294901760
    %v2403 = vsub.f32 %v1196, %v2402
    %v2404 = vand.u32 %v2403, 4294901760
    %2405 = vmatpush1.msra.mxu0 %v2404
    %v2406 = vand.u32 %v1195, 4294901760
    %v2407 = vsub.f32 %v1195, %v2406
    %v2408 = vand.u32 %v2407, 4294901760
    %2409 = vmatprep.subr.mxu0 %v2408
    %v2410 = vand.u32 %v1194, 4294901760
    %v2411 = vsub.f32 %v1194, %v2410
    %v2412 = vand.u32 %v2411, 4294901760
    %2413 = vmatpush1.msra.mxu0 %v2412
    %v2414 = vand.u32 %v1193, 4294901760
    %v2415 = vsub.f32 %v1193, %v2414
    %v2416 = vand.u32 %v2415, 4294901760
    %2417 = vmatprep.subr.mxu0 %v2416
    %v2418 = vand.u32 %v1192, 4294901760
    %v2419 = vsub.f32 %v1192, %v2418
    %v2420 = vand.u32 %v2419, 4294901760
    %2421 = vmatpush1.msra.mxu0 %v2420
    %2422 = vmatprep.subr.mxu0 0.0
    %2423 = vmatpush2.msra.mxu0 0.0
    %2424 = vmatprep.subr.mxu0 0.0
    %2425 = vmatpush2.msra.mxu0 0.0
    %2426 = vmatprep.subr.mxu0 0.0
    %2427 = vmatpush2.msra.mxu0 0.0
    %2428 = vmatprep.subr.mxu0 0.0
    %2429 = vmatpush2.msra.mxu0 0.0
    %2430 = vmatprep.subr.mxu0 0.0
    %2431 = vmatpush2.msra.mxu0 0.0
    %2432 = vmatprep.subr.mxu0 0.0
    %2433 = vmatpush2.msra.mxu0 0.0
    %2434 = vmatprep.subr.mxu0 0.0
    %2435 = vmatpush2.msra.mxu0 0.0
    %2436 = vmatprep.subr.mxu0 0.0
    %2437 = vmatpush2.msra.mxu0 0.0
    %2438 = vmatprep.subr.mxu0 0.0
    %2439 = vmatpush2.msra.mxu0 0.0
    %2440 = vmatprep.subr.mxu0 0.0
    %2441 = vmatpush2.msra.mxu0 0.0
    %2442 = vmatprep.subr.mxu0 0.0
    %2443 = vmatpush2.msra.mxu0 0.0
    %2444 = vmatprep.subr.mxu0 0.0
    %2445 = vmatpush2.msra.mxu0 0.0
    %2446 = vmatprep.subr.mxu0 0.0
    %2447 = vmatpush2.msra.mxu0 0.0
    %2448 = vmatprep.subr.mxu0 0.0
    %2449 = vmatpush2.msra.mxu0 0.0
    %2450 = vmatprep.subr.mxu0 0.0
    %2451 = vmatpush2.msra.mxu0 0.0
    %2452 = vmatprep.subr.mxu0 0.0
    %2453 = vmatpush2.msra.mxu0 0.0
    %2454 = vmatprep.mubr.f32.mxu0 0.0
    %v2455 = vand.u32 %v1901, 4294901760
    %2456 = vmatmul.mubr.f32.gmra.mxu0 %v2455
    %v2457 = vpop.f32.mrf.mxu0
    %v2458 = vadd.f32 %v2338, %v2457
    %v2459 = vpop.f32.mrf.mxu0
    %v2460 = vadd.f32 %v2340, %v2459
    %2461 = vdwg.mxu0
    %2462 = vmatprep.subr.mxu0 0.0
    %2463 = vmatpush1.msra.mxu0 0.0
    %2464 = vmatprep.subr.mxu0 0.0
    %2465 = vmatpush1.msra.mxu0 0.0
    %2466 = vmatprep.subr.mxu0 0.0
    %2467 = vmatpush1.msra.mxu0 0.0
    %2468 = vmatprep.subr.mxu0 0.0
    %2469 = vmatpush1.msra.mxu0 0.0
    %2470 = vmatprep.subr.mxu0 0.0
    %2471 = vmatpush1.msra.mxu0 0.0
    %2472 = vmatprep.subr.mxu0 0.0
    %2473 = vmatpush1.msra.mxu0 0.0
    %2474 = vmatprep.subr.mxu0 0.0
    %2475 = vmatpush1.msra.mxu0 0.0
    %2476 = vmatprep.subr.mxu0 0.0
    %2477 = vmatpush1.msra.mxu0 0.0
    %v2478 = vand.u32 %v1207, 4294901760
    %2479 = vmatprep.subr.mxu0 %v2478
    %v2480 = vand.u32 %v1206, 4294901760
    %2481 = vmatpush1.msra.mxu0 %v2480
    %v2482 = vand.u32 %v1205, 4294901760
    %2483 = vmatprep.subr.mxu0 %v2482
    %v2484 = vand.u32 %v1204, 4294901760
    %2485 = vmatpush1.msra.mxu0 %v2484
    %v2486 = vand.u32 %v1203, 4294901760
    %2487 = vmatprep.subr.mxu0 %v2486
    %v2488 = vand.u32 %v1202, 4294901760
    %2489 = vmatpush1.msra.mxu0 %v2488
    %v2490 = vand.u32 %v1201, 4294901760
    %2491 = vmatprep.subr.mxu0 %v2490
    %v2492 = vand.u32 %v1200, 4294901760
    %2493 = vmatpush1.msra.mxu0 %v2492
    %v2494 = vand.u32 %v1199, 4294901760
    %2495 = vmatprep.subr.mxu0 %v2494
    %v2496 = vand.u32 %v1198, 4294901760
    %2497 = vmatpush1.msra.mxu0 %v2496
    %v2498 = vand.u32 %v1197, 4294901760
    %2499 = vmatprep.subr.mxu0 %v2498
    %v2500 = vand.u32 %v1196, 4294901760
    %2501 = vmatpush1.msra.mxu0 %v2500
    %v2502 = vand.u32 %v1195, 4294901760
    %2503 = vmatprep.subr.mxu0 %v2502
    %v2504 = vand.u32 %v1194, 4294901760
    %2505 = vmatpush1.msra.mxu0 %v2504
    %v2506 = vand.u32 %v1193, 4294901760
    %2507 = vmatprep.subr.mxu0 %v2506
    %v2508 = vand.u32 %v1192, 4294901760
    %2509 = vmatpush1.msra.mxu0 %v2508
    %2510 = vmatprep.subr.mxu0 0.0
    %2511 = vmatpush2.msra.mxu0 0.0
    %2512 = vmatprep.subr.mxu0 0.0
    %2513 = vmatpush2.msra.mxu0 0.0
    %2514 = vmatprep.subr.mxu0 0.0
    %2515 = vmatpush2.msra.mxu0 0.0
    %2516 = vmatprep.subr.mxu0 0.0
    %2517 = vmatpush2.msra.mxu0 0.0
    %2518 = vmatprep.subr.mxu0 0.0
    %2519 = vmatpush2.msra.mxu0 0.0
    %2520 = vmatprep.subr.mxu0 0.0
    %2521 = vmatpush2.msra.mxu0 0.0
    %2522 = vmatprep.subr.mxu0 0.0
    %2523 = vmatpush2.msra.mxu0 0.0
    %2524 = vmatprep.subr.mxu0 0.0
    %2525 = vmatpush2.msra.mxu0 0.0
    %2526 = vmatprep.subr.mxu0 0.0
    %2527 = vmatpush2.msra.mxu0 0.0
    %2528 = vmatprep.subr.mxu0 0.0
    %2529 = vmatpush2.msra.mxu0 0.0
    %2530 = vmatprep.subr.mxu0 0.0
    %2531 = vmatpush2.msra.mxu0 0.0
    %2532 = vmatprep.subr.mxu0 0.0
    %2533 = vmatpush2.msra.mxu0 0.0
    %2534 = vmatprep.subr.mxu0 0.0
    %2535 = vmatpush2.msra.mxu0 0.0
    %2536 = vmatprep.subr.mxu0 0.0
    %2537 = vmatpush2.msra.mxu0 0.0
    %2538 = vmatprep.subr.mxu0 0.0
    %2539 = vmatpush2.msra.mxu0 0.0
    %2540 = vmatprep.subr.mxu0 0.0
    %2541 = vmatpush2.msra.mxu0 0.0
    %2542 = vmatprep.mubr.f32.mxu0 0.0
    %v2543 = vand.u32 %v1901, 4294901760
    %2544 = vmatmul.mubr.f32.gmra.mxu0 %v2543
    %v2545 = vpop.f32.mrf.mxu0
    %v2546 = vadd.f32 %v2458, %v2545
    %v2547 = vpop.f32.mrf.mxu0
    %v2548 = vadd.f32 %v2460, %v2547
    %2549 = vdwg.mxu0
    %v2550 = vadd.f32 %v1898, %v2546
    %v2551 = vadd.f32 %v1899, %v2548
    %v2552 = vxor.u32 %v2550, 2147483648
    %v2553 = vxor.u32 %v2551, 2147483648
    %v2554 = vmul.f32 %v2552, 1.442695
    %v2555 = vpow.pop %v2554
    %v2556 = vmul.f32 %v2553, 1.442695
    %v2557 = vpow.pop %v2556
    %v2558 = vadd.f32 %v2555, 1.0
    %v2559 = vadd.f32 %v2557, 1.0
    %v2560 = vrcp.pop %v2558
    %v2561 = vmul.f32 1.0, %v2560
    %v2562 = vrcp.pop %v2559
    %v2563 = vmul.f32 1.0, %v2562
    %v2564 = vtanh.pop %v2551
    %v2565 = vmul.f32 %v2561, %v1888
    %2567 = vrot.lane.b32.xlu0 %v2564, 64
    %v2568 = vpop.permute.xlu0 %2567
    %v2570 = vmul.f32 %v2561, %v2568
    %2572 = vrot.lane.b32.xlu0 %v2570, 64
    %v2573 = vpop.permute.xlu0 %2572
    %v2575 = vadd.f32 %v2565, %v2573
    %v2576 = vtanh.pop %v2575
    %2578 = vrot.lane.b32.xlu0 %v2576, 64
    %v2579 = vpop.permute.xlu0 %2578
    %v2581 = vmul.f32 %v2563, %v2579
    %v2582 = vmax.f32 %v1894, %v2581
    %s2583 = smul.u32 2, 2
    %s2584 = smul.addr %s2583, 8
    %s2585 = scalar_lea.vmem [#allocation2], %s2584
    %v2586 = vld [vmem:[%s2585] sm:$0xff]
    %v2587 = vld [vmem:[%s2585 + $0x8] sm:$0xff]
    %v2589 = vsel %vm161, %v2581, 0
    %2591 = vmatprep.subr.mxu0 0.0
    %2592 = vmatpush1.msra.mxu0 0.0
    %2593 = vmatprep.subr.mxu0 0.0
    %2594 = vmatpush1.msra.mxu0 0.0
    %2595 = vmatprep.subr.mxu0 0.0
    %2596 = vmatpush1.msra.mxu0 0.0
    %2597 = vmatprep.subr.mxu0 0.0
    %2598 = vmatpush1.msra.mxu0 0.0
    %2599 = vmatprep.subr.mxu0 0.0
    %2600 = vmatpush1.msra.mxu0 0.0
    %2601 = vmatprep.subr.mxu0 0.0
    %2602 = vmatpush1.msra.mxu0 0.0
    %2603 = vmatprep.subr.mxu0 0.0
    %2604 = vmatpush1.msra.mxu0 0.0
    %2605 = vmatprep.subr.mxu0 0.0
    %2606 = vmatpush1.msra.mxu0 0.0
    %v2607 = vand.u32 %v1207, 4294901760
    %2608 = vmatprep.subr.mxu0 %v2607
    %v2609 = vand.u32 %v1206, 4294901760
    %2610 = vmatpush1.msra.mxu0 %v2609
    %v2611 = vand.u32 %v1205, 4294901760
    %2612 = vmatprep.subr.mxu0 %v2611
    %v2613 = vand.u32 %v1204, 4294901760
    %2614 = vmatpush1.msra.mxu0 %v2613
    %v2615 = vand.u32 %v1203, 4294901760
    %2616 = vmatprep.subr.mxu0 %v2615
    %v2617 = vand.u32 %v1202, 4294901760
    %2618 = vmatpush1.msra.mxu0 %v2617
    %v2619 = vand.u32 %v1201, 4294901760
    %2620 = vmatprep.subr.mxu0 %v2619
    %v2621 = vand.u32 %v1200, 4294901760
    %2622 = vmatpush1.msra.mxu0 %v2621
    %v2623 = vand.u32 %v1199, 4294901760
    %2624 = vmatprep.subr.mxu0 %v2623
    %v2625 = vand.u32 %v1198, 4294901760
    %2626 = vmatpush1.msra.mxu0 %v2625
    %v2627 = vand.u32 %v1197, 4294901760
    %2628 = vmatprep.subr.mxu0 %v2627
    %v2629 = vand.u32 %v1196, 4294901760
    %2630 = vmatpush1.msra.mxu0 %v2629
    %v2631 = vand.u32 %v1195, 4294901760
    %2632 = vmatprep.subr.mxu0 %v2631
    %v2633 = vand.u32 %v1194, 4294901760
    %2634 = vmatpush1.msra.mxu0 %v2633
    %v2635 = vand.u32 %v1193, 4294901760
    %2636 = vmatprep.subr.mxu0 %v2635
    %v2637 = vand.u32 %v1192, 4294901760
    %2638 = vmatpush1.msra.mxu0 %v2637
    %2639 = vmatprep.subr.mxu0 0.0
    %2640 = vmatpush2.msra.mxu0 0.0
    %2641 = vmatprep.subr.mxu0 0.0
    %2642 = vmatpush2.msra.mxu0 0.0
    %2643 = vmatprep.subr.mxu0 0.0
    %2644 = vmatpush2.msra.mxu0 0.0
    %2645 = vmatprep.subr.mxu0 0.0
    %2646 = vmatpush2.msra.mxu0 0.0
    %2647 = vmatprep.subr.mxu0 0.0
    %2648 = vmatpush2.msra.mxu0 0.0
    %2649 = vmatprep.subr.mxu0 0.0
    %2650 = vmatpush2.msra.mxu0 0.0
    %2651 = vmatprep.subr.mxu0 0.0
    %2652 = vmatpush2.msra.mxu0 0.0
    %2653 = vmatprep.subr.mxu0 0.0
    %2654 = vmatpush2.msra.mxu0 0.0
    %2655 = vmatprep.subr.mxu0 0.0
    %2656 = vmatpush2.msra.mxu0 0.0
    %2657 = vmatprep.subr.mxu0 0.0
    %2658 = vmatpush2.msra.mxu0 0.0
    %2659 = vmatprep.subr.mxu0 0.0
    %2660 = vmatpush2.msra.mxu0 0.0
    %2661 = vmatprep.subr.mxu0 0.0
    %2662 = vmatpush2.msra.mxu0 0.0
    %2663 = vmatprep.subr.mxu0 0.0
    %2664 = vmatpush2.msra.mxu0 0.0
    %2665 = vmatprep.subr.mxu0 0.0
    %2666 = vmatpush2.msra.mxu0 0.0
    %2667 = vmatprep.subr.mxu0 0.0
    %2668 = vmatpush2.msra.mxu0 0.0
    %2669 = vmatprep.subr.mxu0 0.0
    %2670 = vmatpush2.msra.mxu0 0.0
    %2671 = vmatprep.mubr.f32.mxu0 0.0
    %v2672 = vand.u32 %v2589, 4294901760
    %v2673 = vsub.f32 %v2589, %v2672
    %v2674 = vand.u32 %v2673, 4294901760
    %v2675 = vsub.f32 %v2673, %v2674
    %v2676 = vand.u32 %v2675, 4294901760
    %2677 = vmatmul.mubr.f32.gmra.mxu0 %v2676
    %v2678 = vpop.f32.mrf.mxu0
    %v2679 = vadd.f32 0.0, %v2678
    %v2680 = vpop.f32.mrf.mxu0
    %v2681 = vadd.f32 0.0, %v2680
    %2682 = vdwg.mxu0
    %2683 = vmatprep.subr.mxu0 0.0
    %2684 = vmatpush1.msra.mxu0 0.0
    %2685 = vmatprep.subr.mxu0 0.0
    %2686 = vmatpush1.msra.mxu0 0.0
    %2687 = vmatprep.subr.mxu0 0.0
    %2688 = vmatpush1.msra.mxu0 0.0
    %2689 = vmatprep.subr.mxu0 0.0
    %2690 = vmatpush1.msra.mxu0 0.0
    %2691 = vmatprep.subr.mxu0 0.0
    %2692 = vmatpush1.msra.mxu0 0.0
    %2693 = vmatprep.subr.mxu0 0.0
    %2694 = vmatpush1.msra.mxu0 0.0
    %2695 = vmatprep.subr.mxu0 0.0
    %2696 = vmatpush1.msra.mxu0 0.0
    %2697 = vmatprep.subr.mxu0 0.0
    %2698 = vmatpush1.msra.mxu0 0.0
    %v2699 = vand.u32 %v1207, 4294901760
    %v2700 = vsub.f32 %v1207, %v2699
    %v2701 = vand.u32 %v2700, 4294901760
    %v2702 = vsub.f32 %v2700, %v2701
    %v2703 = vand.u32 %v2702, 4294901760
    %2704 = vmatprep.subr.mxu0 %v2703
    %v2705 = vand.u32 %v1206, 4294901760
    %v2706 = vsub.f32 %v1206, %v2705
    %v2707 = vand.u32 %v2706, 4294901760
    %v2708 = vsub.f32 %v2706, %v2707
    %v2709 = vand.u32 %v2708, 4294901760
    %2710 = vmatpush1.msra.mxu0 %v2709
    %v2711 = vand.u32 %v1205, 4294901760
    %v2712 = vsub.f32 %v1205, %v2711
    %v2713 = vand.u32 %v2712, 4294901760
    %v2714 = vsub.f32 %v2712, %v2713
    %v2715 = vand.u32 %v2714, 4294901760
    %2716 = vmatprep.subr.mxu0 %v2715
    %v2717 = vand.u32 %v1204, 4294901760
    %v2718 = vsub.f32 %v1204, %v2717
    %v2719 = vand.u32 %v2718, 4294901760
    %v2720 = vsub.f32 %v2718, %v2719
    %v2721 = vand.u32 %v2720, 4294901760
    %2722 = vmatpush1.msra.mxu0 %v2721
    %v2723 = vand.u32 %v1203, 4294901760
    %v2724 = vsub.f32 %v1203, %v2723
    %v2725 = vand.u32 %v2724, 4294901760
    %v2726 = vsub.f32 %v2724, %v2725
    %v2727 = vand.u32 %v2726, 4294901760
    %2728 = vmatprep.subr.mxu0 %v2727
    %v2729 = vand.u32 %v1202, 4294901760
    %v2730 = vsub.f32 %v1202, %v2729
    %v2731 = vand.u32 %v2730, 4294901760
    %v2732 = vsub.f32 %v2730, %v2731
    %v2733 = vand.u32 %v2732, 4294901760
    %2734 = vmatpush1.msra.mxu0 %v2733
    %v2735 = vand.u32 %v1201, 4294901760
    %v2736 = vsub.f32 %v1201, %v2735
    %v2737 = vand.u32 %v2736, 4294901760
    %v2738 = vsub.f32 %v2736, %v2737
    %v2739 = vand.u32 %v2738, 4294901760
    %2740 = vmatprep.subr.mxu0 %v2739
    %v2741 = vand.u32 %v1200, 4294901760
    %v2742 = vsub.f32 %v1200, %v2741
    %v2743 = vand.u32 %v2742, 4294901760
    %v2744 = vsub.f32 %v2742, %v2743
    %v2745 = vand.u32 %v2744, 4294901760
    %2746 = vmatpush1.msra.mxu0 %v2745
    %v2747 = vand.u32 %v1199, 4294901760
    %v2748 = vsub.f32 %v1199, %v2747
    %v2749 = vand.u32 %v2748, 4294901760
    %v2750 = vsub.f32 %v2748, %v2749
    %v2751 = vand.u32 %v2750, 4294901760
    %2752 = vmatprep.subr.mxu0 %v2751
    %v2753 = vand.u32 %v1198, 4294901760
    %v2754 = vsub.f32 %v1198, %v2753
    %v2755 = vand.u32 %v2754, 4294901760
    %v2756 = vsub.f32 %v2754, %v2755
    %v2757 = vand.u32 %v2756, 4294901760
    %2758 = vmatpush1.msra.mxu0 %v2757
    %v2759 = vand.u32 %v1197, 4294901760
    %v2760 = vsub.f32 %v1197, %v2759
    %v2761 = vand.u32 %v2760, 4294901760
    %v2762 = vsub.f32 %v2760, %v2761
    %v2763 = vand.u32 %v2762, 4294901760
    %2764 = vmatprep.subr.mxu0 %v2763
    %v2765 = vand.u32 %v1196, 4294901760
    %v2766 = vsub.f32 %v1196, %v2765
    %v2767 = vand.u32 %v2766, 4294901760
    %v2768 = vsub.f32 %v2766, %v2767
    %v2769 = vand.u32 %v2768, 4294901760
    %2770 = vmatpush1.msra.mxu0 %v2769
    %v2771 = vand.u32 %v1195, 4294901760
    %v2772 = vsub.f32 %v1195, %v2771
    %v2773 = vand.u32 %v2772, 4294901760
    %v2774 = vsub.f32 %v2772, %v2773
    %v2775 = vand.u32 %v2774, 4294901760
    %2776 = vmatprep.subr.mxu0 %v2775
    %v2777 = vand.u32 %v1194, 4294901760
    %v2778 = vsub.f32 %v1194, %v2777
    %v2779 = vand.u32 %v2778, 4294901760
    %v2780 = vsub.f32 %v2778, %v2779
    %v2781 = vand.u32 %v2780, 4294901760
    %2782 = vmatpush1.msra.mxu0 %v2781
    %v2783 = vand.u32 %v1193, 4294901760
    %v2784 = vsub.f32 %v1193, %v2783
    %v2785 = vand.u32 %v2784, 4294901760
    %v2786 = vsub.f32 %v2784, %v2785
    %v2787 = vand.u32 %v2786, 4294901760
    %2788 = vmatprep.subr.mxu0 %v2787
    %v2789 = vand.u32 %v1192, 4294901760
    %v2790 = vsub.f32 %v1192, %v2789
    %v2791 = vand.u32 %v2790, 4294901760
    %v2792 = vsub.f32 %v2790, %v2791
    %v2793 = vand.u32 %v2792, 4294901760
    %2794 = vmatpush1.msra.mxu0 %v2793
    %2795 = vmatprep.subr.mxu0 0.0
    %2796 = vmatpush2.msra.mxu0 0.0
    %2797 = vmatprep.subr.mxu0 0.0
    %2798 = vmatpush2.msra.mxu0 0.0
    %2799 = vmatprep.subr.mxu0 0.0
    %2800 = vmatpush2.msra.mxu0 0.0
    %2801 = vmatprep.subr.mxu0 0.0
    %2802 = vmatpush2.msra.mxu0 0.0
    %2803 = vmatprep.subr.mxu0 0.0
    %2804 = vmatpush2.msra.mxu0 0.0
    %2805 = vmatprep.subr.mxu0 0.0
    %2806 = vmatpush2.msra.mxu0 0.0
    %2807 = vmatprep.subr.mxu0 0.0
    %2808 = vmatpush2.msra.mxu0 0.0
    %2809 = vmatprep.subr.mxu0 0.0
    %2810 = vmatpush2.msra.mxu0 0.0
    %2811 = vmatprep.subr.mxu0 0.0
    %2812 = vmatpush2.msra.mxu0 0.0
    %2813 = vmatprep.subr.mxu0 0.0
    %2814 = vmatpush2.msra.mxu0 0.0
    %2815 = vmatprep.subr.mxu0 0.0
    %2816 = vmatpush2.msra.mxu0 0.0
    %2817 = vmatprep.subr.mxu0 0.0
    %2818 = vmatpush2.msra.mxu0 0.0
    %2819 = vmatprep.subr.mxu0 0.0
    %2820 = vmatpush2.msra.mxu0 0.0
    %2821 = vmatprep.subr.mxu0 0.0
    %2822 = vmatpush2.msra.mxu0 0.0
    %2823 = vmatprep.subr.mxu0 0.0
    %2824 = vmatpush2.msra.mxu0 0.0
    %2825 = vmatprep.subr.mxu0 0.0
    %2826 = vmatpush2.msra.mxu0 0.0
    %2827 = vmatprep.mubr.f32.mxu0 0.0
    %v2828 = vand.u32 %v2589, 4294901760
    %2829 = vmatmul.mubr.f32.gmra.mxu0 %v2828
    %v2830 = vpop.f32.mrf.mxu0
    %v2831 = vadd.f32 %v2679, %v2830
    %v2832 = vpop.f32.mrf.mxu0
    %v2833 = vadd.f32 %v2681, %v2832
    %2834 = vdwg.mxu0
    %2835 = vmatprep.subr.mxu0 0.0
    %2836 = vmatpush1.msra.mxu0 0.0
    %2837 = vmatprep.subr.mxu0 0.0
    %2838 = vmatpush1.msra.mxu0 0.0
    %2839 = vmatprep.subr.mxu0 0.0
    %2840 = vmatpush1.msra.mxu0 0.0
    %2841 = vmatprep.subr.mxu0 0.0
    %2842 = vmatpush1.msra.mxu0 0.0
    %2843 = vmatprep.subr.mxu0 0.0
    %2844 = vmatpush1.msra.mxu0 0.0
    %2845 = vmatprep.subr.mxu0 0.0
    %2846 = vmatpush1.msra.mxu0 0.0
    %2847 = vmatprep.subr.mxu0 0.0
    %2848 = vmatpush1.msra.mxu0 0.0
    %2849 = vmatprep.subr.mxu0 0.0
    %2850 = vmatpush1.msra.mxu0 0.0
    %v2851 = vand.u32 %v1207, 4294901760
    %v2852 = vsub.f32 %v1207, %v2851
    %2853 = vmatprep.subr.mxu0 %v2852
    %v2854 = vand.u32 %v1206, 4294901760
    %v2855 = vsub.f32 %v1206, %v2854
    %2856 = vmatpush1.msra.mxu0 %v2855
    %v2857 = vand.u32 %v1205, 4294901760
    %v2858 = vsub.f32 %v1205, %v2857
    %2859 = vmatprep.subr.mxu0 %v2858
    %v2860 = vand.u32 %v1204, 4294901760
    %v2861 = vsub.f32 %v1204, %v2860
    %2862 = vmatpush1.msra.mxu0 %v2861
    %v2863 = vand.u32 %v1203, 4294901760
    %v2864 = vsub.f32 %v1203, %v2863
    %2865 = vmatprep.subr.mxu0 %v2864
    %v2866 = vand.u32 %v1202, 4294901760
    %v2867 = vsub.f32 %v1202, %v2866
    %2868 = vmatpush1.msra.mxu0 %v2867
    %v2869 = vand.u32 %v1201, 4294901760
    %v2870 = vsub.f32 %v1201, %v2869
    %2871 = vmatprep.subr.mxu0 %v2870
    %v2872 = vand.u32 %v1200, 4294901760
    %v2873 = vsub.f32 %v1200, %v2872
    %2874 = vmatpush1.msra.mxu0 %v2873
    %v2875 = vand.u32 %v1199, 4294901760
    %v2876 = vsub.f32 %v1199, %v2875
    %2877 = vmatprep.subr.mxu0 %v2876
    %v2878 = vand.u32 %v1198, 4294901760
    %v2879 = vsub.f32 %v1198, %v2878
    %2880 = vmatpush1.msra.mxu0 %v2879
    %v2881 = vand.u32 %v1197, 4294901760
    %v2882 = vsub.f32 %v1197, %v2881
    %2883 = vmatprep.subr.mxu0 %v2882
    %v2884 = vand.u32 %v1196, 4294901760
    %v2885 = vsub.f32 %v1196, %v2884
    %2886 = vmatpush1.msra.mxu0 %v2885
    %v2887 = vand.u32 %v1195, 4294901760
    %v2888 = vsub.f32 %v1195, %v2887
    %2889 = vmatprep.subr.mxu0 %v2888
    %v2890 = vand.u32 %v1194, 4294901760
    %v2891 = vsub.f32 %v1194, %v2890
    %2892 = vmatpush1.msra.mxu0 %v2891
    %v2893 = vand.u32 %v1193, 4294901760
    %v2894 = vsub.f32 %v1193, %v2893
    %2895 = vmatprep.subr.mxu0 %v2894
    %v2896 = vand.u32 %v1192, 4294901760
    %v2897 = vsub.f32 %v1192, %v2896
    %2898 = vmatpush1.msra.mxu0 %v2897
    %2899 = vmatprep.subr.mxu0 0.0
    %2900 = vmatpush2.msra.mxu0 0.0
    %2901 = vmatprep.subr.mxu0 0.0
    %2902 = vmatpush2.msra.mxu0 0.0
    %2903 = vmatprep.subr.mxu0 0.0
    %2904 = vmatpush2.msra.mxu0 0.0
    %2905 = vmatprep.subr.mxu0 0.0
    %2906 = vmatpush2.msra.mxu0 0.0
    %2907 = vmatprep.subr.mxu0 0.0
    %2908 = vmatpush2.msra.mxu0 0.0
    %2909 = vmatprep.subr.mxu0 0.0
    %2910 = vmatpush2.msra.mxu0 0.0
    %2911 = vmatprep.subr.mxu0 0.0
    %2912 = vmatpush2.msra.mxu0 0.0
    %2913 = vmatprep.subr.mxu0 0.0
    %2914 = vmatpush2.msra.mxu0 0.0
    %2915 = vmatprep.subr.mxu0 0.0
    %2916 = vmatpush2.msra.mxu0 0.0
    %2917 = vmatprep.subr.mxu0 0.0
    %2918 = vmatpush2.msra.mxu0 0.0
    %2919 = vmatprep.subr.mxu0 0.0
    %2920 = vmatpush2.msra.mxu0 0.0
    %2921 = vmatprep.subr.mxu0 0.0
    %2922 = vmatpush2.msra.mxu0 0.0
    %2923 = vmatprep.subr.mxu0 0.0
    %2924 = vmatpush2.msra.mxu0 0.0
    %2925 = vmatprep.subr.mxu0 0.0
    %2926 = vmatpush2.msra.mxu0 0.0
    %2927 = vmatprep.subr.mxu0 0.0
    %2928 = vmatpush2.msra.mxu0 0.0
    %2929 = vmatprep.subr.mxu0 0.0
    %2930 = vmatpush2.msra.mxu0 0.0
    %2931 = vmatprep.mubr.f32.mxu0 0.0
    %v2932 = vand.u32 %v2589, 4294901760
    %v2933 = vsub.f32 %v2589, %v2932
    %2934 = vmatmul.mubr.f32.gmra.mxu0 %v2933
    %v2935 = vpop.f32.mrf.mxu0
    %v2936 = vadd.f32 %v2831, %v2935
    %v2937 = vpop.f32.mrf.mxu0
    %v2938 = vadd.f32 %v2833, %v2937
    %2939 = vdwg.mxu0
    %2940 = vmatprep.subr.mxu0 0.0
    %2941 = vmatpush1.msra.mxu0 0.0
    %2942 = vmatprep.subr.mxu0 0.0
    %2943 = vmatpush1.msra.mxu0 0.0
    %2944 = vmatprep.subr.mxu0 0.0
    %2945 = vmatpush1.msra.mxu0 0.0
    %2946 = vmatprep.subr.mxu0 0.0
    %2947 = vmatpush1.msra.mxu0 0.0
    %2948 = vmatprep.subr.mxu0 0.0
    %2949 = vmatpush1.msra.mxu0 0.0
    %2950 = vmatprep.subr.mxu0 0.0
    %2951 = vmatpush1.msra.mxu0 0.0
    %2952 = vmatprep.subr.mxu0 0.0
    %2953 = vmatpush1.msra.mxu0 0.0
    %2954 = vmatprep.subr.mxu0 0.0
    %2955 = vmatpush1.msra.mxu0 0.0
    %v2956 = vand.u32 %v1207, 4294901760
    %2957 = vmatprep.subr.mxu0 %v2956
    %v2958 = vand.u32 %v1206, 4294901760
    %2959 = vmatpush1.msra.mxu0 %v2958
    %v2960 = vand.u32 %v1205, 4294901760
    %2961 = vmatprep.subr.mxu0 %v2960
    %v2962 = vand.u32 %v1204, 4294901760
    %2963 = vmatpush1.msra.mxu0 %v2962
    %v2964 = vand.u32 %v1203, 4294901760
    %2965 = vmatprep.subr.mxu0 %v2964
    %v2966 = vand.u32 %v1202, 4294901760
    %2967 = vmatpush1.msra.mxu0 %v2966
    %v2968 = vand.u32 %v1201, 4294901760
    %2969 = vmatprep.subr.mxu0 %v2968
    %v2970 = vand.u32 %v1200, 4294901760
    %2971 = vmatpush1.msra.mxu0 %v2970
    %v2972 = vand.u32 %v1199, 4294901760
    %2973 = vmatprep.subr.mxu0 %v2972
    %v2974 = vand.u32 %v1198, 4294901760
    %2975 = vmatpush1.msra.mxu0 %v2974
    %v2976 = vand.u32 %v1197, 4294901760
    %2977 = vmatprep.subr.mxu0 %v2976
    %v2978 = vand.u32 %v1196, 4294901760
    %2979 = vmatpush1.msra.mxu0 %v2978
    %v2980 = vand.u32 %v1195, 4294901760
    %2981 = vmatprep.subr.mxu0 %v2980
    %v2982 = vand.u32 %v1194, 4294901760
    %2983 = vmatpush1.msra.mxu0 %v2982
    %v2984 = vand.u32 %v1193, 4294901760
    %2985 = vmatprep.subr.mxu0 %v2984
    %v2986 = vand.u32 %v1192, 4294901760
    %2987 = vmatpush1.msra.mxu0 %v2986
    %2988 = vmatprep.subr.mxu0 0.0
    %2989 = vmatpush2.msra.mxu0 0.0
    %2990 = vmatprep.subr.mxu0 0.0
    %2991 = vmatpush2.msra.mxu0 0.0
    %2992 = vmatprep.subr.mxu0 0.0
    %2993 = vmatpush2.msra.mxu0 0.0
    %2994 = vmatprep.subr.mxu0 0.0
    %2995 = vmatpush2.msra.mxu0 0.0
    %2996 = vmatprep.subr.mxu0 0.0
    %2997 = vmatpush2.msra.mxu0 0.0
    %2998 = vmatprep.subr.mxu0 0.0
    %2999 = vmatpush2.msra.mxu0 0.0
    %3000 = vmatprep.subr.mxu0 0.0
    %3001 = vmatpush2.msra.mxu0 0.0
    %3002 = vmatprep.subr.mxu0 0.0
    %3003 = vmatpush2.msra.mxu0 0.0
    %3004 = vmatprep.subr.mxu0 0.0
    %3005 = vmatpush2.msra.mxu0 0.0
    %3006 = vmatprep.subr.mxu0 0.0
    %3007 = vmatpush2.msra.mxu0 0.0
    %3008 = vmatprep.subr.mxu0 0.0
    %3009 = vmatpush2.msra.mxu0 0.0
    %3010 = vmatprep.subr.mxu0 0.0
    %3011 = vmatpush2.msra.mxu0 0.0
    %3012 = vmatprep.subr.mxu0 0.0
    %3013 = vmatpush2.msra.mxu0 0.0
    %3014 = vmatprep.subr.mxu0 0.0
    %3015 = vmatpush2.msra.mxu0 0.0
    %3016 = vmatprep.subr.mxu0 0.0
    %3017 = vmatpush2.msra.mxu0 0.0
    %3018 = vmatprep.subr.mxu0 0.0
    %3019 = vmatpush2.msra.mxu0 0.0
    %3020 = vmatprep.mubr.f32.mxu0 0.0
    %v3021 = vand.u32 %v2589, 4294901760
    %v3022 = vsub.f32 %v2589, %v3021
    %v3023 = vand.u32 %v3022, 4294901760
    %3024 = vmatmul.mubr.f32.gmra.mxu0 %v3023
    %v3025 = vpop.f32.mrf.mxu0
    %v3026 = vadd.f32 %v2936, %v3025
    %v3027 = vpop.f32.mrf.mxu0
    %v3028 = vadd.f32 %v2938, %v3027
    %3029 = vdwg.mxu0
    %3030 = vmatprep.subr.mxu0 0.0
    %3031 = vmatpush1.msra.mxu0 0.0
    %3032 = vmatprep.subr.mxu0 0.0
    %3033 = vmatpush1.msra.mxu0 0.0
    %3034 = vmatprep.subr.mxu0 0.0
    %3035 = vmatpush1.msra.mxu0 0.0
    %3036 = vmatprep.subr.mxu0 0.0
    %3037 = vmatpush1.msra.mxu0 0.0
    %3038 = vmatprep.subr.mxu0 0.0
    %3039 = vmatpush1.msra.mxu0 0.0
    %3040 = vmatprep.subr.mxu0 0.0
    %3041 = vmatpush1.msra.mxu0 0.0
    %3042 = vmatprep.subr.mxu0 0.0
    %3043 = vmatpush1.msra.mxu0 0.0
    %3044 = vmatprep.subr.mxu0 0.0
    %3045 = vmatpush1.msra.mxu0 0.0
    %v3046 = vand.u32 %v1207, 4294901760
    %v3047 = vsub.f32 %v1207, %v3046
    %v3048 = vand.u32 %v3047, 4294901760
    %3049 = vmatprep.subr.mxu0 %v3048
    %v3050 = vand.u32 %v1206, 4294901760
    %v3051 = vsub.f32 %v1206, %v3050
    %v3052 = vand.u32 %v3051, 4294901760
    %3053 = vmatpush1.msra.mxu0 %v3052
    %v3054 = vand.u32 %v1205, 4294901760
    %v3055 = vsub.f32 %v1205, %v3054
    %v3056 = vand.u32 %v3055, 4294901760
    %3057 = vmatprep.subr.mxu0 %v3056
    %v3058 = vand.u32 %v1204, 4294901760
    %v3059 = vsub.f32 %v1204, %v3058
    %v3060 = vand.u32 %v3059, 4294901760
    %3061 = vmatpush1.msra.mxu0 %v3060
    %v3062 = vand.u32 %v1203, 4294901760
    %v3063 = vsub.f32 %v1203, %v3062
    %v3064 = vand.u32 %v3063, 4294901760
    %3065 = vmatprep.subr.mxu0 %v3064
    %v3066 = vand.u32 %v1202, 4294901760
    %v3067 = vsub.f32 %v1202, %v3066
    %v3068 = vand.u32 %v3067, 4294901760
    %3069 = vmatpush1.msra.mxu0 %v3068
    %v3070 = vand.u32 %v1201, 4294901760
    %v3071 = vsub.f32 %v1201, %v3070
    %v3072 = vand.u32 %v3071, 4294901760
    %3073 = vmatprep.subr.mxu0 %v3072
    %v3074 = vand.u32 %v1200, 4294901760
    %v3075 = vsub.f32 %v1200, %v3074
    %v3076 = vand.u32 %v3075, 4294901760
    %3077 = vmatpush1.msra.mxu0 %v3076
    %v3078 = vand.u32 %v1199, 4294901760
    %v3079 = vsub.f32 %v1199, %v3078
    %v3080 = vand.u32 %v3079, 4294901760
    %3081 = vmatprep.subr.mxu0 %v3080
    %v3082 = vand.u32 %v1198, 4294901760
    %v3083 = vsub.f32 %v1198, %v3082
    %v3084 = vand.u32 %v3083, 4294901760
    %3085 = vmatpush1.msra.mxu0 %v3084
    %v3086 = vand.u32 %v1197, 4294901760
    %v3087 = vsub.f32 %v1197, %v3086
    %v3088 = vand.u32 %v3087, 4294901760
    %3089 = vmatprep.subr.mxu0 %v3088
    %v3090 = vand.u32 %v1196, 4294901760
    %v3091 = vsub.f32 %v1196, %v3090
    %v3092 = vand.u32 %v3091, 4294901760
    %3093 = vmatpush1.msra.mxu0 %v3092
    %v3094 = vand.u32 %v1195, 4294901760
    %v3095 = vsub.f32 %v1195, %v3094
    %v3096 = vand.u32 %v3095, 4294901760
    %3097 = vmatprep.subr.mxu0 %v3096
    %v3098 = vand.u32 %v1194, 4294901760
    %v3099 = vsub.f32 %v1194, %v3098
    %v3100 = vand.u32 %v3099, 4294901760
    %3101 = vmatpush1.msra.mxu0 %v3100
    %v3102 = vand.u32 %v1193, 4294901760
    %v3103 = vsub.f32 %v1193, %v3102
    %v3104 = vand.u32 %v3103, 4294901760
    %3105 = vmatprep.subr.mxu0 %v3104
    %v3106 = vand.u32 %v1192, 4294901760
    %v3107 = vsub.f32 %v1192, %v3106
    %v3108 = vand.u32 %v3107, 4294901760
    %3109 = vmatpush1.msra.mxu0 %v3108
    %3110 = vmatprep.subr.mxu0 0.0
    %3111 = vmatpush2.msra.mxu0 0.0
    %3112 = vmatprep.subr.mxu0 0.0
    %3113 = vmatpush2.msra.mxu0 0.0
    %3114 = vmatprep.subr.mxu0 0.0
    %3115 = vmatpush2.msra.mxu0 0.0
    %3116 = vmatprep.subr.mxu0 0.0
    %3117 = vmatpush2.msra.mxu0 0.0
    %3118 = vmatprep.subr.mxu0 0.0
    %3119 = vmatpush2.msra.mxu0 0.0
    %3120 = vmatprep.subr.mxu0 0.0
    %3121 = vmatpush2.msra.mxu0 0.0
    %3122 = vmatprep.subr.mxu0 0.0
    %3123 = vmatpush2.msra.mxu0 0.0
    %3124 = vmatprep.subr.mxu0 0.0
    %3125 = vmatpush2.msra.mxu0 0.0
    %3126 = vmatprep.subr.mxu0 0.0
    %3127 = vmatpush2.msra.mxu0 0.0
    %3128 = vmatprep.subr.mxu0 0.0
    %3129 = vmatpush2.msra.mxu0 0.0
    %3130 = vmatprep.subr.mxu0 0.0
    %3131 = vmatpush2.msra.mxu0 0.0
    %3132 = vmatprep.subr.mxu0 0.0
    %3133 = vmatpush2.msra.mxu0 0.0
    %3134 = vmatprep.subr.mxu0 0.0
    %3135 = vmatpush2.msra.mxu0 0.0
    %3136 = vmatprep.subr.mxu0 0.0
    %3137 = vmatpush2.msra.mxu0 0.0
    %3138 = vmatprep.subr.mxu0 0.0
    %3139 = vmatpush2.msra.mxu0 0.0
    %3140 = vmatprep.subr.mxu0 0.0
    %3141 = vmatpush2.msra.mxu0 0.0
    %3142 = vmatprep.mubr.f32.mxu0 0.0
    %v3143 = vand.u32 %v2589, 4294901760
    %3144 = vmatmul.mubr.f32.gmra.mxu0 %v3143
    %v3145 = vpop.f32.mrf.mxu0
    %v3146 = vadd.f32 %v3026, %v3145
    %v3147 = vpop.f32.mrf.mxu0
    %v3148 = vadd.f32 %v3028, %v3147
    %3149 = vdwg.mxu0
    %3150 = vmatprep.subr.mxu0 0.0
    %3151 = vmatpush1.msra.mxu0 0.0
    %3152 = vmatprep.subr.mxu0 0.0
    %3153 = vmatpush1.msra.mxu0 0.0
    %3154 = vmatprep.subr.mxu0 0.0
    %3155 = vmatpush1.msra.mxu0 0.0
    %3156 = vmatprep.subr.mxu0 0.0
    %3157 = vmatpush1.msra.mxu0 0.0
    %3158 = vmatprep.subr.mxu0 0.0
    %3159 = vmatpush1.msra.mxu0 0.0
    %3160 = vmatprep.subr.mxu0 0.0
    %3161 = vmatpush1.msra.mxu0 0.0
    %3162 = vmatprep.subr.mxu0 0.0
    %3163 = vmatpush1.msra.mxu0 0.0
    %3164 = vmatprep.subr.mxu0 0.0
    %3165 = vmatpush1.msra.mxu0 0.0
    %v3166 = vand.u32 %v1207, 4294901760
    %3167 = vmatprep.subr.mxu0 %v3166
    %v3168 = vand.u32 %v1206, 4294901760
    %3169 = vmatpush1.msra.mxu0 %v3168
    %v3170 = vand.u32 %v1205, 4294901760
    %3171 = vmatprep.subr.mxu0 %v3170
    %v3172 = vand.u32 %v1204, 4294901760
    %3173 = vmatpush1.msra.mxu0 %v3172
    %v3174 = vand.u32 %v1203, 4294901760
    %3175 = vmatprep.subr.mxu0 %v3174
    %v3176 = vand.u32 %v1202, 4294901760
    %3177 = vmatpush1.msra.mxu0 %v3176
    %v3178 = vand.u32 %v1201, 4294901760
    %3179 = vmatprep.subr.mxu0 %v3178
    %v3180 = vand.u32 %v1200, 4294901760
    %3181 = vmatpush1.msra.mxu0 %v3180
    %v3182 = vand.u32 %v1199, 4294901760
    %3183 = vmatprep.subr.mxu0 %v3182
    %v3184 = vand.u32 %v1198, 4294901760
    %3185 = vmatpush1.msra.mxu0 %v3184
    %v3186 = vand.u32 %v1197, 4294901760
    %3187 = vmatprep.subr.mxu0 %v3186
    %v3188 = vand.u32 %v1196, 4294901760
    %3189 = vmatpush1.msra.mxu0 %v3188
    %v3190 = vand.u32 %v1195, 4294901760
    %3191 = vmatprep.subr.mxu0 %v3190
    %v3192 = vand.u32 %v1194, 4294901760
    %3193 = vmatpush1.msra.mxu0 %v3192
    %v3194 = vand.u32 %v1193, 4294901760
    %3195 = vmatprep.subr.mxu0 %v3194
    %v3196 = vand.u32 %v1192, 4294901760
    %3197 = vmatpush1.msra.mxu0 %v3196
    %3198 = vmatprep.subr.mxu0 0.0
    %3199 = vmatpush2.msra.mxu0 0.0
    %3200 = vmatprep.subr.mxu0 0.0
    %3201 = vmatpush2.msra.mxu0 0.0
    %3202 = vmatprep.subr.mxu0 0.0
    %3203 = vmatpush2.msra.mxu0 0.0
    %3204 = vmatprep.subr.mxu0 0.0
    %3205 = vmatpush2.msra.mxu0 0.0
    %3206 = vmatprep.subr.mxu0 0.0
    %3207 = vmatpush2.msra.mxu0 0.0
    %3208 = vmatprep.subr.mxu0 0.0
    %3209 = vmatpush2.msra.mxu0 0.0
    %3210 = vmatprep.subr.mxu0 0.0
    %3211 = vmatpush2.msra.mxu0 0.0
    %3212 = vmatprep.subr.mxu0 0.0
    %3213 = vmatpush2.msra.mxu0 0.0
    %3214 = vmatprep.subr.mxu0 0.0
    %3215 = vmatpush2.msra.mxu0 0.0
    %3216 = vmatprep.subr.mxu0 0.0
    %3217 = vmatpush2.msra.mxu0 0.0
    %3218 = vmatprep.subr.mxu0 0.0
    %3219 = vmatpush2.msra.mxu0 0.0
    %3220 = vmatprep.subr.mxu0 0.0
    %3221 = vmatpush2.msra.mxu0 0.0
    %3222 = vmatprep.subr.mxu0 0.0
    %3223 = vmatpush2.msra.mxu0 0.0
    %3224 = vmatprep.subr.mxu0 0.0
    %3225 = vmatpush2.msra.mxu0 0.0
    %3226 = vmatprep.subr.mxu0 0.0
    %3227 = vmatpush2.msra.mxu0 0.0
    %3228 = vmatprep.subr.mxu0 0.0
    %3229 = vmatpush2.msra.mxu0 0.0
    %3230 = vmatprep.mubr.f32.mxu0 0.0
    %v3231 = vand.u32 %v2589, 4294901760
    %3232 = vmatmul.mubr.f32.gmra.mxu0 %v3231
    %v3233 = vpop.f32.mrf.mxu0
    %v3234 = vadd.f32 %v3146, %v3233
    %v3235 = vpop.f32.mrf.mxu0
    %v3236 = vadd.f32 %v3148, %v3235
    %3237 = vdwg.mxu0
    %v3238 = vadd.f32 %v2586, %v3234
    %v3239 = vadd.f32 %v2587, %v3236
    %v3240 = vxor.u32 %v3238, 2147483648
    %v3241 = vxor.u32 %v3239, 2147483648
    %v3242 = vmul.f32 %v3240, 1.442695
    %v3243 = vpow.pop %v3242
    %v3244 = vmul.f32 %v3241, 1.442695
    %v3245 = vpow.pop %v3244
    %v3246 = vadd.f32 %v3243, 1.0
    %v3247 = vadd.f32 %v3245, 1.0
    %v3248 = vrcp.pop %v3246
    %v3249 = vmul.f32 1.0, %v3248
    %v3250 = vrcp.pop %v3247
    %v3251 = vmul.f32 1.0, %v3250
    %v3252 = vtanh.pop %v3239
    %v3253 = vmul.f32 %v3249, %v2575
    %3255 = vrot.lane.b32.xlu0 %v3252, 64
    %v3256 = vpop.permute.xlu0 %3255
    %v3258 = vmul.f32 %v3249, %v3256
    %3260 = vrot.lane.b32.xlu0 %v3258, 64
    %v3261 = vpop.permute.xlu0 %3260
    %v3263 = vadd.f32 %v3253, %v3261
    %v3264 = vtanh.pop %v3263
    %3266 = vrot.lane.b32.xlu0 %v3264, 64
    %v3267 = vpop.permute.xlu0 %3266
    %v3269 = vmul.f32 %v3251, %v3267
    %v3270 = vmax.f32 %v2582, %v3269
    %s3271 = smul.u32 3, 2
    %s3272 = smul.addr %s3271, 8
    %s3273 = scalar_lea.vmem [#allocation2], %s3272
    %v3274 = vld [vmem:[%s3273] sm:$0xff]
    %v3275 = vld [vmem:[%s3273 + $0x8] sm:$0xff]
    %v3277 = vsel %vm161, %v3269, 0
    %3279 = vmatprep.subr.mxu0 0.0
    %3280 = vmatpush1.msra.mxu0 0.0
    %3281 = vmatprep.subr.mxu0 0.0
    %3282 = vmatpush1.msra.mxu0 0.0
    %3283 = vmatprep.subr.mxu0 0.0
    %3284 = vmatpush1.msra.mxu0 0.0
    %3285 = vmatprep.subr.mxu0 0.0
    %3286 = vmatpush1.msra.mxu0 0.0
    %3287 = vmatprep.subr.mxu0 0.0
    %3288 = vmatpush1.msra.mxu0 0.0
    %3289 = vmatprep.subr.mxu0 0.0
    %3290 = vmatpush1.msra.mxu0 0.0
    %3291 = vmatprep.subr.mxu0 0.0
    %3292 = vmatpush1.msra.mxu0 0.0
    %3293 = vmatprep.subr.mxu0 0.0
    %3294 = vmatpush1.msra.mxu0 0.0
    %v3295 = vand.u32 %v1207, 4294901760
    %3296 = vmatprep.subr.mxu0 %v3295
    %v3297 = vand.u32 %v1206, 4294901760
    %3298 = vmatpush1.msra.mxu0 %v3297
    %v3299 = vand.u32 %v1205, 4294901760
    %3300 = vmatprep.subr.mxu0 %v3299
    %v3301 = vand.u32 %v1204, 4294901760
    %3302 = vmatpush1.msra.mxu0 %v3301
    %v3303 = vand.u32 %v1203, 4294901760
    %3304 = vmatprep.subr.mxu0 %v3303
    %v3305 = vand.u32 %v1202, 4294901760
    %3306 = vmatpush1.msra.mxu0 %v3305
    %v3307 = vand.u32 %v1201, 4294901760
    %3308 = vmatprep.subr.mxu0 %v3307
    %v3309 = vand.u32 %v1200, 4294901760
    %3310 = vmatpush1.msra.mxu0 %v3309
    %v3311 = vand.u32 %v1199, 4294901760
    %3312 = vmatprep.subr.mxu0 %v3311
    %v3313 = vand.u32 %v1198, 4294901760
    %3314 = vmatpush1.msra.mxu0 %v3313
    %v3315 = vand.u32 %v1197, 4294901760
    %3316 = vmatprep.subr.mxu0 %v3315
    %v3317 = vand.u32 %v1196, 4294901760
    %3318 = vmatpush1.msra.mxu0 %v3317
    %v3319 = vand.u32 %v1195, 4294901760
    %3320 = vmatprep.subr.mxu0 %v3319
    %v3321 = vand.u32 %v1194, 4294901760
    %3322 = vmatpush1.msra.mxu0 %v3321
    %v3323 = vand.u32 %v1193, 4294901760
    %3324 = vmatprep.subr.mxu0 %v3323
    %v3325 = vand.u32 %v1192, 4294901760
    %3326 = vmatpush1.msra.mxu0 %v3325
    %3327 = vmatprep.subr.mxu0 0.0
    %3328 = vmatpush2.msra.mxu0 0.0
    %3329 = vmatprep.subr.mxu0 0.0
    %3330 = vmatpush2.msra.mxu0 0.0
    %3331 = vmatprep.subr.mxu0 0.0
    %3332 = vmatpush2.msra.mxu0 0.0
    %3333 = vmatprep.subr.mxu0 0.0
    %3334 = vmatpush2.msra.mxu0 0.0
    %3335 = vmatprep.subr.mxu0 0.0
    %3336 = vmatpush2.msra.mxu0 0.0
    %3337 = vmatprep.subr.mxu0 0.0
    %3338 = vmatpush2.msra.mxu0 0.0
    %3339 = vmatprep.subr.mxu0 0.0
    %3340 = vmatpush2.msra.mxu0 0.0
    %3341 = vmatprep.subr.mxu0 0.0
    %3342 = vmatpush2.msra.mxu0 0.0
    %3343 = vmatprep.subr.mxu0 0.0
    %3344 = vmatpush2.msra.mxu0 0.0
    %3345 = vmatprep.subr.mxu0 0.0
    %3346 = vmatpush2.msra.mxu0 0.0
    %3347 = vmatprep.subr.mxu0 0.0
    %3348 = vmatpush2.msra.mxu0 0.0
    %3349 = vmatprep.subr.mxu0 0.0
    %3350 = vmatpush2.msra.mxu0 0.0
    %3351 = vmatprep.subr.mxu0 0.0
    %3352 = vmatpush2.msra.mxu0 0.0
    %3353 = vmatprep.subr.mxu0 0.0
    %3354 = vmatpush2.msra.mxu0 0.0
    %3355 = vmatprep.subr.mxu0 0.0
    %3356 = vmatpush2.msra.mxu0 0.0
    %3357 = vmatprep.subr.mxu0 0.0
    %3358 = vmatpush2.msra.mxu0 0.0
    %3359 = vmatprep.mubr.f32.mxu0 0.0
    %v3360 = vand.u32 %v3277, 4294901760
    %v3361 = vsub.f32 %v3277, %v3360
    %v3362 = vand.u32 %v3361, 4294901760
    %v3363 = vsub.f32 %v3361, %v3362
    %v3364 = vand.u32 %v3363, 4294901760
    %3365 = vmatmul.mubr.f32.gmra.mxu0 %v3364
    %v3366 = vpop.f32.mrf.mxu0
    %v3367 = vadd.f32 0.0, %v3366
    %v3368 = vpop.f32.mrf.mxu0
    %v3369 = vadd.f32 0.0, %v3368
    %3370 = vdwg.mxu0
    %3371 = vmatprep.subr.mxu0 0.0
    %3372 = vmatpush1.msra.mxu0 0.0
    %3373 = vmatprep.subr.mxu0 0.0
    %3374 = vmatpush1.msra.mxu0 0.0
    %3375 = vmatprep.subr.mxu0 0.0
    %3376 = vmatpush1.msra.mxu0 0.0
    %3377 = vmatprep.subr.mxu0 0.0
    %3378 = vmatpush1.msra.mxu0 0.0
    %3379 = vmatprep.subr.mxu0 0.0
    %3380 = vmatpush1.msra.mxu0 0.0
    %3381 = vmatprep.subr.mxu0 0.0
    %3382 = vmatpush1.msra.mxu0 0.0
    %3383 = vmatprep.subr.mxu0 0.0
    %3384 = vmatpush1.msra.mxu0 0.0
    %3385 = vmatprep.subr.mxu0 0.0
    %3386 = vmatpush1.msra.mxu0 0.0
    %v3387 = vand.u32 %v1207, 4294901760
    %v3388 = vsub.f32 %v1207, %v3387
    %v3389 = vand.u32 %v3388, 4294901760
    %v3390 = vsub.f32 %v3388, %v3389
    %v3391 = vand.u32 %v3390, 4294901760
    %3392 = vmatprep.subr.mxu0 %v3391
    %v3393 = vand.u32 %v1206, 4294901760
    %v3394 = vsub.f32 %v1206, %v3393
    %v3395 = vand.u32 %v3394, 4294901760
    %v3396 = vsub.f32 %v3394, %v3395
    %v3397 = vand.u32 %v3396, 4294901760
    %3398 = vmatpush1.msra.mxu0 %v3397
    %v3399 = vand.u32 %v1205, 4294901760
    %v3400 = vsub.f32 %v1205, %v3399
    %v3401 = vand.u32 %v3400, 4294901760
    %v3402 = vsub.f32 %v3400, %v3401
    %v3403 = vand.u32 %v3402, 4294901760
    %3404 = vmatprep.subr.mxu0 %v3403
    %v3405 = vand.u32 %v1204, 4294901760
    %v3406 = vsub.f32 %v1204, %v3405
    %v3407 = vand.u32 %v3406, 4294901760
    %v3408 = vsub.f32 %v3406, %v3407
    %v3409 = vand.u32 %v3408, 4294901760
    %3410 = vmatpush1.msra.mxu0 %v3409
    %v3411 = vand.u32 %v1203, 4294901760
    %v3412 = vsub.f32 %v1203, %v3411
    %v3413 = vand.u32 %v3412, 4294901760
    %v3414 = vsub.f32 %v3412, %v3413
    %v3415 = vand.u32 %v3414, 4294901760
    %3416 = vmatprep.subr.mxu0 %v3415
    %v3417 = vand.u32 %v1202, 4294901760
    %v3418 = vsub.f32 %v1202, %v3417
    %v3419 = vand.u32 %v3418, 4294901760
    %v3420 = vsub.f32 %v3418, %v3419
    %v3421 = vand.u32 %v3420, 4294901760
    %3422 = vmatpush1.msra.mxu0 %v3421
    %v3423 = vand.u32 %v1201, 4294901760
    %v3424 = vsub.f32 %v1201, %v3423
    %v3425 = vand.u32 %v3424, 4294901760
    %v3426 = vsub.f32 %v3424, %v3425
    %v3427 = vand.u32 %v3426, 4294901760
    %3428 = vmatprep.subr.mxu0 %v3427
    %v3429 = vand.u32 %v1200, 4294901760
    %v3430 = vsub.f32 %v1200, %v3429
    %v3431 = vand.u32 %v3430, 4294901760
    %v3432 = vsub.f32 %v3430, %v3431
    %v3433 = vand.u32 %v3432, 4294901760
    %3434 = vmatpush1.msra.mxu0 %v3433
    %v3435 = vand.u32 %v1199, 4294901760
    %v3436 = vsub.f32 %v1199, %v3435
    %v3437 = vand.u32 %v3436, 4294901760
    %v3438 = vsub.f32 %v3436, %v3437
    %v3439 = vand.u32 %v3438, 4294901760
    %3440 = vmatprep.subr.mxu0 %v3439
    %v3441 = vand.u32 %v1198, 4294901760
    %v3442 = vsub.f32 %v1198, %v3441
    %v3443 = vand.u32 %v3442, 4294901760
    %v3444 = vsub.f32 %v3442, %v3443
    %v3445 = vand.u32 %v3444, 4294901760
    %3446 = vmatpush1.msra.mxu0 %v3445
    %v3447 = vand.u32 %v1197, 4294901760
    %v3448 = vsub.f32 %v1197, %v3447
    %v3449 = vand.u32 %v3448, 4294901760
    %v3450 = vsub.f32 %v3448, %v3449
    %v3451 = vand.u32 %v3450, 4294901760
    %3452 = vmatprep.subr.mxu0 %v3451
    %v3453 = vand.u32 %v1196, 4294901760
    %v3454 = vsub.f32 %v1196, %v3453
    %v3455 = vand.u32 %v3454, 4294901760
    %v3456 = vsub.f32 %v3454, %v3455
    %v3457 = vand.u32 %v3456, 4294901760
    %3458 = vmatpush1.msra.mxu0 %v3457
    %v3459 = vand.u32 %v1195, 4294901760
    %v3460 = vsub.f32 %v1195, %v3459
    %v3461 = vand.u32 %v3460, 4294901760
    %v3462 = vsub.f32 %v3460, %v3461
    %v3463 = vand.u32 %v3462, 4294901760
    %3464 = vmatprep.subr.mxu0 %v3463
    %v3465 = vand.u32 %v1194, 4294901760
    %v3466 = vsub.f32 %v1194, %v3465
    %v3467 = vand.u32 %v3466, 4294901760
    %v3468 = vsub.f32 %v3466, %v3467
    %v3469 = vand.u32 %v3468, 4294901760
    %3470 = vmatpush1.msra.mxu0 %v3469
    %v3471 = vand.u32 %v1193, 4294901760
    %v3472 = vsub.f32 %v1193, %v3471
    %v3473 = vand.u32 %v3472, 4294901760
    %v3474 = vsub.f32 %v3472, %v3473
    %v3475 = vand.u32 %v3474, 4294901760
    %3476 = vmatprep.subr.mxu0 %v3475
    %v3477 = vand.u32 %v1192, 4294901760
    %v3478 = vsub.f32 %v1192, %v3477
    %v3479 = vand.u32 %v3478, 4294901760
    %v3480 = vsub.f32 %v3478, %v3479
    %v3481 = vand.u32 %v3480, 4294901760
    %3482 = vmatpush1.msra.mxu0 %v3481
    %3483 = vmatprep.subr.mxu0 0.0
    %3484 = vmatpush2.msra.mxu0 0.0
    %3485 = vmatprep.subr.mxu0 0.0
    %3486 = vmatpush2.msra.mxu0 0.0
    %3487 = vmatprep.subr.mxu0 0.0
    %3488 = vmatpush2.msra.mxu0 0.0
    %3489 = vmatprep.subr.mxu0 0.0
    %3490 = vmatpush2.msra.mxu0 0.0
    %3491 = vmatprep.subr.mxu0 0.0
    %3492 = vmatpush2.msra.mxu0 0.0
    %3493 = vmatprep.subr.mxu0 0.0
    %3494 = vmatpush2.msra.mxu0 0.0
    %3495 = vmatprep.subr.mxu0 0.0
    %3496 = vmatpush2.msra.mxu0 0.0
    %3497 = vmatprep.subr.mxu0 0.0
    %3498 = vmatpush2.msra.mxu0 0.0
    %3499 = vmatprep.subr.mxu0 0.0
    %3500 = vmatpush2.msra.mxu0 0.0
    %3501 = vmatprep.subr.mxu0 0.0
    %3502 = vmatpush2.msra.mxu0 0.0
    %3503 = vmatprep.subr.mxu0 0.0
    %3504 = vmatpush2.msra.mxu0 0.0
    %3505 = vmatprep.subr.mxu0 0.0
    %3506 = vmatpush2.msra.mxu0 0.0
    %3507 = vmatprep.subr.mxu0 0.0
    %3508 = vmatpush2.msra.mxu0 0.0
    %3509 = vmatprep.subr.mxu0 0.0
    %3510 = vmatpush2.msra.mxu0 0.0
    %3511 = vmatprep.subr.mxu0 0.0
    %3512 = vmatpush2.msra.mxu0 0.0
    %3513 = vmatprep.subr.mxu0 0.0
    %3514 = vmatpush2.msra.mxu0 0.0
    %3515 = vmatprep.mubr.f32.mxu0 0.0
    %v3516 = vand.u32 %v3277, 4294901760
    %3517 = vmatmul.mubr.f32.gmra.mxu0 %v3516
    %v3518 = vpop.f32.mrf.mxu0
    %v3519 = vadd.f32 %v3367, %v3518
    %v3520 = vpop.f32.mrf.mxu0
    %v3521 = vadd.f32 %v3369, %v3520
    %3522 = vdwg.mxu0
    %3523 = vmatprep.subr.mxu0 0.0
    %3524 = vmatpush1.msra.mxu0 0.0
    %3525 = vmatprep.subr.mxu0 0.0
    %3526 = vmatpush1.msra.mxu0 0.0
    %3527 = vmatprep.subr.mxu0 0.0
    %3528 = vmatpush1.msra.mxu0 0.0
    %3529 = vmatprep.subr.mxu0 0.0
    %3530 = vmatpush1.msra.mxu0 0.0
    %3531 = vmatprep.subr.mxu0 0.0
    %3532 = vmatpush1.msra.mxu0 0.0
    %3533 = vmatprep.subr.mxu0 0.0
    %3534 = vmatpush1.msra.mxu0 0.0
    %3535 = vmatprep.subr.mxu0 0.0
    %3536 = vmatpush1.msra.mxu0 0.0
    %3537 = vmatprep.subr.mxu0 0.0
    %3538 = vmatpush1.msra.mxu0 0.0
    %v3539 = vand.u32 %v1207, 4294901760
    %v3540 = vsub.f32 %v1207, %v3539
    %3541 = vmatprep.subr.mxu0 %v3540
    %v3542 = vand.u32 %v1206, 4294901760
    %v3543 = vsub.f32 %v1206, %v3542
    %3544 = vmatpush1.msra.mxu0 %v3543
    %v3545 = vand.u32 %v1205, 4294901760
    %v3546 = vsub.f32 %v1205, %v3545
    %3547 = vmatprep.subr.mxu0 %v3546
    %v3548 = vand.u32 %v1204, 4294901760
    %v3549 = vsub.f32 %v1204, %v3548
    %3550 = vmatpush1.msra.mxu0 %v3549
    %v3551 = vand.u32 %v1203, 4294901760
    %v3552 = vsub.f32 %v1203, %v3551
    %3553 = vmatprep.subr.mxu0 %v3552
    %v3554 = vand.u32 %v1202, 4294901760
    %v3555 = vsub.f32 %v1202, %v3554
    %3556 = vmatpush1.msra.mxu0 %v3555
    %v3557 = vand.u32 %v1201, 4294901760
    %v3558 = vsub.f32 %v1201, %v3557
    %3559 = vmatprep.subr.mxu0 %v3558
    %v3560 = vand.u32 %v1200, 4294901760
    %v3561 = vsub.f32 %v1200, %v3560
    %3562 = vmatpush1.msra.mxu0 %v3561
    %v3563 = vand.u32 %v1199, 4294901760
    %v3564 = vsub.f32 %v1199, %v3563
    %3565 = vmatprep.subr.mxu0 %v3564
    %v3566 = vand.u32 %v1198, 4294901760
    %v3567 = vsub.f32 %v1198, %v3566
    %3568 = vmatpush1.msra.mxu0 %v3567
    %v3569 = vand.u32 %v1197, 4294901760
    %v3570 = vsub.f32 %v1197, %v3569
    %3571 = vmatprep.subr.mxu0 %v3570
    %v3572 = vand.u32 %v1196, 4294901760
    %v3573 = vsub.f32 %v1196, %v3572
    %3574 = vmatpush1.msra.mxu0 %v3573
    %v3575 = vand.u32 %v1195, 4294901760
    %v3576 = vsub.f32 %v1195, %v3575
    %3577 = vmatprep.subr.mxu0 %v3576
    %v3578 = vand.u32 %v1194, 4294901760
    %v3579 = vsub.f32 %v1194, %v3578
    %3580 = vmatpush1.msra.mxu0 %v3579
    %v3581 = vand.u32 %v1193, 4294901760
    %v3582 = vsub.f32 %v1193, %v3581
    %3583 = vmatprep.subr.mxu0 %v3582
    %v3584 = vand.u32 %v1192, 4294901760
    %v3585 = vsub.f32 %v1192, %v3584
    %3586 = vmatpush1.msra.mxu0 %v3585
    %3587 = vmatprep.subr.mxu0 0.0
    %3588 = vmatpush2.msra.mxu0 0.0
    %3589 = vmatprep.subr.mxu0 0.0
    %3590 = vmatpush2.msra.mxu0 0.0
    %3591 = vmatprep.subr.mxu0 0.0
    %3592 = vmatpush2.msra.mxu0 0.0
    %3593 = vmatprep.subr.mxu0 0.0
    %3594 = vmatpush2.msra.mxu0 0.0
    %3595 = vmatprep.subr.mxu0 0.0
    %3596 = vmatpush2.msra.mxu0 0.0
    %3597 = vmatprep.subr.mxu0 0.0
    %3598 = vmatpush2.msra.mxu0 0.0
    %3599 = vmatprep.subr.mxu0 0.0
    %3600 = vmatpush2.msra.mxu0 0.0
    %3601 = vmatprep.subr.mxu0 0.0
    %3602 = vmatpush2.msra.mxu0 0.0
    %3603 = vmatprep.subr.mxu0 0.0
    %3604 = vmatpush2.msra.mxu0 0.0
    %3605 = vmatprep.subr.mxu0 0.0
    %3606 = vmatpush2.msra.mxu0 0.0
    %3607 = vmatprep.subr.mxu0 0.0
    %3608 = vmatpush2.msra.mxu0 0.0
    %3609 = vmatprep.subr.mxu0 0.0
    %3610 = vmatpush2.msra.mxu0 0.0
    %3611 = vmatprep.subr.mxu0 0.0
    %3612 = vmatpush2.msra.mxu0 0.0
    %3613 = vmatprep.subr.mxu0 0.0
    %3614 = vmatpush2.msra.mxu0 0.0
    %3615 = vmatprep.subr.mxu0 0.0
    %3616 = vmatpush2.msra.mxu0 0.0
    %3617 = vmatprep.subr.mxu0 0.0
    %3618 = vmatpush2.msra.mxu0 0.0
    %3619 = vmatprep.mubr.f32.mxu0 0.0
    %v3620 = vand.u32 %v3277, 4294901760
    %v3621 = vsub.f32 %v3277, %v3620
    %3622 = vmatmul.mubr.f32.gmra.mxu0 %v3621
    %v3623 = vpop.f32.mrf.mxu0
    %v3624 = vadd.f32 %v3519, %v3623
    %v3625 = vpop.f32.mrf.mxu0
    %v3626 = vadd.f32 %v3521, %v3625
    %3627 = vdwg.mxu0
    %3628 = vmatprep.subr.mxu0 0.0
    %3629 = vmatpush1.msra.mxu0 0.0
    %3630 = vmatprep.subr.mxu0 0.0
    %3631 = vmatpush1.msra.mxu0 0.0
    %3632 = vmatprep.subr.mxu0 0.0
    %3633 = vmatpush1.msra.mxu0 0.0
    %3634 = vmatprep.subr.mxu0 0.0
    %3635 = vmatpush1.msra.mxu0 0.0
    %3636 = vmatprep.subr.mxu0 0.0
    %3637 = vmatpush1.msra.mxu0 0.0
    %3638 = vmatprep.subr.mxu0 0.0
    %3639 = vmatpush1.msra.mxu0 0.0
    %3640 = vmatprep.subr.mxu0 0.0
    %3641 = vmatpush1.msra.mxu0 0.0
    %3642 = vmatprep.subr.mxu0 0.0
    %3643 = vmatpush1.msra.mxu0 0.0
    %v3644 = vand.u32 %v1207, 4294901760
    %3645 = vmatprep.subr.mxu0 %v3644
    %v3646 = vand.u32 %v1206, 4294901760
    %3647 = vmatpush1.msra.mxu0 %v3646
    %v3648 = vand.u32 %v1205, 4294901760
    %3649 = vmatprep.subr.mxu0 %v3648
    %v3650 = vand.u32 %v1204, 4294901760
    %3651 = vmatpush1.msra.mxu0 %v3650
    %v3652 = vand.u32 %v1203, 4294901760
    %3653 = vmatprep.subr.mxu0 %v3652
    %v3654 = vand.u32 %v1202, 4294901760
    %3655 = vmatpush1.msra.mxu0 %v3654
    %v3656 = vand.u32 %v1201, 4294901760
    %3657 = vmatprep.subr.mxu0 %v3656
    %v3658 = vand.u32 %v1200, 4294901760
    %3659 = vmatpush1.msra.mxu0 %v3658
    %v3660 = vand.u32 %v1199, 4294901760
    %3661 = vmatprep.subr.mxu0 %v3660
    %v3662 = vand.u32 %v1198, 4294901760
    %3663 = vmatpush1.msra.mxu0 %v3662
    %v3664 = vand.u32 %v1197, 4294901760
    %3665 = vmatprep.subr.mxu0 %v3664
    %v3666 = vand.u32 %v1196, 4294901760
    %3667 = vmatpush1.msra.mxu0 %v3666
    %v3668 = vand.u32 %v1195, 4294901760
    %3669 = vmatprep.subr.mxu0 %v3668
    %v3670 = vand.u32 %v1194, 4294901760
    %3671 = vmatpush1.msra.mxu0 %v3670
    %v3672 = vand.u32 %v1193, 4294901760
    %3673 = vmatprep.subr.mxu0 %v3672
    %v3674 = vand.u32 %v1192, 4294901760
    %3675 = vmatpush1.msra.mxu0 %v3674
    %3676 = vmatprep.subr.mxu0 0.0
    %3677 = vmatpush2.msra.mxu0 0.0
    %3678 = vmatprep.subr.mxu0 0.0
    %3679 = vmatpush2.msra.mxu0 0.0
    %3680 = vmatprep.subr.mxu0 0.0
    %3681 = vmatpush2.msra.mxu0 0.0
    %3682 = vmatprep.subr.mxu0 0.0
    %3683 = vmatpush2.msra.mxu0 0.0
    %3684 = vmatprep.subr.mxu0 0.0
    %3685 = vmatpush2.msra.mxu0 0.0
    %3686 = vmatprep.subr.mxu0 0.0
    %3687 = vmatpush2.msra.mxu0 0.0
    %3688 = vmatprep.subr.mxu0 0.0
    %3689 = vmatpush2.msra.mxu0 0.0
    %3690 = vmatprep.subr.mxu0 0.0
    %3691 = vmatpush2.msra.mxu0 0.0
    %3692 = vmatprep.subr.mxu0 0.0
    %3693 = vmatpush2.msra.mxu0 0.0
    %3694 = vmatprep.subr.mxu0 0.0
    %3695 = vmatpush2.msra.mxu0 0.0
    %3696 = vmatprep.subr.mxu0 0.0
    %3697 = vmatpush2.msra.mxu0 0.0
    %3698 = vmatprep.subr.mxu0 0.0
    %3699 = vmatpush2.msra.mxu0 0.0
    %3700 = vmatprep.subr.mxu0 0.0
    %3701 = vmatpush2.msra.mxu0 0.0
    %3702 = vmatprep.subr.mxu0 0.0
    %3703 = vmatpush2.msra.mxu0 0.0
    %3704 = vmatprep.subr.mxu0 0.0
    %3705 = vmatpush2.msra.mxu0 0.0
    %3706 = vmatprep.subr.mxu0 0.0
    %3707 = vmatpush2.msra.mxu0 0.0
    %3708 = vmatprep.mubr.f32.mxu0 0.0
    %v3709 = vand.u32 %v3277, 4294901760
    %v3710 = vsub.f32 %v3277, %v3709
    %v3711 = vand.u32 %v3710, 4294901760
    %3712 = vmatmul.mubr.f32.gmra.mxu0 %v3711
    %v3713 = vpop.f32.mrf.mxu0
    %v3714 = vadd.f32 %v3624, %v3713
    %v3715 = vpop.f32.mrf.mxu0
    %v3716 = vadd.f32 %v3626, %v3715
    %3717 = vdwg.mxu0
    %3718 = vmatprep.subr.mxu0 0.0
    %3719 = vmatpush1.msra.mxu0 0.0
    %3720 = vmatprep.subr.mxu0 0.0
    %3721 = vmatpush1.msra.mxu0 0.0
    %3722 = vmatprep.subr.mxu0 0.0
    %3723 = vmatpush1.msra.mxu0 0.0
    %3724 = vmatprep.subr.mxu0 0.0
    %3725 = vmatpush1.msra.mxu0 0.0
    %3726 = vmatprep.subr.mxu0 0.0
    %3727 = vmatpush1.msra.mxu0 0.0
    %3728 = vmatprep.subr.mxu0 0.0
    %3729 = vmatpush1.msra.mxu0 0.0
    %3730 = vmatprep.subr.mxu0 0.0
    %3731 = vmatpush1.msra.mxu0 0.0
    %3732 = vmatprep.subr.mxu0 0.0
    %3733 = vmatpush1.msra.mxu0 0.0
    %v3734 = vand.u32 %v1207, 4294901760
    %v3735 = vsub.f32 %v1207, %v3734
    %v3736 = vand.u32 %v3735, 4294901760
    %3737 = vmatprep.subr.mxu0 %v3736
    %v3738 = vand.u32 %v1206, 4294901760
    %v3739 = vsub.f32 %v1206, %v3738
    %v3740 = vand.u32 %v3739, 4294901760
    %3741 = vmatpush1.msra.mxu0 %v3740
    %v3742 = vand.u32 %v1205, 4294901760
    %v3743 = vsub.f32 %v1205, %v3742
    %v3744 = vand.u32 %v3743, 4294901760
    %3745 = vmatprep.subr.mxu0 %v3744
    %v3746 = vand.u32 %v1204, 4294901760
    %v3747 = vsub.f32 %v1204, %v3746
    %v3748 = vand.u32 %v3747, 4294901760
    %3749 = vmatpush1.msra.mxu0 %v3748
    %v3750 = vand.u32 %v1203, 4294901760
    %v3751 = vsub.f32 %v1203, %v3750
    %v3752 = vand.u32 %v3751, 4294901760
    %3753 = vmatprep.subr.mxu0 %v3752
    %v3754 = vand.u32 %v1202, 4294901760
    %v3755 = vsub.f32 %v1202, %v3754
    %v3756 = vand.u32 %v3755, 4294901760
    %3757 = vmatpush1.msra.mxu0 %v3756
    %v3758 = vand.u32 %v1201, 4294901760
    %v3759 = vsub.f32 %v1201, %v3758
    %v3760 = vand.u32 %v3759, 4294901760
    %3761 = vmatprep.subr.mxu0 %v3760
    %v3762 = vand.u32 %v1200, 4294901760
    %v3763 = vsub.f32 %v1200, %v3762
    %v3764 = vand.u32 %v3763, 4294901760
    %3765 = vmatpush1.msra.mxu0 %v3764
    %v3766 = vand.u32 %v1199, 4294901760
    %v3767 = vsub.f32 %v1199, %v3766
    %v3768 = vand.u32 %v3767, 4294901760
    %3769 = vmatprep.subr.mxu0 %v3768
    %v3770 = vand.u32 %v1198, 4294901760
    %v3771 = vsub.f32 %v1198, %v3770
    %v3772 = vand.u32 %v3771, 4294901760
    %3773 = vmatpush1.msra.mxu0 %v3772
    %v3774 = vand.u32 %v1197, 4294901760
    %v3775 = vsub.f32 %v1197, %v3774
    %v3776 = vand.u32 %v3775, 4294901760
    %3777 = vmatprep.subr.mxu0 %v3776
    %v3778 = vand.u32 %v1196, 4294901760
    %v3779 = vsub.f32 %v1196, %v3778
    %v3780 = vand.u32 %v3779, 4294901760
    %3781 = vmatpush1.msra.mxu0 %v3780
    %v3782 = vand.u32 %v1195, 4294901760
    %v3783 = vsub.f32 %v1195, %v3782
    %v3784 = vand.u32 %v3783, 4294901760
    %3785 = vmatprep.subr.mxu0 %v3784
    %v3786 = vand.u32 %v1194, 4294901760
    %v3787 = vsub.f32 %v1194, %v3786
    %v3788 = vand.u32 %v3787, 4294901760
    %3789 = vmatpush1.msra.mxu0 %v3788
    %v3790 = vand.u32 %v1193, 4294901760
    %v3791 = vsub.f32 %v1193, %v3790
    %v3792 = vand.u32 %v3791, 4294901760
    %3793 = vmatprep.subr.mxu0 %v3792
    %v3794 = vand.u32 %v1192, 4294901760
    %v3795 = vsub.f32 %v1192, %v3794
    %v3796 = vand.u32 %v3795, 4294901760
    %3797 = vmatpush1.msra.mxu0 %v3796
    %3798 = vmatprep.subr.mxu0 0.0
    %3799 = vmatpush2.msra.mxu0 0.0
    %3800 = vmatprep.subr.mxu0 0.0
    %3801 = vmatpush2.msra.mxu0 0.0
    %3802 = vmatprep.subr.mxu0 0.0
    %3803 = vmatpush2.msra.mxu0 0.0
    %3804 = vmatprep.subr.mxu0 0.0
    %3805 = vmatpush2.msra.mxu0 0.0
    %3806 = vmatprep.subr.mxu0 0.0
    %3807 = vmatpush2.msra.mxu0 0.0
    %3808 = vmatprep.subr.mxu0 0.0
    %3809 = vmatpush2.msra.mxu0 0.0
    %3810 = vmatprep.subr.mxu0 0.0
    %3811 = vmatpush2.msra.mxu0 0.0
    %3812 = vmatprep.subr.mxu0 0.0
    %3813 = vmatpush2.msra.mxu0 0.0
    %3814 = vmatprep.subr.mxu0 0.0
    %3815 = vmatpush2.msra.mxu0 0.0
    %3816 = vmatprep.subr.mxu0 0.0
    %3817 = vmatpush2.msra.mxu0 0.0
    %3818 = vmatprep.subr.mxu0 0.0
    %3819 = vmatpush2.msra.mxu0 0.0
    %3820 = vmatprep.subr.mxu0 0.0
    %3821 = vmatpush2.msra.mxu0 0.0
    %3822 = vmatprep.subr.mxu0 0.0
    %3823 = vmatpush2.msra.mxu0 0.0
    %3824 = vmatprep.subr.mxu0 0.0
    %3825 = vmatpush2.msra.mxu0 0.0
    %3826 = vmatprep.subr.mxu0 0.0
    %3827 = vmatpush2.msra.mxu0 0.0
    %3828 = vmatprep.subr.mxu0 0.0
    %3829 = vmatpush2.msra.mxu0 0.0
    %3830 = vmatprep.mubr.f32.mxu0 0.0
    %v3831 = vand.u32 %v3277, 4294901760
    %3832 = vmatmul.mubr.f32.gmra.mxu0 %v3831
    %v3833 = vpop.f32.mrf.mxu0
    %v3834 = vadd.f32 %v3714, %v3833
    %v3835 = vpop.f32.mrf.mxu0
    %v3836 = vadd.f32 %v3716, %v3835
    %3837 = vdwg.mxu0
    %3838 = vmatprep.subr.mxu0 0.0
    %3839 = vmatpush1.msra.mxu0 0.0
    %3840 = vmatprep.subr.mxu0 0.0
    %3841 = vmatpush1.msra.mxu0 0.0
    %3842 = vmatprep.subr.mxu0 0.0
    %3843 = vmatpush1.msra.mxu0 0.0
    %3844 = vmatprep.subr.mxu0 0.0
    %3845 = vmatpush1.msra.mxu0 0.0
    %3846 = vmatprep.subr.mxu0 0.0
    %3847 = vmatpush1.msra.mxu0 0.0
    %3848 = vmatprep.subr.mxu0 0.0
    %3849 = vmatpush1.msra.mxu0 0.0
    %3850 = vmatprep.subr.mxu0 0.0
    %3851 = vmatpush1.msra.mxu0 0.0
    %3852 = vmatprep.subr.mxu0 0.0
    %3853 = vmatpush1.msra.mxu0 0.0
    %v3854 = vand.u32 %v1207, 4294901760
    %3855 = vmatprep.subr.mxu0 %v3854
    %v3856 = vand.u32 %v1206, 4294901760
    %3857 = vmatpush1.msra.mxu0 %v3856
    %v3858 = vand.u32 %v1205, 4294901760
    %3859 = vmatprep.subr.mxu0 %v3858
    %v3860 = vand.u32 %v1204, 4294901760
    %3861 = vmatpush1.msra.mxu0 %v3860
    %v3862 = vand.u32 %v1203, 4294901760
    %3863 = vmatprep.subr.mxu0 %v3862
    %v3864 = vand.u32 %v1202, 4294901760
    %3865 = vmatpush1.msra.mxu0 %v3864
    %v3866 = vand.u32 %v1201, 4294901760
    %3867 = vmatprep.subr.mxu0 %v3866
    %v3868 = vand.u32 %v1200, 4294901760
    %3869 = vmatpush1.msra.mxu0 %v3868
    %v3870 = vand.u32 %v1199, 4294901760
    %3871 = vmatprep.subr.mxu0 %v3870
    %v3872 = vand.u32 %v1198, 4294901760
    %3873 = vmatpush1.msra.mxu0 %v3872
    %v3874 = vand.u32 %v1197, 4294901760
    %3875 = vmatprep.subr.mxu0 %v3874
    %v3876 = vand.u32 %v1196, 4294901760
    %3877 = vmatpush1.msra.mxu0 %v3876
    %v3878 = vand.u32 %v1195, 4294901760
    %3879 = vmatprep.subr.mxu0 %v3878
    %v3880 = vand.u32 %v1194, 4294901760
    %3881 = vmatpush1.msra.mxu0 %v3880
    %v3882 = vand.u32 %v1193, 4294901760
    %3883 = vmatprep.subr.mxu0 %v3882
    %v3884 = vand.u32 %v1192, 4294901760
    %3885 = vmatpush1.msra.mxu0 %v3884
    %3886 = vmatprep.subr.mxu0 0.0
    %3887 = vmatpush2.msra.mxu0 0.0
    %3888 = vmatprep.subr.mxu0 0.0
    %3889 = vmatpush2.msra.mxu0 0.0
    %3890 = vmatprep.subr.mxu0 0.0
    %3891 = vmatpush2.msra.mxu0 0.0
    %3892 = vmatprep.subr.mxu0 0.0
    %3893 = vmatpush2.msra.mxu0 0.0
    %3894 = vmatprep.subr.mxu0 0.0
    %3895 = vmatpush2.msra.mxu0 0.0
    %3896 = vmatprep.subr.mxu0 0.0
    %3897 = vmatpush2.msra.mxu0 0.0
    %3898 = vmatprep.subr.mxu0 0.0
    %3899 = vmatpush2.msra.mxu0 0.0
    %3900 = vmatprep.subr.mxu0 0.0
    %3901 = vmatpush2.msra.mxu0 0.0
    %3902 = vmatprep.subr.mxu0 0.0
    %3903 = vmatpush2.msra.mxu0 0.0
    %3904 = vmatprep.subr.mxu0 0.0
    %3905 = vmatpush2.msra.mxu0 0.0
    %3906 = vmatprep.subr.mxu0 0.0
    %3907 = vmatpush2.msra.mxu0 0.0
    %3908 = vmatprep.subr.mxu0 0.0
    %3909 = vmatpush2.msra.mxu0 0.0
    %3910 = vmatprep.subr.mxu0 0.0
    %3911 = vmatpush2.msra.mxu0 0.0
    %3912 = vmatprep.subr.mxu0 0.0
    %3913 = vmatpush2.msra.mxu0 0.0
    %3914 = vmatprep.subr.mxu0 0.0
    %3915 = vmatpush2.msra.mxu0 0.0
    %3916 = vmatprep.subr.mxu0 0.0
    %3917 = vmatpush2.msra.mxu0 0.0
    %3918 = vmatprep.mubr.f32.mxu0 0.0
    %v3919 = vand.u32 %v3277, 4294901760
    %3920 = vmatmul.mubr.f32.gmra.mxu0 %v3919
    %v3921 = vpop.f32.mrf.mxu0
    %v3922 = vadd.f32 %v3834, %v3921
    %v3923 = vpop.f32.mrf.mxu0
    %v3924 = vadd.f32 %v3836, %v3923
    %3925 = vdwg.mxu0
    %v3926 = vadd.f32 %v3274, %v3922
    %v3927 = vadd.f32 %v3275, %v3924
    %v3928 = vxor.u32 %v3926, 2147483648
    %v3929 = vxor.u32 %v3927, 2147483648
    %v3930 = vmul.f32 %v3928, 1.442695
    %v3931 = vpow.pop %v3930
    %v3932 = vmul.f32 %v3929, 1.442695
    %v3933 = vpow.pop %v3932
    %v3934 = vadd.f32 %v3931, 1.0
    %v3935 = vadd.f32 %v3933, 1.0
    %v3936 = vrcp.pop %v3934
    %v3937 = vmul.f32 1.0, %v3936
    %v3938 = vrcp.pop %v3935
    %v3939 = vmul.f32 1.0, %v3938
    %v3940 = vtanh.pop %v3927
    %v3941 = vmul.f32 %v3937, %v3263
    %3943 = vrot.lane.b32.xlu0 %v3940, 64
    %v3944 = vpop.permute.xlu0 %3943
    %v3946 = vmul.f32 %v3937, %v3944
    %3948 = vrot.lane.b32.xlu0 %v3946, 64
    %v3949 = vpop.permute.xlu0 %3948
    %v3951 = vadd.f32 %v3941, %v3949
    %v3952 = vtanh.pop %v3951
    %3954 = vrot.lane.b32.xlu0 %v3952, 64
    %v3955 = vpop.permute.xlu0 %3954
    %v3957 = vmul.f32 %v3939, %v3955
    %v3958 = vmax.f32 %v3270, %v3957
    %s3959 = smul.u32 4, 2
    %s3960 = smul.addr %s3959, 8
    %s3961 = scalar_lea.vmem [#allocation2], %s3960
    %v3962 = vld [vmem:[%s3961] sm:$0xff]
    %v3963 = vld [vmem:[%s3961 + $0x8] sm:$0xff]
    %v3965 = vsel %vm161, %v3957, 0
    %3967 = vmatprep.subr.mxu0 0.0
    %3968 = vmatpush1.msra.mxu0 0.0
    %3969 = vmatprep.subr.mxu0 0.0
    %3970 = vmatpush1.msra.mxu0 0.0
    %3971 = vmatprep.subr.mxu0 0.0
    %3972 = vmatpush1.msra.mxu0 0.0
    %3973 = vmatprep.subr.mxu0 0.0
    %3974 = vmatpush1.msra.mxu0 0.0
    %3975 = vmatprep.subr.mxu0 0.0
    %3976 = vmatpush1.msra.mxu0 0.0
    %3977 = vmatprep.subr.mxu0 0.0
    %3978 = vmatpush1.msra.mxu0 0.0
    %3979 = vmatprep.subr.mxu0 0.0
    %3980 = vmatpush1.msra.mxu0 0.0
    %3981 = vmatprep.subr.mxu0 0.0
    %3982 = vmatpush1.msra.mxu0 0.0
    %v3983 = vand.u32 %v1207, 4294901760
    %3984 = vmatprep.subr.mxu0 %v3983
    %v3985 = vand.u32 %v1206, 4294901760
    %3986 = vmatpush1.msra.mxu0 %v3985
    %v3987 = vand.u32 %v1205, 4294901760
    %3988 = vmatprep.subr.mxu0 %v3987
    %v3989 = vand.u32 %v1204, 4294901760
    %3990 = vmatpush1.msra.mxu0 %v3989
    %v3991 = vand.u32 %v1203, 4294901760
    %3992 = vmatprep.subr.mxu0 %v3991
    %v3993 = vand.u32 %v1202, 4294901760
    %3994 = vmatpush1.msra.mxu0 %v3993
    %v3995 = vand.u32 %v1201, 4294901760
    %3996 = vmatprep.subr.mxu0 %v3995
    %v3997 = vand.u32 %v1200, 4294901760
    %3998 = vmatpush1.msra.mxu0 %v3997
    %v3999 = vand.u32 %v1199, 4294901760
    %4000 = vmatprep.subr.mxu0 %v3999
    %v4001 = vand.u32 %v1198, 4294901760
    %4002 = vmatpush1.msra.mxu0 %v4001
    %v4003 = vand.u32 %v1197, 4294901760
    %4004 = vmatprep.subr.mxu0 %v4003
    %v4005 = vand.u32 %v1196, 4294901760
    %4006 = vmatpush1.msra.mxu0 %v4005
    %v4007 = vand.u32 %v1195, 4294901760
    %4008 = vmatprep.subr.mxu0 %v4007
    %v4009 = vand.u32 %v1194, 4294901760
    %4010 = vmatpush1.msra.mxu0 %v4009
    %v4011 = vand.u32 %v1193, 4294901760
    %4012 = vmatprep.subr.mxu0 %v4011
    %v4013 = vand.u32 %v1192, 4294901760
    %4014 = vmatpush1.msra.mxu0 %v4013
    %4015 = vmatprep.subr.mxu0 0.0
    %4016 = vmatpush2.msra.mxu0 0.0
    %4017 = vmatprep.subr.mxu0 0.0
    %4018 = vmatpush2.msra.mxu0 0.0
    %4019 = vmatprep.subr.mxu0 0.0
    %4020 = vmatpush2.msra.mxu0 0.0
    %4021 = vmatprep.subr.mxu0 0.0
    %4022 = vmatpush2.msra.mxu0 0.0
    %4023 = vmatprep.subr.mxu0 0.0
    %4024 = vmatpush2.msra.mxu0 0.0
    %4025 = vmatprep.subr.mxu0 0.0
    %4026 = vmatpush2.msra.mxu0 0.0
    %4027 = vmatprep.subr.mxu0 0.0
    %4028 = vmatpush2.msra.mxu0 0.0
    %4029 = vmatprep.subr.mxu0 0.0
    %4030 = vmatpush2.msra.mxu0 0.0
    %4031 = vmatprep.subr.mxu0 0.0
    %4032 = vmatpush2.msra.mxu0 0.0
    %4033 = vmatprep.subr.mxu0 0.0
    %4034 = vmatpush2.msra.mxu0 0.0
    %4035 = vmatprep.subr.mxu0 0.0
    %4036 = vmatpush2.msra.mxu0 0.0
    %4037 = vmatprep.subr.mxu0 0.0
    %4038 = vmatpush2.msra.mxu0 0.0
    %4039 = vmatprep.subr.mxu0 0.0
    %4040 = vmatpush2.msra.mxu0 0.0
    %4041 = vmatprep.subr.mxu0 0.0
    %4042 = vmatpush2.msra.mxu0 0.0
    %4043 = vmatprep.subr.mxu0 0.0
    %4044 = vmatpush2.msra.mxu0 0.0
    %4045 = vmatprep.subr.mxu0 0.0
    %4046 = vmatpush2.msra.mxu0 0.0
    %4047 = vmatprep.mubr.f32.mxu0 0.0
    %v4048 = vand.u32 %v3965, 4294901760
    %v4049 = vsub.f32 %v3965, %v4048
    %v4050 = vand.u32 %v4049, 4294901760
    %v4051 = vsub.f32 %v4049, %v4050
    %v4052 = vand.u32 %v4051, 4294901760
    %4053 = vmatmul.mubr.f32.gmra.mxu0 %v4052
    %v4054 = vpop.f32.mrf.mxu0
    %v4055 = vadd.f32 0.0, %v4054
    %v4056 = vpop.f32.mrf.mxu0
    %v4057 = vadd.f32 0.0, %v4056
    %4058 = vdwg.mxu0
    %4059 = vmatprep.subr.mxu0 0.0
    %4060 = vmatpush1.msra.mxu0 0.0
    %4061 = vmatprep.subr.mxu0 0.0
    %4062 = vmatpush1.msra.mxu0 0.0
    %4063 = vmatprep.subr.mxu0 0.0
    %4064 = vmatpush1.msra.mxu0 0.0
    %4065 = vmatprep.subr.mxu0 0.0
    %4066 = vmatpush1.msra.mxu0 0.0
    %4067 = vmatprep.subr.mxu0 0.0
    %4068 = vmatpush1.msra.mxu0 0.0
    %4069 = vmatprep.subr.mxu0 0.0
    %4070 = vmatpush1.msra.mxu0 0.0
    %4071 = vmatprep.subr.mxu0 0.0
    %4072 = vmatpush1.msra.mxu0 0.0
    %4073 = vmatprep.subr.mxu0 0.0
    %4074 = vmatpush1.msra.mxu0 0.0
    %v4075 = vand.u32 %v1207, 4294901760
    %v4076 = vsub.f32 %v1207, %v4075
    %v4077 = vand.u32 %v4076, 4294901760
    %v4078 = vsub.f32 %v4076, %v4077
    %v4079 = vand.u32 %v4078, 4294901760
    %4080 = vmatprep.subr.mxu0 %v4079
    %v4081 = vand.u32 %v1206, 4294901760
    %v4082 = vsub.f32 %v1206, %v4081
    %v4083 = vand.u32 %v4082, 4294901760
    %v4084 = vsub.f32 %v4082, %v4083
    %v4085 = vand.u32 %v4084, 4294901760
    %4086 = vmatpush1.msra.mxu0 %v4085
    %v4087 = vand.u32 %v1205, 4294901760
    %v4088 = vsub.f32 %v1205, %v4087
    %v4089 = vand.u32 %v4088, 4294901760
    %v4090 = vsub.f32 %v4088, %v4089
    %v4091 = vand.u32 %v4090, 4294901760
    %4092 = vmatprep.subr.mxu0 %v4091
    %v4093 = vand.u32 %v1204, 4294901760
    %v4094 = vsub.f32 %v1204, %v4093
    %v4095 = vand.u32 %v4094, 4294901760
    %v4096 = vsub.f32 %v4094, %v4095
    %v4097 = vand.u32 %v4096, 4294901760
    %4098 = vmatpush1.msra.mxu0 %v4097
    %v4099 = vand.u32 %v1203, 4294901760
    %v4100 = vsub.f32 %v1203, %v4099
    %v4101 = vand.u32 %v4100, 4294901760
    %v4102 = vsub.f32 %v4100, %v4101
    %v4103 = vand.u32 %v4102, 4294901760
    %4104 = vmatprep.subr.mxu0 %v4103
    %v4105 = vand.u32 %v1202, 4294901760
    %v4106 = vsub.f32 %v1202, %v4105
    %v4107 = vand.u32 %v4106, 4294901760
    %v4108 = vsub.f32 %v4106, %v4107
    %v4109 = vand.u32 %v4108, 4294901760
    %4110 = vmatpush1.msra.mxu0 %v4109
    %v4111 = vand.u32 %v1201, 4294901760
    %v4112 = vsub.f32 %v1201, %v4111
    %v4113 = vand.u32 %v4112, 4294901760
    %v4114 = vsub.f32 %v4112, %v4113
    %v4115 = vand.u32 %v4114, 4294901760
    %4116 = vmatprep.subr.mxu0 %v4115
    %v4117 = vand.u32 %v1200, 4294901760
    %v4118 = vsub.f32 %v1200, %v4117
    %v4119 = vand.u32 %v4118, 4294901760
    %v4120 = vsub.f32 %v4118, %v4119
    %v4121 = vand.u32 %v4120, 4294901760
    %4122 = vmatpush1.msra.mxu0 %v4121
    %v4123 = vand.u32 %v1199, 4294901760
    %v4124 = vsub.f32 %v1199, %v4123
    %v4125 = vand.u32 %v4124, 4294901760
    %v4126 = vsub.f32 %v4124, %v4125
    %v4127 = vand.u32 %v4126, 4294901760
    %4128 = vmatprep.subr.mxu0 %v4127
    %v4129 = vand.u32 %v1198, 4294901760
    %v4130 = vsub.f32 %v1198, %v4129
    %v4131 = vand.u32 %v4130, 4294901760
    %v4132 = vsub.f32 %v4130, %v4131
    %v4133 = vand.u32 %v4132, 4294901760
    %4134 = vmatpush1.msra.mxu0 %v4133
    %v4135 = vand.u32 %v1197, 4294901760
    %v4136 = vsub.f32 %v1197, %v4135
    %v4137 = vand.u32 %v4136, 4294901760
    %v4138 = vsub.f32 %v4136, %v4137
    %v4139 = vand.u32 %v4138, 4294901760
    %4140 = vmatprep.subr.mxu0 %v4139
    %v4141 = vand.u32 %v1196, 4294901760
    %v4142 = vsub.f32 %v1196, %v4141
    %v4143 = vand.u32 %v4142, 4294901760
    %v4144 = vsub.f32 %v4142, %v4143
    %v4145 = vand.u32 %v4144, 4294901760
    %4146 = vmatpush1.msra.mxu0 %v4145
    %v4147 = vand.u32 %v1195, 4294901760
    %v4148 = vsub.f32 %v1195, %v4147
    %v4149 = vand.u32 %v4148, 4294901760
    %v4150 = vsub.f32 %v4148, %v4149
    %v4151 = vand.u32 %v4150, 4294901760
    %4152 = vmatprep.subr.mxu0 %v4151
    %v4153 = vand.u32 %v1194, 4294901760
    %v4154 = vsub.f32 %v1194, %v4153
    %v4155 = vand.u32 %v4154, 4294901760
    %v4156 = vsub.f32 %v4154, %v4155
    %v4157 = vand.u32 %v4156, 4294901760
    %4158 = vmatpush1.msra.mxu0 %v4157
    %v4159 = vand.u32 %v1193, 4294901760
    %v4160 = vsub.f32 %v1193, %v4159
    %v4161 = vand.u32 %v4160, 4294901760
    %v4162 = vsub.f32 %v4160, %v4161
    %v4163 = vand.u32 %v4162, 4294901760
    %4164 = vmatprep.subr.mxu0 %v4163
    %v4165 = vand.u32 %v1192, 4294901760
    %v4166 = vsub.f32 %v1192, %v4165
    %v4167 = vand.u32 %v4166, 4294901760
    %v4168 = vsub.f32 %v4166, %v4167
    %v4169 = vand.u32 %v4168, 4294901760
    %4170 = vmatpush1.msra.mxu0 %v4169
    %4171 = vmatprep.subr.mxu0 0.0
    %4172 = vmatpush2.msra.mxu0 0.0
    %4173 = vmatprep.subr.mxu0 0.0
    %4174 = vmatpush2.msra.mxu0 0.0
    %4175 = vmatprep.subr.mxu0 0.0
    %4176 = vmatpush2.msra.mxu0 0.0
    %4177 = vmatprep.subr.mxu0 0.0
    %4178 = vmatpush2.msra.mxu0 0.0
    %4179 = vmatprep.subr.mxu0 0.0
    %4180 = vmatpush2.msra.mxu0 0.0
    %4181 = vmatprep.subr.mxu0 0.0
    %4182 = vmatpush2.msra.mxu0 0.0
    %4183 = vmatprep.subr.mxu0 0.0
    %4184 = vmatpush2.msra.mxu0 0.0
    %4185 = vmatprep.subr.mxu0 0.0
    %4186 = vmatpush2.msra.mxu0 0.0
    %4187 = vmatprep.subr.mxu0 0.0
    %4188 = vmatpush2.msra.mxu0 0.0
    %4189 = vmatprep.subr.mxu0 0.0
    %4190 = vmatpush2.msra.mxu0 0.0
    %4191 = vmatprep.subr.mxu0 0.0
    %4192 = vmatpush2.msra.mxu0 0.0
    %4193 = vmatprep.subr.mxu0 0.0
    %4194 = vmatpush2.msra.mxu0 0.0
    %4195 = vmatprep.subr.mxu0 0.0
    %4196 = vmatpush2.msra.mxu0 0.0
    %4197 = vmatprep.subr.mxu0 0.0
    %4198 = vmatpush2.msra.mxu0 0.0
    %4199 = vmatprep.subr.mxu0 0.0
    %4200 = vmatpush2.msra.mxu0 0.0
    %4201 = vmatprep.subr.mxu0 0.0
    %4202 = vmatpush2.msra.mxu0 0.0
    %4203 = vmatprep.mubr.f32.mxu0 0.0
    %v4204 = vand.u32 %v3965, 4294901760
    %4205 = vmatmul.mubr.f32.gmra.mxu0 %v4204
    %v4206 = vpop.f32.mrf.mxu0
    %v4207 = vadd.f32 %v4055, %v4206
    %v4208 = vpop.f32.mrf.mxu0
    %v4209 = vadd.f32 %v4057, %v4208
    %4210 = vdwg.mxu0
    %4211 = vmatprep.subr.mxu0 0.0
    %4212 = vmatpush1.msra.mxu0 0.0
    %4213 = vmatprep.subr.mxu0 0.0
    %4214 = vmatpush1.msra.mxu0 0.0
    %4215 = vmatprep.subr.mxu0 0.0
    %4216 = vmatpush1.msra.mxu0 0.0
    %4217 = vmatprep.subr.mxu0 0.0
    %4218 = vmatpush1.msra.mxu0 0.0
    %4219 = vmatprep.subr.mxu0 0.0
    %4220 = vmatpush1.msra.mxu0 0.0
    %4221 = vmatprep.subr.mxu0 0.0
    %4222 = vmatpush1.msra.mxu0 0.0
    %4223 = vmatprep.subr.mxu0 0.0
    %4224 = vmatpush1.msra.mxu0 0.0
    %4225 = vmatprep.subr.mxu0 0.0
    %4226 = vmatpush1.msra.mxu0 0.0
    %v4227 = vand.u32 %v1207, 4294901760
    %v4228 = vsub.f32 %v1207, %v4227
    %4229 = vmatprep.subr.mxu0 %v4228
    %v4230 = vand.u32 %v1206, 4294901760
    %v4231 = vsub.f32 %v1206, %v4230
    %4232 = vmatpush1.msra.mxu0 %v4231
    %v4233 = vand.u32 %v1205, 4294901760
    %v4234 = vsub.f32 %v1205, %v4233
    %4235 = vmatprep.subr.mxu0 %v4234
    %v4236 = vand.u32 %v1204, 4294901760
    %v4237 = vsub.f32 %v1204, %v4236
    %4238 = vmatpush1.msra.mxu0 %v4237
    %v4239 = vand.u32 %v1203, 4294901760
    %v4240 = vsub.f32 %v1203, %v4239
    %4241 = vmatprep.subr.mxu0 %v4240
    %v4242 = vand.u32 %v1202, 4294901760
    %v4243 = vsub.f32 %v1202, %v4242
    %4244 = vmatpush1.msra.mxu0 %v4243
    %v4245 = vand.u32 %v1201, 4294901760
    %v4246 = vsub.f32 %v1201, %v4245
    %4247 = vmatprep.subr.mxu0 %v4246
    %v4248 = vand.u32 %v1200, 4294901760
    %v4249 = vsub.f32 %v1200, %v4248
    %4250 = vmatpush1.msra.mxu0 %v4249
    %v4251 = vand.u32 %v1199, 4294901760
    %v4252 = vsub.f32 %v1199, %v4251
    %4253 = vmatprep.subr.mxu0 %v4252
    %v4254 = vand.u32 %v1198, 4294901760
    %v4255 = vsub.f32 %v1198, %v4254
    %4256 = vmatpush1.msra.mxu0 %v4255
    %v4257 = vand.u32 %v1197, 4294901760
    %v4258 = vsub.f32 %v1197, %v4257
    %4259 = vmatprep.subr.mxu0 %v4258
    %v4260 = vand.u32 %v1196, 4294901760
    %v4261 = vsub.f32 %v1196, %v4260
    %4262 = vmatpush1.msra.mxu0 %v4261
    %v4263 = vand.u32 %v1195, 4294901760
    %v4264 = vsub.f32 %v1195, %v4263
    %4265 = vmatprep.subr.mxu0 %v4264
    %v4266 = vand.u32 %v1194, 4294901760
    %v4267 = vsub.f32 %v1194, %v4266
    %4268 = vmatpush1.msra.mxu0 %v4267
    %v4269 = vand.u32 %v1193, 4294901760
    %v4270 = vsub.f32 %v1193, %v4269
    %4271 = vmatprep.subr.mxu0 %v4270
    %v4272 = vand.u32 %v1192, 4294901760
    %v4273 = vsub.f32 %v1192, %v4272
    %4274 = vmatpush1.msra.mxu0 %v4273
    %4275 = vmatprep.subr.mxu0 0.0
    %4276 = vmatpush2.msra.mxu0 0.0
    %4277 = vmatprep.subr.mxu0 0.0
    %4278 = vmatpush2.msra.mxu0 0.0
    %4279 = vmatprep.subr.mxu0 0.0
    %4280 = vmatpush2.msra.mxu0 0.0
    %4281 = vmatprep.subr.mxu0 0.0
    %4282 = vmatpush2.msra.mxu0 0.0
    %4283 = vmatprep.subr.mxu0 0.0
    %4284 = vmatpush2.msra.mxu0 0.0
    %4285 = vmatprep.subr.mxu0 0.0
    %4286 = vmatpush2.msra.mxu0 0.0
    %4287 = vmatprep.subr.mxu0 0.0
    %4288 = vmatpush2.msra.mxu0 0.0
    %4289 = vmatprep.subr.mxu0 0.0
    %4290 = vmatpush2.msra.mxu0 0.0
    %4291 = vmatprep.subr.mxu0 0.0
    %4292 = vmatpush2.msra.mxu0 0.0
    %4293 = vmatprep.subr.mxu0 0.0
    %4294 = vmatpush2.msra.mxu0 0.0
    %4295 = vmatprep.subr.mxu0 0.0
    %4296 = vmatpush2.msra.mxu0 0.0
    %4297 = vmatprep.subr.mxu0 0.0
    %4298 = vmatpush2.msra.mxu0 0.0
    %4299 = vmatprep.subr.mxu0 0.0
    %4300 = vmatpush2.msra.mxu0 0.0
    %4301 = vmatprep.subr.mxu0 0.0
    %4302 = vmatpush2.msra.mxu0 0.0
    %4303 = vmatprep.subr.mxu0 0.0
    %4304 = vmatpush2.msra.mxu0 0.0
    %4305 = vmatprep.subr.mxu0 0.0
    %4306 = vmatpush2.msra.mxu0 0.0
    %4307 = vmatprep.mubr.f32.mxu0 0.0
    %v4308 = vand.u32 %v3965, 4294901760
    %v4309 = vsub.f32 %v3965, %v4308
    %4310 = vmatmul.mubr.f32.gmra.mxu0 %v4309
    %v4311 = vpop.f32.mrf.mxu0
    %v4312 = vadd.f32 %v4207, %v4311
    %v4313 = vpop.f32.mrf.mxu0
    %v4314 = vadd.f32 %v4209, %v4313
    %4315 = vdwg.mxu0
    %4316 = vmatprep.subr.mxu0 0.0
    %4317 = vmatpush1.msra.mxu0 0.0
    %4318 = vmatprep.subr.mxu0 0.0
    %4319 = vmatpush1.msra.mxu0 0.0
    %4320 = vmatprep.subr.mxu0 0.0
    %4321 = vmatpush1.msra.mxu0 0.0
    %4322 = vmatprep.subr.mxu0 0.0
    %4323 = vmatpush1.msra.mxu0 0.0
    %4324 = vmatprep.subr.mxu0 0.0
    %4325 = vmatpush1.msra.mxu0 0.0
    %4326 = vmatprep.subr.mxu0 0.0
    %4327 = vmatpush1.msra.mxu0 0.0
    %4328 = vmatprep.subr.mxu0 0.0
    %4329 = vmatpush1.msra.mxu0 0.0
    %4330 = vmatprep.subr.mxu0 0.0
    %4331 = vmatpush1.msra.mxu0 0.0
    %v4332 = vand.u32 %v1207, 4294901760
    %4333 = vmatprep.subr.mxu0 %v4332
    %v4334 = vand.u32 %v1206, 4294901760
    %4335 = vmatpush1.msra.mxu0 %v4334
    %v4336 = vand.u32 %v1205, 4294901760
    %4337 = vmatprep.subr.mxu0 %v4336
    %v4338 = vand.u32 %v1204, 4294901760
    %4339 = vmatpush1.msra.mxu0 %v4338
    %v4340 = vand.u32 %v1203, 4294901760
    %4341 = vmatprep.subr.mxu0 %v4340
    %v4342 = vand.u32 %v1202, 4294901760
    %4343 = vmatpush1.msra.mxu0 %v4342
    %v4344 = vand.u32 %v1201, 4294901760
    %4345 = vmatprep.subr.mxu0 %v4344
    %v4346 = vand.u32 %v1200, 4294901760
    %4347 = vmatpush1.msra.mxu0 %v4346
    %v4348 = vand.u32 %v1199, 4294901760
    %4349 = vmatprep.subr.mxu0 %v4348
    %v4350 = vand.u32 %v1198, 4294901760
    %4351 = vmatpush1.msra.mxu0 %v4350
    %v4352 = vand.u32 %v1197, 4294901760
    %4353 = vmatprep.subr.mxu0 %v4352
    %v4354 = vand.u32 %v1196, 4294901760
    %4355 = vmatpush1.msra.mxu0 %v4354
    %v4356 = vand.u32 %v1195, 4294901760
    %4357 = vmatprep.subr.mxu0 %v4356
    %v4358 = vand.u32 %v1194, 4294901760
    %4359 = vmatpush1.msra.mxu0 %v4358
    %v4360 = vand.u32 %v1193, 4294901760
    %4361 = vmatprep.subr.mxu0 %v4360
    %v4362 = vand.u32 %v1192, 4294901760
    %4363 = vmatpush1.msra.mxu0 %v4362
    %4364 = vmatprep.subr.mxu0 0.0
    %4365 = vmatpush2.msra.mxu0 0.0
    %4366 = vmatprep.subr.mxu0 0.0
    %4367 = vmatpush2.msra.mxu0 0.0
    %4368 = vmatprep.subr.mxu0 0.0
    %4369 = vmatpush2.msra.mxu0 0.0
    %4370 = vmatprep.subr.mxu0 0.0
    %4371 = vmatpush2.msra.mxu0 0.0
    %4372 = vmatprep.subr.mxu0 0.0
    %4373 = vmatpush2.msra.mxu0 0.0
    %4374 = vmatprep.subr.mxu0 0.0
    %4375 = vmatpush2.msra.mxu0 0.0
    %4376 = vmatprep.subr.mxu0 0.0
    %4377 = vmatpush2.msra.mxu0 0.0
    %4378 = vmatprep.subr.mxu0 0.0
    %4379 = vmatpush2.msra.mxu0 0.0
    %4380 = vmatprep.subr.mxu0 0.0
    %4381 = vmatpush2.msra.mxu0 0.0
    %4382 = vmatprep.subr.mxu0 0.0
    %4383 = vmatpush2.msra.mxu0 0.0
    %4384 = vmatprep.subr.mxu0 0.0
    %4385 = vmatpush2.msra.mxu0 0.0
    %4386 = vmatprep.subr.mxu0 0.0
    %4387 = vmatpush2.msra.mxu0 0.0
    %4388 = vmatprep.subr.mxu0 0.0
    %4389 = vmatpush2.msra.mxu0 0.0
    %4390 = vmatprep.subr.mxu0 0.0
    %4391 = vmatpush2.msra.mxu0 0.0
    %4392 = vmatprep.subr.mxu0 0.0
    %4393 = vmatpush2.msra.mxu0 0.0
    %4394 = vmatprep.subr.mxu0 0.0
    %4395 = vmatpush2.msra.mxu0 0.0
    %4396 = vmatprep.mubr.f32.mxu0 0.0
    %v4397 = vand.u32 %v3965, 4294901760
    %v4398 = vsub.f32 %v3965, %v4397
    %v4399 = vand.u32 %v4398, 4294901760
    %4400 = vmatmul.mubr.f32.gmra.mxu0 %v4399
    %v4401 = vpop.f32.mrf.mxu0
    %v4402 = vadd.f32 %v4312, %v4401
    %v4403 = vpop.f32.mrf.mxu0
    %v4404 = vadd.f32 %v4314, %v4403
    %4405 = vdwg.mxu0
    %4406 = vmatprep.subr.mxu0 0.0
    %4407 = vmatpush1.msra.mxu0 0.0
    %4408 = vmatprep.subr.mxu0 0.0
    %4409 = vmatpush1.msra.mxu0 0.0
    %4410 = vmatprep.subr.mxu0 0.0
    %4411 = vmatpush1.msra.mxu0 0.0
    %4412 = vmatprep.subr.mxu0 0.0
    %4413 = vmatpush1.msra.mxu0 0.0
    %4414 = vmatprep.subr.mxu0 0.0
    %4415 = vmatpush1.msra.mxu0 0.0
    %4416 = vmatprep.subr.mxu0 0.0
    %4417 = vmatpush1.msra.mxu0 0.0
    %4418 = vmatprep.subr.mxu0 0.0
    %4419 = vmatpush1.msra.mxu0 0.0
    %4420 = vmatprep.subr.mxu0 0.0
    %4421 = vmatpush1.msra.mxu0 0.0
    %v4422 = vand.u32 %v1207, 4294901760
    %v4423 = vsub.f32 %v1207, %v4422
    %v4424 = vand.u32 %v4423, 4294901760
    %4425 = vmatprep.subr.mxu0 %v4424
    %v4426 = vand.u32 %v1206, 4294901760
    %v4427 = vsub.f32 %v1206, %v4426
    %v4428 = vand.u32 %v4427, 4294901760
    %4429 = vmatpush1.msra.mxu0 %v4428
    %v4430 = vand.u32 %v1205, 4294901760
    %v4431 = vsub.f32 %v1205, %v4430
    %v4432 = vand.u32 %v4431, 4294901760
    %4433 = vmatprep.subr.mxu0 %v4432
    %v4434 = vand.u32 %v1204, 4294901760
    %v4435 = vsub.f32 %v1204, %v4434
    %v4436 = vand.u32 %v4435, 4294901760
    %4437 = vmatpush1.msra.mxu0 %v4436
    %v4438 = vand.u32 %v1203, 4294901760
    %v4439 = vsub.f32 %v1203, %v4438
    %v4440 = vand.u32 %v4439, 4294901760
    %4441 = vmatprep.subr.mxu0 %v4440
    %v4442 = vand.u32 %v1202, 4294901760
    %v4443 = vsub.f32 %v1202, %v4442
    %v4444 = vand.u32 %v4443, 4294901760
    %4445 = vmatpush1.msra.mxu0 %v4444
    %v4446 = vand.u32 %v1201, 4294901760
    %v4447 = vsub.f32 %v1201, %v4446
    %v4448 = vand.u32 %v4447, 4294901760
    %4449 = vmatprep.subr.mxu0 %v4448
    %v4450 = vand.u32 %v1200, 4294901760
    %v4451 = vsub.f32 %v1200, %v4450
    %v4452 = vand.u32 %v4451, 4294901760
    %4453 = vmatpush1.msra.mxu0 %v4452
    %v4454 = vand.u32 %v1199, 4294901760
    %v4455 = vsub.f32 %v1199, %v4454
    %v4456 = vand.u32 %v4455, 4294901760
    %4457 = vmatprep.subr.mxu0 %v4456
    %v4458 = vand.u32 %v1198, 4294901760
    %v4459 = vsub.f32 %v1198, %v4458
    %v4460 = vand.u32 %v4459, 4294901760
    %4461 = vmatpush1.msra.mxu0 %v4460
    %v4462 = vand.u32 %v1197, 4294901760
    %v4463 = vsub.f32 %v1197, %v4462
    %v4464 = vand.u32 %v4463, 4294901760
    %4465 = vmatprep.subr.mxu0 %v4464
    %v4466 = vand.u32 %v1196, 4294901760
    %v4467 = vsub.f32 %v1196, %v4466
    %v4468 = vand.u32 %v4467, 4294901760
    %4469 = vmatpush1.msra.mxu0 %v4468
    %v4470 = vand.u32 %v1195, 4294901760
    %v4471 = vsub.f32 %v1195, %v4470
    %v4472 = vand.u32 %v4471, 4294901760
    %4473 = vmatprep.subr.mxu0 %v4472
    %v4474 = vand.u32 %v1194, 4294901760
    %v4475 = vsub.f32 %v1194, %v4474
    %v4476 = vand.u32 %v4475, 4294901760
    %4477 = vmatpush1.msra.mxu0 %v4476
    %v4478 = vand.u32 %v1193, 4294901760
    %v4479 = vsub.f32 %v1193, %v4478
    %v4480 = vand.u32 %v4479, 4294901760
    %4481 = vmatprep.subr.mxu0 %v4480
    %v4482 = vand.u32 %v1192, 4294901760
    %v4483 = vsub.f32 %v1192, %v4482
    %v4484 = vand.u32 %v4483, 4294901760
    %4485 = vmatpush1.msra.mxu0 %v4484
    %4486 = vmatprep.subr.mxu0 0.0
    %4487 = vmatpush2.msra.mxu0 0.0
    %4488 = vmatprep.subr.mxu0 0.0
    %4489 = vmatpush2.msra.mxu0 0.0
    %4490 = vmatprep.subr.mxu0 0.0
    %4491 = vmatpush2.msra.mxu0 0.0
    %4492 = vmatprep.subr.mxu0 0.0
    %4493 = vmatpush2.msra.mxu0 0.0
    %4494 = vmatprep.subr.mxu0 0.0
    %4495 = vmatpush2.msra.mxu0 0.0
    %4496 = vmatprep.subr.mxu0 0.0
    %4497 = vmatpush2.msra.mxu0 0.0
    %4498 = vmatprep.subr.mxu0 0.0
    %4499 = vmatpush2.msra.mxu0 0.0
    %4500 = vmatprep.subr.mxu0 0.0
    %4501 = vmatpush2.msra.mxu0 0.0
    %4502 = vmatprep.subr.mxu0 0.0
    %4503 = vmatpush2.msra.mxu0 0.0
    %4504 = vmatprep.subr.mxu0 0.0
    %4505 = vmatpush2.msra.mxu0 0.0
    %4506 = vmatprep.subr.mxu0 0.0
    %4507 = vmatpush2.msra.mxu0 0.0
    %4508 = vmatprep.subr.mxu0 0.0
    %4509 = vmatpush2.msra.mxu0 0.0
    %4510 = vmatprep.subr.mxu0 0.0
    %4511 = vmatpush2.msra.mxu0 0.0
    %4512 = vmatprep.subr.mxu0 0.0
    %4513 = vmatpush2.msra.mxu0 0.0
    %4514 = vmatprep.subr.mxu0 0.0
    %4515 = vmatpush2.msra.mxu0 0.0
    %4516 = vmatprep.subr.mxu0 0.0
    %4517 = vmatpush2.msra.mxu0 0.0
    %4518 = vmatprep.mubr.f32.mxu0 0.0
    %v4519 = vand.u32 %v3965, 4294901760
    %4520 = vmatmul.mubr.f32.gmra.mxu0 %v4519
    %v4521 = vpop.f32.mrf.mxu0
    %v4522 = vadd.f32 %v4402, %v4521
    %v4523 = vpop.f32.mrf.mxu0
    %v4524 = vadd.f32 %v4404, %v4523
    %4525 = vdwg.mxu0
    %4526 = vmatprep.subr.mxu0 0.0
    %4527 = vmatpush1.msra.mxu0 0.0
    %4528 = vmatprep.subr.mxu0 0.0
    %4529 = vmatpush1.msra.mxu0 0.0
    %4530 = vmatprep.subr.mxu0 0.0
    %4531 = vmatpush1.msra.mxu0 0.0
    %4532 = vmatprep.subr.mxu0 0.0
    %4533 = vmatpush1.msra.mxu0 0.0
    %4534 = vmatprep.subr.mxu0 0.0
    %4535 = vmatpush1.msra.mxu0 0.0
    %4536 = vmatprep.subr.mxu0 0.0
    %4537 = vmatpush1.msra.mxu0 0.0
    %4538 = vmatprep.subr.mxu0 0.0
    %4539 = vmatpush1.msra.mxu0 0.0
    %4540 = vmatprep.subr.mxu0 0.0
    %4541 = vmatpush1.msra.mxu0 0.0
    %v4542 = vand.u32 %v1207, 4294901760
    %4543 = vmatprep.subr.mxu0 %v4542
    %v4544 = vand.u32 %v1206, 4294901760
    %4545 = vmatpush1.msra.mxu0 %v4544
    %v4546 = vand.u32 %v1205, 4294901760
    %4547 = vmatprep.subr.mxu0 %v4546
    %v4548 = vand.u32 %v1204, 4294901760
    %4549 = vmatpush1.msra.mxu0 %v4548
    %v4550 = vand.u32 %v1203, 4294901760
    %4551 = vmatprep.subr.mxu0 %v4550
    %v4552 = vand.u32 %v1202, 4294901760
    %4553 = vmatpush1.msra.mxu0 %v4552
    %v4554 = vand.u32 %v1201, 4294901760
    %4555 = vmatprep.subr.mxu0 %v4554
    %v4556 = vand.u32 %v1200, 4294901760
    %4557 = vmatpush1.msra.mxu0 %v4556
    %v4558 = vand.u32 %v1199, 4294901760
    %4559 = vmatprep.subr.mxu0 %v4558
    %v4560 = vand.u32 %v1198, 4294901760
    %4561 = vmatpush1.msra.mxu0 %v4560
    %v4562 = vand.u32 %v1197, 4294901760
    %4563 = vmatprep.subr.mxu0 %v4562
    %v4564 = vand.u32 %v1196, 4294901760
    %4565 = vmatpush1.msra.mxu0 %v4564
    %v4566 = vand.u32 %v1195, 4294901760
    %4567 = vmatprep.subr.mxu0 %v4566
    %v4568 = vand.u32 %v1194, 4294901760
    %4569 = vmatpush1.msra.mxu0 %v4568
    %v4570 = vand.u32 %v1193, 4294901760
    %4571 = vmatprep.subr.mxu0 %v4570
    %v4572 = vand.u32 %v1192, 4294901760
    %4573 = vmatpush1.msra.mxu0 %v4572
    %4574 = vmatprep.subr.mxu0 0.0
    %4575 = vmatpush2.msra.mxu0 0.0
    %4576 = vmatprep.subr.mxu0 0.0
    %4577 = vmatpush2.msra.mxu0 0.0
    %4578 = vmatprep.subr.mxu0 0.0
    %4579 = vmatpush2.msra.mxu0 0.0
    %4580 = vmatprep.subr.mxu0 0.0
    %4581 = vmatpush2.msra.mxu0 0.0
    %4582 = vmatprep.subr.mxu0 0.0
    %4583 = vmatpush2.msra.mxu0 0.0
    %4584 = vmatprep.subr.mxu0 0.0
    %4585 = vmatpush2.msra.mxu0 0.0
    %4586 = vmatprep.subr.mxu0 0.0
    %4587 = vmatpush2.msra.mxu0 0.0
    %4588 = vmatprep.subr.mxu0 0.0
    %4589 = vmatpush2.msra.mxu0 0.0
    %4590 = vmatprep.subr.mxu0 0.0
    %4591 = vmatpush2.msra.mxu0 0.0
    %4592 = vmatprep.subr.mxu0 0.0
    %4593 = vmatpush2.msra.mxu0 0.0
    %4594 = vmatprep.subr.mxu0 0.0
    %4595 = vmatpush2.msra.mxu0 0.0
    %4596 = vmatprep.subr.mxu0 0.0
    %4597 = vmatpush2.msra.mxu0 0.0
    %4598 = vmatprep.subr.mxu0 0.0
    %4599 = vmatpush2.msra.mxu0 0.0
    %4600 = vmatprep.subr.mxu0 0.0
    %4601 = vmatpush2.msra.mxu0 0.0
    %4602 = vmatprep.subr.mxu0 0.0
    %4603 = vmatpush2.msra.mxu0 0.0
    %4604 = vmatprep.subr.mxu0 0.0
    %4605 = vmatpush2.msra.mxu0 0.0
    %4606 = vmatprep.mubr.f32.mxu0 0.0
    %v4607 = vand.u32 %v3965, 4294901760
    %4608 = vmatmul.mubr.f32.gmra.mxu0 %v4607
    %v4609 = vpop.f32.mrf.mxu0
    %v4610 = vadd.f32 %v4522, %v4609
    %v4611 = vpop.f32.mrf.mxu0
    %v4612 = vadd.f32 %v4524, %v4611
    %4613 = vdwg.mxu0
    %v4614 = vadd.f32 %v3962, %v4610
    %v4615 = vadd.f32 %v3963, %v4612
    %v4616 = vxor.u32 %v4614, 2147483648
    %v4617 = vxor.u32 %v4615, 2147483648
    %v4618 = vmul.f32 %v4616, 1.442695
    %v4619 = vpow.pop %v4618
    %v4620 = vmul.f32 %v4617, 1.442695
    %v4621 = vpow.pop %v4620
    %v4622 = vadd.f32 %v4619, 1.0
    %v4623 = vadd.f32 %v4621, 1.0
    %v4624 = vrcp.pop %v4622
    %v4625 = vmul.f32 1.0, %v4624
    %v4626 = vrcp.pop %v4623
    %v4627 = vmul.f32 1.0, %v4626
    %v4628 = vtanh.pop %v4615
    %v4629 = vmul.f32 %v4625, %v3951
    %4631 = vrot.lane.b32.xlu0 %v4628, 64
    %v4632 = vpop.permute.xlu0 %4631
    %v4634 = vmul.f32 %v4625, %v4632
    %4636 = vrot.lane.b32.xlu0 %v4634, 64
    %v4637 = vpop.permute.xlu0 %4636
    %v4639 = vadd.f32 %v4629, %v4637
    %v4640 = vtanh.pop %v4639
    %4642 = vrot.lane.b32.xlu0 %v4640, 64
    %v4643 = vpop.permute.xlu0 %4642
    %v4645 = vmul.f32 %v4627, %v4643
    %v4646 = vmax.f32 %v3958, %v4645
    %s4647 = smul.u32 5, 2
    %s4648 = smul.addr %s4647, 8
    %s4649 = scalar_lea.vmem [#allocation2], %s4648
    %v4650 = vld [vmem:[%s4649] sm:$0xff]
    %v4651 = vld [vmem:[%s4649 + $0x8] sm:$0xff]
    %v4653 = vsel %vm161, %v4645, 0
    %4655 = vmatprep.subr.mxu0 0.0
    %4656 = vmatpush1.msra.mxu0 0.0
    %4657 = vmatprep.subr.mxu0 0.0
    %4658 = vmatpush1.msra.mxu0 0.0
    %4659 = vmatprep.subr.mxu0 0.0
    %4660 = vmatpush1.msra.mxu0 0.0
    %4661 = vmatprep.subr.mxu0 0.0
    %4662 = vmatpush1.msra.mxu0 0.0
    %4663 = vmatprep.subr.mxu0 0.0
    %4664 = vmatpush1.msra.mxu0 0.0
    %4665 = vmatprep.subr.mxu0 0.0
    %4666 = vmatpush1.msra.mxu0 0.0
    %4667 = vmatprep.subr.mxu0 0.0
    %4668 = vmatpush1.msra.mxu0 0.0
    %4669 = vmatprep.subr.mxu0 0.0
    %4670 = vmatpush1.msra.mxu0 0.0
    %v4671 = vand.u32 %v1207, 4294901760
    %4672 = vmatprep.subr.mxu0 %v4671
    %v4673 = vand.u32 %v1206, 4294901760
    %4674 = vmatpush1.msra.mxu0 %v4673
    %v4675 = vand.u32 %v1205, 4294901760
    %4676 = vmatprep.subr.mxu0 %v4675
    %v4677 = vand.u32 %v1204, 4294901760
    %4678 = vmatpush1.msra.mxu0 %v4677
    %v4679 = vand.u32 %v1203, 4294901760
    %4680 = vmatprep.subr.mxu0 %v4679
    %v4681 = vand.u32 %v1202, 4294901760
    %4682 = vmatpush1.msra.mxu0 %v4681
    %v4683 = vand.u32 %v1201, 4294901760
    %4684 = vmatprep.subr.mxu0 %v4683
    %v4685 = vand.u32 %v1200, 4294901760
    %4686 = vmatpush1.msra.mxu0 %v4685
    %v4687 = vand.u32 %v1199, 4294901760
    %4688 = vmatprep.subr.mxu0 %v4687
    %v4689 = vand.u32 %v1198, 4294901760
    %4690 = vmatpush1.msra.mxu0 %v4689
    %v4691 = vand.u32 %v1197, 4294901760
    %4692 = vmatprep.subr.mxu0 %v4691
    %v4693 = vand.u32 %v1196, 4294901760
    %4694 = vmatpush1.msra.mxu0 %v4693
    %v4695 = vand.u32 %v1195, 4294901760
    %4696 = vmatprep.subr.mxu0 %v4695
    %v4697 = vand.u32 %v1194, 4294901760
    %4698 = vmatpush1.msra.mxu0 %v4697
    %v4699 = vand.u32 %v1193, 4294901760
    %4700 = vmatprep.subr.mxu0 %v4699
    %v4701 = vand.u32 %v1192, 4294901760
    %4702 = vmatpush1.msra.mxu0 %v4701
    %4703 = vmatprep.subr.mxu0 0.0
    %4704 = vmatpush2.msra.mxu0 0.0
    %4705 = vmatprep.subr.mxu0 0.0
    %4706 = vmatpush2.msra.mxu0 0.0
    %4707 = vmatprep.subr.mxu0 0.0
    %4708 = vmatpush2.msra.mxu0 0.0
    %4709 = vmatprep.subr.mxu0 0.0
    %4710 = vmatpush2.msra.mxu0 0.0
    %4711 = vmatprep.subr.mxu0 0.0
    %4712 = vmatpush2.msra.mxu0 0.0
    %4713 = vmatprep.subr.mxu0 0.0
    %4714 = vmatpush2.msra.mxu0 0.0
    %4715 = vmatprep.subr.mxu0 0.0
    %4716 = vmatpush2.msra.mxu0 0.0
    %4717 = vmatprep.subr.mxu0 0.0
    %4718 = vmatpush2.msra.mxu0 0.0
    %4719 = vmatprep.subr.mxu0 0.0
    %4720 = vmatpush2.msra.mxu0 0.0
    %4721 = vmatprep.subr.mxu0 0.0
    %4722 = vmatpush2.msra.mxu0 0.0
    %4723 = vmatprep.subr.mxu0 0.0
    %4724 = vmatpush2.msra.mxu0 0.0
    %4725 = vmatprep.subr.mxu0 0.0
    %4726 = vmatpush2.msra.mxu0 0.0
    %4727 = vmatprep.subr.mxu0 0.0
    %4728 = vmatpush2.msra.mxu0 0.0
    %4729 = vmatprep.subr.mxu0 0.0
    %4730 = vmatpush2.msra.mxu0 0.0
    %4731 = vmatprep.subr.mxu0 0.0
    %4732 = vmatpush2.msra.mxu0 0.0
    %4733 = vmatprep.subr.mxu0 0.0
    %4734 = vmatpush2.msra.mxu0 0.0
    %4735 = vmatprep.mubr.f32.mxu0 0.0
    %v4736 = vand.u32 %v4653, 4294901760
    %v4737 = vsub.f32 %v4653, %v4736
    %v4738 = vand.u32 %v4737, 4294901760
    %v4739 = vsub.f32 %v4737, %v4738
    %v4740 = vand.u32 %v4739, 4294901760
    %4741 = vmatmul.mubr.f32.gmra.mxu0 %v4740
    %v4742 = vpop.f32.mrf.mxu0
    %v4743 = vadd.f32 0.0, %v4742
    %v4744 = vpop.f32.mrf.mxu0
    %v4745 = vadd.f32 0.0, %v4744
    %4746 = vdwg.mxu0
    %4747 = vmatprep.subr.mxu0 0.0
    %4748 = vmatpush1.msra.mxu0 0.0
    %4749 = vmatprep.subr.mxu0 0.0
    %4750 = vmatpush1.msra.mxu0 0.0
    %4751 = vmatprep.subr.mxu0 0.0
    %4752 = vmatpush1.msra.mxu0 0.0
    %4753 = vmatprep.subr.mxu0 0.0
    %4754 = vmatpush1.msra.mxu0 0.0
    %4755 = vmatprep.subr.mxu0 0.0
    %4756 = vmatpush1.msra.mxu0 0.0
    %4757 = vmatprep.subr.mxu0 0.0
    %4758 = vmatpush1.msra.mxu0 0.0
    %4759 = vmatprep.subr.mxu0 0.0
    %4760 = vmatpush1.msra.mxu0 0.0
    %4761 = vmatprep.subr.mxu0 0.0
    %4762 = vmatpush1.msra.mxu0 0.0
    %v4763 = vand.u32 %v1207, 4294901760
    %v4764 = vsub.f32 %v1207, %v4763
    %v4765 = vand.u32 %v4764, 4294901760
    %v4766 = vsub.f32 %v4764, %v4765
    %v4767 = vand.u32 %v4766, 4294901760
    %4768 = vmatprep.subr.mxu0 %v4767
    %v4769 = vand.u32 %v1206, 4294901760
    %v4770 = vsub.f32 %v1206, %v4769
    %v4771 = vand.u32 %v4770, 4294901760
    %v4772 = vsub.f32 %v4770, %v4771
    %v4773 = vand.u32 %v4772, 4294901760
    %4774 = vmatpush1.msra.mxu0 %v4773
    %v4775 = vand.u32 %v1205, 4294901760
    %v4776 = vsub.f32 %v1205, %v4775
    %v4777 = vand.u32 %v4776, 4294901760
    %v4778 = vsub.f32 %v4776, %v4777
    %v4779 = vand.u32 %v4778, 4294901760
    %4780 = vmatprep.subr.mxu0 %v4779
    %v4781 = vand.u32 %v1204, 4294901760
    %v4782 = vsub.f32 %v1204, %v4781
    %v4783 = vand.u32 %v4782, 4294901760
    %v4784 = vsub.f32 %v4782, %v4783
    %v4785 = vand.u32 %v4784, 4294901760
    %4786 = vmatpush1.msra.mxu0 %v4785
    %v4787 = vand.u32 %v1203, 4294901760
    %v4788 = vsub.f32 %v1203, %v4787
    %v4789 = vand.u32 %v4788, 4294901760
    %v4790 = vsub.f32 %v4788, %v4789
    %v4791 = vand.u32 %v4790, 4294901760
    %4792 = vmatprep.subr.mxu0 %v4791
    %v4793 = vand.u32 %v1202, 4294901760
    %v4794 = vsub.f32 %v1202, %v4793
    %v4795 = vand.u32 %v4794, 4294901760
    %v4796 = vsub.f32 %v4794, %v4795
    %v4797 = vand.u32 %v4796, 4294901760
    %4798 = vmatpush1.msra.mxu0 %v4797
    %v4799 = vand.u32 %v1201, 4294901760
    %v4800 = vsub.f32 %v1201, %v4799
    %v4801 = vand.u32 %v4800, 4294901760
    %v4802 = vsub.f32 %v4800, %v4801
    %v4803 = vand.u32 %v4802, 4294901760
    %4804 = vmatprep.subr.mxu0 %v4803
    %v4805 = vand.u32 %v1200, 4294901760
    %v4806 = vsub.f32 %v1200, %v4805
    %v4807 = vand.u32 %v4806, 4294901760
    %v4808 = vsub.f32 %v4806, %v4807
    %v4809 = vand.u32 %v4808, 4294901760
    %4810 = vmatpush1.msra.mxu0 %v4809
    %v4811 = vand.u32 %v1199, 4294901760
    %v4812 = vsub.f32 %v1199, %v4811
    %v4813 = vand.u32 %v4812, 4294901760
    %v4814 = vsub.f32 %v4812, %v4813
    %v4815 = vand.u32 %v4814, 4294901760
    %4816 = vmatprep.subr.mxu0 %v4815
    %v4817 = vand.u32 %v1198, 4294901760
    %v4818 = vsub.f32 %v1198, %v4817
    %v4819 = vand.u32 %v4818, 4294901760
    %v4820 = vsub.f32 %v4818, %v4819
    %v4821 = vand.u32 %v4820, 4294901760
    %4822 = vmatpush1.msra.mxu0 %v4821
    %v4823 = vand.u32 %v1197, 4294901760
    %v4824 = vsub.f32 %v1197, %v4823
    %v4825 = vand.u32 %v4824, 4294901760
    %v4826 = vsub.f32 %v4824, %v4825
    %v4827 = vand.u32 %v4826, 4294901760
    %4828 = vmatprep.subr.mxu0 %v4827
    %v4829 = vand.u32 %v1196, 4294901760
    %v4830 = vsub.f32 %v1196, %v4829
    %v4831 = vand.u32 %v4830, 4294901760
    %v4832 = vsub.f32 %v4830, %v4831
    %v4833 = vand.u32 %v4832, 4294901760
    %4834 = vmatpush1.msra.mxu0 %v4833
    %v4835 = vand.u32 %v1195, 4294901760
    %v4836 = vsub.f32 %v1195, %v4835
    %v4837 = vand.u32 %v4836, 4294901760
    %v4838 = vsub.f32 %v4836, %v4837
    %v4839 = vand.u32 %v4838, 4294901760
    %4840 = vmatprep.subr.mxu0 %v4839
    %v4841 = vand.u32 %v1194, 4294901760
    %v4842 = vsub.f32 %v1194, %v4841
    %v4843 = vand.u32 %v4842, 4294901760
    %v4844 = vsub.f32 %v4842, %v4843
    %v4845 = vand.u32 %v4844, 4294901760
    %4846 = vmatpush1.msra.mxu0 %v4845
    %v4847 = vand.u32 %v1193, 4294901760
    %v4848 = vsub.f32 %v1193, %v4847
    %v4849 = vand.u32 %v4848, 4294901760
    %v4850 = vsub.f32 %v4848, %v4849
    %v4851 = vand.u32 %v4850, 4294901760
    %4852 = vmatprep.subr.mxu0 %v4851
    %v4853 = vand.u32 %v1192, 4294901760
    %v4854 = vsub.f32 %v1192, %v4853
    %v4855 = vand.u32 %v4854, 4294901760
    %v4856 = vsub.f32 %v4854, %v4855
    %v4857 = vand.u32 %v4856, 4294901760
    %4858 = vmatpush1.msra.mxu0 %v4857
    %4859 = vmatprep.subr.mxu0 0.0
    %4860 = vmatpush2.msra.mxu0 0.0
    %4861 = vmatprep.subr.mxu0 0.0
    %4862 = vmatpush2.msra.mxu0 0.0
    %4863 = vmatprep.subr.mxu0 0.0
    %4864 = vmatpush2.msra.mxu0 0.0
    %4865 = vmatprep.subr.mxu0 0.0
    %4866 = vmatpush2.msra.mxu0 0.0
    %4867 = vmatprep.subr.mxu0 0.0
    %4868 = vmatpush2.msra.mxu0 0.0
    %4869 = vmatprep.subr.mxu0 0.0
    %4870 = vmatpush2.msra.mxu0 0.0
    %4871 = vmatprep.subr.mxu0 0.0
    %4872 = vmatpush2.msra.mxu0 0.0
    %4873 = vmatprep.subr.mxu0 0.0
    %4874 = vmatpush2.msra.mxu0 0.0
    %4875 = vmatprep.subr.mxu0 0.0
    %4876 = vmatpush2.msra.mxu0 0.0
    %4877 = vmatprep.subr.mxu0 0.0
    %4878 = vmatpush2.msra.mxu0 0.0
    %4879 = vmatprep.subr.mxu0 0.0
    %4880 = vmatpush2.msra.mxu0 0.0
    %4881 = vmatprep.subr.mxu0 0.0
    %4882 = vmatpush2.msra.mxu0 0.0
    %4883 = vmatprep.subr.mxu0 0.0
    %4884 = vmatpush2.msra.mxu0 0.0
    %4885 = vmatprep.subr.mxu0 0.0
    %4886 = vmatpush2.msra.mxu0 0.0
    %4887 = vmatprep.subr.mxu0 0.0
    %4888 = vmatpush2.msra.mxu0 0.0
    %4889 = vmatprep.subr.mxu0 0.0
    %4890 = vmatpush2.msra.mxu0 0.0
    %4891 = vmatprep.mubr.f32.mxu0 0.0
    %v4892 = vand.u32 %v4653, 4294901760
    %4893 = vmatmul.mubr.f32.gmra.mxu0 %v4892
    %v4894 = vpop.f32.mrf.mxu0
    %v4895 = vadd.f32 %v4743, %v4894
    %v4896 = vpop.f32.mrf.mxu0
    %v4897 = vadd.f32 %v4745, %v4896
    %4898 = vdwg.mxu0
    %4899 = vmatprep.subr.mxu0 0.0
    %4900 = vmatpush1.msra.mxu0 0.0
    %4901 = vmatprep.subr.mxu0 0.0
    %4902 = vmatpush1.msra.mxu0 0.0
    %4903 = vmatprep.subr.mxu0 0.0
    %4904 = vmatpush1.msra.mxu0 0.0
    %4905 = vmatprep.subr.mxu0 0.0
    %4906 = vmatpush1.msra.mxu0 0.0
    %4907 = vmatprep.subr.mxu0 0.0
    %4908 = vmatpush1.msra.mxu0 0.0
    %4909 = vmatprep.subr.mxu0 0.0
    %4910 = vmatpush1.msra.mxu0 0.0
    %4911 = vmatprep.subr.mxu0 0.0
    %4912 = vmatpush1.msra.mxu0 0.0
    %4913 = vmatprep.subr.mxu0 0.0
    %4914 = vmatpush1.msra.mxu0 0.0
    %v4915 = vand.u32 %v1207, 4294901760
    %v4916 = vsub.f32 %v1207, %v4915
    %4917 = vmatprep.subr.mxu0 %v4916
    %v4918 = vand.u32 %v1206, 4294901760
    %v4919 = vsub.f32 %v1206, %v4918
    %4920 = vmatpush1.msra.mxu0 %v4919
    %v4921 = vand.u32 %v1205, 4294901760
    %v4922 = vsub.f32 %v1205, %v4921
    %4923 = vmatprep.subr.mxu0 %v4922
    %v4924 = vand.u32 %v1204, 4294901760
    %v4925 = vsub.f32 %v1204, %v4924
    %4926 = vmatpush1.msra.mxu0 %v4925
    %v4927 = vand.u32 %v1203, 4294901760
    %v4928 = vsub.f32 %v1203, %v4927
    %4929 = vmatprep.subr.mxu0 %v4928
    %v4930 = vand.u32 %v1202, 4294901760
    %v4931 = vsub.f32 %v1202, %v4930
    %4932 = vmatpush1.msra.mxu0 %v4931
    %v4933 = vand.u32 %v1201, 4294901760
    %v4934 = vsub.f32 %v1201, %v4933
    %4935 = vmatprep.subr.mxu0 %v4934
    %v4936 = vand.u32 %v1200, 4294901760
    %v4937 = vsub.f32 %v1200, %v4936
    %4938 = vmatpush1.msra.mxu0 %v4937
    %v4939 = vand.u32 %v1199, 4294901760
    %v4940 = vsub.f32 %v1199, %v4939
    %4941 = vmatprep.subr.mxu0 %v4940
    %v4942 = vand.u32 %v1198, 4294901760
    %v4943 = vsub.f32 %v1198, %v4942
    %4944 = vmatpush1.msra.mxu0 %v4943
    %v4945 = vand.u32 %v1197, 4294901760
    %v4946 = vsub.f32 %v1197, %v4945
    %4947 = vmatprep.subr.mxu0 %v4946
    %v4948 = vand.u32 %v1196, 4294901760
    %v4949 = vsub.f32 %v1196, %v4948
    %4950 = vmatpush1.msra.mxu0 %v4949
    %v4951 = vand.u32 %v1195, 4294901760
    %v4952 = vsub.f32 %v1195, %v4951
    %4953 = vmatprep.subr.mxu0 %v4952
    %v4954 = vand.u32 %v1194, 4294901760
    %v4955 = vsub.f32 %v1194, %v4954
    %4956 = vmatpush1.msra.mxu0 %v4955
    %v4957 = vand.u32 %v1193, 4294901760
    %v4958 = vsub.f32 %v1193, %v4957
    %4959 = vmatprep.subr.mxu0 %v4958
    %v4960 = vand.u32 %v1192, 4294901760
    %v4961 = vsub.f32 %v1192, %v4960
    %4962 = vmatpush1.msra.mxu0 %v4961
    %4963 = vmatprep.subr.mxu0 0.0
    %4964 = vmatpush2.msra.mxu0 0.0
    %4965 = vmatprep.subr.mxu0 0.0
    %4966 = vmatpush2.msra.mxu0 0.0
    %4967 = vmatprep.subr.mxu0 0.0
    %4968 = vmatpush2.msra.mxu0 0.0
    %4969 = vmatprep.subr.mxu0 0.0
    %4970 = vmatpush2.msra.mxu0 0.0
    %4971 = vmatprep.subr.mxu0 0.0
    %4972 = vmatpush2.msra.mxu0 0.0
    %4973 = vmatprep.subr.mxu0 0.0
    %4974 = vmatpush2.msra.mxu0 0.0
    %4975 = vmatprep.subr.mxu0 0.0
    %4976 = vmatpush2.msra.mxu0 0.0
    %4977 = vmatprep.subr.mxu0 0.0
    %4978 = vmatpush2.msra.mxu0 0.0
    %4979 = vmatprep.subr.mxu0 0.0
    %4980 = vmatpush2.msra.mxu0 0.0
    %4981 = vmatprep.subr.mxu0 0.0
    %4982 = vmatpush2.msra.mxu0 0.0
    %4983 = vmatprep.subr.mxu0 0.0
    %4984 = vmatpush2.msra.mxu0 0.0
    %4985 = vmatprep.subr.mxu0 0.0
    %4986 = vmatpush2.msra.mxu0 0.0
    %4987 = vmatprep.subr.mxu0 0.0
    %4988 = vmatpush2.msra.mxu0 0.0
    %4989 = vmatprep.subr.mxu0 0.0
    %4990 = vmatpush2.msra.mxu0 0.0
    %4991 = vmatprep.subr.mxu0 0.0
    %4992 = vmatpush2.msra.mxu0 0.0
    %4993 = vmatprep.subr.mxu0 0.0
    %4994 = vmatpush2.msra.mxu0 0.0
    %4995 = vmatprep.mubr.f32.mxu0 0.0
    %v4996 = vand.u32 %v4653, 4294901760
    %v4997 = vsub.f32 %v4653, %v4996
    %4998 = vmatmul.mubr.f32.gmra.mxu0 %v4997
    %v4999 = vpop.f32.mrf.mxu0
    %v5000 = vadd.f32 %v4895, %v4999
    %v5001 = vpop.f32.mrf.mxu0
    %v5002 = vadd.f32 %v4897, %v5001
    %5003 = vdwg.mxu0
    %5004 = vmatprep.subr.mxu0 0.0
    %5005 = vmatpush1.msra.mxu0 0.0
    %5006 = vmatprep.subr.mxu0 0.0
    %5007 = vmatpush1.msra.mxu0 0.0
    %5008 = vmatprep.subr.mxu0 0.0
    %5009 = vmatpush1.msra.mxu0 0.0
    %5010 = vmatprep.subr.mxu0 0.0
    %5011 = vmatpush1.msra.mxu0 0.0
    %5012 = vmatprep.subr.mxu0 0.0
    %5013 = vmatpush1.msra.mxu0 0.0
    %5014 = vmatprep.subr.mxu0 0.0
    %5015 = vmatpush1.msra.mxu0 0.0
    %5016 = vmatprep.subr.mxu0 0.0
    %5017 = vmatpush1.msra.mxu0 0.0
    %5018 = vmatprep.subr.mxu0 0.0
    %5019 = vmatpush1.msra.mxu0 0.0
    %v5020 = vand.u32 %v1207, 4294901760
    %5021 = vmatprep.subr.mxu0 %v5020
    %v5022 = vand.u32 %v1206, 4294901760
    %5023 = vmatpush1.msra.mxu0 %v5022
    %v5024 = vand.u32 %v1205, 4294901760
    %5025 = vmatprep.subr.mxu0 %v5024
    %v5026 = vand.u32 %v1204, 4294901760
    %5027 = vmatpush1.msra.mxu0 %v5026
    %v5028 = vand.u32 %v1203, 4294901760
    %5029 = vmatprep.subr.mxu0 %v5028
    %v5030 = vand.u32 %v1202, 4294901760
    %5031 = vmatpush1.msra.mxu0 %v5030
    %v5032 = vand.u32 %v1201, 4294901760
    %5033 = vmatprep.subr.mxu0 %v5032
    %v5034 = vand.u32 %v1200, 4294901760
    %5035 = vmatpush1.msra.mxu0 %v5034
    %v5036 = vand.u32 %v1199, 4294901760
    %5037 = vmatprep.subr.mxu0 %v5036
    %v5038 = vand.u32 %v1198, 4294901760
    %5039 = vmatpush1.msra.mxu0 %v5038
    %v5040 = vand.u32 %v1197, 4294901760
    %5041 = vmatprep.subr.mxu0 %v5040
    %v5042 = vand.u32 %v1196, 4294901760
    %5043 = vmatpush1.msra.mxu0 %v5042
    %v5044 = vand.u32 %v1195, 4294901760
    %5045 = vmatprep.subr.mxu0 %v5044
    %v5046 = vand.u32 %v1194, 4294901760
    %5047 = vmatpush1.msra.mxu0 %v5046
    %v5048 = vand.u32 %v1193, 4294901760
    %5049 = vmatprep.subr.mxu0 %v5048
    %v5050 = vand.u32 %v1192, 4294901760
    %5051 = vmatpush1.msra.mxu0 %v5050
    %5052 = vmatprep.subr.mxu0 0.0
    %5053 = vmatpush2.msra.mxu0 0.0
    %5054 = vmatprep.subr.mxu0 0.0
    %5055 = vmatpush2.msra.mxu0 0.0
    %5056 = vmatprep.subr.mxu0 0.0
    %5057 = vmatpush2.msra.mxu0 0.0
    %5058 = vmatprep.subr.mxu0 0.0
    %5059 = vmatpush2.msra.mxu0 0.0
    %5060 = vmatprep.subr.mxu0 0.0
    %5061 = vmatpush2.msra.mxu0 0.0
    %5062 = vmatprep.subr.mxu0 0.0
    %5063 = vmatpush2.msra.mxu0 0.0
    %5064 = vmatprep.subr.mxu0 0.0
    %5065 = vmatpush2.msra.mxu0 0.0
    %5066 = vmatprep.subr.mxu0 0.0
    %5067 = vmatpush2.msra.mxu0 0.0
    %5068 = vmatprep.subr.mxu0 0.0
    %5069 = vmatpush2.msra.mxu0 0.0
    %5070 = vmatprep.subr.mxu0 0.0
    %5071 = vmatpush2.msra.mxu0 0.0
    %5072 = vmatprep.subr.mxu0 0.0
    %5073 = vmatpush2.msra.mxu0 0.0
    %5074 = vmatprep.subr.mxu0 0.0
    %5075 = vmatpush2.msra.mxu0 0.0
    %5076 = vmatprep.subr.mxu0 0.0
    %5077 = vmatpush2.msra.mxu0 0.0
    %5078 = vmatprep.subr.mxu0 0.0
    %5079 = vmatpush2.msra.mxu0 0.0
    %5080 = vmatprep.subr.mxu0 0.0
    %5081 = vmatpush2.msra.mxu0 0.0
    %5082 = vmatprep.subr.mxu0 0.0
    %5083 = vmatpush2.msra.mxu0 0.0
    %5084 = vmatprep.mubr.f32.mxu0 0.0
    %v5085 = vand.u32 %v4653, 4294901760
    %v5086 = vsub.f32 %v4653, %v5085
    %v5087 = vand.u32 %v5086, 4294901760
    %5088 = vmatmul.mubr.f32.gmra.mxu0 %v5087
    %v5089 = vpop.f32.mrf.mxu0
    %v5090 = vadd.f32 %v5000, %v5089
    %v5091 = vpop.f32.mrf.mxu0
    %v5092 = vadd.f32 %v5002, %v5091
    %5093 = vdwg.mxu0
    %5094 = vmatprep.subr.mxu0 0.0
    %5095 = vmatpush1.msra.mxu0 0.0
    %5096 = vmatprep.subr.mxu0 0.0
    %5097 = vmatpush1.msra.mxu0 0.0
    %5098 = vmatprep.subr.mxu0 0.0
    %5099 = vmatpush1.msra.mxu0 0.0
    %5100 = vmatprep.subr.mxu0 0.0
    %5101 = vmatpush1.msra.mxu0 0.0
    %5102 = vmatprep.subr.mxu0 0.0
    %5103 = vmatpush1.msra.mxu0 0.0
    %5104 = vmatprep.subr.mxu0 0.0
    %5105 = vmatpush1.msra.mxu0 0.0
    %5106 = vmatprep.subr.mxu0 0.0
    %5107 = vmatpush1.msra.mxu0 0.0
    %5108 = vmatprep.subr.mxu0 0.0
    %5109 = vmatpush1.msra.mxu0 0.0
    %v5110 = vand.u32 %v1207, 4294901760
    %v5111 = vsub.f32 %v1207, %v5110
    %v5112 = vand.u32 %v5111, 4294901760
    %5113 = vmatprep.subr.mxu0 %v5112
    %v5114 = vand.u32 %v1206, 4294901760
    %v5115 = vsub.f32 %v1206, %v5114
    %v5116 = vand.u32 %v5115, 4294901760
    %5117 = vmatpush1.msra.mxu0 %v5116
    %v5118 = vand.u32 %v1205, 4294901760
    %v5119 = vsub.f32 %v1205, %v5118
    %v5120 = vand.u32 %v5119, 4294901760
    %5121 = vmatprep.subr.mxu0 %v5120
    %v5122 = vand.u32 %v1204, 4294901760
    %v5123 = vsub.f32 %v1204, %v5122
    %v5124 = vand.u32 %v5123, 4294901760
    %5125 = vmatpush1.msra.mxu0 %v5124
    %v5126 = vand.u32 %v1203, 4294901760
    %v5127 = vsub.f32 %v1203, %v5126
    %v5128 = vand.u32 %v5127, 4294901760
    %5129 = vmatprep.subr.mxu0 %v5128
    %v5130 = vand.u32 %v1202, 4294901760
    %v5131 = vsub.f32 %v1202, %v5130
    %v5132 = vand.u32 %v5131, 4294901760
    %5133 = vmatpush1.msra.mxu0 %v5132
    %v5134 = vand.u32 %v1201, 4294901760
    %v5135 = vsub.f32 %v1201, %v5134
    %v5136 = vand.u32 %v5135, 4294901760
    %5137 = vmatprep.subr.mxu0 %v5136
    %v5138 = vand.u32 %v1200, 4294901760
    %v5139 = vsub.f32 %v1200, %v5138
    %v5140 = vand.u32 %v5139, 4294901760
    %5141 = vmatpush1.msra.mxu0 %v5140
    %v5142 = vand.u32 %v1199, 4294901760
    %v5143 = vsub.f32 %v1199, %v5142
    %v5144 = vand.u32 %v5143, 4294901760
    %5145 = vmatprep.subr.mxu0 %v5144
    %v5146 = vand.u32 %v1198, 4294901760
    %v5147 = vsub.f32 %v1198, %v5146
    %v5148 = vand.u32 %v5147, 4294901760
    %5149 = vmatpush1.msra.mxu0 %v5148
    %v5150 = vand.u32 %v1197, 4294901760
    %v5151 = vsub.f32 %v1197, %v5150
    %v5152 = vand.u32 %v5151, 4294901760
    %5153 = vmatprep.subr.mxu0 %v5152
    %v5154 = vand.u32 %v1196, 4294901760
    %v5155 = vsub.f32 %v1196, %v5154
    %v5156 = vand.u32 %v5155, 4294901760
    %5157 = vmatpush1.msra.mxu0 %v5156
    %v5158 = vand.u32 %v1195, 4294901760
    %v5159 = vsub.f32 %v1195, %v5158
    %v5160 = vand.u32 %v5159, 4294901760
    %5161 = vmatprep.subr.mxu0 %v5160
    %v5162 = vand.u32 %v1194, 4294901760
    %v5163 = vsub.f32 %v1194, %v5162
    %v5164 = vand.u32 %v5163, 4294901760
    %5165 = vmatpush1.msra.mxu0 %v5164
    %v5166 = vand.u32 %v1193, 4294901760
    %v5167 = vsub.f32 %v1193, %v5166
    %v5168 = vand.u32 %v5167, 4294901760
    %5169 = vmatprep.subr.mxu0 %v5168
    %v5170 = vand.u32 %v1192, 4294901760
    %v5171 = vsub.f32 %v1192, %v5170
    %v5172 = vand.u32 %v5171, 4294901760
    %5173 = vmatpush1.msra.mxu0 %v5172
    %5174 = vmatprep.subr.mxu0 0.0
    %5175 = vmatpush2.msra.mxu0 0.0
    %5176 = vmatprep.subr.mxu0 0.0
    %5177 = vmatpush2.msra.mxu0 0.0
    %5178 = vmatprep.subr.mxu0 0.0
    %5179 = vmatpush2.msra.mxu0 0.0
    %5180 = vmatprep.subr.mxu0 0.0
    %5181 = vmatpush2.msra.mxu0 0.0
    %5182 = vmatprep.subr.mxu0 0.0
    %5183 = vmatpush2.msra.mxu0 0.0
    %5184 = vmatprep.subr.mxu0 0.0
    %5185 = vmatpush2.msra.mxu0 0.0
    %5186 = vmatprep.subr.mxu0 0.0
    %5187 = vmatpush2.msra.mxu0 0.0
    %5188 = vmatprep.subr.mxu0 0.0
    %5189 = vmatpush2.msra.mxu0 0.0
    %5190 = vmatprep.subr.mxu0 0.0
    %5191 = vmatpush2.msra.mxu0 0.0
    %5192 = vmatprep.subr.mxu0 0.0
    %5193 = vmatpush2.msra.mxu0 0.0
    %5194 = vmatprep.subr.mxu0 0.0
    %5195 = vmatpush2.msra.mxu0 0.0
    %5196 = vmatprep.subr.mxu0 0.0
    %5197 = vmatpush2.msra.mxu0 0.0
    %5198 = vmatprep.subr.mxu0 0.0
    %5199 = vmatpush2.msra.mxu0 0.0
    %5200 = vmatprep.subr.mxu0 0.0
    %5201 = vmatpush2.msra.mxu0 0.0
    %5202 = vmatprep.subr.mxu0 0.0
    %5203 = vmatpush2.msra.mxu0 0.0
    %5204 = vmatprep.subr.mxu0 0.0
    %5205 = vmatpush2.msra.mxu0 0.0
    %5206 = vmatprep.mubr.f32.mxu0 0.0
    %v5207 = vand.u32 %v4653, 4294901760
    %5208 = vmatmul.mubr.f32.gmra.mxu0 %v5207
    %v5209 = vpop.f32.mrf.mxu0
    %v5210 = vadd.f32 %v5090, %v5209
    %v5211 = vpop.f32.mrf.mxu0
    %v5212 = vadd.f32 %v5092, %v5211
    %5213 = vdwg.mxu0
    %5214 = vmatprep.subr.mxu0 0.0
    %5215 = vmatpush1.msra.mxu0 0.0
    %5216 = vmatprep.subr.mxu0 0.0
    %5217 = vmatpush1.msra.mxu0 0.0
    %5218 = vmatprep.subr.mxu0 0.0
    %5219 = vmatpush1.msra.mxu0 0.0
    %5220 = vmatprep.subr.mxu0 0.0
    %5221 = vmatpush1.msra.mxu0 0.0
    %5222 = vmatprep.subr.mxu0 0.0
    %5223 = vmatpush1.msra.mxu0 0.0
    %5224 = vmatprep.subr.mxu0 0.0
    %5225 = vmatpush1.msra.mxu0 0.0
    %5226 = vmatprep.subr.mxu0 0.0
    %5227 = vmatpush1.msra.mxu0 0.0
    %5228 = vmatprep.subr.mxu0 0.0
    %5229 = vmatpush1.msra.mxu0 0.0
    %v5230 = vand.u32 %v1207, 4294901760
    %5231 = vmatprep.subr.mxu0 %v5230
    %v5232 = vand.u32 %v1206, 4294901760
    %5233 = vmatpush1.msra.mxu0 %v5232
    %v5234 = vand.u32 %v1205, 4294901760
    %5235 = vmatprep.subr.mxu0 %v5234
    %v5236 = vand.u32 %v1204, 4294901760
    %5237 = vmatpush1.msra.mxu0 %v5236
    %v5238 = vand.u32 %v1203, 4294901760
    %5239 = vmatprep.subr.mxu0 %v5238
    %v5240 = vand.u32 %v1202, 4294901760
    %5241 = vmatpush1.msra.mxu0 %v5240
    %v5242 = vand.u32 %v1201, 4294901760
    %5243 = vmatprep.subr.mxu0 %v5242
    %v5244 = vand.u32 %v1200, 4294901760
    %5245 = vmatpush1.msra.mxu0 %v5244
    %v5246 = vand.u32 %v1199, 4294901760
    %5247 = vmatprep.subr.mxu0 %v5246
    %v5248 = vand.u32 %v1198, 4294901760
    %5249 = vmatpush1.msra.mxu0 %v5248
    %v5250 = vand.u32 %v1197, 4294901760
    %5251 = vmatprep.subr.mxu0 %v5250
    %v5252 = vand.u32 %v1196, 4294901760
    %5253 = vmatpush1.msra.mxu0 %v5252
    %v5254 = vand.u32 %v1195, 4294901760
    %5255 = vmatprep.subr.mxu0 %v5254
    %v5256 = vand.u32 %v1194, 4294901760
    %5257 = vmatpush1.msra.mxu0 %v5256
    %v5258 = vand.u32 %v1193, 4294901760
    %5259 = vmatprep.subr.mxu0 %v5258
    %v5260 = vand.u32 %v1192, 4294901760
    %5261 = vmatpush1.msra.mxu0 %v5260
    %5262 = vmatprep.subr.mxu0 0.0
    %5263 = vmatpush2.msra.mxu0 0.0
    %5264 = vmatprep.subr.mxu0 0.0
    %5265 = vmatpush2.msra.mxu0 0.0
    %5266 = vmatprep.subr.mxu0 0.0
    %5267 = vmatpush2.msra.mxu0 0.0
    %5268 = vmatprep.subr.mxu0 0.0
    %5269 = vmatpush2.msra.mxu0 0.0
    %5270 = vmatprep.subr.mxu0 0.0
    %5271 = vmatpush2.msra.mxu0 0.0
    %5272 = vmatprep.subr.mxu0 0.0
    %5273 = vmatpush2.msra.mxu0 0.0
    %5274 = vmatprep.subr.mxu0 0.0
    %5275 = vmatpush2.msra.mxu0 0.0
    %5276 = vmatprep.subr.mxu0 0.0
    %5277 = vmatpush2.msra.mxu0 0.0
    %5278 = vmatprep.subr.mxu0 0.0
    %5279 = vmatpush2.msra.mxu0 0.0
    %5280 = vmatprep.subr.mxu0 0.0
    %5281 = vmatpush2.msra.mxu0 0.0
    %5282 = vmatprep.subr.mxu0 0.0
    %5283 = vmatpush2.msra.mxu0 0.0
    %5284 = vmatprep.subr.mxu0 0.0
    %5285 = vmatpush2.msra.mxu0 0.0
    %5286 = vmatprep.subr.mxu0 0.0
    %5287 = vmatpush2.msra.mxu0 0.0
    %5288 = vmatprep.subr.mxu0 0.0
    %5289 = vmatpush2.msra.mxu0 0.0
    %5290 = vmatprep.subr.mxu0 0.0
    %5291 = vmatpush2.msra.mxu0 0.0
    %5292 = vmatprep.subr.mxu0 0.0
    %5293 = vmatpush2.msra.mxu0 0.0
    %5294 = vmatprep.mubr.f32.mxu0 0.0
    %v5295 = vand.u32 %v4653, 4294901760
    %5296 = vmatmul.mubr.f32.gmra.mxu0 %v5295
    %v5297 = vpop.f32.mrf.mxu0
    %v5298 = vadd.f32 %v5210, %v5297
    %v5299 = vpop.f32.mrf.mxu0
    %v5300 = vadd.f32 %v5212, %v5299
    %5301 = vdwg.mxu0
    %v5302 = vadd.f32 %v4650, %v5298
    %v5303 = vadd.f32 %v4651, %v5300
    %v5304 = vxor.u32 %v5302, 2147483648
    %v5305 = vxor.u32 %v5303, 2147483648
    %v5306 = vmul.f32 %v5304, 1.442695
    %v5307 = vpow.pop %v5306
    %v5308 = vmul.f32 %v5305, 1.442695
    %v5309 = vpow.pop %v5308
    %v5310 = vadd.f32 %v5307, 1.0
    %v5311 = vadd.f32 %v5309, 1.0
    %v5312 = vrcp.pop %v5310
    %v5313 = vmul.f32 1.0, %v5312
    %v5314 = vrcp.pop %v5311
    %v5315 = vmul.f32 1.0, %v5314
    %v5316 = vtanh.pop %v5303
    %v5317 = vmul.f32 %v5313, %v4639
    %5319 = vrot.lane.b32.xlu0 %v5316, 64
    %v5320 = vpop.permute.xlu0 %5319
    %v5322 = vmul.f32 %v5313, %v5320
    %5324 = vrot.lane.b32.xlu0 %v5322, 64
    %v5325 = vpop.permute.xlu0 %5324
    %v5327 = vadd.f32 %v5317, %v5325
    %v5328 = vtanh.pop %v5327
    %5330 = vrot.lane.b32.xlu0 %v5328, 64
    %v5331 = vpop.permute.xlu0 %5330
    %v5333 = vmul.f32 %v5315, %v5331
    %v5334 = vmax.f32 %v4646, %v5333
    %s5335 = smul.u32 6, 2
    %s5336 = smul.addr %s5335, 8
    %s5337 = scalar_lea.vmem [#allocation2], %s5336
    %v5338 = vld [vmem:[%s5337] sm:$0xff]
    %v5339 = vld [vmem:[%s5337 + $0x8] sm:$0xff]
    %v5341 = vsel %vm161, %v5333, 0
    %5343 = vmatprep.subr.mxu0 0.0
    %5344 = vmatpush1.msra.mxu0 0.0
    %5345 = vmatprep.subr.mxu0 0.0
    %5346 = vmatpush1.msra.mxu0 0.0
    %5347 = vmatprep.subr.mxu0 0.0
    %5348 = vmatpush1.msra.mxu0 0.0
    %5349 = vmatprep.subr.mxu0 0.0
    %5350 = vmatpush1.msra.mxu0 0.0
    %5351 = vmatprep.subr.mxu0 0.0
    %5352 = vmatpush1.msra.mxu0 0.0
    %5353 = vmatprep.subr.mxu0 0.0
    %5354 = vmatpush1.msra.mxu0 0.0
    %5355 = vmatprep.subr.mxu0 0.0
    %5356 = vmatpush1.msra.mxu0 0.0
    %5357 = vmatprep.subr.mxu0 0.0
    %5358 = vmatpush1.msra.mxu0 0.0
    %v5359 = vand.u32 %v1207, 4294901760
    %5360 = vmatprep.subr.mxu0 %v5359
    %v5361 = vand.u32 %v1206, 4294901760
    %5362 = vmatpush1.msra.mxu0 %v5361
    %v5363 = vand.u32 %v1205, 4294901760
    %5364 = vmatprep.subr.mxu0 %v5363
    %v5365 = vand.u32 %v1204, 4294901760
    %5366 = vmatpush1.msra.mxu0 %v5365
    %v5367 = vand.u32 %v1203, 4294901760
    %5368 = vmatprep.subr.mxu0 %v5367
    %v5369 = vand.u32 %v1202, 4294901760
    %5370 = vmatpush1.msra.mxu0 %v5369
    %v5371 = vand.u32 %v1201, 4294901760
    %5372 = vmatprep.subr.mxu0 %v5371
    %v5373 = vand.u32 %v1200, 4294901760
    %5374 = vmatpush1.msra.mxu0 %v5373
    %v5375 = vand.u32 %v1199, 4294901760
    %5376 = vmatprep.subr.mxu0 %v5375
    %v5377 = vand.u32 %v1198, 4294901760
    %5378 = vmatpush1.msra.mxu0 %v5377
    %v5379 = vand.u32 %v1197, 4294901760
    %5380 = vmatprep.subr.mxu0 %v5379
    %v5381 = vand.u32 %v1196, 4294901760
    %5382 = vmatpush1.msra.mxu0 %v5381
    %v5383 = vand.u32 %v1195, 4294901760
    %5384 = vmatprep.subr.mxu0 %v5383
    %v5385 = vand.u32 %v1194, 4294901760
    %5386 = vmatpush1.msra.mxu0 %v5385
    %v5387 = vand.u32 %v1193, 4294901760
    %5388 = vmatprep.subr.mxu0 %v5387
    %v5389 = vand.u32 %v1192, 4294901760
    %5390 = vmatpush1.msra.mxu0 %v5389
    %5391 = vmatprep.subr.mxu0 0.0
    %5392 = vmatpush2.msra.mxu0 0.0
    %5393 = vmatprep.subr.mxu0 0.0
    %5394 = vmatpush2.msra.mxu0 0.0
    %5395 = vmatprep.subr.mxu0 0.0
    %5396 = vmatpush2.msra.mxu0 0.0
    %5397 = vmatprep.subr.mxu0 0.0
    %5398 = vmatpush2.msra.mxu0 0.0
    %5399 = vmatprep.subr.mxu0 0.0
    %5400 = vmatpush2.msra.mxu0 0.0
    %5401 = vmatprep.subr.mxu0 0.0
    %5402 = vmatpush2.msra.mxu0 0.0
    %5403 = vmatprep.subr.mxu0 0.0
    %5404 = vmatpush2.msra.mxu0 0.0
    %5405 = vmatprep.subr.mxu0 0.0
    %5406 = vmatpush2.msra.mxu0 0.0
    %5407 = vmatprep.subr.mxu0 0.0
    %5408 = vmatpush2.msra.mxu0 0.0
    %5409 = vmatprep.subr.mxu0 0.0
    %5410 = vmatpush2.msra.mxu0 0.0
    %5411 = vmatprep.subr.mxu0 0.0
    %5412 = vmatpush2.msra.mxu0 0.0
    %5413 = vmatprep.subr.mxu0 0.0
    %5414 = vmatpush2.msra.mxu0 0.0
    %5415 = vmatprep.subr.mxu0 0.0
    %5416 = vmatpush2.msra.mxu0 0.0
    %5417 = vmatprep.subr.mxu0 0.0
    %5418 = vmatpush2.msra.mxu0 0.0
    %5419 = vmatprep.subr.mxu0 0.0
    %5420 = vmatpush2.msra.mxu0 0.0
    %5421 = vmatprep.subr.mxu0 0.0
    %5422 = vmatpush2.msra.mxu0 0.0
    %5423 = vmatprep.mubr.f32.mxu0 0.0
    %v5424 = vand.u32 %v5341, 4294901760
    %v5425 = vsub.f32 %v5341, %v5424
    %v5426 = vand.u32 %v5425, 4294901760
    %v5427 = vsub.f32 %v5425, %v5426
    %v5428 = vand.u32 %v5427, 4294901760
    %5429 = vmatmul.mubr.f32.gmra.mxu0 %v5428
    %v5430 = vpop.f32.mrf.mxu0
    %v5431 = vadd.f32 0.0, %v5430
    %v5432 = vpop.f32.mrf.mxu0
    %v5433 = vadd.f32 0.0, %v5432
    %5434 = vdwg.mxu0
    %5435 = vmatprep.subr.mxu0 0.0
    %5436 = vmatpush1.msra.mxu0 0.0
    %5437 = vmatprep.subr.mxu0 0.0
    %5438 = vmatpush1.msra.mxu0 0.0
    %5439 = vmatprep.subr.mxu0 0.0
    %5440 = vmatpush1.msra.mxu0 0.0
    %5441 = vmatprep.subr.mxu0 0.0
    %5442 = vmatpush1.msra.mxu0 0.0
    %5443 = vmatprep.subr.mxu0 0.0
    %5444 = vmatpush1.msra.mxu0 0.0
    %5445 = vmatprep.subr.mxu0 0.0
    %5446 = vmatpush1.msra.mxu0 0.0
    %5447 = vmatprep.subr.mxu0 0.0
    %5448 = vmatpush1.msra.mxu0 0.0
    %5449 = vmatprep.subr.mxu0 0.0
    %5450 = vmatpush1.msra.mxu0 0.0
    %v5451 = vand.u32 %v1207, 4294901760
    %v5452 = vsub.f32 %v1207, %v5451
    %v5453 = vand.u32 %v5452, 4294901760
    %v5454 = vsub.f32 %v5452, %v5453
    %v5455 = vand.u32 %v5454, 4294901760
    %5456 = vmatprep.subr.mxu0 %v5455
    %v5457 = vand.u32 %v1206, 4294901760
    %v5458 = vsub.f32 %v1206, %v5457
    %v5459 = vand.u32 %v5458, 4294901760
    %v5460 = vsub.f32 %v5458, %v5459
    %v5461 = vand.u32 %v5460, 4294901760
    %5462 = vmatpush1.msra.mxu0 %v5461
    %v5463 = vand.u32 %v1205, 4294901760
    %v5464 = vsub.f32 %v1205, %v5463
    %v5465 = vand.u32 %v5464, 4294901760
    %v5466 = vsub.f32 %v5464, %v5465
    %v5467 = vand.u32 %v5466, 4294901760
    %5468 = vmatprep.subr.mxu0 %v5467
    %v5469 = vand.u32 %v1204, 4294901760
    %v5470 = vsub.f32 %v1204, %v5469
    %v5471 = vand.u32 %v5470, 4294901760
    %v5472 = vsub.f32 %v5470, %v5471
    %v5473 = vand.u32 %v5472, 4294901760
    %5474 = vmatpush1.msra.mxu0 %v5473
    %v5475 = vand.u32 %v1203, 4294901760
    %v5476 = vsub.f32 %v1203, %v5475
    %v5477 = vand.u32 %v5476, 4294901760
    %v5478 = vsub.f32 %v5476, %v5477
    %v5479 = vand.u32 %v5478, 4294901760
    %5480 = vmatprep.subr.mxu0 %v5479
    %v5481 = vand.u32 %v1202, 4294901760
    %v5482 = vsub.f32 %v1202, %v5481
    %v5483 = vand.u32 %v5482, 4294901760
    %v5484 = vsub.f32 %v5482, %v5483
    %v5485 = vand.u32 %v5484, 4294901760
    %5486 = vmatpush1.msra.mxu0 %v5485
    %v5487 = vand.u32 %v1201, 4294901760
    %v5488 = vsub.f32 %v1201, %v5487
    %v5489 = vand.u32 %v5488, 4294901760
    %v5490 = vsub.f32 %v5488, %v5489
    %v5491 = vand.u32 %v5490, 4294901760
    %5492 = vmatprep.subr.mxu0 %v5491
    %v5493 = vand.u32 %v1200, 4294901760
    %v5494 = vsub.f32 %v1200, %v5493
    %v5495 = vand.u32 %v5494, 4294901760
    %v5496 = vsub.f32 %v5494, %v5495
    %v5497 = vand.u32 %v5496, 4294901760
    %5498 = vmatpush1.msra.mxu0 %v5497
    %v5499 = vand.u32 %v1199, 4294901760
    %v5500 = vsub.f32 %v1199, %v5499
    %v5501 = vand.u32 %v5500, 4294901760
    %v5502 = vsub.f32 %v5500, %v5501
    %v5503 = vand.u32 %v5502, 4294901760
    %5504 = vmatprep.subr.mxu0 %v5503
    %v5505 = vand.u32 %v1198, 4294901760
    %v5506 = vsub.f32 %v1198, %v5505
    %v5507 = vand.u32 %v5506, 4294901760
    %v5508 = vsub.f32 %v5506, %v5507
    %v5509 = vand.u32 %v5508, 4294901760
    %5510 = vmatpush1.msra.mxu0 %v5509
    %v5511 = vand.u32 %v1197, 4294901760
    %v5512 = vsub.f32 %v1197, %v5511
    %v5513 = vand.u32 %v5512, 4294901760
    %v5514 = vsub.f32 %v5512, %v5513
    %v5515 = vand.u32 %v5514, 4294901760
    %5516 = vmatprep.subr.mxu0 %v5515
    %v5517 = vand.u32 %v1196, 4294901760
    %v5518 = vsub.f32 %v1196, %v5517
    %v5519 = vand.u32 %v5518, 4294901760
    %v5520 = vsub.f32 %v5518, %v5519
    %v5521 = vand.u32 %v5520, 4294901760
    %5522 = vmatpush1.msra.mxu0 %v5521
    %v5523 = vand.u32 %v1195, 4294901760
    %v5524 = vsub.f32 %v1195, %v5523
    %v5525 = vand.u32 %v5524, 4294901760
    %v5526 = vsub.f32 %v5524, %v5525
    %v5527 = vand.u32 %v5526, 4294901760
    %5528 = vmatprep.subr.mxu0 %v5527
    %v5529 = vand.u32 %v1194, 4294901760
    %v5530 = vsub.f32 %v1194, %v5529
    %v5531 = vand.u32 %v5530, 4294901760
    %v5532 = vsub.f32 %v5530, %v5531
    %v5533 = vand.u32 %v5532, 4294901760
    %5534 = vmatpush1.msra.mxu0 %v5533
    %v5535 = vand.u32 %v1193, 4294901760
    %v5536 = vsub.f32 %v1193, %v5535
    %v5537 = vand.u32 %v5536, 4294901760
    %v5538 = vsub.f32 %v5536, %v5537
    %v5539 = vand.u32 %v5538, 4294901760
    %5540 = vmatprep.subr.mxu0 %v5539
    %v5541 = vand.u32 %v1192, 4294901760
    %v5542 = vsub.f32 %v1192, %v5541
    %v5543 = vand.u32 %v5542, 4294901760
    %v5544 = vsub.f32 %v5542, %v5543
    %v5545 = vand.u32 %v5544, 4294901760
    %5546 = vmatpush1.msra.mxu0 %v5545
    %5547 = vmatprep.subr.mxu0 0.0
    %5548 = vmatpush2.msra.mxu0 0.0
    %5549 = vmatprep.subr.mxu0 0.0
    %5550 = vmatpush2.msra.mxu0 0.0
    %5551 = vmatprep.subr.mxu0 0.0
    %5552 = vmatpush2.msra.mxu0 0.0
    %5553 = vmatprep.subr.mxu0 0.0
    %5554 = vmatpush2.msra.mxu0 0.0
    %5555 = vmatprep.subr.mxu0 0.0
    %5556 = vmatpush2.msra.mxu0 0.0
    %5557 = vmatprep.subr.mxu0 0.0
    %5558 = vmatpush2.msra.mxu0 0.0
    %5559 = vmatprep.subr.mxu0 0.0
    %5560 = vmatpush2.msra.mxu0 0.0
    %5561 = vmatprep.subr.mxu0 0.0
    %5562 = vmatpush2.msra.mxu0 0.0
    %5563 = vmatprep.subr.mxu0 0.0
    %5564 = vmatpush2.msra.mxu0 0.0
    %5565 = vmatprep.subr.mxu0 0.0
    %5566 = vmatpush2.msra.mxu0 0.0
    %5567 = vmatprep.subr.mxu0 0.0
    %5568 = vmatpush2.msra.mxu0 0.0
    %5569 = vmatprep.subr.mxu0 0.0
    %5570 = vmatpush2.msra.mxu0 0.0
    %5571 = vmatprep.subr.mxu0 0.0
    %5572 = vmatpush2.msra.mxu0 0.0
    %5573 = vmatprep.subr.mxu0 0.0
    %5574 = vmatpush2.msra.mxu0 0.0
    %5575 = vmatprep.subr.mxu0 0.0
    %5576 = vmatpush2.msra.mxu0 0.0
    %5577 = vmatprep.subr.mxu0 0.0
    %5578 = vmatpush2.msra.mxu0 0.0
    %5579 = vmatprep.mubr.f32.mxu0 0.0
    %v5580 = vand.u32 %v5341, 4294901760
    %5581 = vmatmul.mubr.f32.gmra.mxu0 %v5580
    %v5582 = vpop.f32.mrf.mxu0
    %v5583 = vadd.f32 %v5431, %v5582
    %v5584 = vpop.f32.mrf.mxu0
    %v5585 = vadd.f32 %v5433, %v5584
    %5586 = vdwg.mxu0
    %5587 = vmatprep.subr.mxu0 0.0
    %5588 = vmatpush1.msra.mxu0 0.0
    %5589 = vmatprep.subr.mxu0 0.0
    %5590 = vmatpush1.msra.mxu0 0.0
    %5591 = vmatprep.subr.mxu0 0.0
    %5592 = vmatpush1.msra.mxu0 0.0
    %5593 = vmatprep.subr.mxu0 0.0
    %5594 = vmatpush1.msra.mxu0 0.0
    %5595 = vmatprep.subr.mxu0 0.0
    %5596 = vmatpush1.msra.mxu0 0.0
    %5597 = vmatprep.subr.mxu0 0.0
    %5598 = vmatpush1.msra.mxu0 0.0
    %5599 = vmatprep.subr.mxu0 0.0
    %5600 = vmatpush1.msra.mxu0 0.0
    %5601 = vmatprep.subr.mxu0 0.0
    %5602 = vmatpush1.msra.mxu0 0.0
    %v5603 = vand.u32 %v1207, 4294901760
    %v5604 = vsub.f32 %v1207, %v5603
    %5605 = vmatprep.subr.mxu0 %v5604
    %v5606 = vand.u32 %v1206, 4294901760
    %v5607 = vsub.f32 %v1206, %v5606
    %5608 = vmatpush1.msra.mxu0 %v5607
    %v5609 = vand.u32 %v1205, 4294901760
    %v5610 = vsub.f32 %v1205, %v5609
    %5611 = vmatprep.subr.mxu0 %v5610
    %v5612 = vand.u32 %v1204, 4294901760
    %v5613 = vsub.f32 %v1204, %v5612
    %5614 = vmatpush1.msra.mxu0 %v5613
    %v5615 = vand.u32 %v1203, 4294901760
    %v5616 = vsub.f32 %v1203, %v5615
    %5617 = vmatprep.subr.mxu0 %v5616
    %v5618 = vand.u32 %v1202, 4294901760
    %v5619 = vsub.f32 %v1202, %v5618
    %5620 = vmatpush1.msra.mxu0 %v5619
    %v5621 = vand.u32 %v1201, 4294901760
    %v5622 = vsub.f32 %v1201, %v5621
    %5623 = vmatprep.subr.mxu0 %v5622
    %v5624 = vand.u32 %v1200, 4294901760
    %v5625 = vsub.f32 %v1200, %v5624
    %5626 = vmatpush1.msra.mxu0 %v5625
    %v5627 = vand.u32 %v1199, 4294901760
    %v5628 = vsub.f32 %v1199, %v5627
    %5629 = vmatprep.subr.mxu0 %v5628
    %v5630 = vand.u32 %v1198, 4294901760
    %v5631 = vsub.f32 %v1198, %v5630
    %5632 = vmatpush1.msra.mxu0 %v5631
    %v5633 = vand.u32 %v1197, 4294901760
    %v5634 = vsub.f32 %v1197, %v5633
    %5635 = vmatprep.subr.mxu0 %v5634
    %v5636 = vand.u32 %v1196, 4294901760
    %v5637 = vsub.f32 %v1196, %v5636
    %5638 = vmatpush1.msra.mxu0 %v5637
    %v5639 = vand.u32 %v1195, 4294901760
    %v5640 = vsub.f32 %v1195, %v5639
    %5641 = vmatprep.subr.mxu0 %v5640
    %v5642 = vand.u32 %v1194, 4294901760
    %v5643 = vsub.f32 %v1194, %v5642
    %5644 = vmatpush1.msra.mxu0 %v5643
    %v5645 = vand.u32 %v1193, 4294901760
    %v5646 = vsub.f32 %v1193, %v5645
    %5647 = vmatprep.subr.mxu0 %v5646
    %v5648 = vand.u32 %v1192, 4294901760
    %v5649 = vsub.f32 %v1192, %v5648
    %5650 = vmatpush1.msra.mxu0 %v5649
    %5651 = vmatprep.subr.mxu0 0.0
    %5652 = vmatpush2.msra.mxu0 0.0
    %5653 = vmatprep.subr.mxu0 0.0
    %5654 = vmatpush2.msra.mxu0 0.0
    %5655 = vmatprep.subr.mxu0 0.0
    %5656 = vmatpush2.msra.mxu0 0.0
    %5657 = vmatprep.subr.mxu0 0.0
    %5658 = vmatpush2.msra.mxu0 0.0
    %5659 = vmatprep.subr.mxu0 0.0
    %5660 = vmatpush2.msra.mxu0 0.0
    %5661 = vmatprep.subr.mxu0 0.0
    %5662 = vmatpush2.msra.mxu0 0.0
    %5663 = vmatprep.subr.mxu0 0.0
    %5664 = vmatpush2.msra.mxu0 0.0
    %5665 = vmatprep.subr.mxu0 0.0
    %5666 = vmatpush2.msra.mxu0 0.0
    %5667 = vmatprep.subr.mxu0 0.0
    %5668 = vmatpush2.msra.mxu0 0.0
    %5669 = vmatprep.subr.mxu0 0.0
    %5670 = vmatpush2.msra.mxu0 0.0
    %5671 = vmatprep.subr.mxu0 0.0
    %5672 = vmatpush2.msra.mxu0 0.0
    %5673 = vmatprep.subr.mxu0 0.0
    %5674 = vmatpush2.msra.mxu0 0.0
    %5675 = vmatprep.subr.mxu0 0.0
    %5676 = vmatpush2.msra.mxu0 0.0
    %5677 = vmatprep.subr.mxu0 0.0
    %5678 = vmatpush2.msra.mxu0 0.0
    %5679 = vmatprep.subr.mxu0 0.0
    %5680 = vmatpush2.msra.mxu0 0.0
    %5681 = vmatprep.subr.mxu0 0.0
    %5682 = vmatpush2.msra.mxu0 0.0
    %5683 = vmatprep.mubr.f32.mxu0 0.0
    %v5684 = vand.u32 %v5341, 4294901760
    %v5685 = vsub.f32 %v5341, %v5684
    %5686 = vmatmul.mubr.f32.gmra.mxu0 %v5685
    %v5687 = vpop.f32.mrf.mxu0
    %v5688 = vadd.f32 %v5583, %v5687
    %v5689 = vpop.f32.mrf.mxu0
    %v5690 = vadd.f32 %v5585, %v5689
    %5691 = vdwg.mxu0
    %5692 = vmatprep.subr.mxu0 0.0
    %5693 = vmatpush1.msra.mxu0 0.0
    %5694 = vmatprep.subr.mxu0 0.0
    %5695 = vmatpush1.msra.mxu0 0.0
    %5696 = vmatprep.subr.mxu0 0.0
    %5697 = vmatpush1.msra.mxu0 0.0
    %5698 = vmatprep.subr.mxu0 0.0
    %5699 = vmatpush1.msra.mxu0 0.0
    %5700 = vmatprep.subr.mxu0 0.0
    %5701 = vmatpush1.msra.mxu0 0.0
    %5702 = vmatprep.subr.mxu0 0.0
    %5703 = vmatpush1.msra.mxu0 0.0
    %5704 = vmatprep.subr.mxu0 0.0
    %5705 = vmatpush1.msra.mxu0 0.0
    %5706 = vmatprep.subr.mxu0 0.0
    %5707 = vmatpush1.msra.mxu0 0.0
    %v5708 = vand.u32 %v1207, 4294901760
    %5709 = vmatprep.subr.mxu0 %v5708
    %v5710 = vand.u32 %v1206, 4294901760
    %5711 = vmatpush1.msra.mxu0 %v5710
    %v5712 = vand.u32 %v1205, 4294901760
    %5713 = vmatprep.subr.mxu0 %v5712
    %v5714 = vand.u32 %v1204, 4294901760
    %5715 = vmatpush1.msra.mxu0 %v5714
    %v5716 = vand.u32 %v1203, 4294901760
    %5717 = vmatprep.subr.mxu0 %v5716
    %v5718 = vand.u32 %v1202, 4294901760
    %5719 = vmatpush1.msra.mxu0 %v5718
    %v5720 = vand.u32 %v1201, 4294901760
    %5721 = vmatprep.subr.mxu0 %v5720
    %v5722 = vand.u32 %v1200, 4294901760
    %5723 = vmatpush1.msra.mxu0 %v5722
    %v5724 = vand.u32 %v1199, 4294901760
    %5725 = vmatprep.subr.mxu0 %v5724
    %v5726 = vand.u32 %v1198, 4294901760
    %5727 = vmatpush1.msra.mxu0 %v5726
    %v5728 = vand.u32 %v1197, 4294901760
    %5729 = vmatprep.subr.mxu0 %v5728
    %v5730 = vand.u32 %v1196, 4294901760
    %5731 = vmatpush1.msra.mxu0 %v5730
    %v5732 = vand.u32 %v1195, 4294901760
    %5733 = vmatprep.subr.mxu0 %v5732
    %v5734 = vand.u32 %v1194, 4294901760
    %5735 = vmatpush1.msra.mxu0 %v5734
    %v5736 = vand.u32 %v1193, 4294901760
    %5737 = vmatprep.subr.mxu0 %v5736
    %v5738 = vand.u32 %v1192, 4294901760
    %5739 = vmatpush1.msra.mxu0 %v5738
    %5740 = vmatprep.subr.mxu0 0.0
    %5741 = vmatpush2.msra.mxu0 0.0
    %5742 = vmatprep.subr.mxu0 0.0
    %5743 = vmatpush2.msra.mxu0 0.0
    %5744 = vmatprep.subr.mxu0 0.0
    %5745 = vmatpush2.msra.mxu0 0.0
    %5746 = vmatprep.subr.mxu0 0.0
    %5747 = vmatpush2.msra.mxu0 0.0
    %5748 = vmatprep.subr.mxu0 0.0
    %5749 = vmatpush2.msra.mxu0 0.0
    %5750 = vmatprep.subr.mxu0 0.0
    %5751 = vmatpush2.msra.mxu0 0.0
    %5752 = vmatprep.subr.mxu0 0.0
    %5753 = vmatpush2.msra.mxu0 0.0
    %5754 = vmatprep.subr.mxu0 0.0
    %5755 = vmatpush2.msra.mxu0 0.0
    %5756 = vmatprep.subr.mxu0 0.0
    %5757 = vmatpush2.msra.mxu0 0.0
    %5758 = vmatprep.subr.mxu0 0.0
    %5759 = vmatpush2.msra.mxu0 0.0
    %5760 = vmatprep.subr.mxu0 0.0
    %5761 = vmatpush2.msra.mxu0 0.0
    %5762 = vmatprep.subr.mxu0 0.0
    %5763 = vmatpush2.msra.mxu0 0.0
    %5764 = vmatprep.subr.mxu0 0.0
    %5765 = vmatpush2.msra.mxu0 0.0
    %5766 = vmatprep.subr.mxu0 0.0
    %5767 = vmatpush2.msra.mxu0 0.0
    %5768 = vmatprep.subr.mxu0 0.0
    %5769 = vmatpush2.msra.mxu0 0.0
    %5770 = vmatprep.subr.mxu0 0.0
    %5771 = vmatpush2.msra.mxu0 0.0
    %5772 = vmatprep.mubr.f32.mxu0 0.0
    %v5773 = vand.u32 %v5341, 4294901760
    %v5774 = vsub.f32 %v5341, %v5773
    %v5775 = vand.u32 %v5774, 4294901760
    %5776 = vmatmul.mubr.f32.gmra.mxu0 %v5775
    %v5777 = vpop.f32.mrf.mxu0
    %v5778 = vadd.f32 %v5688, %v5777
    %v5779 = vpop.f32.mrf.mxu0
    %v5780 = vadd.f32 %v5690, %v5779
    %5781 = vdwg.mxu0
    %5782 = vmatprep.subr.mxu0 0.0
    %5783 = vmatpush1.msra.mxu0 0.0
    %5784 = vmatprep.subr.mxu0 0.0
    %5785 = vmatpush1.msra.mxu0 0.0
    %5786 = vmatprep.subr.mxu0 0.0
    %5787 = vmatpush1.msra.mxu0 0.0
    %5788 = vmatprep.subr.mxu0 0.0
    %5789 = vmatpush1.msra.mxu0 0.0
    %5790 = vmatprep.subr.mxu0 0.0
    %5791 = vmatpush1.msra.mxu0 0.0
    %5792 = vmatprep.subr.mxu0 0.0
    %5793 = vmatpush1.msra.mxu0 0.0
    %5794 = vmatprep.subr.mxu0 0.0
    %5795 = vmatpush1.msra.mxu0 0.0
    %5796 = vmatprep.subr.mxu0 0.0
    %5797 = vmatpush1.msra.mxu0 0.0
    %v5798 = vand.u32 %v1207, 4294901760
    %v5799 = vsub.f32 %v1207, %v5798
    %v5800 = vand.u32 %v5799, 4294901760
    %5801 = vmatprep.subr.mxu0 %v5800
    %v5802 = vand.u32 %v1206, 4294901760
    %v5803 = vsub.f32 %v1206, %v5802
    %v5804 = vand.u32 %v5803, 4294901760
    %5805 = vmatpush1.msra.mxu0 %v5804
    %v5806 = vand.u32 %v1205, 4294901760
    %v5807 = vsub.f32 %v1205, %v5806
    %v5808 = vand.u32 %v5807, 4294901760
    %5809 = vmatprep.subr.mxu0 %v5808
    %v5810 = vand.u32 %v1204, 4294901760
    %v5811 = vsub.f32 %v1204, %v5810
    %v5812 = vand.u32 %v5811, 4294901760
    %5813 = vmatpush1.msra.mxu0 %v5812
    %v5814 = vand.u32 %v1203, 4294901760
    %v5815 = vsub.f32 %v1203, %v5814
    %v5816 = vand.u32 %v5815, 4294901760
    %5817 = vmatprep.subr.mxu0 %v5816
    %v5818 = vand.u32 %v1202, 4294901760
    %v5819 = vsub.f32 %v1202, %v5818
    %v5820 = vand.u32 %v5819, 4294901760
    %5821 = vmatpush1.msra.mxu0 %v5820
    %v5822 = vand.u32 %v1201, 4294901760
    %v5823 = vsub.f32 %v1201, %v5822
    %v5824 = vand.u32 %v5823, 4294901760
    %5825 = vmatprep.subr.mxu0 %v5824
    %v5826 = vand.u32 %v1200, 4294901760
    %v5827 = vsub.f32 %v1200, %v5826
    %v5828 = vand.u32 %v5827, 4294901760
    %5829 = vmatpush1.msra.mxu0 %v5828
    %v5830 = vand.u32 %v1199, 4294901760
    %v5831 = vsub.f32 %v1199, %v5830
    %v5832 = vand.u32 %v5831, 4294901760
    %5833 = vmatprep.subr.mxu0 %v5832
    %v5834 = vand.u32 %v1198, 4294901760
    %v5835 = vsub.f32 %v1198, %v5834
    %v5836 = vand.u32 %v5835, 4294901760
    %5837 = vmatpush1.msra.mxu0 %v5836
    %v5838 = vand.u32 %v1197, 4294901760
    %v5839 = vsub.f32 %v1197, %v5838
    %v5840 = vand.u32 %v5839, 4294901760
    %5841 = vmatprep.subr.mxu0 %v5840
    %v5842 = vand.u32 %v1196, 4294901760
    %v5843 = vsub.f32 %v1196, %v5842
    %v5844 = vand.u32 %v5843, 4294901760
    %5845 = vmatpush1.msra.mxu0 %v5844
    %v5846 = vand.u32 %v1195, 4294901760
    %v5847 = vsub.f32 %v1195, %v5846
    %v5848 = vand.u32 %v5847, 4294901760
    %5849 = vmatprep.subr.mxu0 %v5848
    %v5850 = vand.u32 %v1194, 4294901760
    %v5851 = vsub.f32 %v1194, %v5850
    %v5852 = vand.u32 %v5851, 4294901760
    %5853 = vmatpush1.msra.mxu0 %v5852
    %v5854 = vand.u32 %v1193, 4294901760
    %v5855 = vsub.f32 %v1193, %v5854
    %v5856 = vand.u32 %v5855, 4294901760
    %5857 = vmatprep.subr.mxu0 %v5856
    %v5858 = vand.u32 %v1192, 4294901760
    %v5859 = vsub.f32 %v1192, %v5858
    %v5860 = vand.u32 %v5859, 4294901760
    %5861 = vmatpush1.msra.mxu0 %v5860
    %5862 = vmatprep.subr.mxu0 0.0
    %5863 = vmatpush2.msra.mxu0 0.0
    %5864 = vmatprep.subr.mxu0 0.0
    %5865 = vmatpush2.msra.mxu0 0.0
    %5866 = vmatprep.subr.mxu0 0.0
    %5867 = vmatpush2.msra.mxu0 0.0
    %5868 = vmatprep.subr.mxu0 0.0
    %5869 = vmatpush2.msra.mxu0 0.0
    %5870 = vmatprep.subr.mxu0 0.0
    %5871 = vmatpush2.msra.mxu0 0.0
    %5872 = vmatprep.subr.mxu0 0.0
    %5873 = vmatpush2.msra.mxu0 0.0
    %5874 = vmatprep.subr.mxu0 0.0
    %5875 = vmatpush2.msra.mxu0 0.0
    %5876 = vmatprep.subr.mxu0 0.0
    %5877 = vmatpush2.msra.mxu0 0.0
    %5878 = vmatprep.subr.mxu0 0.0
    %5879 = vmatpush2.msra.mxu0 0.0
    %5880 = vmatprep.subr.mxu0 0.0
    %5881 = vmatpush2.msra.mxu0 0.0
    %5882 = vmatprep.subr.mxu0 0.0
    %5883 = vmatpush2.msra.mxu0 0.0
    %5884 = vmatprep.subr.mxu0 0.0
    %5885 = vmatpush2.msra.mxu0 0.0
    %5886 = vmatprep.subr.mxu0 0.0
    %5887 = vmatpush2.msra.mxu0 0.0
    %5888 = vmatprep.subr.mxu0 0.0
    %5889 = vmatpush2.msra.mxu0 0.0
    %5890 = vmatprep.subr.mxu0 0.0
    %5891 = vmatpush2.msra.mxu0 0.0
    %5892 = vmatprep.subr.mxu0 0.0
    %5893 = vmatpush2.msra.mxu0 0.0
    %5894 = vmatprep.mubr.f32.mxu0 0.0
    %v5895 = vand.u32 %v5341, 4294901760
    %5896 = vmatmul.mubr.f32.gmra.mxu0 %v5895
    %v5897 = vpop.f32.mrf.mxu0
    %v5898 = vadd.f32 %v5778, %v5897
    %v5899 = vpop.f32.mrf.mxu0
    %v5900 = vadd.f32 %v5780, %v5899
    %5901 = vdwg.mxu0
    %5902 = vmatprep.subr.mxu0 0.0
    %5903 = vmatpush1.msra.mxu0 0.0
    %5904 = vmatprep.subr.mxu0 0.0
    %5905 = vmatpush1.msra.mxu0 0.0
    %5906 = vmatprep.subr.mxu0 0.0
    %5907 = vmatpush1.msra.mxu0 0.0
    %5908 = vmatprep.subr.mxu0 0.0
    %5909 = vmatpush1.msra.mxu0 0.0
    %5910 = vmatprep.subr.mxu0 0.0
    %5911 = vmatpush1.msra.mxu0 0.0
    %5912 = vmatprep.subr.mxu0 0.0
    %5913 = vmatpush1.msra.mxu0 0.0
    %5914 = vmatprep.subr.mxu0 0.0
    %5915 = vmatpush1.msra.mxu0 0.0
    %5916 = vmatprep.subr.mxu0 0.0
    %5917 = vmatpush1.msra.mxu0 0.0
    %v5918 = vand.u32 %v1207, 4294901760
    %5919 = vmatprep.subr.mxu0 %v5918
    %v5920 = vand.u32 %v1206, 4294901760
    %5921 = vmatpush1.msra.mxu0 %v5920
    %v5922 = vand.u32 %v1205, 4294901760
    %5923 = vmatprep.subr.mxu0 %v5922
    %v5924 = vand.u32 %v1204, 4294901760
    %5925 = vmatpush1.msra.mxu0 %v5924
    %v5926 = vand.u32 %v1203, 4294901760
    %5927 = vmatprep.subr.mxu0 %v5926
    %v5928 = vand.u32 %v1202, 4294901760
    %5929 = vmatpush1.msra.mxu0 %v5928
    %v5930 = vand.u32 %v1201, 4294901760
    %5931 = vmatprep.subr.mxu0 %v5930
    %v5932 = vand.u32 %v1200, 4294901760
    %5933 = vmatpush1.msra.mxu0 %v5932
    %v5934 = vand.u32 %v1199, 4294901760
    %5935 = vmatprep.subr.mxu0 %v5934
    %v5936 = vand.u32 %v1198, 4294901760
    %5937 = vmatpush1.msra.mxu0 %v5936
    %v5938 = vand.u32 %v1197, 4294901760
    %5939 = vmatprep.subr.mxu0 %v5938
    %v5940 = vand.u32 %v1196, 4294901760
    %5941 = vmatpush1.msra.mxu0 %v5940
    %v5942 = vand.u32 %v1195, 4294901760
    %5943 = vmatprep.subr.mxu0 %v5942
    %v5944 = vand.u32 %v1194, 4294901760
    %5945 = vmatpush1.msra.mxu0 %v5944
    %v5946 = vand.u32 %v1193, 4294901760
    %5947 = vmatprep.subr.mxu0 %v5946
    %v5948 = vand.u32 %v1192, 4294901760
    %5949 = vmatpush1.msra.mxu0 %v5948
    %5950 = vmatprep.subr.mxu0 0.0
    %5951 = vmatpush2.msra.mxu0 0.0
    %5952 = vmatprep.subr.mxu0 0.0
    %5953 = vmatpush2.msra.mxu0 0.0
    %5954 = vmatprep.subr.mxu0 0.0
    %5955 = vmatpush2.msra.mxu0 0.0
    %5956 = vmatprep.subr.mxu0 0.0
    %5957 = vmatpush2.msra.mxu0 0.0
    %5958 = vmatprep.subr.mxu0 0.0
    %5959 = vmatpush2.msra.mxu0 0.0
    %5960 = vmatprep.subr.mxu0 0.0
    %5961 = vmatpush2.msra.mxu0 0.0
    %5962 = vmatprep.subr.mxu0 0.0
    %5963 = vmatpush2.msra.mxu0 0.0
    %5964 = vmatprep.subr.mxu0 0.0
    %5965 = vmatpush2.msra.mxu0 0.0
    %5966 = vmatprep.subr.mxu0 0.0
    %5967 = vmatpush2.msra.mxu0 0.0
    %5968 = vmatprep.subr.mxu0 0.0
    %5969 = vmatpush2.msra.mxu0 0.0
    %5970 = vmatprep.subr.mxu0 0.0
    %5971 = vmatpush2.msra.mxu0 0.0
    %5972 = vmatprep.subr.mxu0 0.0
    %5973 = vmatpush2.msra.mxu0 0.0
    %5974 = vmatprep.subr.mxu0 0.0
    %5975 = vmatpush2.msra.mxu0 0.0
    %5976 = vmatprep.subr.mxu0 0.0
    %5977 = vmatpush2.msra.mxu0 0.0
    %5978 = vmatprep.subr.mxu0 0.0
    %5979 = vmatpush2.msra.mxu0 0.0
    %5980 = vmatprep.subr.mxu0 0.0
    %5981 = vmatpush2.msra.mxu0 0.0
    %5982 = vmatprep.mubr.f32.mxu0 0.0
    %v5983 = vand.u32 %v5341, 4294901760
    %5984 = vmatmul.mubr.f32.gmra.mxu0 %v5983
    %v5985 = vpop.f32.mrf.mxu0
    %v5986 = vadd.f32 %v5898, %v5985
    %v5987 = vpop.f32.mrf.mxu0
    %v5988 = vadd.f32 %v5900, %v5987
    %5989 = vdwg.mxu0
    %v5990 = vadd.f32 %v5338, %v5986
    %v5991 = vadd.f32 %v5339, %v5988
    %v5992 = vxor.u32 %v5990, 2147483648
    %v5993 = vxor.u32 %v5991, 2147483648
    %v5994 = vmul.f32 %v5992, 1.442695
    %v5995 = vpow.pop %v5994
    %v5996 = vmul.f32 %v5993, 1.442695
    %v5997 = vpow.pop %v5996
    %v5998 = vadd.f32 %v5995, 1.0
    %v5999 = vadd.f32 %v5997, 1.0
    %v6000 = vrcp.pop %v5998
    %v6001 = vmul.f32 1.0, %v6000
    %v6002 = vrcp.pop %v5999
    %v6003 = vmul.f32 1.0, %v6002
    %v6004 = vtanh.pop %v5991
    %v6005 = vmul.f32 %v6001, %v5327
    %6007 = vrot.lane.b32.xlu0 %v6004, 64
    %v6008 = vpop.permute.xlu0 %6007
    %v6010 = vmul.f32 %v6001, %v6008
    %6012 = vrot.lane.b32.xlu0 %v6010, 64
    %v6013 = vpop.permute.xlu0 %6012
    %v6015 = vadd.f32 %v6005, %v6013
    %v6016 = vtanh.pop %v6015
    %6018 = vrot.lane.b32.xlu0 %v6016, 64
    %v6019 = vpop.permute.xlu0 %6018
    %v6021 = vmul.f32 %v6003, %v6019
    %v6022 = vmax.f32 %v5334, %v6021
    %s6023 = smul.u32 7, 2
    %s6024 = smul.addr %s6023, 8
    %s6025 = scalar_lea.vmem [#allocation2], %s6024
    %v6026 = vld [vmem:[%s6025] sm:$0xff]
    %v6027 = vld [vmem:[%s6025 + $0x8] sm:$0xff]
    %v6029 = vsel %vm161, %v6021, 0
    %6031 = vmatprep.subr.mxu0 0.0
    %6032 = vmatpush1.msra.mxu0 0.0
    %6033 = vmatprep.subr.mxu0 0.0
    %6034 = vmatpush1.msra.mxu0 0.0
    %6035 = vmatprep.subr.mxu0 0.0
    %6036 = vmatpush1.msra.mxu0 0.0
    %6037 = vmatprep.subr.mxu0 0.0
    %6038 = vmatpush1.msra.mxu0 0.0
    %6039 = vmatprep.subr.mxu0 0.0
    %6040 = vmatpush1.msra.mxu0 0.0
    %6041 = vmatprep.subr.mxu0 0.0
    %6042 = vmatpush1.msra.mxu0 0.0
    %6043 = vmatprep.subr.mxu0 0.0
    %6044 = vmatpush1.msra.mxu0 0.0
    %6045 = vmatprep.subr.mxu0 0.0
    %6046 = vmatpush1.msra.mxu0 0.0
    %v6047 = vand.u32 %v1207, 4294901760
    %6048 = vmatprep.subr.mxu0 %v6047
    %v6049 = vand.u32 %v1206, 4294901760
    %6050 = vmatpush1.msra.mxu0 %v6049
    %v6051 = vand.u32 %v1205, 4294901760
    %6052 = vmatprep.subr.mxu0 %v6051
    %v6053 = vand.u32 %v1204, 4294901760
    %6054 = vmatpush1.msra.mxu0 %v6053
    %v6055 = vand.u32 %v1203, 4294901760
    %6056 = vmatprep.subr.mxu0 %v6055
    %v6057 = vand.u32 %v1202, 4294901760
    %6058 = vmatpush1.msra.mxu0 %v6057
    %v6059 = vand.u32 %v1201, 4294901760
    %6060 = vmatprep.subr.mxu0 %v6059
    %v6061 = vand.u32 %v1200, 4294901760
    %6062 = vmatpush1.msra.mxu0 %v6061
    %v6063 = vand.u32 %v1199, 4294901760
    %6064 = vmatprep.subr.mxu0 %v6063
    %v6065 = vand.u32 %v1198, 4294901760
    %6066 = vmatpush1.msra.mxu0 %v6065
    %v6067 = vand.u32 %v1197, 4294901760
    %6068 = vmatprep.subr.mxu0 %v6067
    %v6069 = vand.u32 %v1196, 4294901760
    %6070 = vmatpush1.msra.mxu0 %v6069
    %v6071 = vand.u32 %v1195, 4294901760
    %6072 = vmatprep.subr.mxu0 %v6071
    %v6073 = vand.u32 %v1194, 4294901760
    %6074 = vmatpush1.msra.mxu0 %v6073
    %v6075 = vand.u32 %v1193, 4294901760
    %6076 = vmatprep.subr.mxu0 %v6075
    %v6077 = vand.u32 %v1192, 4294901760
    %6078 = vmatpush1.msra.mxu0 %v6077
    %6079 = vmatprep.subr.mxu0 0.0
    %6080 = vmatpush2.msra.mxu0 0.0
    %6081 = vmatprep.subr.mxu0 0.0
    %6082 = vmatpush2.msra.mxu0 0.0
    %6083 = vmatprep.subr.mxu0 0.0
    %6084 = vmatpush2.msra.mxu0 0.0
    %6085 = vmatprep.subr.mxu0 0.0
    %6086 = vmatpush2.msra.mxu0 0.0
    %6087 = vmatprep.subr.mxu0 0.0
    %6088 = vmatpush2.msra.mxu0 0.0
    %6089 = vmatprep.subr.mxu0 0.0
    %6090 = vmatpush2.msra.mxu0 0.0
    %6091 = vmatprep.subr.mxu0 0.0
    %6092 = vmatpush2.msra.mxu0 0.0
    %6093 = vmatprep.subr.mxu0 0.0
    %6094 = vmatpush2.msra.mxu0 0.0
    %6095 = vmatprep.subr.mxu0 0.0
    %6096 = vmatpush2.msra.mxu0 0.0
    %6097 = vmatprep.subr.mxu0 0.0
    %6098 = vmatpush2.msra.mxu0 0.0
    %6099 = vmatprep.subr.mxu0 0.0
    %6100 = vmatpush2.msra.mxu0 0.0
    %6101 = vmatprep.subr.mxu0 0.0
    %6102 = vmatpush2.msra.mxu0 0.0
    %6103 = vmatprep.subr.mxu0 0.0
    %6104 = vmatpush2.msra.mxu0 0.0
    %6105 = vmatprep.subr.mxu0 0.0
    %6106 = vmatpush2.msra.mxu0 0.0
    %6107 = vmatprep.subr.mxu0 0.0
    %6108 = vmatpush2.msra.mxu0 0.0
    %6109 = vmatprep.subr.mxu0 0.0
    %6110 = vmatpush2.msra.mxu0 0.0
    %6111 = vmatprep.mubr.f32.mxu0 0.0
    %v6112 = vand.u32 %v6029, 4294901760
    %v6113 = vsub.f32 %v6029, %v6112
    %v6114 = vand.u32 %v6113, 4294901760
    %v6115 = vsub.f32 %v6113, %v6114
    %v6116 = vand.u32 %v6115, 4294901760
    %6117 = vmatmul.mubr.f32.gmra.mxu0 %v6116
    %v6118 = vpop.f32.mrf.mxu0
    %v6119 = vadd.f32 0.0, %v6118
    %v6120 = vpop.f32.mrf.mxu0
    %v6121 = vadd.f32 0.0, %v6120
    %6122 = vdwg.mxu0
    %6123 = vmatprep.subr.mxu0 0.0
    %6124 = vmatpush1.msra.mxu0 0.0
    %6125 = vmatprep.subr.mxu0 0.0
    %6126 = vmatpush1.msra.mxu0 0.0
    %6127 = vmatprep.subr.mxu0 0.0
    %6128 = vmatpush1.msra.mxu0 0.0
    %6129 = vmatprep.subr.mxu0 0.0
    %6130 = vmatpush1.msra.mxu0 0.0
    %6131 = vmatprep.subr.mxu0 0.0
    %6132 = vmatpush1.msra.mxu0 0.0
    %6133 = vmatprep.subr.mxu0 0.0
    %6134 = vmatpush1.msra.mxu0 0.0
    %6135 = vmatprep.subr.mxu0 0.0
    %6136 = vmatpush1.msra.mxu0 0.0
    %6137 = vmatprep.subr.mxu0 0.0
    %6138 = vmatpush1.msra.mxu0 0.0
    %v6139 = vand.u32 %v1207, 4294901760
    %v6140 = vsub.f32 %v1207, %v6139
    %v6141 = vand.u32 %v6140, 4294901760
    %v6142 = vsub.f32 %v6140, %v6141
    %v6143 = vand.u32 %v6142, 4294901760
    %6144 = vmatprep.subr.mxu0 %v6143
    %v6145 = vand.u32 %v1206, 4294901760
    %v6146 = vsub.f32 %v1206, %v6145
    %v6147 = vand.u32 %v6146, 4294901760
    %v6148 = vsub.f32 %v6146, %v6147
    %v6149 = vand.u32 %v6148, 4294901760
    %6150 = vmatpush1.msra.mxu0 %v6149
    %v6151 = vand.u32 %v1205, 4294901760
    %v6152 = vsub.f32 %v1205, %v6151
    %v6153 = vand.u32 %v6152, 4294901760
    %v6154 = vsub.f32 %v6152, %v6153
    %v6155 = vand.u32 %v6154, 4294901760
    %6156 = vmatprep.subr.mxu0 %v6155
    %v6157 = vand.u32 %v1204, 4294901760
    %v6158 = vsub.f32 %v1204, %v6157
    %v6159 = vand.u32 %v6158, 4294901760
    %v6160 = vsub.f32 %v6158, %v6159
    %v6161 = vand.u32 %v6160, 4294901760
    %6162 = vmatpush1.msra.mxu0 %v6161
    %v6163 = vand.u32 %v1203, 4294901760
    %v6164 = vsub.f32 %v1203, %v6163
    %v6165 = vand.u32 %v6164, 4294901760
    %v6166 = vsub.f32 %v6164, %v6165
    %v6167 = vand.u32 %v6166, 4294901760
    %6168 = vmatprep.subr.mxu0 %v6167
    %v6169 = vand.u32 %v1202, 4294901760
    %v6170 = vsub.f32 %v1202, %v6169
    %v6171 = vand.u32 %v6170, 4294901760
    %v6172 = vsub.f32 %v6170, %v6171
    %v6173 = vand.u32 %v6172, 4294901760
    %6174 = vmatpush1.msra.mxu0 %v6173
    %v6175 = vand.u32 %v1201, 4294901760
    %v6176 = vsub.f32 %v1201, %v6175
    %v6177 = vand.u32 %v6176, 4294901760
    %v6178 = vsub.f32 %v6176, %v6177
    %v6179 = vand.u32 %v6178, 4294901760
    %6180 = vmatprep.subr.mxu0 %v6179
    %v6181 = vand.u32 %v1200, 4294901760
    %v6182 = vsub.f32 %v1200, %v6181
    %v6183 = vand.u32 %v6182, 4294901760
    %v6184 = vsub.f32 %v6182, %v6183
    %v6185 = vand.u32 %v6184, 4294901760
    %6186 = vmatpush1.msra.mxu0 %v6185
    %v6187 = vand.u32 %v1199, 4294901760
    %v6188 = vsub.f32 %v1199, %v6187
    %v6189 = vand.u32 %v6188, 4294901760
    %v6190 = vsub.f32 %v6188, %v6189
    %v6191 = vand.u32 %v6190, 4294901760
    %6192 = vmatprep.subr.mxu0 %v6191
    %v6193 = vand.u32 %v1198, 4294901760
    %v6194 = vsub.f32 %v1198, %v6193
    %v6195 = vand.u32 %v6194, 4294901760
    %v6196 = vsub.f32 %v6194, %v6195
    %v6197 = vand.u32 %v6196, 4294901760
    %6198 = vmatpush1.msra.mxu0 %v6197
    %v6199 = vand.u32 %v1197, 4294901760
    %v6200 = vsub.f32 %v1197, %v6199
    %v6201 = vand.u32 %v6200, 4294901760
    %v6202 = vsub.f32 %v6200, %v6201
    %v6203 = vand.u32 %v6202, 4294901760
    %6204 = vmatprep.subr.mxu0 %v6203
    %v6205 = vand.u32 %v1196, 4294901760
    %v6206 = vsub.f32 %v1196, %v6205
    %v6207 = vand.u32 %v6206, 4294901760
    %v6208 = vsub.f32 %v6206, %v6207
    %v6209 = vand.u32 %v6208, 4294901760
    %6210 = vmatpush1.msra.mxu0 %v6209
    %v6211 = vand.u32 %v1195, 4294901760
    %v6212 = vsub.f32 %v1195, %v6211
    %v6213 = vand.u32 %v6212, 4294901760
    %v6214 = vsub.f32 %v6212, %v6213
    %v6215 = vand.u32 %v6214, 4294901760
    %6216 = vmatprep.subr.mxu0 %v6215
    %v6217 = vand.u32 %v1194, 4294901760
    %v6218 = vsub.f32 %v1194, %v6217
    %v6219 = vand.u32 %v6218, 4294901760
    %v6220 = vsub.f32 %v6218, %v6219
    %v6221 = vand.u32 %v6220, 4294901760
    %6222 = vmatpush1.msra.mxu0 %v6221
    %v6223 = vand.u32 %v1193, 4294901760
    %v6224 = vsub.f32 %v1193, %v6223
    %v6225 = vand.u32 %v6224, 4294901760
    %v6226 = vsub.f32 %v6224, %v6225
    %v6227 = vand.u32 %v6226, 4294901760
    %6228 = vmatprep.subr.mxu0 %v6227
    %v6229 = vand.u32 %v1192, 4294901760
    %v6230 = vsub.f32 %v1192, %v6229
    %v6231 = vand.u32 %v6230, 4294901760
    %v6232 = vsub.f32 %v6230, %v6231
    %v6233 = vand.u32 %v6232, 4294901760
    %6234 = vmatpush1.msra.mxu0 %v6233
    %6235 = vmatprep.subr.mxu0 0.0
    %6236 = vmatpush2.msra.mxu0 0.0
    %6237 = vmatprep.subr.mxu0 0.0
    %6238 = vmatpush2.msra.mxu0 0.0
    %6239 = vmatprep.subr.mxu0 0.0
    %6240 = vmatpush2.msra.mxu0 0.0
    %6241 = vmatprep.subr.mxu0 0.0
    %6242 = vmatpush2.msra.mxu0 0.0
    %6243 = vmatprep.subr.mxu0 0.0
    %6244 = vmatpush2.msra.mxu0 0.0
    %6245 = vmatprep.subr.mxu0 0.0
    %6246 = vmatpush2.msra.mxu0 0.0
    %6247 = vmatprep.subr.mxu0 0.0
    %6248 = vmatpush2.msra.mxu0 0.0
    %6249 = vmatprep.subr.mxu0 0.0
    %6250 = vmatpush2.msra.mxu0 0.0
    %6251 = vmatprep.subr.mxu0 0.0
    %6252 = vmatpush2.msra.mxu0 0.0
    %6253 = vmatprep.subr.mxu0 0.0
    %6254 = vmatpush2.msra.mxu0 0.0
    %6255 = vmatprep.subr.mxu0 0.0
    %6256 = vmatpush2.msra.mxu0 0.0
    %6257 = vmatprep.subr.mxu0 0.0
    %6258 = vmatpush2.msra.mxu0 0.0
    %6259 = vmatprep.subr.mxu0 0.0
    %6260 = vmatpush2.msra.mxu0 0.0
    %6261 = vmatprep.subr.mxu0 0.0
    %6262 = vmatpush2.msra.mxu0 0.0
    %6263 = vmatprep.subr.mxu0 0.0
    %6264 = vmatpush2.msra.mxu0 0.0
    %6265 = vmatprep.subr.mxu0 0.0
    %6266 = vmatpush2.msra.mxu0 0.0
    %6267 = vmatprep.mubr.f32.mxu0 0.0
    %v6268 = vand.u32 %v6029, 4294901760
    %6269 = vmatmul.mubr.f32.gmra.mxu0 %v6268
    %v6270 = vpop.f32.mrf.mxu0
    %v6271 = vadd.f32 %v6119, %v6270
    %v6272 = vpop.f32.mrf.mxu0
    %v6273 = vadd.f32 %v6121, %v6272
    %6274 = vdwg.mxu0
    %6275 = vmatprep.subr.mxu0 0.0
    %6276 = vmatpush1.msra.mxu0 0.0
    %6277 = vmatprep.subr.mxu0 0.0
    %6278 = vmatpush1.msra.mxu0 0.0
    %6279 = vmatprep.subr.mxu0 0.0
    %6280 = vmatpush1.msra.mxu0 0.0
    %6281 = vmatprep.subr.mxu0 0.0
    %6282 = vmatpush1.msra.mxu0 0.0
    %6283 = vmatprep.subr.mxu0 0.0
    %6284 = vmatpush1.msra.mxu0 0.0
    %6285 = vmatprep.subr.mxu0 0.0
    %6286 = vmatpush1.msra.mxu0 0.0
    %6287 = vmatprep.subr.mxu0 0.0
    %6288 = vmatpush1.msra.mxu0 0.0
    %6289 = vmatprep.subr.mxu0 0.0
    %6290 = vmatpush1.msra.mxu0 0.0
    %v6291 = vand.u32 %v1207, 4294901760
    %v6292 = vsub.f32 %v1207, %v6291
    %6293 = vmatprep.subr.mxu0 %v6292
    %v6294 = vand.u32 %v1206, 4294901760
    %v6295 = vsub.f32 %v1206, %v6294
    %6296 = vmatpush1.msra.mxu0 %v6295
    %v6297 = vand.u32 %v1205, 4294901760
    %v6298 = vsub.f32 %v1205, %v6297
    %6299 = vmatprep.subr.mxu0 %v6298
    %v6300 = vand.u32 %v1204, 4294901760
    %v6301 = vsub.f32 %v1204, %v6300
    %6302 = vmatpush1.msra.mxu0 %v6301
    %v6303 = vand.u32 %v1203, 4294901760
    %v6304 = vsub.f32 %v1203, %v6303
    %6305 = vmatprep.subr.mxu0 %v6304
    %v6306 = vand.u32 %v1202, 4294901760
    %v6307 = vsub.f32 %v1202, %v6306
    %6308 = vmatpush1.msra.mxu0 %v6307
    %v6309 = vand.u32 %v1201, 4294901760
    %v6310 = vsub.f32 %v1201, %v6309
    %6311 = vmatprep.subr.mxu0 %v6310
    %v6312 = vand.u32 %v1200, 4294901760
    %v6313 = vsub.f32 %v1200, %v6312
    %6314 = vmatpush1.msra.mxu0 %v6313
    %v6315 = vand.u32 %v1199, 4294901760
    %v6316 = vsub.f32 %v1199, %v6315
    %6317 = vmatprep.subr.mxu0 %v6316
    %v6318 = vand.u32 %v1198, 4294901760
    %v6319 = vsub.f32 %v1198, %v6318
    %6320 = vmatpush1.msra.mxu0 %v6319
    %v6321 = vand.u32 %v1197, 4294901760
    %v6322 = vsub.f32 %v1197, %v6321
    %6323 = vmatprep.subr.mxu0 %v6322
    %v6324 = vand.u32 %v1196, 4294901760
    %v6325 = vsub.f32 %v1196, %v6324
    %6326 = vmatpush1.msra.mxu0 %v6325
    %v6327 = vand.u32 %v1195, 4294901760
    %v6328 = vsub.f32 %v1195, %v6327
    %6329 = vmatprep.subr.mxu0 %v6328
    %v6330 = vand.u32 %v1194, 4294901760
    %v6331 = vsub.f32 %v1194, %v6330
    %6332 = vmatpush1.msra.mxu0 %v6331
    %v6333 = vand.u32 %v1193, 4294901760
    %v6334 = vsub.f32 %v1193, %v6333
    %6335 = vmatprep.subr.mxu0 %v6334
    %v6336 = vand.u32 %v1192, 4294901760
    %v6337 = vsub.f32 %v1192, %v6336
    %6338 = vmatpush1.msra.mxu0 %v6337
    %6339 = vmatprep.subr.mxu0 0.0
    %6340 = vmatpush2.msra.mxu0 0.0
    %6341 = vmatprep.subr.mxu0 0.0
    %6342 = vmatpush2.msra.mxu0 0.0
    %6343 = vmatprep.subr.mxu0 0.0
    %6344 = vmatpush2.msra.mxu0 0.0
    %6345 = vmatprep.subr.mxu0 0.0
    %6346 = vmatpush2.msra.mxu0 0.0
    %6347 = vmatprep.subr.mxu0 0.0
    %6348 = vmatpush2.msra.mxu0 0.0
    %6349 = vmatprep.subr.mxu0 0.0
    %6350 = vmatpush2.msra.mxu0 0.0
    %6351 = vmatprep.subr.mxu0 0.0
    %6352 = vmatpush2.msra.mxu0 0.0
    %6353 = vmatprep.subr.mxu0 0.0
    %6354 = vmatpush2.msra.mxu0 0.0
    %6355 = vmatprep.subr.mxu0 0.0
    %6356 = vmatpush2.msra.mxu0 0.0
    %6357 = vmatprep.subr.mxu0 0.0
    %6358 = vmatpush2.msra.mxu0 0.0
    %6359 = vmatprep.subr.mxu0 0.0
    %6360 = vmatpush2.msra.mxu0 0.0
    %6361 = vmatprep.subr.mxu0 0.0
    %6362 = vmatpush2.msra.mxu0 0.0
    %6363 = vmatprep.subr.mxu0 0.0
    %6364 = vmatpush2.msra.mxu0 0.0
    %6365 = vmatprep.subr.mxu0 0.0
    %6366 = vmatpush2.msra.mxu0 0.0
    %6367 = vmatprep.subr.mxu0 0.0
    %6368 = vmatpush2.msra.mxu0 0.0
    %6369 = vmatprep.subr.mxu0 0.0
    %6370 = vmatpush2.msra.mxu0 0.0
    %6371 = vmatprep.mubr.f32.mxu0 0.0
    %v6372 = vand.u32 %v6029, 4294901760
    %v6373 = vsub.f32 %v6029, %v6372
    %6374 = vmatmul.mubr.f32.gmra.mxu0 %v6373
    %v6375 = vpop.f32.mrf.mxu0
    %v6376 = vadd.f32 %v6271, %v6375
    %v6377 = vpop.f32.mrf.mxu0
    %v6378 = vadd.f32 %v6273, %v6377
    %6379 = vdwg.mxu0
    %6380 = vmatprep.subr.mxu0 0.0
    %6381 = vmatpush1.msra.mxu0 0.0
    %6382 = vmatprep.subr.mxu0 0.0
    %6383 = vmatpush1.msra.mxu0 0.0
    %6384 = vmatprep.subr.mxu0 0.0
    %6385 = vmatpush1.msra.mxu0 0.0
    %6386 = vmatprep.subr.mxu0 0.0
    %6387 = vmatpush1.msra.mxu0 0.0
    %6388 = vmatprep.subr.mxu0 0.0
    %6389 = vmatpush1.msra.mxu0 0.0
    %6390 = vmatprep.subr.mxu0 0.0
    %6391 = vmatpush1.msra.mxu0 0.0
    %6392 = vmatprep.subr.mxu0 0.0
    %6393 = vmatpush1.msra.mxu0 0.0
    %6394 = vmatprep.subr.mxu0 0.0
    %6395 = vmatpush1.msra.mxu0 0.0
    %v6396 = vand.u32 %v1207, 4294901760
    %6397 = vmatprep.subr.mxu0 %v6396
    %v6398 = vand.u32 %v1206, 4294901760
    %6399 = vmatpush1.msra.mxu0 %v6398
    %v6400 = vand.u32 %v1205, 4294901760
    %6401 = vmatprep.subr.mxu0 %v6400
    %v6402 = vand.u32 %v1204, 4294901760
    %6403 = vmatpush1.msra.mxu0 %v6402
    %v6404 = vand.u32 %v1203, 4294901760
    %6405 = vmatprep.subr.mxu0 %v6404
    %v6406 = vand.u32 %v1202, 4294901760
    %6407 = vmatpush1.msra.mxu0 %v6406
    %v6408 = vand.u32 %v1201, 4294901760
    %6409 = vmatprep.subr.mxu0 %v6408
    %v6410 = vand.u32 %v1200, 4294901760
    %6411 = vmatpush1.msra.mxu0 %v6410
    %v6412 = vand.u32 %v1199, 4294901760
    %6413 = vmatprep.subr.mxu0 %v6412
    %v6414 = vand.u32 %v1198, 4294901760
    %6415 = vmatpush1.msra.mxu0 %v6414
    %v6416 = vand.u32 %v1197, 4294901760
    %6417 = vmatprep.subr.mxu0 %v6416
    %v6418 = vand.u32 %v1196, 4294901760
    %6419 = vmatpush1.msra.mxu0 %v6418
    %v6420 = vand.u32 %v1195, 4294901760
    %6421 = vmatprep.subr.mxu0 %v6420
    %v6422 = vand.u32 %v1194, 4294901760
    %6423 = vmatpush1.msra.mxu0 %v6422
    %v6424 = vand.u32 %v1193, 4294901760
    %6425 = vmatprep.subr.mxu0 %v6424
    %v6426 = vand.u32 %v1192, 4294901760
    %6427 = vmatpush1.msra.mxu0 %v6426
    %6428 = vmatprep.subr.mxu0 0.0
    %6429 = vmatpush2.msra.mxu0 0.0
    %6430 = vmatprep.subr.mxu0 0.0
    %6431 = vmatpush2.msra.mxu0 0.0
    %6432 = vmatprep.subr.mxu0 0.0
    %6433 = vmatpush2.msra.mxu0 0.0
    %6434 = vmatprep.subr.mxu0 0.0
    %6435 = vmatpush2.msra.mxu0 0.0
    %6436 = vmatprep.subr.mxu0 0.0
    %6437 = vmatpush2.msra.mxu0 0.0
    %6438 = vmatprep.subr.mxu0 0.0
    %6439 = vmatpush2.msra.mxu0 0.0
    %6440 = vmatprep.subr.mxu0 0.0
    %6441 = vmatpush2.msra.mxu0 0.0
    %6442 = vmatprep.subr.mxu0 0.0
    %6443 = vmatpush2.msra.mxu0 0.0
    %6444 = vmatprep.subr.mxu0 0.0
    %6445 = vmatpush2.msra.mxu0 0.0
    %6446 = vmatprep.subr.mxu0 0.0
    %6447 = vmatpush2.msra.mxu0 0.0
    %6448 = vmatprep.subr.mxu0 0.0
    %6449 = vmatpush2.msra.mxu0 0.0
    %6450 = vmatprep.subr.mxu0 0.0
    %6451 = vmatpush2.msra.mxu0 0.0
    %6452 = vmatprep.subr.mxu0 0.0
    %6453 = vmatpush2.msra.mxu0 0.0
    %6454 = vmatprep.subr.mxu0 0.0
    %6455 = vmatpush2.msra.mxu0 0.0
    %6456 = vmatprep.subr.mxu0 0.0
    %6457 = vmatpush2.msra.mxu0 0.0
    %6458 = vmatprep.subr.mxu0 0.0
    %6459 = vmatpush2.msra.mxu0 0.0
    %6460 = vmatprep.mubr.f32.mxu0 0.0
    %v6461 = vand.u32 %v6029, 4294901760
    %v6462 = vsub.f32 %v6029, %v6461
    %v6463 = vand.u32 %v6462, 4294901760
    %6464 = vmatmul.mubr.f32.gmra.mxu0 %v6463
    %v6465 = vpop.f32.mrf.mxu0
    %v6466 = vadd.f32 %v6376, %v6465
    %v6467 = vpop.f32.mrf.mxu0
    %v6468 = vadd.f32 %v6378, %v6467
    %6469 = vdwg.mxu0
    %6470 = vmatprep.subr.mxu0 0.0
    %6471 = vmatpush1.msra.mxu0 0.0
    %6472 = vmatprep.subr.mxu0 0.0
    %6473 = vmatpush1.msra.mxu0 0.0
    %6474 = vmatprep.subr.mxu0 0.0
    %6475 = vmatpush1.msra.mxu0 0.0
    %6476 = vmatprep.subr.mxu0 0.0
    %6477 = vmatpush1.msra.mxu0 0.0
    %6478 = vmatprep.subr.mxu0 0.0
    %6479 = vmatpush1.msra.mxu0 0.0
    %6480 = vmatprep.subr.mxu0 0.0
    %6481 = vmatpush1.msra.mxu0 0.0
    %6482 = vmatprep.subr.mxu0 0.0
    %6483 = vmatpush1.msra.mxu0 0.0
    %6484 = vmatprep.subr.mxu0 0.0
    %6485 = vmatpush1.msra.mxu0 0.0
    %v6486 = vand.u32 %v1207, 4294901760
    %v6487 = vsub.f32 %v1207, %v6486
    %v6488 = vand.u32 %v6487, 4294901760
    %6489 = vmatprep.subr.mxu0 %v6488
    %v6490 = vand.u32 %v1206, 4294901760
    %v6491 = vsub.f32 %v1206, %v6490
    %v6492 = vand.u32 %v6491, 4294901760
    %6493 = vmatpush1.msra.mxu0 %v6492
    %v6494 = vand.u32 %v1205, 4294901760
    %v6495 = vsub.f32 %v1205, %v6494
    %v6496 = vand.u32 %v6495, 4294901760
    %6497 = vmatprep.subr.mxu0 %v6496
    %v6498 = vand.u32 %v1204, 4294901760
    %v6499 = vsub.f32 %v1204, %v6498
    %v6500 = vand.u32 %v6499, 4294901760
    %6501 = vmatpush1.msra.mxu0 %v6500
    %v6502 = vand.u32 %v1203, 4294901760
    %v6503 = vsub.f32 %v1203, %v6502
    %v6504 = vand.u32 %v6503, 4294901760
    %6505 = vmatprep.subr.mxu0 %v6504
    %v6506 = vand.u32 %v1202, 4294901760
    %v6507 = vsub.f32 %v1202, %v6506
    %v6508 = vand.u32 %v6507, 4294901760
    %6509 = vmatpush1.msra.mxu0 %v6508
    %v6510 = vand.u32 %v1201, 4294901760
    %v6511 = vsub.f32 %v1201, %v6510
    %v6512 = vand.u32 %v6511, 4294901760
    %6513 = vmatprep.subr.mxu0 %v6512
    %v6514 = vand.u32 %v1200, 4294901760
    %v6515 = vsub.f32 %v1200, %v6514
    %v6516 = vand.u32 %v6515, 4294901760
    %6517 = vmatpush1.msra.mxu0 %v6516
    %v6518 = vand.u32 %v1199, 4294901760
    %v6519 = vsub.f32 %v1199, %v6518
    %v6520 = vand.u32 %v6519, 4294901760
    %6521 = vmatprep.subr.mxu0 %v6520
    %v6522 = vand.u32 %v1198, 4294901760
    %v6523 = vsub.f32 %v1198, %v6522
    %v6524 = vand.u32 %v6523, 4294901760
    %6525 = vmatpush1.msra.mxu0 %v6524
    %v6526 = vand.u32 %v1197, 4294901760
    %v6527 = vsub.f32 %v1197, %v6526
    %v6528 = vand.u32 %v6527, 4294901760
    %6529 = vmatprep.subr.mxu0 %v6528
    %v6530 = vand.u32 %v1196, 4294901760
    %v6531 = vsub.f32 %v1196, %v6530
    %v6532 = vand.u32 %v6531, 4294901760
    %6533 = vmatpush1.msra.mxu0 %v6532
    %v6534 = vand.u32 %v1195, 4294901760
    %v6535 = vsub.f32 %v1195, %v6534
    %v6536 = vand.u32 %v6535, 4294901760
    %6537 = vmatprep.subr.mxu0 %v6536
    %v6538 = vand.u32 %v1194, 4294901760
    %v6539 = vsub.f32 %v1194, %v6538
    %v6540 = vand.u32 %v6539, 4294901760
    %6541 = vmatpush1.msra.mxu0 %v6540
    %v6542 = vand.u32 %v1193, 4294901760
    %v6543 = vsub.f32 %v1193, %v6542
    %v6544 = vand.u32 %v6543, 4294901760
    %6545 = vmatprep.subr.mxu0 %v6544
    %v6546 = vand.u32 %v1192, 4294901760
    %v6547 = vsub.f32 %v1192, %v6546
    %v6548 = vand.u32 %v6547, 4294901760
    %6549 = vmatpush1.msra.mxu0 %v6548
    %6550 = vmatprep.subr.mxu0 0.0
    %6551 = vmatpush2.msra.mxu0 0.0
    %6552 = vmatprep.subr.mxu0 0.0
    %6553 = vmatpush2.msra.mxu0 0.0
    %6554 = vmatprep.subr.mxu0 0.0
    %6555 = vmatpush2.msra.mxu0 0.0
    %6556 = vmatprep.subr.mxu0 0.0
    %6557 = vmatpush2.msra.mxu0 0.0
    %6558 = vmatprep.subr.mxu0 0.0
    %6559 = vmatpush2.msra.mxu0 0.0
    %6560 = vmatprep.subr.mxu0 0.0
    %6561 = vmatpush2.msra.mxu0 0.0
    %6562 = vmatprep.subr.mxu0 0.0
    %6563 = vmatpush2.msra.mxu0 0.0
    %6564 = vmatprep.subr.mxu0 0.0
    %6565 = vmatpush2.msra.mxu0 0.0
    %6566 = vmatprep.subr.mxu0 0.0
    %6567 = vmatpush2.msra.mxu0 0.0
    %6568 = vmatprep.subr.mxu0 0.0
    %6569 = vmatpush2.msra.mxu0 0.0
    %6570 = vmatprep.subr.mxu0 0.0
    %6571 = vmatpush2.msra.mxu0 0.0
    %6572 = vmatprep.subr.mxu0 0.0
    %6573 = vmatpush2.msra.mxu0 0.0
    %6574 = vmatprep.subr.mxu0 0.0
    %6575 = vmatpush2.msra.mxu0 0.0
    %6576 = vmatprep.subr.mxu0 0.0
    %6577 = vmatpush2.msra.mxu0 0.0
    %6578 = vmatprep.subr.mxu0 0.0
    %6579 = vmatpush2.msra.mxu0 0.0
    %6580 = vmatprep.subr.mxu0 0.0
    %6581 = vmatpush2.msra.mxu0 0.0
    %6582 = vmatprep.mubr.f32.mxu0 0.0
    %v6583 = vand.u32 %v6029, 4294901760
    %6584 = vmatmul.mubr.f32.gmra.mxu0 %v6583
    %v6585 = vpop.f32.mrf.mxu0
    %v6586 = vadd.f32 %v6466, %v6585
    %v6587 = vpop.f32.mrf.mxu0
    %v6588 = vadd.f32 %v6468, %v6587
    %6589 = vdwg.mxu0
    %6590 = vmatprep.subr.mxu0 0.0
    %6591 = vmatpush1.msra.mxu0 0.0
    %6592 = vmatprep.subr.mxu0 0.0
    %6593 = vmatpush1.msra.mxu0 0.0
    %6594 = vmatprep.subr.mxu0 0.0
    %6595 = vmatpush1.msra.mxu0 0.0
    %6596 = vmatprep.subr.mxu0 0.0
    %6597 = vmatpush1.msra.mxu0 0.0
    %6598 = vmatprep.subr.mxu0 0.0
    %6599 = vmatpush1.msra.mxu0 0.0
    %6600 = vmatprep.subr.mxu0 0.0
    %6601 = vmatpush1.msra.mxu0 0.0
    %6602 = vmatprep.subr.mxu0 0.0
    %6603 = vmatpush1.msra.mxu0 0.0
    %6604 = vmatprep.subr.mxu0 0.0
    %6605 = vmatpush1.msra.mxu0 0.0
    %v6606 = vand.u32 %v1207, 4294901760
    %6607 = vmatprep.subr.mxu0 %v6606
    %v6608 = vand.u32 %v1206, 4294901760
    %6609 = vmatpush1.msra.mxu0 %v6608
    %v6610 = vand.u32 %v1205, 4294901760
    %6611 = vmatprep.subr.mxu0 %v6610
    %v6612 = vand.u32 %v1204, 4294901760
    %6613 = vmatpush1.msra.mxu0 %v6612
    %v6614 = vand.u32 %v1203, 4294901760
    %6615 = vmatprep.subr.mxu0 %v6614
    %v6616 = vand.u32 %v1202, 4294901760
    %6617 = vmatpush1.msra.mxu0 %v6616
    %v6618 = vand.u32 %v1201, 4294901760
    %6619 = vmatprep.subr.mxu0 %v6618
    %v6620 = vand.u32 %v1200, 4294901760
    %6621 = vmatpush1.msra.mxu0 %v6620
    %v6622 = vand.u32 %v1199, 4294901760
    %6623 = vmatprep.subr.mxu0 %v6622
    %v6624 = vand.u32 %v1198, 4294901760
    %6625 = vmatpush1.msra.mxu0 %v6624
    %v6626 = vand.u32 %v1197, 4294901760
    %6627 = vmatprep.subr.mxu0 %v6626
    %v6628 = vand.u32 %v1196, 4294901760
    %6629 = vmatpush1.msra.mxu0 %v6628
    %v6630 = vand.u32 %v1195, 4294901760
    %6631 = vmatprep.subr.mxu0 %v6630
    %v6632 = vand.u32 %v1194, 4294901760
    %6633 = vmatpush1.msra.mxu0 %v6632
    %v6634 = vand.u32 %v1193, 4294901760
    %6635 = vmatprep.subr.mxu0 %v6634
    %v6636 = vand.u32 %v1192, 4294901760
    %6637 = vmatpush1.msra.mxu0 %v6636
    %6638 = vmatprep.subr.mxu0 0.0
    %6639 = vmatpush2.msra.mxu0 0.0
    %6640 = vmatprep.subr.mxu0 0.0
    %6641 = vmatpush2.msra.mxu0 0.0
    %6642 = vmatprep.subr.mxu0 0.0
    %6643 = vmatpush2.msra.mxu0 0.0
    %6644 = vmatprep.subr.mxu0 0.0
    %6645 = vmatpush2.msra.mxu0 0.0
    %6646 = vmatprep.subr.mxu0 0.0
    %6647 = vmatpush2.msra.mxu0 0.0
    %6648 = vmatprep.subr.mxu0 0.0
    %6649 = vmatpush2.msra.mxu0 0.0
    %6650 = vmatprep.subr.mxu0 0.0
    %6651 = vmatpush2.msra.mxu0 0.0
    %6652 = vmatprep.subr.mxu0 0.0
    %6653 = vmatpush2.msra.mxu0 0.0
    %6654 = vmatprep.subr.mxu0 0.0
    %6655 = vmatpush2.msra.mxu0 0.0
    %6656 = vmatprep.subr.mxu0 0.0
    %6657 = vmatpush2.msra.mxu0 0.0
    %6658 = vmatprep.subr.mxu0 0.0
    %6659 = vmatpush2.msra.mxu0 0.0
    %6660 = vmatprep.subr.mxu0 0.0
    %6661 = vmatpush2.msra.mxu0 0.0
    %6662 = vmatprep.subr.mxu0 0.0
    %6663 = vmatpush2.msra.mxu0 0.0
    %6664 = vmatprep.subr.mxu0 0.0
    %6665 = vmatpush2.msra.mxu0 0.0
    %6666 = vmatprep.subr.mxu0 0.0
    %6667 = vmatpush2.msra.mxu0 0.0
    %6668 = vmatprep.subr.mxu0 0.0
    %6669 = vmatpush2.msra.mxu0 0.0
    %6670 = vmatprep.mubr.f32.mxu0 0.0
    %v6671 = vand.u32 %v6029, 4294901760
    %6672 = vmatmul.mubr.f32.gmra.mxu0 %v6671
    %v6673 = vpop.f32.mrf.mxu0
    %v6674 = vadd.f32 %v6586, %v6673
    %v6675 = vpop.f32.mrf.mxu0
    %v6676 = vadd.f32 %v6588, %v6675
    %6677 = vdwg.mxu0
    %v6678 = vadd.f32 %v6026, %v6674
    %v6679 = vadd.f32 %v6027, %v6676
    %v6680 = vxor.u32 %v6678, 2147483648
    %v6681 = vxor.u32 %v6679, 2147483648
    %v6682 = vmul.f32 %v6680, 1.442695
    %v6683 = vpow.pop %v6682
    %v6684 = vmul.f32 %v6681, 1.442695
    %v6685 = vpow.pop %v6684
    %v6686 = vadd.f32 %v6683, 1.0
    %v6687 = vadd.f32 %v6685, 1.0
    %v6688 = vrcp.pop %v6686
    %v6689 = vmul.f32 1.0, %v6688
    %v6690 = vrcp.pop %v6687
    %v6691 = vmul.f32 1.0, %v6690
    %v6692 = vtanh.pop %v6679
    %v6693 = vmul.f32 %v6689, %v6015
    %6695 = vrot.lane.b32.xlu0 %v6692, 64
    %v6696 = vpop.permute.xlu0 %6695
    %v6698 = vmul.f32 %v6689, %v6696
    %6700 = vrot.lane.b32.xlu0 %v6698, 64
    %v6701 = vpop.permute.xlu0 %6700
    %v6703 = vadd.f32 %v6693, %v6701
    %v6704 = vtanh.pop %v6703
    %6706 = vrot.lane.b32.xlu0 %v6704, 64
    %v6707 = vpop.permute.xlu0 %6706
    %v6709 = vmul.f32 %v6691, %v6707
    %v6710 = vmax.f32 %v6022, %v6709
    %v6711 = vld [vmem:[%s4] sm:$0xff]
    %v6712 = vld [vmem:[%s4 + $0x8] sm:$0xff]
    %v6713 = vld [vmem:[%s4 + $0x10] sm:$0xff]
    %v6714 = vld [vmem:[%s4 + $0x18] sm:$0xff]
    %v6715 = vld [vmem:[%s4 + $0x20] sm:$0xff]
    %v6716 = vld [vmem:[%s4 + $0x28] sm:$0xff]
    %v6717 = vld [vmem:[%s4 + $0x30] sm:$0xff]
    %v6718 = vld [vmem:[%s4 + $0x38] sm:$0xff]
    %v6719 = vld [vmem:[#allocation3] sm:$0x1]
    %v6721 = vlaneseq
    %v6722 = vshrl.u32 %v6721, 7
    %v6723 = vsub.s32 0, %v6722
    %v6724 = vrot.slane %v6719, %v6723
    %v6727 = vsel %vm161, %v6710, 0
    %6729 = vmatprep.subr.mxu0 0.0
    %6730 = vmatpush1.msra.mxu0 0.0
    %6731 = vmatprep.subr.mxu0 0.0
    %6732 = vmatpush1.msra.mxu0 0.0
    %6733 = vmatprep.subr.mxu0 0.0
    %6734 = vmatpush1.msra.mxu0 0.0
    %6735 = vmatprep.subr.mxu0 0.0
    %6736 = vmatpush1.msra.mxu0 0.0
    %6737 = vmatprep.subr.mxu0 0.0
    %6738 = vmatpush1.msra.mxu0 0.0
    %6739 = vmatprep.subr.mxu0 0.0
    %6740 = vmatpush1.msra.mxu0 0.0
    %6741 = vmatprep.subr.mxu0 0.0
    %6742 = vmatpush1.msra.mxu0 0.0
    %6743 = vmatprep.subr.mxu0 0.0
    %6744 = vmatpush1.msra.mxu0 0.0
    %6745 = vmatprep.subr.mxu0 0.0
    %v6746 = vand.u32 %v6718, 4294901760
    %6747 = vmatpush1.msra.mxu0 %v6746
    %6748 = vmatprep.subr.mxu0 0.0
    %v6749 = vand.u32 %v6717, 4294901760
    %6750 = vmatpush1.msra.mxu0 %v6749
    %6751 = vmatprep.subr.mxu0 0.0
    %v6752 = vand.u32 %v6716, 4294901760
    %6753 = vmatpush1.msra.mxu0 %v6752
    %6754 = vmatprep.subr.mxu0 0.0
    %v6755 = vand.u32 %v6715, 4294901760
    %6756 = vmatpush1.msra.mxu0 %v6755
    %6757 = vmatprep.subr.mxu0 0.0
    %v6758 = vand.u32 %v6714, 4294901760
    %6759 = vmatpush1.msra.mxu0 %v6758
    %6760 = vmatprep.subr.mxu0 0.0
    %v6761 = vand.u32 %v6713, 4294901760
    %6762 = vmatpush1.msra.mxu0 %v6761
    %6763 = vmatprep.subr.mxu0 0.0
    %v6764 = vand.u32 %v6712, 4294901760
    %6765 = vmatpush1.msra.mxu0 %v6764
    %6766 = vmatprep.subr.mxu0 0.0
    %v6767 = vand.u32 %v6711, 4294901760
    %6768 = vmatpush1.msra.mxu0 %v6767
    %6769 = vmatprep.subr.mxu0 0.0
    %6770 = vmatpush2.msra.mxu0 0.0
    %6771 = vmatprep.subr.mxu0 0.0
    %6772 = vmatpush2.msra.mxu0 0.0
    %6773 = vmatprep.subr.mxu0 0.0
    %6774 = vmatpush2.msra.mxu0 0.0
    %6775 = vmatprep.subr.mxu0 0.0
    %6776 = vmatpush2.msra.mxu0 0.0
    %6777 = vmatprep.subr.mxu0 0.0
    %6778 = vmatpush2.msra.mxu0 0.0
    %6779 = vmatprep.subr.mxu0 0.0
    %6780 = vmatpush2.msra.mxu0 0.0
    %6781 = vmatprep.subr.mxu0 0.0
    %6782 = vmatpush2.msra.mxu0 0.0
    %6783 = vmatprep.subr.mxu0 0.0
    %6784 = vmatpush2.msra.mxu0 0.0
    %6785 = vmatprep.subr.mxu0 0.0
    %6786 = vmatpush2.msra.mxu0 0.0
    %6787 = vmatprep.subr.mxu0 0.0
    %6788 = vmatpush2.msra.mxu0 0.0
    %6789 = vmatprep.subr.mxu0 0.0
    %6790 = vmatpush2.msra.mxu0 0.0
    %6791 = vmatprep.subr.mxu0 0.0
    %6792 = vmatpush2.msra.mxu0 0.0
    %6793 = vmatprep.subr.mxu0 0.0
    %6794 = vmatpush2.msra.mxu0 0.0
    %6795 = vmatprep.subr.mxu0 0.0
    %6796 = vmatpush2.msra.mxu0 0.0
    %6797 = vmatprep.subr.mxu0 0.0
    %6798 = vmatpush2.msra.mxu0 0.0
    %6799 = vmatprep.subr.mxu0 0.0
    %6800 = vmatpush2.msra.mxu0 0.0
    %6801 = vmatprep.mubr.f32.mxu0 0.0
    %v6802 = vand.u32 %v6727, 4294901760
    %v6803 = vsub.f32 %v6727, %v6802
    %v6804 = vand.u32 %v6803, 4294901760
    %v6805 = vsub.f32 %v6803, %v6804
    %v6806 = vand.u32 %v6805, 4294901760
    %6807 = vmatmul.mubr.f32.gmra.mxu0 %v6806
    %v6808 = vpop.f32.mrf.mxu0
    %v6809 = vadd.f32 %v6724, %v6808
    %v6810 = vpop.f32.mrf.mxu0
    %6811 = vdwg.mxu0
    %6812 = vmatprep.subr.mxu0 0.0
    %6813 = vmatpush1.msra.mxu0 0.0
    %6814 = vmatprep.subr.mxu0 0.0
    %6815 = vmatpush1.msra.mxu0 0.0
    %6816 = vmatprep.subr.mxu0 0.0
    %6817 = vmatpush1.msra.mxu0 0.0
    %6818 = vmatprep.subr.mxu0 0.0
    %6819 = vmatpush1.msra.mxu0 0.0
    %6820 = vmatprep.subr.mxu0 0.0
    %6821 = vmatpush1.msra.mxu0 0.0
    %6822 = vmatprep.subr.mxu0 0.0
    %6823 = vmatpush1.msra.mxu0 0.0
    %6824 = vmatprep.subr.mxu0 0.0
    %6825 = vmatpush1.msra.mxu0 0.0
    %6826 = vmatprep.subr.mxu0 0.0
    %6827 = vmatpush1.msra.mxu0 0.0
    %6828 = vmatprep.subr.mxu0 0.0
    %v6829 = vand.u32 %v6718, 4294901760
    %v6830 = vsub.f32 %v6718, %v6829
    %v6831 = vand.u32 %v6830, 4294901760
    %v6832 = vsub.f32 %v6830, %v6831
    %v6833 = vand.u32 %v6832, 4294901760
    %6834 = vmatpush1.msra.mxu0 %v6833
    %6835 = vmatprep.subr.mxu0 0.0
    %v6836 = vand.u32 %v6717, 4294901760
    %v6837 = vsub.f32 %v6717, %v6836
    %v6838 = vand.u32 %v6837, 4294901760
    %v6839 = vsub.f32 %v6837, %v6838
    %v6840 = vand.u32 %v6839, 4294901760
    %6841 = vmatpush1.msra.mxu0 %v6840
    %6842 = vmatprep.subr.mxu0 0.0
    %v6843 = vand.u32 %v6716, 4294901760
    %v6844 = vsub.f32 %v6716, %v6843
    %v6845 = vand.u32 %v6844, 4294901760
    %v6846 = vsub.f32 %v6844, %v6845
    %v6847 = vand.u32 %v6846, 4294901760
    %6848 = vmatpush1.msra.mxu0 %v6847
    %6849 = vmatprep.subr.mxu0 0.0
    %v6850 = vand.u32 %v6715, 4294901760
    %v6851 = vsub.f32 %v6715, %v6850
    %v6852 = vand.u32 %v6851, 4294901760
    %v6853 = vsub.f32 %v6851, %v6852
    %v6854 = vand.u32 %v6853, 4294901760
    %6855 = vmatpush1.msra.mxu0 %v6854
    %6856 = vmatprep.subr.mxu0 0.0
    %v6857 = vand.u32 %v6714, 4294901760
    %v6858 = vsub.f32 %v6714, %v6857
    %v6859 = vand.u32 %v6858, 4294901760
    %v6860 = vsub.f32 %v6858, %v6859
    %v6861 = vand.u32 %v6860, 4294901760
    %6862 = vmatpush1.msra.mxu0 %v6861
    %6863 = vmatprep.subr.mxu0 0.0
    %v6864 = vand.u32 %v6713, 4294901760
    %v6865 = vsub.f32 %v6713, %v6864
    %v6866 = vand.u32 %v6865, 4294901760
    %v6867 = vsub.f32 %v6865, %v6866
    %v6868 = vand.u32 %v6867, 4294901760
    %6869 = vmatpush1.msra.mxu0 %v6868
    %6870 = vmatprep.subr.mxu0 0.0
    %v6871 = vand.u32 %v6712, 4294901760
    %v6872 = vsub.f32 %v6712, %v6871
    %v6873 = vand.u32 %v6872, 4294901760
    %v6874 = vsub.f32 %v6872, %v6873
    %v6875 = vand.u32 %v6874, 4294901760
    %6876 = vmatpush1.msra.mxu0 %v6875
    %6877 = vmatprep.subr.mxu0 0.0
    %v6878 = vand.u32 %v6711, 4294901760
    %v6879 = vsub.f32 %v6711, %v6878
    %v6880 = vand.u32 %v6879, 4294901760
    %v6881 = vsub.f32 %v6879, %v6880
    %v6882 = vand.u32 %v6881, 4294901760
    %6883 = vmatpush1.msra.mxu0 %v6882
    %6884 = vmatprep.subr.mxu0 0.0
    %6885 = vmatpush2.msra.mxu0 0.0
    %6886 = vmatprep.subr.mxu0 0.0
    %6887 = vmatpush2.msra.mxu0 0.0
    %6888 = vmatprep.subr.mxu0 0.0
    %6889 = vmatpush2.msra.mxu0 0.0
    %6890 = vmatprep.subr.mxu0 0.0
    %6891 = vmatpush2.msra.mxu0 0.0
    %6892 = vmatprep.subr.mxu0 0.0
    %6893 = vmatpush2.msra.mxu0 0.0
    %6894 = vmatprep.subr.mxu0 0.0
    %6895 = vmatpush2.msra.mxu0 0.0
    %6896 = vmatprep.subr.mxu0 0.0
    %6897 = vmatpush2.msra.mxu0 0.0
    %6898 = vmatprep.subr.mxu0 0.0
    %6899 = vmatpush2.msra.mxu0 0.0
    %6900 = vmatprep.subr.mxu0 0.0
    %6901 = vmatpush2.msra.mxu0 0.0
    %6902 = vmatprep.subr.mxu0 0.0
    %6903 = vmatpush2.msra.mxu0 0.0
    %6904 = vmatprep.subr.mxu0 0.0
    %6905 = vmatpush2.msra.mxu0 0.0
    %6906 = vmatprep.subr.mxu0 0.0
    %6907 = vmatpush2.msra.mxu0 0.0
    %6908 = vmatprep.subr.mxu0 0.0
    %6909 = vmatpush2.msra.mxu0 0.0
    %6910 = vmatprep.subr.mxu0 0.0
    %6911 = vmatpush2.msra.mxu0 0.0
    %6912 = vmatprep.subr.mxu0 0.0
    %6913 = vmatpush2.msra.mxu0 0.0
    %6914 = vmatprep.subr.mxu0 0.0
    %6915 = vmatpush2.msra.mxu0 0.0
    %6916 = vmatprep.mubr.f32.mxu0 0.0
    %v6917 = vand.u32 %v6727, 4294901760
    %6918 = vmatmul.mubr.f32.gmra.mxu0 %v6917
    %v6919 = vpop.f32.mrf.mxu0
    %v6920 = vadd.f32 %v6809, %v6919
    %v6921 = vpop.f32.mrf.mxu0
    %6922 = vdwg.mxu0
    %6923 = vmatprep.subr.mxu0 0.0
    %6924 = vmatpush1.msra.mxu0 0.0
    %6925 = vmatprep.subr.mxu0 0.0
    %6926 = vmatpush1.msra.mxu0 0.0
    %6927 = vmatprep.subr.mxu0 0.0
    %6928 = vmatpush1.msra.mxu0 0.0
    %6929 = vmatprep.subr.mxu0 0.0
    %6930 = vmatpush1.msra.mxu0 0.0
    %6931 = vmatprep.subr.mxu0 0.0
    %6932 = vmatpush1.msra.mxu0 0.0
    %6933 = vmatprep.subr.mxu0 0.0
    %6934 = vmatpush1.msra.mxu0 0.0
    %6935 = vmatprep.subr.mxu0 0.0
    %6936 = vmatpush1.msra.mxu0 0.0
    %6937 = vmatprep.subr.mxu0 0.0
    %6938 = vmatpush1.msra.mxu0 0.0
    %6939 = vmatprep.subr.mxu0 0.0
    %v6940 = vand.u32 %v6718, 4294901760
    %v6941 = vsub.f32 %v6718, %v6940
    %6942 = vmatpush1.msra.mxu0 %v6941
    %6943 = vmatprep.subr.mxu0 0.0
    %v6944 = vand.u32 %v6717, 4294901760
    %v6945 = vsub.f32 %v6717, %v6944
    %6946 = vmatpush1.msra.mxu0 %v6945
    %6947 = vmatprep.subr.mxu0 0.0
    %v6948 = vand.u32 %v6716, 4294901760
    %v6949 = vsub.f32 %v6716, %v6948
    %6950 = vmatpush1.msra.mxu0 %v6949
    %6951 = vmatprep.subr.mxu0 0.0
    %v6952 = vand.u32 %v6715, 4294901760
    %v6953 = vsub.f32 %v6715, %v6952
    %6954 = vmatpush1.msra.mxu0 %v6953
    %6955 = vmatprep.subr.mxu0 0.0
    %v6956 = vand.u32 %v6714, 4294901760
    %v6957 = vsub.f32 %v6714, %v6956
    %6958 = vmatpush1.msra.mxu0 %v6957
    %6959 = vmatprep.subr.mxu0 0.0
    %v6960 = vand.u32 %v6713, 4294901760
    %v6961 = vsub.f32 %v6713, %v6960
    %6962 = vmatpush1.msra.mxu0 %v6961
    %6963 = vmatprep.subr.mxu0 0.0
    %v6964 = vand.u32 %v6712, 4294901760
    %v6965 = vsub.f32 %v6712, %v6964
    %6966 = vmatpush1.msra.mxu0 %v6965
    %6967 = vmatprep.subr.mxu0 0.0
    %v6968 = vand.u32 %v6711, 4294901760
    %v6969 = vsub.f32 %v6711, %v6968
    %6970 = vmatpush1.msra.mxu0 %v6969
    %6971 = vmatprep.subr.mxu0 0.0
    %6972 = vmatpush2.msra.mxu0 0.0
    %6973 = vmatprep.subr.mxu0 0.0
    %6974 = vmatpush2.msra.mxu0 0.0
    %6975 = vmatprep.subr.mxu0 0.0
    %6976 = vmatpush2.msra.mxu0 0.0
    %6977 = vmatprep.subr.mxu0 0.0
    %6978 = vmatpush2.msra.mxu0 0.0
    %6979 = vmatprep.subr.mxu0 0.0
    %6980 = vmatpush2.msra.mxu0 0.0
    %6981 = vmatprep.subr.mxu0 0.0
    %6982 = vmatpush2.msra.mxu0 0.0
    %6983 = vmatprep.subr.mxu0 0.0
    %6984 = vmatpush2.msra.mxu0 0.0
    %6985 = vmatprep.subr.mxu0 0.0
    %6986 = vmatpush2.msra.mxu0 0.0
    %6987 = vmatprep.subr.mxu0 0.0
    %6988 = vmatpush2.msra.mxu0 0.0
    %6989 = vmatprep.subr.mxu0 0.0
    %6990 = vmatpush2.msra.mxu0 0.0
    %6991 = vmatprep.subr.mxu0 0.0
    %6992 = vmatpush2.msra.mxu0 0.0
    %6993 = vmatprep.subr.mxu0 0.0
    %6994 = vmatpush2.msra.mxu0 0.0
    %6995 = vmatprep.subr.mxu0 0.0
    %6996 = vmatpush2.msra.mxu0 0.0
    %6997 = vmatprep.subr.mxu0 0.0
    %6998 = vmatpush2.msra.mxu0 0.0
    %6999 = vmatprep.subr.mxu0 0.0
    %7000 = vmatpush2.msra.mxu0 0.0
    %7001 = vmatprep.subr.mxu0 0.0
    %7002 = vmatpush2.msra.mxu0 0.0
    %7003 = vmatprep.mubr.f32.mxu0 0.0
    %v7004 = vand.u32 %v6727, 4294901760
    %v7005 = vsub.f32 %v6727, %v7004
    %7006 = vmatmul.mubr.f32.gmra.mxu0 %v7005
    %v7007 = vpop.f32.mrf.mxu0
    %v7008 = vadd.f32 %v6920, %v7007
    %v7009 = vpop.f32.mrf.mxu0
    %7010 = vdwg.mxu0
    %7011 = vmatprep.subr.mxu0 0.0
    %7012 = vmatpush1.msra.mxu0 0.0
    %7013 = vmatprep.subr.mxu0 0.0
    %7014 = vmatpush1.msra.mxu0 0.0
    %7015 = vmatprep.subr.mxu0 0.0
    %7016 = vmatpush1.msra.mxu0 0.0
    %7017 = vmatprep.subr.mxu0 0.0
    %7018 = vmatpush1.msra.mxu0 0.0
    %7019 = vmatprep.subr.mxu0 0.0
    %7020 = vmatpush1.msra.mxu0 0.0
    %7021 = vmatprep.subr.mxu0 0.0
    %7022 = vmatpush1.msra.mxu0 0.0
    %7023 = vmatprep.subr.mxu0 0.0
    %7024 = vmatpush1.msra.mxu0 0.0
    %7025 = vmatprep.subr.mxu0 0.0
    %7026 = vmatpush1.msra.mxu0 0.0
    %7027 = vmatprep.subr.mxu0 0.0
    %v7028 = vand.u32 %v6718, 4294901760
    %7029 = vmatpush1.msra.mxu0 %v7028
    %7030 = vmatprep.subr.mxu0 0.0
    %v7031 = vand.u32 %v6717, 4294901760
    %7032 = vmatpush1.msra.mxu0 %v7031
    %7033 = vmatprep.subr.mxu0 0.0
    %v7034 = vand.u32 %v6716, 4294901760
    %7035 = vmatpush1.msra.mxu0 %v7034
    %7036 = vmatprep.subr.mxu0 0.0
    %v7037 = vand.u32 %v6715, 4294901760
    %7038 = vmatpush1.msra.mxu0 %v7037
    %7039 = vmatprep.subr.mxu0 0.0
    %v7040 = vand.u32 %v6714, 4294901760
    %7041 = vmatpush1.msra.mxu0 %v7040
    %7042 = vmatprep.subr.mxu0 0.0
    %v7043 = vand.u32 %v6713, 4294901760
    %7044 = vmatpush1.msra.mxu0 %v7043
    %7045 = vmatprep.subr.mxu0 0.0
    %v7046 = vand.u32 %v6712, 4294901760
    %7047 = vmatpush1.msra.mxu0 %v7046
    %7048 = vmatprep.subr.mxu0 0.0
    %v7049 = vand.u32 %v6711, 4294901760
    %7050 = vmatpush1.msra.mxu0 %v7049
    %7051 = vmatprep.subr.mxu0 0.0
    %7052 = vmatpush2.msra.mxu0 0.0
    %7053 = vmatprep.subr.mxu0 0.0
    %7054 = vmatpush2.msra.mxu0 0.0
    %7055 = vmatprep.subr.mxu0 0.0
    %7056 = vmatpush2.msra.mxu0 0.0
    %7057 = vmatprep.subr.mxu0 0.0
    %7058 = vmatpush2.msra.mxu0 0.0
    %7059 = vmatprep.subr.mxu0 0.0
    %7060 = vmatpush2.msra.mxu0 0.0
    %7061 = vmatprep.subr.mxu0 0.0
    %7062 = vmatpush2.msra.mxu0 0.0
    %7063 = vmatprep.subr.mxu0 0.0
    %7064 = vmatpush2.msra.mxu0 0.0
    %7065 = vmatprep.subr.mxu0 0.0
    %7066 = vmatpush2.msra.mxu0 0.0
    %7067 = vmatprep.subr.mxu0 0.0
    %7068 = vmatpush2.msra.mxu0 0.0
    %7069 = vmatprep.subr.mxu0 0.0
    %7070 = vmatpush2.msra.mxu0 0.0
    %7071 = vmatprep.subr.mxu0 0.0
    %7072 = vmatpush2.msra.mxu0 0.0
    %7073 = vmatprep.subr.mxu0 0.0
    %7074 = vmatpush2.msra.mxu0 0.0
    %7075 = vmatprep.subr.mxu0 0.0
    %7076 = vmatpush2.msra.mxu0 0.0
    %7077 = vmatprep.subr.mxu0 0.0
    %7078 = vmatpush2.msra.mxu0 0.0
    %7079 = vmatprep.subr.mxu0 0.0
    %7080 = vmatpush2.msra.mxu0 0.0
    %7081 = vmatprep.subr.mxu0 0.0
    %7082 = vmatpush2.msra.mxu0 0.0
    %7083 = vmatprep.mubr.f32.mxu0 0.0
    %v7084 = vand.u32 %v6727, 4294901760
    %v7085 = vsub.f32 %v6727, %v7084
    %v7086 = vand.u32 %v7085, 4294901760
    %7087 = vmatmul.mubr.f32.gmra.mxu0 %v7086
    %v7088 = vpop.f32.mrf.mxu0
    %v7089 = vadd.f32 %v7008, %v7088
    %v7090 = vpop.f32.mrf.mxu0
    %7091 = vdwg.mxu0
    %7092 = vmatprep.subr.mxu0 0.0
    %7093 = vmatpush1.msra.mxu0 0.0
    %7094 = vmatprep.subr.mxu0 0.0
    %7095 = vmatpush1.msra.mxu0 0.0
    %7096 = vmatprep.subr.mxu0 0.0
    %7097 = vmatpush1.msra.mxu0 0.0
    %7098 = vmatprep.subr.mxu0 0.0
    %7099 = vmatpush1.msra.mxu0 0.0
    %7100 = vmatprep.subr.mxu0 0.0
    %7101 = vmatpush1.msra.mxu0 0.0
    %7102 = vmatprep.subr.mxu0 0.0
    %7103 = vmatpush1.msra.mxu0 0.0
    %7104 = vmatprep.subr.mxu0 0.0
    %7105 = vmatpush1.msra.mxu0 0.0
    %7106 = vmatprep.subr.mxu0 0.0
    %7107 = vmatpush1.msra.mxu0 0.0
    %7108 = vmatprep.subr.mxu0 0.0
    %v7109 = vand.u32 %v6718, 4294901760
    %v7110 = vsub.f32 %v6718, %v7109
    %v7111 = vand.u32 %v7110, 4294901760
    %7112 = vmatpush1.msra.mxu0 %v7111
    %7113 = vmatprep.subr.mxu0 0.0
    %v7114 = vand.u32 %v6717, 4294901760
    %v7115 = vsub.f32 %v6717, %v7114
    %v7116 = vand.u32 %v7115, 4294901760
    %7117 = vmatpush1.msra.mxu0 %v7116
    %7118 = vmatprep.subr.mxu0 0.0
    %v7119 = vand.u32 %v6716, 4294901760
    %v7120 = vsub.f32 %v6716, %v7119
    %v7121 = vand.u32 %v7120, 4294901760
    %7122 = vmatpush1.msra.mxu0 %v7121
    %7123 = vmatprep.subr.mxu0 0.0
    %v7124 = vand.u32 %v6715, 4294901760
    %v7125 = vsub.f32 %v6715, %v7124
    %v7126 = vand.u32 %v7125, 4294901760
    %7127 = vmatpush1.msra.mxu0 %v7126
    %7128 = vmatprep.subr.mxu0 0.0
    %v7129 = vand.u32 %v6714, 4294901760
    %v7130 = vsub.f32 %v6714, %v7129
    %v7131 = vand.u32 %v7130, 4294901760
    %7132 = vmatpush1.msra.mxu0 %v7131
    %7133 = vmatprep.subr.mxu0 0.0
    %v7134 = vand.u32 %v6713, 4294901760
    %v7135 = vsub.f32 %v6713, %v7134
    %v7136 = vand.u32 %v7135, 4294901760
    %7137 = vmatpush1.msra.mxu0 %v7136
    %7138 = vmatprep.subr.mxu0 0.0
    %v7139 = vand.u32 %v6712, 4294901760
    %v7140 = vsub.f32 %v6712, %v7139
    %v7141 = vand.u32 %v7140, 4294901760
    %7142 = vmatpush1.msra.mxu0 %v7141
    %7143 = vmatprep.subr.mxu0 0.0
    %v7144 = vand.u32 %v6711, 4294901760
    %v7145 = vsub.f32 %v6711, %v7144
    %v7146 = vand.u32 %v7145, 4294901760
    %7147 = vmatpush1.msra.mxu0 %v7146
    %7148 = vmatprep.subr.mxu0 0.0
    %7149 = vmatpush2.msra.mxu0 0.0
    %7150 = vmatprep.subr.mxu0 0.0
    %7151 = vmatpush2.msra.mxu0 0.0
    %7152 = vmatprep.subr.mxu0 0.0
    %7153 = vmatpush2.msra.mxu0 0.0
    %7154 = vmatprep.subr.mxu0 0.0
    %7155 = vmatpush2.msra.mxu0 0.0
    %7156 = vmatprep.subr.mxu0 0.0
    %7157 = vmatpush2.msra.mxu0 0.0
    %7158 = vmatprep.subr.mxu0 0.0
    %7159 = vmatpush2.msra.mxu0 0.0
    %7160 = vmatprep.subr.mxu0 0.0
    %7161 = vmatpush2.msra.mxu0 0.0
    %7162 = vmatprep.subr.mxu0 0.0
    %7163 = vmatpush2.msra.mxu0 0.0
    %7164 = vmatprep.subr.mxu0 0.0
    %7165 = vmatpush2.msra.mxu0 0.0
    %7166 = vmatprep.subr.mxu0 0.0
    %7167 = vmatpush2.msra.mxu0 0.0
    %7168 = vmatprep.subr.mxu0 0.0
    %7169 = vmatpush2.msra.mxu0 0.0
    %7170 = vmatprep.subr.mxu0 0.0
    %7171 = vmatpush2.msra.mxu0 0.0
    %7172 = vmatprep.subr.mxu0 0.0
    %7173 = vmatpush2.msra.mxu0 0.0
    %7174 = vmatprep.subr.mxu0 0.0
    %7175 = vmatpush2.msra.mxu0 0.0
    %7176 = vmatprep.subr.mxu0 0.0
    %7177 = vmatpush2.msra.mxu0 0.0
    %7178 = vmatprep.subr.mxu0 0.0
    %7179 = vmatpush2.msra.mxu0 0.0
    %7180 = vmatprep.mubr.f32.mxu0 0.0
    %v7181 = vand.u32 %v6727, 4294901760
    %7182 = vmatmul.mubr.f32.gmra.mxu0 %v7181
    %v7183 = vpop.f32.mrf.mxu0
    %v7184 = vadd.f32 %v7089, %v7183
    %v7185 = vpop.f32.mrf.mxu0
    %7186 = vdwg.mxu0
    %7187 = vmatprep.subr.mxu0 0.0
    %7188 = vmatpush1.msra.mxu0 0.0
    %7189 = vmatprep.subr.mxu0 0.0
    %7190 = vmatpush1.msra.mxu0 0.0
    %7191 = vmatprep.subr.mxu0 0.0
    %7192 = vmatpush1.msra.mxu0 0.0
    %7193 = vmatprep.subr.mxu0 0.0
    %7194 = vmatpush1.msra.mxu0 0.0
    %7195 = vmatprep.subr.mxu0 0.0
    %7196 = vmatpush1.msra.mxu0 0.0
    %7197 = vmatprep.subr.mxu0 0.0
    %7198 = vmatpush1.msra.mxu0 0.0
    %7199 = vmatprep.subr.mxu0 0.0
    %7200 = vmatpush1.msra.mxu0 0.0
    %7201 = vmatprep.subr.mxu0 0.0
    %7202 = vmatpush1.msra.mxu0 0.0
    %7203 = vmatprep.subr.mxu0 0.0
    %v7204 = vand.u32 %v6718, 4294901760
    %7205 = vmatpush1.msra.mxu0 %v7204
    %7206 = vmatprep.subr.mxu0 0.0
    %v7207 = vand.u32 %v6717, 4294901760
    %7208 = vmatpush1.msra.mxu0 %v7207
    %7209 = vmatprep.subr.mxu0 0.0
    %v7210 = vand.u32 %v6716, 4294901760
    %7211 = vmatpush1.msra.mxu0 %v7210
    %7212 = vmatprep.subr.mxu0 0.0
    %v7213 = vand.u32 %v6715, 4294901760
    %7214 = vmatpush1.msra.mxu0 %v7213
    %7215 = vmatprep.subr.mxu0 0.0
    %v7216 = vand.u32 %v6714, 4294901760
    %7217 = vmatpush1.msra.mxu0 %v7216
    %7218 = vmatprep.subr.mxu0 0.0
    %v7219 = vand.u32 %v6713, 4294901760
    %7220 = vmatpush1.msra.mxu0 %v7219
    %7221 = vmatprep.subr.mxu0 0.0
    %v7222 = vand.u32 %v6712, 4294901760
    %7223 = vmatpush1.msra.mxu0 %v7222
    %7224 = vmatprep.subr.mxu0 0.0
    %v7225 = vand.u32 %v6711, 4294901760
    %7226 = vmatpush1.msra.mxu0 %v7225
    %7227 = vmatprep.subr.mxu0 0.0
    %7228 = vmatpush2.msra.mxu0 0.0
    %7229 = vmatprep.subr.mxu0 0.0
    %7230 = vmatpush2.msra.mxu0 0.0
    %7231 = vmatprep.subr.mxu0 0.0
    %7232 = vmatpush2.msra.mxu0 0.0
    %7233 = vmatprep.subr.mxu0 0.0
    %7234 = vmatpush2.msra.mxu0 0.0
    %7235 = vmatprep.subr.mxu0 0.0
    %7236 = vmatpush2.msra.mxu0 0.0
    %7237 = vmatprep.subr.mxu0 0.0
    %7238 = vmatpush2.msra.mxu0 0.0
    %7239 = vmatprep.subr.mxu0 0.0
    %7240 = vmatpush2.msra.mxu0 0.0
    %7241 = vmatprep.subr.mxu0 0.0
    %7242 = vmatpush2.msra.mxu0 0.0
    %7243 = vmatprep.subr.mxu0 0.0
    %7244 = vmatpush2.msra.mxu0 0.0
    %7245 = vmatprep.subr.mxu0 0.0
    %7246 = vmatpush2.msra.mxu0 0.0
    %7247 = vmatprep.subr.mxu0 0.0
    %7248 = vmatpush2.msra.mxu0 0.0
    %7249 = vmatprep.subr.mxu0 0.0
    %7250 = vmatpush2.msra.mxu0 0.0
    %7251 = vmatprep.subr.mxu0 0.0
    %7252 = vmatpush2.msra.mxu0 0.0
    %7253 = vmatprep.subr.mxu0 0.0
    %7254 = vmatpush2.msra.mxu0 0.0
    %7255 = vmatprep.subr.mxu0 0.0
    %7256 = vmatpush2.msra.mxu0 0.0
    %7257 = vmatprep.subr.mxu0 0.0
    %7258 = vmatpush2.msra.mxu0 0.0
    %7259 = vmatprep.mubr.f32.mxu0 0.0
    %v7260 = vand.u32 %v6727, 4294901760
    %7261 = vmatmul.mubr.f32.gmra.mxu0 %v7260
    %v7262 = vpop.f32.mrf.mxu0
    %v7263 = vadd.f32 %v7184, %v7262
    %v7264 = vpop.f32.mrf.mxu0
    %7265 = vdwg.mxu0
    %vm7266 = vcmask 7168
    %7267 = vst.msk [vmem:[%s6] sm:$0xff] %vm7266, %v7263
    // Predicated region
    $region30: #{tpu_custom_call.1} parent=1 // pred_check
      _
    $region31: #{tpu_custom_call.1} parent=1 // pred_check_branch
      %7269 = sbr.rel (0) target = $region33
    $region32: #{tpu_custom_call.1} parent=1 // pred_region
      _
    $region33: #{tpu_custom_call.1} parent=1 // pred_fallthru
      _
    // Predicated region
    $region34: #{tpu_custom_call.1} parent=1 // pred_check
      _
    $region35: #{tpu_custom_call.1} parent=1 // pred_check_branch
      %7271 = sbr.rel (0) target = $region37
    $region36: #{tpu_custom_call.1} parent=1 // pred_region
      _
    $region37: #{tpu_custom_call.1} parent=1 // pred_fallthru
      _
    %7272 = vsyncpa [#allocation5], 1

</llo_original>
